<compile_context>
chip_gen: v5e
topology: v5e:2x2
jax: 0.10.0
libtpu: 0.0.40
codegen_flags: <defaults>
</compile_context>

<pallas_src>
import functools
import math

import jax
import jax.numpy as jnp
from jax import lax
from jax.experimental import pallas as pl
from jax.experimental.pallas import tpu as pltpu

SEQ_WORLD_SIZE = 1  # single-device simulation of the sequence-parallel group


# ----------------------------------------------------------------------------
# Pallas kernel: multi-head attention with optional additive bias
# (flash / online softmax).
#   q/k/v/out refs : (1, tile, H*D)   -- lane-dense, native memory layout
#   bias ref       : (1, H, tq, tk)   -- only present when has_bias
#   scratches      : q_sc (H,tq,D) bf16, m_sc/l_sc (H,tq,1) f32, acc (tq,H*D) f32
# ----------------------------------------------------------------------------
def _flash_kernel(scale, H, D, has_bias, *refs):
    if has_bias:
        q_ref, k_ref, v_ref, b_ref, o_ref, q_sc, m_sc, l_sc, acc_sc = refs
    else:
        q_ref, k_ref, v_ref, o_ref, q_sc, m_sc, l_sc, acc_sc = refs
        b_ref = None

    kv = pl.program_id(2)
    tq = acc_sc.shape[0]

    @pl.when(kv == 0)
    def _():
        m_sc[...] = jnp.full_like(m_sc, -jnp.inf)
        l_sc[...] = jnp.zeros_like(l_sc)
        acc_sc[...] = jnp.zeros_like(acc_sc)
        # Hoisted once per q-tile: fold softmax scale into Q, cast to bf16,
        # split per head.  Reused across every kv step.
        qf = q_ref[0].astype(jnp.float32) * scale            # (tq, H*D)
        for h in range(H):
            q_sc[h] = qf[:, h * D:(h + 1) * D].astype(jnp.bfloat16)

    k_full = k_ref[0]                                         # (tk, H*D)
    v_full = v_ref[0]                                         # (tk, H*D)

    alphas = []
    pvs = []
    # Static unroll over heads (H*D == lane width keeps the tiles lane-dense).
    for h in range(H):
        lo = h * D
        kh = k_full[:, lo:lo + D].astype(jnp.bfloat16)        # (tk, D)
        vh = v_full[:, lo:lo + D].astype(jnp.bfloat16)        # (tk, D)

        # QK^T without materializing a transpose: contract the last dims.
        s = lax.dot_general(
            q_sc[h], kh,
            dimension_numbers=(((1,), (1,)), ((), ())),
            preferred_element_type=jnp.float32)               # (tq, tk)
        if has_bias:
            s = s + b_ref[0, h].astype(jnp.float32)

        m_prev = m_sc[h]                                      # (tq, 1)
        m_new = jnp.maximum(m_prev, s.max(axis=-1, keepdims=True))
        # Guard fully-masked rows (all -inf) so exp stays NaN-free.
        m_safe = jnp.where(m_new == -jnp.inf, 0.0, m_new)
        alpha = jnp.exp(m_prev - m_safe)                      # (tq, 1)
        p = jnp.exp(s - m_safe)                               # (tq, tk)

        l_sc[h] = alpha * l_sc[h] + p.sum(axis=-1, keepdims=True)
        m_sc[h] = m_new

        pvs.append(jnp.dot(p.astype(jnp.bfloat16), vh,
                           preferred_element_type=jnp.float32))   # (tq, D)
        alphas.append(jnp.broadcast_to(alpha, (tq, D)))

    # Single dense, unmasked (tq, H*D) accumulator update (no per-head RMW).
    alpha_full = jnp.concatenate(alphas, axis=-1)             # (tq, H*D)
    pv_full = jnp.concatenate(pvs, axis=-1)                   # (tq, H*D)
    acc_sc[...] = alpha_full * acc_sc[...] + pv_full

    @pl.when(kv == pl.num_programs(2) - 1)
    def _():
        invs = []
        for h in range(H):
            l_h = l_sc[h]
            # Guard l == 0 (fully masked row -> output 0), divide via EUP.
            inv = pl.reciprocal(jnp.where(l_h == 0.0, 1.0, l_h), approx=True)
            invs.append(jnp.broadcast_to(inv, (tq, D)))
        inv_full = jnp.concatenate(invs, axis=-1)             # (tq, H*D)
        # Single full-width, lane-dense multiply + store.
        o_ref[0] = (acc_sc[...] * inv_full).astype(o_ref.dtype)


def pallas_local_attention(q, k, v, attn_bias=None, *, tq=256, tk=256):
    """softmax(Q K^T / sqrt(D) + bias) V   (the `local_attn` hot path).

    q, k, v: [B, S, H, D];  attn_bias: [B, H, S, S] or None;  returns [B, S, H, D].
    Inputs are streamed in their producer dtype (bf16 recommended); compute is
    bf16 on the MXU with f32 accumulation.
    On v5e, callers may pass tq=512 (when S allows) to halve K/V re-fetch traffic.
    """
    B, S, H, D = q.shape
    HD = H * D
    scale = 1.0 / math.sqrt(D)
    has_bias = attn_bias is not None

    tq = min(tq, S)
    tk = min(tk, S)

    # v7x megacore balance: keep the parallel grid extent B*(S//tq) >= 2 when we
    # can do so without violating the (8,128)/divisibility rules.
    while (B * (S // tq) < 2 and tq % 2 == 0 and (tq // 2) % 8 == 0
           and S % (tq // 2) == 0):
        tq //= 2

    # VMEM guard (v7x: 64 MiB physical, 32 MiB scoped default): keep the
    # double-buffered bias tile <= ~8 MiB so Q/K/V/out/acc still fit.
    if has_bias:
        bias_itemsize = jnp.dtype(attn_bias.dtype).itemsize
        while (2 * H * tq * tk * bias_itemsize > (8 << 20)
               and tk % 2 == 0 and (tk // 2) % 128 == 0 and S % (tk // 2) == 0):
            tk //= 2

    assert S % tq == 0 and S % tk == 0, (
        f"sequence length {S} must be divisible by tile sizes ({tq}, {tk})")

    # Free reshapes (trailing dims are contiguous) -- no HBM transpose passes.
    qf = q.reshape(B, S, HD)
    kf = k.reshape(B, S, HD)
    vf = v.reshape(B, S, HD)

    grid = (B, S // tq, S // tk)

    in_specs = [
        pl.BlockSpec((1, tq, HD), lambda b, i, j: (b, i, 0)),      # Q
        pl.BlockSpec((1, tk, HD), lambda b, i, j: (b, j, 0)),      # K
        pl.BlockSpec((1, tk, HD), lambda b, i, j: (b, j, 0)),      # V
    ]
    operands = [qf, kf, vf]
    if has_bias:
        in_specs.append(
            pl.BlockSpec((1, H, tq, tk), lambda b, i, j: (b, 0, i, j)))  # bias
        operands.append(attn_bias)

    out = pl.pallas_call(
        functools.partial(_flash_kernel, scale, H, D, has_bias),
        out_shape=jax.ShapeDtypeStruct((B, S, HD), q.dtype),
        grid_spec=pltpu.PrefetchScalarGridSpec(
            num_scalar_prefetch=0,
            grid=grid,
            in_specs=in_specs,
            out_specs=pl.BlockSpec((1, tq, HD), lambda b, i, j: (b, i, 0)),
            scratch_shapes=[
                pltpu.VMEM((H, tq, D), jnp.bfloat16),  # scaled Q (per head)
                pltpu.VMEM((H, tq, 1), jnp.float32),   # running max (per head)
                pltpu.VMEM((H, tq, 1), jnp.float32),   # running denom (per head)
                pltpu.VMEM((tq, HD), jnp.float32),     # running numerator (lane-dense)
            ],
        ),
        compiler_params=pltpu.CompilerParams(
            # batch and query-tile axes shard across TensorCores (v7x megacore);
            # the kv axis carries the online-softmax accumulator.
            dimension_semantics=("parallel", "parallel", "arbitrary")),
    )(*operands)

    return out.reshape(B, S, H, D)


# ----------------------------------------------------------------------------
# Module-equivalent forward (sequence-parallel world size = 1)
# ----------------------------------------------------------------------------
def _seq_all_to_all(x, scatter_idx, gather_idx, world_size=SEQ_WORLD_SIZE):
    # With a 1-member process group, tensor_split -> all_to_all -> cat is identity.
    del scatter_idx, gather_idx
    if world_size == 1:
        return x
    raise NotImplementedError("multi-device sequence parallelism not simulated")


def _seq_gather(x, gather_idx, world_size=SEQ_WORLD_SIZE):
    del gather_idx
    if world_size == 1:
        return x
    raise NotImplementedError("multi-device sequence parallelism not simulated")


def distributed_attention_global0_forward(query, key, value, attn_bias,
                                          edge_index, *, training=False,
                                          scatter_idx=2, gather_idx=1):
    del edge_index  # not used by the dense softmax local attention
    if training:
        q = _seq_all_to_all(query, scatter_idx, gather_idx)
        k = _seq_all_to_all(key, scatter_idx, gather_idx)
        v = _seq_all_to_all(value, scatter_idx, gather_idx)
        b = _seq_gather(attn_bias, gather_idx) if attn_bias is not None else None
        # merge_global_token0 treated as identity (see TODO above)
    else:
        q, k, v, b = query, key, value, attn_bias

    context = pallas_local_attention(q, k, v, b)

    if training:
        # extend_global_token0 treated as identity (see TODO above)
        context = _seq_all_to_all(context, gather_idx, scatter_idx)
    return context


# ----------------------------------------------------------------------------
# Reference (plain JAX, f32) for verification
# ----------------------------------------------------------------------------
def reference_attention(q, k, v, bias):
    B, S, H, D = q.shape
    qf = q.astype(jnp.float32)
    kf = k.astype(jnp.float32)
    vf = v.astype(jnp.float32)
    s = jnp.einsum('bqhd,bkhd->bhqk', qf, kf) / math.sqrt(D)
    if bias is not None:
        s = s + bias.astype(jnp.float32)
    p = jax.nn.softmax(s, axis=-1)
    return jnp.einsum('bhqk,bkhd->bqhd', p, vf)


if __name__ == "__main__":
    B, S, H, D = 2, 256, 4, 32   # H*D = 128 -> lane-dense blocks
    k0 = jax.random.PRNGKey(0)
    kq, kk, kv_, kb = jax.random.split(k0, 4)
    # bf16 producers: halves Q/K/V and bias HBM traffic (no wrapper cast passes).
    query = jax.random.normal(kq, (B, S, H, D), jnp.float32).astype(jnp.bfloat16)
    key_t = jax.random.normal(kk, (B, S, H, D), jnp.float32).astype(jnp.bfloat16)
    value = jax.random.normal(kv_, (B, S, H, D), jnp.float32).astype(jnp.bfloat16)
    attn_bias = (0.5 * jax.random.normal(kb, (B, H, S, S), jnp.float32)
                 ).astype(jnp.bfloat16)
    edge_index = jnp.zeros((2, 16), jnp.int32)  # accepted but unused

    fwd = jax.jit(functools.partial(
        distributed_attention_global0_forward, training=False))

    # With bias (bf16 streamed bias).
    out = jax.block_until_ready(fwd(query, key_t, value, attn_bias, edge_index))
    ref = reference_attention(query, key_t, value, attn_bias)
    diff = jnp.abs(out.astype(jnp.float32) - ref)
    max_err = float(jnp.max(diff))
    mean_err = float(jnp.mean(diff))
    assert out.shape == query.shape, (out.shape, query.shape)
    # bf16 streaming + bf16 MXU operands + approx reciprocal vs f32 reference.
    assert max_err < 1.25e-1 and mean_err < 2.5e-2, (max_err, mean_err)

    # Without bias (no zero-bias stream is materialized).
    out_nb = jax.block_until_ready(fwd(query, key_t, value, None, edge_index))
    ref_nb = reference_attention(query, key_t, value, None)
    max_err_nb = float(jnp.max(jnp.abs(out_nb.astype(jnp.float32) - ref_nb)))
    assert max_err_nb < 1.25e-1, max_err_nb

    print("KERNEL_OK")
</pallas_src>

<mosaic_0001>
module attributes {stable_mosaic.version = 11 : i64} {
  func.func @_flash_kernel(%arg0: i32, %arg1: i32, %arg2: i32, %arg3: memref<1x256x128xbf16, #tpu.memory_space<vmem>>, %arg4: memref<1x256x128xbf16, #tpu.memory_space<vmem>>, %arg5: memref<1x256x128xbf16, #tpu.memory_space<vmem>>, %arg6: memref<1x4x256x256xbf16, #tpu.memory_space<vmem>>, %arg7: memref<1x256x128xbf16, #tpu.memory_space<vmem>>, %arg8: memref<4x256x32xbf16, #tpu.memory_space<vmem>>, %arg9: memref<4x256x1xf32, #tpu.memory_space<vmem>>, %arg10: memref<4x256x1xf32, #tpu.memory_space<vmem>>, %arg11: memref<256x128xf32, #tpu.memory_space<vmem>>) attributes {dimension_semantics = [#tpu.dimension_semantics<parallel>, #tpu.dimension_semantics<parallel>, #tpu.dimension_semantics<arbitrary>], iteration_bounds = array<i64: 2, 1, 1>, scalar_prefetch = 0 : i64, scratch_operands = 4 : i64, tpu.core_type = #tpu.core_type<tc>, window_params = [{transform_indices = @transform_0, window_bounds = array<i64: 1, 256, 128>}, {transform_indices = @transform_1, window_bounds = array<i64: 1, 256, 128>}, {transform_indices = @transform_2, window_bounds = array<i64: 1, 256, 128>}, {transform_indices = @transform_3, window_bounds = array<i64: 1, 4, 256, 256>}, {transform_indices = @transform_4, window_bounds = array<i64: 1, 256, 128>}]} {
    %c0_i32 = arith.constant 0 : i32
    %0 = arith.cmpi eq, %arg2, %c0_i32 : i32
    %1 = arith.extui %0 : i1 to i32
    %c0_i32_0 = arith.constant 0 : i32
    %2 = arith.cmpi ne, %1, %c0_i32_0 : i32
    scf.if %2 {
      %cst_108 = arith.constant 0xFF800000 : f32
      %172 = vector.broadcast %cst_108 : f32 to vector<4x256x1xf32>
      %c0_109 = arith.constant 0 : index
      %c0_110 = arith.constant 0 : index
      %c0_111 = arith.constant 0 : index
      %173 = vector.load %arg9[%c0_109, %c0_110, %c0_111] : memref<4x256x1xf32, #tpu.memory_space<vmem>>, vector<4x256x1xf32>
      tpu.vector_store %arg9[%c0_109, %c0_110, %c0_111], %172 {strides = array<i32>} : memref<4x256x1xf32, #tpu.memory_space<vmem>>, vector<4x256x1xf32>,
      %cst_112 = arith.constant 0.000000e+00 : f32
      %174 = vector.broadcast %cst_112 : f32 to vector<4x256x1xf32>
      %c0_113 = arith.constant 0 : index
      %c0_114 = arith.constant 0 : index
      %c0_115 = arith.constant 0 : index
      %175 = vector.load %arg10[%c0_113, %c0_114, %c0_115] : memref<4x256x1xf32, #tpu.memory_space<vmem>>, vector<4x256x1xf32>
      tpu.vector_store %arg10[%c0_113, %c0_114, %c0_115], %174 {strides = array<i32>} : memref<4x256x1xf32, #tpu.memory_space<vmem>>, vector<4x256x1xf32>,
      %cst_116 = arith.constant 0.000000e+00 : f32
      %176 = vector.broadcast %cst_116 : f32 to vector<256x128xf32>
      %c0_117 = arith.constant 0 : index
      %c0_118 = arith.constant 0 : index
      %177 = vector.load %arg11[%c0_117, %c0_118] : memref<256x128xf32, #tpu.memory_space<vmem>>, vector<256x128xf32>
      tpu.vector_store %arg11[%c0_117, %c0_118], %176 {strides = array<i32>} : memref<256x128xf32, #tpu.memory_space<vmem>>, vector<256x128xf32>,
      %c0_119 = arith.constant 0 : index
      %c0_120 = arith.constant 0 : index
      %c0_121 = arith.constant 0 : index
      %178 = vector.load %arg3[%c0_119, %c0_120, %c0_121] : memref<1x256x128xbf16, #tpu.memory_space<vmem>>, vector<1x256x128xbf16>
      %179 = vector.shape_cast %178 : vector<1x256x128xbf16> to vector<256x128xbf16>
      %180 = arith.extf %179 : vector<256x128xbf16> to vector<256x128xf32>
      %cst_122 = arith.constant 0.176776692 : f32
      %181 = vector.broadcast %cst_122 : f32 to vector<256x128xf32>
      %182 = arith.mulf %180, %181 : vector<256x128xf32>
      %183 = vector.extract_strided_slice %182 {offsets = [0, 0], sizes = [256, 32], strides = [1, 1]} : vector<256x128xf32> to vector<256x32xf32>
      %184 = arith.truncf %183 : vector<256x32xf32> to vector<256x32xbf16>
      %c0_123 = arith.constant 0 : index
      %c0_124 = arith.constant 0 : index
      %c0_125 = arith.constant 0 : index
      %185 = vector.load %arg8[%c0_123, %c0_124, %c0_125] : memref<4x256x32xbf16, #tpu.memory_space<vmem>>, vector<1x256x32xbf16>
      %186 = vector.shape_cast %185 : vector<1x256x32xbf16> to vector<256x32xbf16>
      %187 = vector.shape_cast %184 : vector<256x32xbf16> to vector<1x256x32xbf16>
      tpu.vector_store %arg8[%c0_123, %c0_124, %c0_125], %187 {strides = array<i32>} : memref<4x256x32xbf16, #tpu.memory_space<vmem>>, vector<1x256x32xbf16>,
      %188 = vector.extract_strided_slice %182 {offsets = [0, 32], sizes = [256, 32], strides = [1, 1]} : vector<256x128xf32> to vector<256x32xf32>
      %189 = arith.truncf %188 : vector<256x32xf32> to vector<256x32xbf16>
      %c1_126 = arith.constant 1 : index
      %c0_127 = arith.constant 0 : index
      %c0_128 = arith.constant 0 : index
      %190 = vector.load %arg8[%c1_126, %c0_127, %c0_128] : memref<4x256x32xbf16, #tpu.memory_space<vmem>>, vector<1x256x32xbf16>
      %191 = vector.shape_cast %190 : vector<1x256x32xbf16> to vector<256x32xbf16>
      %192 = vector.shape_cast %189 : vector<256x32xbf16> to vector<1x256x32xbf16>
      tpu.vector_store %arg8[%c1_126, %c0_127, %c0_128], %192 {strides = array<i32>} : memref<4x256x32xbf16, #tpu.memory_space<vmem>>, vector<1x256x32xbf16>,
      %193 = vector.extract_strided_slice %182 {offsets = [0, 64], sizes = [256, 32], strides = [1, 1]} : vector<256x128xf32> to vector<256x32xf32>
      %194 = arith.truncf %193 : vector<256x32xf32> to vector<256x32xbf16>
      %c2_129 = arith.constant 2 : index
      %c0_130 = arith.constant 0 : index
      %c0_131 = arith.constant 0 : index
      %195 = vector.load %arg8[%c2_129, %c0_130, %c0_131] : memref<4x256x32xbf16, #tpu.memory_space<vmem>>, vector<1x256x32xbf16>
      %196 = vector.shape_cast %195 : vector<1x256x32xbf16> to vector<256x32xbf16>
      %197 = vector.shape_cast %194 : vector<256x32xbf16> to vector<1x256x32xbf16>
      tpu.vector_store %arg8[%c2_129, %c0_130, %c0_131], %197 {strides = array<i32>} : memref<4x256x32xbf16, #tpu.memory_space<vmem>>, vector<1x256x32xbf16>,
      %198 = vector.extract_strided_slice %182 {offsets = [0, 96], sizes = [256, 32], strides = [1, 1]} : vector<256x128xf32> to vector<256x32xf32>
      %199 = arith.truncf %198 : vector<256x32xf32> to vector<256x32xbf16>
      %c3_132 = arith.constant 3 : index
      %c0_133 = arith.constant 0 : index
      %c0_134 = arith.constant 0 : index
      %200 = vector.load %arg8[%c3_132, %c0_133, %c0_134] : memref<4x256x32xbf16, #tpu.memory_space<vmem>>, vector<1x256x32xbf16>
      %201 = vector.shape_cast %200 : vector<1x256x32xbf16> to vector<256x32xbf16>
      %202 = vector.shape_cast %199 : vector<256x32xbf16> to vector<1x256x32xbf16>
      tpu.vector_store %arg8[%c3_132, %c0_133, %c0_134], %202 {strides = array<i32>} : memref<4x256x32xbf16, #tpu.memory_space<vmem>>, vector<1x256x32xbf16>,
    } else {
    }
    %c0 = arith.constant 0 : index
    %c0_1 = arith.constant 0 : index
    %c0_2 = arith.constant 0 : index
    %3 = vector.load %arg4[%c0, %c0_1, %c0_2] : memref<1x256x128xbf16, #tpu.memory_space<vmem>>, vector<1x256x128xbf16>
    %4 = vector.shape_cast %3 : vector<1x256x128xbf16> to vector<256x128xbf16>
    %c0_3 = arith.constant 0 : index
    %c0_4 = arith.constant 0 : index
    %c0_5 = arith.constant 0 : index
    %5 = vector.load %arg5[%c0_3, %c0_4, %c0_5] : memref<1x256x128xbf16, #tpu.memory_space<vmem>>, vector<1x256x128xbf16>
    %6 = vector.shape_cast %5 : vector<1x256x128xbf16> to vector<256x128xbf16>
    %7 = vector.extract_strided_slice %4 {offsets = [0, 0], sizes = [256, 32], strides = [1, 1]} : vector<256x128xbf16> to vector<256x32xbf16>
    %8 = vector.extract_strided_slice %6 {offsets = [0, 0], sizes = [256, 32], strides = [1, 1]} : vector<256x128xbf16> to vector<256x32xbf16>
    %c0_6 = arith.constant 0 : index
    %c0_7 = arith.constant 0 : index
    %c0_8 = arith.constant 0 : index
    %9 = vector.load %arg8[%c0_6, %c0_7, %c0_8] : memref<4x256x32xbf16, #tpu.memory_space<vmem>>, vector<1x256x32xbf16>
    %10 = vector.shape_cast %9 : vector<1x256x32xbf16> to vector<256x32xbf16>
    %cst = arith.constant dense<0.000000e+00> : vector<256x256xf32>
    %11 = tpu.matmul %10, %7, %cst {dimension_numbers = #tpu.dot_dimension_numbers<[1], [1], [0], [0], [0, 0, 1, 0], [], []>} : vector<256x32xbf16>, vector<256x32xbf16>, vector<256x256xf32> -> vector<256x256xf32>
    %c0_9 = arith.constant 0 : index
    %c0_10 = arith.constant 0 : index
    %c0_11 = arith.constant 0 : index
    %c0_12 = arith.constant 0 : index
    %12 = vector.load %arg6[%c0_9, %c0_10, %c0_11, %c0_12] : memref<1x4x256x256xbf16, #tpu.memory_space<vmem>>, vector<1x1x256x256xbf16>
    %13 = vector.shape_cast %12 : vector<1x1x256x256xbf16> to vector<256x256xbf16>
    %14 = arith.extf %13 : vector<256x256xbf16> to vector<256x256xf32>
    %15 = arith.addf %11, %14 : vector<256x256xf32>
    %c0_13 = arith.constant 0 : index
    %c0_14 = arith.constant 0 : index
    %c0_15 = arith.constant 0 : index
    %16 = vector.load %arg9[%c0_13, %c0_14, %c0_15] : memref<4x256x1xf32, #tpu.memory_space<vmem>>, vector<1x256x1xf32>
    %17 = vector.shape_cast %16 : vector<1x256x1xf32> to vector<256x1xf32>
    %cst_16 = arith.constant dense<0xFF800000> : vector<256xf32>
    %18 = vector.multi_reduction <maximumf>, %15, %cst_16 [1] : vector<256x256xf32> to vector<256xf32>
    %19 = vector.shape_cast %18 : vector<256xf32> to vector<256x1xf32>
    %20 = arith.maximumf %17, %19 : vector<256x1xf32>
    %cst_17 = arith.constant 0xFF800000 : f32
    %21 = vector.broadcast %cst_17 : f32 to vector<256x1xf32>
    %22 = arith.cmpf oeq, %20, %21 : vector<256x1xf32>
    %cst_18 = arith.constant 0.000000e+00 : f32
    %23 = vector.broadcast %cst_18 : f32 to vector<256x1xf32>
    %24 = arith.select %22, %23, %20 : vector<256x1xi1>, vector<256x1xf32>
    %25 = arith.subf %17, %24 : vector<256x1xf32>
    %26 = math.exp %25 : vector<256x1xf32>
    %27 = vector.broadcast %24 : vector<256x1xf32> to vector<256x256xf32>
    %28 = arith.subf %15, %27 : vector<256x256xf32>
    %29 = math.exp %28 : vector<256x256xf32>
    %c0_19 = arith.constant 0 : index
    %c0_20 = arith.constant 0 : index
    %c0_21 = arith.constant 0 : index
    %30 = vector.load %arg10[%c0_19, %c0_20, %c0_21] : memref<4x256x1xf32, #tpu.memory_space<vmem>>, vector<1x256x1xf32>
    %31 = vector.shape_cast %30 : vector<1x256x1xf32> to vector<256x1xf32>
    %32 = arith.mulf %26, %31 : vector<256x1xf32>
    %cst_22 = arith.constant dense<0.000000e+00> : vector<256xf32>
    %33 = vector.multi_reduction <add>, %29, %cst_22 [1] : vector<256x256xf32> to vector<256xf32>
    %34 = vector.shape_cast %33 : vector<256xf32> to vector<256x1xf32>
    %35 = arith.addf %32, %34 : vector<256x1xf32>
    %c0_23 = arith.constant 0 : index
    %c0_24 = arith.constant 0 : index
    %c0_25 = arith.constant 0 : index
    %36 = vector.load %arg10[%c0_23, %c0_24, %c0_25] : memref<4x256x1xf32, #tpu.memory_space<vmem>>, vector<1x256x1xf32>
    %37 = vector.shape_cast %36 : vector<1x256x1xf32> to vector<256x1xf32>
    %38 = vector.shape_cast %35 : vector<256x1xf32> to vector<1x256x1xf32>
    tpu.vector_store %arg10[%c0_23, %c0_24, %c0_25], %38 {strides = array<i32>} : memref<4x256x1xf32, #tpu.memory_space<vmem>>, vector<1x256x1xf32>,
    %c0_26 = arith.constant 0 : index
    %c0_27 = arith.constant 0 : index
    %c0_28 = arith.constant 0 : index
    %39 = vector.load %arg9[%c0_26, %c0_27, %c0_28] : memref<4x256x1xf32, #tpu.memory_space<vmem>>, vector<1x256x1xf32>
    %40 = vector.shape_cast %39 : vector<1x256x1xf32> to vector<256x1xf32>
    %41 = vector.shape_cast %20 : vector<256x1xf32> to vector<1x256x1xf32>
    tpu.vector_store %arg9[%c0_26, %c0_27, %c0_28], %41 {strides = array<i32>} : memref<4x256x1xf32, #tpu.memory_space<vmem>>, vector<1x256x1xf32>,
    %42 = arith.truncf %29 : vector<256x256xf32> to vector<256x256xbf16>
    %cst_29 = arith.constant dense<0.000000e+00> : vector<256x32xf32>
    %43 = tpu.matmul %42, %8, %cst_29 {dimension_numbers = #tpu.dot_dimension_numbers<[1], [0], [0], [1], [0, 0, 1, 1], [], []>} : vector<256x256xbf16>, vector<256x32xbf16>, vector<256x32xf32> -> vector<256x32xf32>
    %44 = vector.shape_cast %26 : vector<256x1xf32> to vector<256x1xf32>
    %45 = vector.broadcast %44 : vector<256x1xf32> to vector<256x32xf32>
    %46 = vector.extract_strided_slice %4 {offsets = [0, 32], sizes = [256, 32], strides = [1, 1]} : vector<256x128xbf16> to vector<256x32xbf16>
    %47 = vector.extract_strided_slice %6 {offsets = [0, 32], sizes = [256, 32], strides = [1, 1]} : vector<256x128xbf16> to vector<256x32xbf16>
    %c1 = arith.constant 1 : index
    %c0_30 = arith.constant 0 : index
    %c0_31 = arith.constant 0 : index
    %48 = vector.load %arg8[%c1, %c0_30, %c0_31] : memref<4x256x32xbf16, #tpu.memory_space<vmem>>, vector<1x256x32xbf16>
    %49 = vector.shape_cast %48 : vector<1x256x32xbf16> to vector<256x32xbf16>
    %cst_32 = arith.constant dense<0.000000e+00> : vector<256x256xf32>
    %50 = tpu.matmul %49, %46, %cst_32 {dimension_numbers = #tpu.dot_dimension_numbers<[1], [1], [0], [0], [0, 0, 1, 0], [], []>} : vector<256x32xbf16>, vector<256x32xbf16>, vector<256x256xf32> -> vector<256x256xf32>
    %c0_33 = arith.constant 0 : index
    %c1_34 = arith.constant 1 : index
    %c0_35 = arith.constant 0 : index
    %c0_36 = arith.constant 0 : index
    %51 = vector.load %arg6[%c0_33, %c1_34, %c0_35, %c0_36] : memref<1x4x256x256xbf16, #tpu.memory_space<vmem>>, vector<1x1x256x256xbf16>
    %52 = vector.shape_cast %51 : vector<1x1x256x256xbf16> to vector<256x256xbf16>
    %53 = arith.extf %52 : vector<256x256xbf16> to vector<256x256xf32>
    %54 = arith.addf %50, %53 : vector<256x256xf32>
    %c1_37 = arith.constant 1 : index
    %c0_38 = arith.constant 0 : index
    %c0_39 = arith.constant 0 : index
    %55 = vector.load %arg9[%c1_37, %c0_38, %c0_39] : memref<4x256x1xf32, #tpu.memory_space<vmem>>, vector<1x256x1xf32>
    %56 = vector.shape_cast %55 : vector<1x256x1xf32> to vector<256x1xf32>
    %cst_40 = arith.constant dense<0xFF800000> : vector<256xf32>
    %57 = vector.multi_reduction <maximumf>, %54, %cst_40 [1] : vector<256x256xf32> to vector<256xf32>
    %58 = vector.shape_cast %57 : vector<256xf32> to vector<256x1xf32>
    %59 = arith.maximumf %56, %58 : vector<256x1xf32>
    %cst_41 = arith.constant 0xFF800000 : f32
    %60 = vector.broadcast %cst_41 : f32 to vector<256x1xf32>
    %61 = arith.cmpf oeq, %59, %60 : vector<256x1xf32>
    %cst_42 = arith.constant 0.000000e+00 : f32
    %62 = vector.broadcast %cst_42 : f32 to vector<256x1xf32>
    %63 = arith.select %61, %62, %59 : vector<256x1xi1>, vector<256x1xf32>
    %64 = arith.subf %56, %63 : vector<256x1xf32>
    %65 = math.exp %64 : vector<256x1xf32>
    %66 = vector.broadcast %63 : vector<256x1xf32> to vector<256x256xf32>
    %67 = arith.subf %54, %66 : vector<256x256xf32>
    %68 = math.exp %67 : vector<256x256xf32>
    %c1_43 = arith.constant 1 : index
    %c0_44 = arith.constant 0 : index
    %c0_45 = arith.constant 0 : index
    %69 = vector.load %arg10[%c1_43, %c0_44, %c0_45] : memref<4x256x1xf32, #tpu.memory_space<vmem>>, vector<1x256x1xf32>
    %70 = vector.shape_cast %69 : vector<1x256x1xf32> to vector<256x1xf32>
    %71 = arith.mulf %65, %70 : vector<256x1xf32>
    %cst_46 = arith.constant dense<0.000000e+00> : vector<256xf32>
    %72 = vector.multi_reduction <add>, %68, %cst_46 [1] : vector<256x256xf32> to vector<256xf32>
    %73 = vector.shape_cast %72 : vector<256xf32> to vector<256x1xf32>
    %74 = arith.addf %71, %73 : vector<256x1xf32>
    %c1_47 = arith.constant 1 : index
    %c0_48 = arith.constant 0 : index
    %c0_49 = arith.constant 0 : index
    %75 = vector.load %arg10[%c1_47, %c0_48, %c0_49] : memref<4x256x1xf32, #tpu.memory_space<vmem>>, vector<1x256x1xf32>
    %76 = vector.shape_cast %75 : vector<1x256x1xf32> to vector<256x1xf32>
    %77 = vector.shape_cast %74 : vector<256x1xf32> to vector<1x256x1xf32>
    tpu.vector_store %arg10[%c1_47, %c0_48, %c0_49], %77 {strides = array<i32>} : memref<4x256x1xf32, #tpu.memory_space<vmem>>, vector<1x256x1xf32>,
    %c1_50 = arith.constant 1 : index
    %c0_51 = arith.constant 0 : index
    %c0_52 = arith.constant 0 : index
    %78 = vector.load %arg9[%c1_50, %c0_51, %c0_52] : memref<4x256x1xf32, #tpu.memory_space<vmem>>, vector<1x256x1xf32>
    %79 = vector.shape_cast %78 : vector<1x256x1xf32> to vector<256x1xf32>
    %80 = vector.shape_cast %59 : vector<256x1xf32> to vector<1x256x1xf32>
    tpu.vector_store %arg9[%c1_50, %c0_51, %c0_52], %80 {strides = array<i32>} : memref<4x256x1xf32, #tpu.memory_space<vmem>>, vector<1x256x1xf32>,
    %81 = arith.truncf %68 : vector<256x256xf32> to vector<256x256xbf16>
    %cst_53 = arith.constant dense<0.000000e+00> : vector<256x32xf32>
    %82 = tpu.matmul %81, %47, %cst_53 {dimension_numbers = #tpu.dot_dimension_numbers<[1], [0], [0], [1], [0, 0, 1, 1], [], []>} : vector<256x256xbf16>, vector<256x32xbf16>, vector<256x32xf32> -> vector<256x32xf32>
    %83 = vector.shape_cast %65 : vector<256x1xf32> to vector<256x1xf32>
    %84 = vector.broadcast %83 : vector<256x1xf32> to vector<256x32xf32>
    %85 = vector.extract_strided_slice %4 {offsets = [0, 64], sizes = [256, 32], strides = [1, 1]} : vector<256x128xbf16> to vector<256x32xbf16>
    %86 = vector.extract_strided_slice %6 {offsets = [0, 64], sizes = [256, 32], strides = [1, 1]} : vector<256x128xbf16> to vector<256x32xbf16>
    %c2 = arith.constant 2 : index
    %c0_54 = arith.constant 0 : index
    %c0_55 = arith.constant 0 : index
    %87 = vector.load %arg8[%c2, %c0_54, %c0_55] : memref<4x256x32xbf16, #tpu.memory_space<vmem>>, vector<1x256x32xbf16>
    %88 = vector.shape_cast %87 : vector<1x256x32xbf16> to vector<256x32xbf16>
    %cst_56 = arith.constant dense<0.000000e+00> : vector<256x256xf32>
    %89 = tpu.matmul %88, %85, %cst_56 {dimension_numbers = #tpu.dot_dimension_numbers<[1], [1], [0], [0], [0, 0, 1, 0], [], []>} : vector<256x32xbf16>, vector<256x32xbf16>, vector<256x256xf32> -> vector<256x256xf32>
    %c0_57 = arith.constant 0 : index
    %c2_58 = arith.constant 2 : index
    %c0_59 = arith.constant 0 : index
    %c0_60 = arith.constant 0 : index
    %90 = vector.load %arg6[%c0_57, %c2_58, %c0_59, %c0_60] : memref<1x4x256x256xbf16, #tpu.memory_space<vmem>>, vector<1x1x256x256xbf16>
    %91 = vector.shape_cast %90 : vector<1x1x256x256xbf16> to vector<256x256xbf16>
    %92 = arith.extf %91 : vector<256x256xbf16> to vector<256x256xf32>
    %93 = arith.addf %89, %92 : vector<256x256xf32>
    %c2_61 = arith.constant 2 : index
    %c0_62 = arith.constant 0 : index
    %c0_63 = arith.constant 0 : index
    %94 = vector.load %arg9[%c2_61, %c0_62, %c0_63] : memref<4x256x1xf32, #tpu.memory_space<vmem>>, vector<1x256x1xf32>
    %95 = vector.shape_cast %94 : vector<1x256x1xf32> to vector<256x1xf32>
    %cst_64 = arith.constant dense<0xFF800000> : vector<256xf32>
    %96 = vector.multi_reduction <maximumf>, %93, %cst_64 [1] : vector<256x256xf32> to vector<256xf32>
    %97 = vector.shape_cast %96 : vector<256xf32> to vector<256x1xf32>
    %98 = arith.maximumf %95, %97 : vector<256x1xf32>
    %cst_65 = arith.constant 0xFF800000 : f32
    %99 = vector.broadcast %cst_65 : f32 to vector<256x1xf32>
    %100 = arith.cmpf oeq, %98, %99 : vector<256x1xf32>
    %cst_66 = arith.constant 0.000000e+00 : f32
    %101 = vector.broadcast %cst_66 : f32 to vector<256x1xf32>
    %102 = arith.select %100, %101, %98 : vector<256x1xi1>, vector<256x1xf32>
    %103 = arith.subf %95, %102 : vector<256x1xf32>
    %104 = math.exp %103 : vector<256x1xf32>
    %105 = vector.broadcast %102 : vector<256x1xf32> to vector<256x256xf32>
    %106 = arith.subf %93, %105 : vector<256x256xf32>
    %107 = math.exp %106 : vector<256x256xf32>
    %c2_67 = arith.constant 2 : index
    %c0_68 = arith.constant 0 : index
    %c0_69 = arith.constant 0 : index
    %108 = vector.load %arg10[%c2_67, %c0_68, %c0_69] : memref<4x256x1xf32, #tpu.memory_space<vmem>>, vector<1x256x1xf32>
    %109 = vector.shape_cast %108 : vector<1x256x1xf32> to vector<256x1xf32>
    %110 = arith.mulf %104, %109 : vector<256x1xf32>
    %cst_70 = arith.constant dense<0.000000e+00> : vector<256xf32>
    %111 = vector.multi_reduction <add>, %107, %cst_70 [1] : vector<256x256xf32> to vector<256xf32>
    %112 = vector.shape_cast %111 : vector<256xf32> to vector<256x1xf32>
    %113 = arith.addf %110, %112 : vector<256x1xf32>
    %c2_71 = arith.constant 2 : index
    %c0_72 = arith.constant 0 : index
    %c0_73 = arith.constant 0 : index
    %114 = vector.load %arg10[%c2_71, %c0_72, %c0_73] : memref<4x256x1xf32, #tpu.memory_space<vmem>>, vector<1x256x1xf32>
    %115 = vector.shape_cast %114 : vector<1x256x1xf32> to vector<256x1xf32>
    %116 = vector.shape_cast %113 : vector<256x1xf32> to vector<1x256x1xf32>
    tpu.vector_store %arg10[%c2_71, %c0_72, %c0_73], %116 {strides = array<i32>} : memref<4x256x1xf32, #tpu.memory_space<vmem>>, vector<1x256x1xf32>,
    %c2_74 = arith.constant 2 : index
    %c0_75 = arith.constant 0 : index
    %c0_76 = arith.constant 0 : index
    %117 = vector.load %arg9[%c2_74, %c0_75, %c0_76] : memref<4x256x1xf32, #tpu.memory_space<vmem>>, vector<1x256x1xf32>
    %118 = vector.shape_cast %117 : vector<1x256x1xf32> to vector<256x1xf32>
    %119 = vector.shape_cast %98 : vector<256x1xf32> to vector<1x256x1xf32>
    tpu.vector_store %arg9[%c2_74, %c0_75, %c0_76], %119 {strides = array<i32>} : memref<4x256x1xf32, #tpu.memory_space<vmem>>, vector<1x256x1xf32>,
    %120 = arith.truncf %107 : vector<256x256xf32> to vector<256x256xbf16>
    %cst_77 = arith.constant dense<0.000000e+00> : vector<256x32xf32>
    %121 = tpu.matmul %120, %86, %cst_77 {dimension_numbers = #tpu.dot_dimension_numbers<[1], [0], [0], [1], [0, 0, 1, 1], [], []>} : vector<256x256xbf16>, vector<256x32xbf16>, vector<256x32xf32> -> vector<256x32xf32>
    %122 = vector.shape_cast %104 : vector<256x1xf32> to vector<256x1xf32>
    %123 = vector.broadcast %122 : vector<256x1xf32> to vector<256x32xf32>
    %124 = vector.extract_strided_slice %4 {offsets = [0, 96], sizes = [256, 32], strides = [1, 1]} : vector<256x128xbf16> to vector<256x32xbf16>
    %125 = vector.extract_strided_slice %6 {offsets = [0, 96], sizes = [256, 32], strides = [1, 1]} : vector<256x128xbf16> to vector<256x32xbf16>
    %c3 = arith.constant 3 : index
    %c0_78 = arith.constant 0 : index
    %c0_79 = arith.constant 0 : index
    %126 = vector.load %arg8[%c3, %c0_78, %c0_79] : memref<4x256x32xbf16, #tpu.memory_space<vmem>>, vector<1x256x32xbf16>
    %127 = vector.shape_cast %126 : vector<1x256x32xbf16> to vector<256x32xbf16>
    %cst_80 = arith.constant dense<0.000000e+00> : vector<256x256xf32>
    %128 = tpu.matmul %127, %124, %cst_80 {dimension_numbers = #tpu.dot_dimension_numbers<[1], [1], [0], [0], [0, 0, 1, 0], [], []>} : vector<256x32xbf16>, vector<256x32xbf16>, vector<256x256xf32> -> vector<256x256xf32>
    %c0_81 = arith.constant 0 : index
    %c3_82 = arith.constant 3 : index
    %c0_83 = arith.constant 0 : index
    %c0_84 = arith.constant 0 : index
    %129 = vector.load %arg6[%c0_81, %c3_82, %c0_83, %c0_84] : memref<1x4x256x256xbf16, #tpu.memory_space<vmem>>, vector<1x1x256x256xbf16>
    %130 = vector.shape_cast %129 : vector<1x1x256x256xbf16> to vector<256x256xbf16>
    %131 = arith.extf %130 : vector<256x256xbf16> to vector<256x256xf32>
    %132 = arith.addf %128, %131 : vector<256x256xf32>
    %c3_85 = arith.constant 3 : index
    %c0_86 = arith.constant 0 : index
    %c0_87 = arith.constant 0 : index
    %133 = vector.load %arg9[%c3_85, %c0_86, %c0_87] : memref<4x256x1xf32, #tpu.memory_space<vmem>>, vector<1x256x1xf32>
    %134 = vector.shape_cast %133 : vector<1x256x1xf32> to vector<256x1xf32>
    %cst_88 = arith.constant dense<0xFF800000> : vector<256xf32>
    %135 = vector.multi_reduction <maximumf>, %132, %cst_88 [1] : vector<256x256xf32> to vector<256xf32>
    %136 = vector.shape_cast %135 : vector<256xf32> to vector<256x1xf32>
    %137 = arith.maximumf %134, %136 : vector<256x1xf32>
    %cst_89 = arith.constant 0xFF800000 : f32
    %138 = vector.broadcast %cst_89 : f32 to vector<256x1xf32>
    %139 = arith.cmpf oeq, %137, %138 : vector<256x1xf32>
    %cst_90 = arith.constant 0.000000e+00 : f32
    %140 = vector.broadcast %cst_90 : f32 to vector<256x1xf32>
    %141 = arith.select %139, %140, %137 : vector<256x1xi1>, vector<256x1xf32>
    %142 = arith.subf %134, %141 : vector<256x1xf32>
    %143 = math.exp %142 : vector<256x1xf32>
    %144 = vector.broadcast %141 : vector<256x1xf32> to vector<256x256xf32>
    %145 = arith.subf %132, %144 : vector<256x256xf32>
    %146 = math.exp %145 : vector<256x256xf32>
    %c3_91 = arith.constant 3 : index
    %c0_92 = arith.constant 0 : index
    %c0_93 = arith.constant 0 : index
    %147 = vector.load %arg10[%c3_91, %c0_92, %c0_93] : memref<4x256x1xf32, #tpu.memory_space<vmem>>, vector<1x256x1xf32>
    %148 = vector.shape_cast %147 : vector<1x256x1xf32> to vector<256x1xf32>
    %149 = arith.mulf %143, %148 : vector<256x1xf32>
    %cst_94 = arith.constant dense<0.000000e+00> : vector<256xf32>
    %150 = vector.multi_reduction <add>, %146, %cst_94 [1] : vector<256x256xf32> to vector<256xf32>
    %151 = vector.shape_cast %150 : vector<256xf32> to vector<256x1xf32>
    %152 = arith.addf %149, %151 : vector<256x1xf32>
    %c3_95 = arith.constant 3 : index
    %c0_96 = arith.constant 0 : index
    %c0_97 = arith.constant 0 : index
    %153 = vector.load %arg10[%c3_95, %c0_96, %c0_97] : memref<4x256x1xf32, #tpu.memory_space<vmem>>, vector<1x256x1xf32>
    %154 = vector.shape_cast %153 : vector<1x256x1xf32> to vector<256x1xf32>
    %155 = vector.shape_cast %152 : vector<256x1xf32> to vector<1x256x1xf32>
    tpu.vector_store %arg10[%c3_95, %c0_96, %c0_97], %155 {strides = array<i32>} : memref<4x256x1xf32, #tpu.memory_space<vmem>>, vector<1x256x1xf32>,
    %c3_98 = arith.constant 3 : index
    %c0_99 = arith.constant 0 : index
    %c0_100 = arith.constant 0 : index
    %156 = vector.load %arg9[%c3_98, %c0_99, %c0_100] : memref<4x256x1xf32, #tpu.memory_space<vmem>>, vector<1x256x1xf32>
    %157 = vector.shape_cast %156 : vector<1x256x1xf32> to vector<256x1xf32>
    %158 = vector.shape_cast %137 : vector<256x1xf32> to vector<1x256x1xf32>
    tpu.vector_store %arg9[%c3_98, %c0_99, %c0_100], %158 {strides = array<i32>} : memref<4x256x1xf32, #tpu.memory_space<vmem>>, vector<1x256x1xf32>,
    %159 = arith.truncf %146 : vector<256x256xf32> to vector<256x256xbf16>
    %cst_101 = arith.constant dense<0.000000e+00> : vector<256x32xf32>
    %160 = tpu.matmul %159, %125, %cst_101 {dimension_numbers = #tpu.dot_dimension_numbers<[1], [0], [0], [1], [0, 0, 1, 1], [], []>} : vector<256x256xbf16>, vector<256x32xbf16>, vector<256x32xf32> -> vector<256x32xf32>
    %161 = vector.shape_cast %143 : vector<256x1xf32> to vector<256x1xf32>
    %162 = vector.broadcast %161 : vector<256x1xf32> to vector<256x32xf32>
    %163 = tpu.concatenate %45, %84, %123, %162 in 1 : vector<256x32xf32>, vector<256x32xf32>, vector<256x32xf32>, vector<256x32xf32> -> vector<256x128xf32>
    %164 = tpu.concatenate %43, %82, %121, %160 in 1 : vector<256x32xf32>, vector<256x32xf32>, vector<256x32xf32>, vector<256x32xf32> -> vector<256x128xf32>
    %c0_102 = arith.constant 0 : index
    %c0_103 = arith.constant 0 : index
    %165 = vector.load %arg11[%c0_102, %c0_103] : memref<256x128xf32, #tpu.memory_space<vmem>>, vector<256x128xf32>
    %166 = arith.mulf %163, %165 : vector<256x128xf32>
    %167 = arith.addf %166, %164 : vector<256x128xf32>
    %c0_104 = arith.constant 0 : index
    %c0_105 = arith.constant 0 : index
    %168 = vector.load %arg11[%c0_104, %c0_105] : memref<256x128xf32, #tpu.memory_space<vmem>>, vector<256x128xf32>
    tpu.vector_store %arg11[%c0_104, %c0_105], %167 {strides = array<i32>} : memref<256x128xf32, #tpu.memory_space<vmem>>, vector<256x128xf32>,
    %c0_i32_106 = arith.constant 0 : i32
    %169 = arith.cmpi eq, %arg2, %c0_i32_106 : i32
    %170 = arith.extui %169 : i1 to i32
    %c0_i32_107 = arith.constant 0 : i32
    %171 = arith.cmpi ne, %170, %c0_i32_107 : i32
    scf.if %171 {
      %c0_108 = arith.constant 0 : index
      %c0_109 = arith.constant 0 : index
      %c0_110 = arith.constant 0 : index
      %172 = vector.load %arg10[%c0_108, %c0_109, %c0_110] : memref<4x256x1xf32, #tpu.memory_space<vmem>>, vector<1x256x1xf32>
      %173 = vector.shape_cast %172 : vector<1x256x1xf32> to vector<256x1xf32>
      %cst_111 = arith.constant 0.000000e+00 : f32
      %174 = vector.broadcast %cst_111 : f32 to vector<256x1xf32>
      %175 = arith.cmpf oeq, %173, %174 : vector<256x1xf32>
      %cst_112 = arith.constant 1.000000e+00 : f32
      %176 = vector.broadcast %cst_112 : f32 to vector<256x1xf32>
      %177 = arith.select %175, %176, %173 : vector<256x1xi1>, vector<256x1xf32>
      %178 = tpu.reciprocal %177 {approx = true} : vector<256x1xf32> -> vector<256x1xf32>
      %179 = vector.shape_cast %178 : vector<256x1xf32> to vector<256x1xf32>
      %180 = vector.broadcast %179 : vector<256x1xf32> to vector<256x32xf32>
      %c1_113 = arith.constant 1 : index
      %c0_114 = arith.constant 0 : index
      %c0_115 = arith.constant 0 : index
      %181 = vector.load %arg10[%c1_113, %c0_114, %c0_115] : memref<4x256x1xf32, #tpu.memory_space<vmem>>, vector<1x256x1xf32>
      %182 = vector.shape_cast %181 : vector<1x256x1xf32> to vector<256x1xf32>
      %cst_116 = arith.constant 0.000000e+00 : f32
      %183 = vector.broadcast %cst_116 : f32 to vector<256x1xf32>
      %184 = arith.cmpf oeq, %182, %183 : vector<256x1xf32>
      %cst_117 = arith.constant 1.000000e+00 : f32
      %185 = vector.broadcast %cst_117 : f32 to vector<256x1xf32>
      %186 = arith.select %184, %185, %182 : vector<256x1xi1>, vector<256x1xf32>
      %187 = tpu.reciprocal %186 {approx = true} : vector<256x1xf32> -> vector<256x1xf32>
      %188 = vector.shape_cast %187 : vector<256x1xf32> to vector<256x1xf32>
      %189 = vector.broadcast %188 : vector<256x1xf32> to vector<256x32xf32>
      %c2_118 = arith.constant 2 : index
      %c0_119 = arith.constant 0 : index
      %c0_120 = arith.constant 0 : index
      %190 = vector.load %arg10[%c2_118, %c0_119, %c0_120] : memref<4x256x1xf32, #tpu.memory_space<vmem>>, vector<1x256x1xf32>
      %191 = vector.shape_cast %190 : vector<1x256x1xf32> to vector<256x1xf32>
      %cst_121 = arith.constant 0.000000e+00 : f32
      %192 = vector.broadcast %cst_121 : f32 to vector<256x1xf32>
      %193 = arith.cmpf oeq, %191, %192 : vector<256x1xf32>
      %cst_122 = arith.constant 1.000000e+00 : f32
      %194 = vector.broadcast %cst_122 : f32 to vector<256x1xf32>
      %195 = arith.select %193, %194, %191 : vector<256x1xi1>, vector<256x1xf32>
      %196 = tpu.reciprocal %195 {approx = true} : vector<256x1xf32> -> vector<256x1xf32>
      %197 = vector.shape_cast %196 : vector<256x1xf32> to vector<256x1xf32>
      %198 = vector.broadcast %197 : vector<256x1xf32> to vector<256x32xf32>
      %c3_123 = arith.constant 3 : index
      %c0_124 = arith.constant 0 : index
      %c0_125 = arith.constant 0 : index
      %199 = vector.load %arg10[%c3_123, %c0_124, %c0_125] : memref<4x256x1xf32, #tpu.memory_space<vmem>>, vector<1x256x1xf32>
      %200 = vector.shape_cast %199 : vector<1x256x1xf32> to vector<256x1xf32>
      %cst_126 = arith.constant 0.000000e+00 : f32
      %201 = vector.broadcast %cst_126 : f32 to vector<256x1xf32>
      %202 = arith.cmpf oeq, %200, %201 : vector<256x1xf32>
      %cst_127 = arith.constant 1.000000e+00 : f32
      %203 = vector.broadcast %cst_127 : f32 to vector<256x1xf32>
      %204 = arith.select %202, %203, %200 : vector<256x1xi1>, vector<256x1xf32>
      %205 = tpu.reciprocal %204 {approx = true} : vector<256x1xf32> -> vector<256x1xf32>
      %206 = vector.shape_cast %205 : vector<256x1xf32> to vector<256x1xf32>
      %207 = vector.broadcast %206 : vector<256x1xf32> to vector<256x32xf32>
      %208 = tpu.concatenate %180, %189, %198, %207 in 1 : vector<256x32xf32>, vector<256x32xf32>, vector<256x32xf32>, vector<256x32xf32> -> vector<256x128xf32>
      %c0_128 = arith.constant 0 : index
      %c0_129 = arith.constant 0 : index
      %209 = vector.load %arg11[%c0_128, %c0_129] : memref<256x128xf32, #tpu.memory_space<vmem>>, vector<256x128xf32>
      %210 = arith.mulf %209, %208 : vector<256x128xf32>
      %211 = arith.truncf %210 : vector<256x128xf32> to vector<256x128xbf16>
      %c0_130 = arith.constant 0 : index
      %c0_131 = arith.constant 0 : index
      %c0_132 = arith.constant 0 : index
      %212 = vector.load %arg7[%c0_130, %c0_131, %c0_132] : memref<1x256x128xbf16, #tpu.memory_space<vmem>>, vector<1x256x128xbf16>
      %213 = vector.shape_cast %212 : vector<1x256x128xbf16> to vector<256x128xbf16>
      %214 = vector.shape_cast %211 : vector<256x128xbf16> to vector<1x256x128xbf16>
      tpu.vector_store %arg7[%c0_130, %c0_131, %c0_132], %214 {strides = array<i32>} : memref<1x256x128xbf16, #tpu.memory_space<vmem>>, vector<1x256x128xbf16>,
    } else {
    }
    return
  }
  func.func @transform_0(%arg0: i32, %arg1: i32, %arg2: i32) -> (i32, i32, i32) {
    %c0_i32 = arith.constant 0 : i32
    %c0_i32_0 = arith.constant 0 : i32
    return %arg0, %arg1, %c0_i32 : i32, i32, i32
  }
  func.func @transform_1(%arg0: i32, %arg1: i32, %arg2: i32) -> (i32, i32, i32) {
    %c0_i32 = arith.constant 0 : i32
    %c0_i32_0 = arith.constant 0 : i32
    return %arg0, %arg2, %c0_i32 : i32, i32, i32
  }
  func.func @transform_2(%arg0: i32, %arg1: i32, %arg2: i32) -> (i32, i32, i32) {
    %c0_i32 = arith.constant 0 : i32
    %c0_i32_0 = arith.constant 0 : i32
    return %arg0, %arg2, %c0_i32 : i32, i32, i32
  }
  func.func @transform_3(%arg0: i32, %arg1: i32, %arg2: i32) -> (i32, i32, i32, i32) {
    %c0_i32 = arith.constant 0 : i32
    %c0_i32_0 = arith.constant 0 : i32
    return %arg0, %c0_i32, %arg1, %arg2 : i32, i32, i32, i32
  }
  func.func @transform_4(%arg0: i32, %arg1: i32, %arg2: i32) -> (i32, i32, i32) {
    %c0_i32 = arith.constant 0 : i32
    %c0_i32_0 = arith.constant 0 : i32
    return %arg0, %arg1, %c0_i32 : i32, i32, i32
  }
}

</mosaic_0001>

<llo_original>
// kernel: distributed_attention_global0_forward.1
$region0: #{distributed_attention_global0_forward.1}
  #allocation0 [shape = 'u32[]', space=smem, size = 0x4, offset = 0x4, fixed_abs, tag = 'smem constant byte address 0x4 - core index']
  #allocation1 [shape = 'u32[72,128]{1,0:T(1,128)}', space=vmem, size = 0x9000, scoped, tag = 'internal scratch']
  #allocation2 [shape = 'bf16[4,256,32]{2,1,0:T(8,128)(2,1)}', space=vmem, size = 0x40000, scoped, tag = 'scratch operand']
  #allocation3 [shape = 'f32[4,256,1]{2,1,0:T(8,128)}', space=vmem, size = 0x80000, scoped, tag = 'scratch operand']
  #allocation4 [shape = 'f32[4,256,1]{2,1,0:T(8,128)}', space=vmem, size = 0x80000, scoped, tag = 'scratch operand']
  #allocation5 [shape = 'f32[256,128]{1,0:T(8,128)}', space=vmem, size = 0x20000, scoped, tag = 'scratch operand']
  %s0 = inlined_call_operand.vmem [shape: bf16[2,256,128], index: 0, kind: input, shape index: {}]
  %s1 = inlined_call_operand.vmem [shape: bf16[2,256,128], index: 1, kind: input, shape index: {}]
  %s2 = inlined_call_operand.vmem [shape: bf16[2,256,128], index: 2, kind: input, shape index: {}]
  %s3 = inlined_call_operand.hbm [shape: bf16[2,4,256,256], index: 3, kind: input, shape index: {}]
  %s4 = inlined_call_operand.vmem [shape: bf16[2,256,128], index: 4, kind: output, shape index: {}]
  %s5 = sld [smem:[#allocation0]]
  $region61: #{distributed_attention_global0_forward.1} parent=0
    _
  %s7 = ssub.s32 1, %s5
  %s8 = scalar_select 0, %s7, %s5
  $region1: #{distributed_attention_global0_forward.1} parent=0
    #allocation6 [shape = 'u8[1048576]{0}', space=vmem, size = 0x100000, scoped, tag = 'input window, operand 3']
    #allocation7 [shape = 's32[2]{0}', space=sflag, size = 0x8, scoped, tag = 'scoped memory for distributed_attention_global0_forward.1']
    %9 = vsyncpa [#allocation7], 0
    %s10 = scalar_lea.sflag [#allocation7], 1
    %11 = vsyncpa %s10, 0
    loop: start=0, step=1, limit=4
    $region2: #{distributed_attention_global0_forward.1} parent=1 // loop_pre_header
      _
    $region3: #{distributed_attention_global0_forward.1} parent=1 // loop_header
      %s13 = sphi 0, %s17
      %p14 = scmp.ge.s32.totalorder %s13, 4
      %s20 = sphi 0, %s39
      %s21 = sphi 0, %s35
      %s22 = sphi 0, %s31
      %s23 = sphi 0, %s20
      %s24 = sphi 0, %s21
      %s25 = sphi 0, %s22
      %s26 = sphi 0, %s23
      %s27 = sphi 0, %s24
      %s28 = sphi 0, %s25
      %s44 = sphi 0, %s46
      %s47 = sphi 0, %s44
      %s48 = sphi 0, %s47
      %s64 = sphi 0, %s48
      %s72 = sphi 0, %s74
      %s75 = sphi 0, %s72
      %s76 = sphi 0, %s75
      %s92 = sphi 0, %s76
      %s100 = sphi 0, %s102
      %s103 = sphi 0, %s100
      %s104 = sphi 0, %s103
      %s120 = sphi 0, %s104
      %s130 = sphi 0, %s132
      %s133 = sphi 0, %s130
      %s134 = sphi 0, %s133
      %s150 = sphi 0, %s134
      %s158 = sphi 0, %s160
      %s161 = sphi 0, %s158
      %s162 = sphi 0, %s161
      %s178 = sphi 0, %s162
    $region4: #{distributed_attention_global0_forward.1} parent=1 // loop_header_branch
      %16 = sbr.rel (%p14) target = $region8
    $region5: #{distributed_attention_global0_forward.1} parent=1 // loop_body
      %s18 = ssub.s32 %s13, 1
      %s19 = ssub.s32 %s13, 2
      %s29 = sadd.s32 1, %s22
      %p30 = scmp.ge.s32.totalorder %s29, 1
      %s31 = scalar_select %p30, 0, %s29
      %s32 = sadd.s32 1, %s21
      %s33 = scalar_select %p30, %s32, %s21
      %p34 = scmp.ge.s32.totalorder %s33, 1
      %s35 = scalar_select %p34, 0, %s33
      %s36 = sadd.s32 1, %s20
      %s37 = scalar_select %p34, %s36, %s20
      %p38 = scmp.ge.s32.totalorder %s37, 2
      %s39 = scalar_select %p38, 0, %s37
      %s40 = ssub.s32 %s20, %s39
      %s41 = ssub.s32 %s21, %s35
      %s42 = sor.u32 %s40, %s41
      %p43 = scmp.eq.s32.totalorder %s42, 0
      %s45 = sadd.s32 %s44, 1
      %s46 = scalar_select %p43, %s44, %s45
      %p49 = pneg %p43
      %p50 = scmp.eq.s32.totalorder %s13, 1
      %p51 = por %p49, %p50
      %p52 = scmp.ne.s32.totalorder %s44, %s47
      %p53 = scmp.eq.s32.totalorder %s13, 0
      %p54 = por %p52, %p53
      %p55 = scmp.ne.s32.totalorder %s44, %s47
      %p56 = scmp.eq.s32.totalorder %s18, 1
      %p57 = por %p55, %p56
      %p58 = scmp.ne.s32.totalorder %s47, %s48
      %p59 = scmp.eq.s32.totalorder %s18, 0
      %p60 = por %p58, %p59
      %p61 = scmp.ne.s32.totalorder %s47, %s48
      %p62 = scmp.eq.s32.totalorder %s19, 1
      %p63 = por %p61, %p62
      %p65 = scmp.ne.s32.totalorder %s48, %s64
      %p66 = scmp.eq.s32.totalorder %s19, 0
      %p67 = por %p65, %p66
      %s68 = ssub.s32 %s20, %s39
      %s69 = ssub.s32 %s22, %s31
      %s70 = sor.u32 %s68, %s69
      %p71 = scmp.eq.s32.totalorder %s70, 0
      %s73 = sadd.s32 %s72, 1
      %s74 = scalar_select %p71, %s72, %s73
      %p77 = pneg %p71
      %p78 = scmp.eq.s32.totalorder %s13, 1
      %p79 = por %p77, %p78
      %p80 = scmp.ne.s32.totalorder %s72, %s75
      %p81 = scmp.eq.s32.totalorder %s13, 0
      %p82 = por %p80, %p81
      %p83 = scmp.ne.s32.totalorder %s72, %s75
      %p84 = scmp.eq.s32.totalorder %s18, 1
      %p85 = por %p83, %p84
      %p86 = scmp.ne.s32.totalorder %s75, %s76
      %p87 = scmp.eq.s32.totalorder %s18, 0
      %p88 = por %p86, %p87
      %p89 = scmp.ne.s32.totalorder %s75, %s76
      %p90 = scmp.eq.s32.totalorder %s19, 1
      %p91 = por %p89, %p90
      %p93 = scmp.ne.s32.totalorder %s76, %s92
      %p94 = scmp.eq.s32.totalorder %s19, 0
      %p95 = por %p93, %p94
      %s96 = ssub.s32 %s20, %s39
      %s97 = ssub.s32 %s22, %s31
      %s98 = sor.u32 %s96, %s97
      %p99 = scmp.eq.s32.totalorder %s98, 0
      %s101 = sadd.s32 %s100, 1
      %s102 = scalar_select %p99, %s100, %s101
      %p105 = pneg %p99
      %p106 = scmp.eq.s32.totalorder %s13, 1
      %p107 = por %p105, %p106
      %p108 = scmp.ne.s32.totalorder %s100, %s103
      %p109 = scmp.eq.s32.totalorder %s13, 0
      %p110 = por %p108, %p109
      %p111 = scmp.ne.s32.totalorder %s100, %s103
      %p112 = scmp.eq.s32.totalorder %s18, 1
      %p113 = por %p111, %p112
      %p114 = scmp.ne.s32.totalorder %s103, %s104
      %p115 = scmp.eq.s32.totalorder %s18, 0
      %p116 = por %p114, %p115
      %p117 = scmp.ne.s32.totalorder %s103, %s104
      %p118 = scmp.eq.s32.totalorder %s19, 1
      %p119 = por %p117, %p118
      %p121 = scmp.ne.s32.totalorder %s104, %s120
      %p122 = scmp.eq.s32.totalorder %s19, 0
      %p123 = por %p121, %p122
      %s124 = ssub.s32 %s20, %s39
      %s125 = ssub.s32 %s21, %s35
      %s126 = sor.u32 %s124, %s125
      %s127 = ssub.s32 %s22, %s31
      %s128 = sor.u32 %s126, %s127
      %p129 = scmp.eq.s32.totalorder %s128, 0
      %s131 = sadd.s32 %s130, 1
      %s132 = scalar_select %p129, %s130, %s131
      %p135 = pneg %p129
      %p136 = scmp.eq.s32.totalorder %s13, 1
      %p137 = por %p135, %p136
      %p138 = scmp.ne.s32.totalorder %s130, %s133
      %p139 = scmp.eq.s32.totalorder %s13, 0
      %p140 = por %p138, %p139
      %p141 = scmp.ne.s32.totalorder %s130, %s133
      %p142 = scmp.eq.s32.totalorder %s18, 1
      %p143 = por %p141, %p142
      %p144 = scmp.ne.s32.totalorder %s133, %s134
      %p145 = scmp.eq.s32.totalorder %s18, 0
      %p146 = por %p144, %p145
      %p147 = scmp.ne.s32.totalorder %s133, %s134
      %p148 = scmp.eq.s32.totalorder %s19, 1
      %p149 = por %p147, %p148
      %p151 = scmp.ne.s32.totalorder %s134, %s150
      %p152 = scmp.eq.s32.totalorder %s19, 0
      %p153 = por %p151, %p152
      %s154 = ssub.s32 %s20, %s39
      %s155 = ssub.s32 %s21, %s35
      %s156 = sor.u32 %s154, %s155
      %p157 = scmp.eq.s32.totalorder %s156, 0
      %s159 = sadd.s32 %s158, 1
      %s160 = scalar_select %p157, %s158, %s159
      %p163 = pneg %p157
      %p164 = scmp.eq.s32.totalorder %s13, 1
      %p165 = por %p163, %p164
      %p166 = scmp.ne.s32.totalorder %s158, %s161
      %p167 = scmp.eq.s32.totalorder %s13, 0
      %p168 = por %p166, %p167
      %p169 = scmp.ne.s32.totalorder %s158, %s161
      %p170 = scmp.eq.s32.totalorder %s18, 1
      %p171 = por %p169, %p170
      %p172 = scmp.ne.s32.totalorder %s161, %s162
      %p173 = scmp.eq.s32.totalorder %s18, 0
      %p174 = por %p172, %p173
      %p175 = scmp.ne.s32.totalorder %s161, %s162
      %p176 = scmp.eq.s32.totalorder %s19, 1
      %p177 = por %p175, %p176
      %p179 = scmp.ne.s32.totalorder %s162, %s178
      %p180 = scmp.eq.s32.totalorder %s19, 0
      %p181 = por %p179, %p180
      %p182 = scmp.le.s32.totalorder 1, %s13
      %p183 = scmp.lt.s32.totalorder %s13, 3
      %p184 = pnand %p182, %p183
      %p185 = pneg %p184
      // Predicated region
      $region9: #{distributed_attention_global0_forward.1} parent=5 // pred_check
        _
      $region10: #{distributed_attention_global0_forward.1} parent=5 // pred_check_branch
        %187 = sbr.rel (%p184) target = $region12
      $region11: #{distributed_attention_global0_forward.1} parent=5 // pred_region
        %s188 = ssub.s32 %s13, 1
      $region12: #{distributed_attention_global0_forward.1} parent=5 // pred_fallthru
        _
      %p189 = scmp.lt.s32.totalorder %s13, 2
      // Predicated region
      $region13: #{distributed_attention_global0_forward.1} parent=5 // pred_check
        %p190 = pneg %p189
      $region14: #{distributed_attention_global0_forward.1} parent=5 // pred_check_branch
        %192 = sbr.rel (%p190) target = $region16
      $region15: #{distributed_attention_global0_forward.1} parent=5 // pred_region
        // Predicated region
        $region17: #{distributed_attention_global0_forward.1} parent=15 // pred_check
          %p193 = pneg %p54
        $region18: #{distributed_attention_global0_forward.1} parent=15 // pred_check_branch
          %195 = sbr.rel (%p193) target = $region20
        $region19: #{distributed_attention_global0_forward.1} parent=15 // pred_region
          %s196 = smul.u32 32, %s21
          %p197 = scmp.lt.s32.totalorder %s20, 1
          %s198 = scalar_select %p197, %s20, 1
          %p199 = scmp.lt.s32.totalorder %s196, 31
          %s200 = scalar_select %p199, %s196, 31
          %s201 = smul.addr %s198, 32
          %s202 = sadd.s32 %s200, %s201
          %s203 = smul.addr %s202, 4
          %s204 = scalar_lea.vmem %s0, %s203
          %s205 = smul.u32 32, %s21
        $region20: #{distributed_attention_global0_forward.1} parent=15 // pred_fallthru
          _
        // Predicated region
        $region21: #{distributed_attention_global0_forward.1} parent=15 // pred_check
          %p206 = pneg %p82
        $region22: #{distributed_attention_global0_forward.1} parent=15 // pred_check_branch
          %208 = sbr.rel (%p206) target = $region24
        $region23: #{distributed_attention_global0_forward.1} parent=15 // pred_region
          %s209 = smul.u32 32, %s22
          %p210 = scmp.lt.s32.totalorder %s20, 1
          %s211 = scalar_select %p210, %s20, 1
          %p212 = scmp.lt.s32.totalorder %s209, 31
          %s213 = scalar_select %p212, %s209, 31
          %s214 = smul.addr %s211, 32
          %s215 = sadd.s32 %s213, %s214
          %s216 = smul.addr %s215, 4
          %s217 = scalar_lea.vmem %s1, %s216
          %s218 = smul.u32 32, %s22
        $region24: #{distributed_attention_global0_forward.1} parent=15 // pred_fallthru
          _
        // Predicated region
        $region25: #{distributed_attention_global0_forward.1} parent=15 // pred_check
          %p219 = pneg %p110
        $region26: #{distributed_attention_global0_forward.1} parent=15 // pred_check_branch
          %221 = sbr.rel (%p219) target = $region28
        $region27: #{distributed_attention_global0_forward.1} parent=15 // pred_region
          %s222 = smul.u32 32, %s22
          %p223 = scmp.lt.s32.totalorder %s20, 1
          %s224 = scalar_select %p223, %s20, 1
          %p225 = scmp.lt.s32.totalorder %s222, 31
          %s226 = scalar_select %p225, %s222, 31
          %s227 = smul.addr %s224, 32
          %s228 = sadd.s32 %s226, %s227
          %s229 = smul.addr %s228, 4
          %s230 = scalar_lea.vmem %s2, %s229
          %s231 = smul.u32 32, %s22
        $region28: #{distributed_attention_global0_forward.1} parent=15 // pred_fallthru
          _
        // Predicated region
        $region29: #{distributed_attention_global0_forward.1} parent=15 // pred_check
          %p232 = pneg %p140
        $region30: #{distributed_attention_global0_forward.1} parent=15 // pred_check_branch
          %234 = sbr.rel (%p232) target = $region32
        $region31: #{distributed_attention_global0_forward.1} parent=15 // pred_region
          %s235 = sand.u32 %s130, 1
          %s236 = scalar_lea.sflag [#allocation7], %s235
          %s237 = sand.u32 %s130, 1
          %s238 = smul.addr %s237, 1024
          %s239 = scalar_lea.vmem [#allocation6], %s238
          %s240 = smul.u32 32, %s21
          %s241 = smul.u32 2, %s22
          %243 = vsyncadd %s236, 0
          %s244 = smul.addr %s240, 2
          %s245 = sadd.s32 %s241, %s244
          %s246 = smul.addr %s20, 256
          %s247 = sadd.s32 %s245, %s246
          %s248 = smul.addr %s247, 4
          %s249 = scalar_lea.hbm %s3, %s248
          %s250 = sshll.u32 %s249, 4
          %s251 = int_to_ptr.hbm [resolvable:$true] %s250
          %s252 = sshll.u32 %s239, 4
          %s253 = int_to_ptr.vmem [resolvable:$true] %s252
          %258 = dma.hbm_to_vmem [thread:$0]  %s251, 16384, %s253, %s236, 128, 128, 8
        $region32: #{distributed_attention_global0_forward.1} parent=15 // pred_fallthru
          _
      $region16: #{distributed_attention_global0_forward.1} parent=5 // pred_fallthru
        _
      %p259 = scmp.le.s32.totalorder 1, %s13
      %p260 = scmp.lt.s32.totalorder %s13, 3
      %p261 = pnand %p259, %p260
      %p262 = pneg %p261
      // Predicated region
      $region33: #{distributed_attention_global0_forward.1} parent=5 // pred_check
        _
      $region34: #{distributed_attention_global0_forward.1} parent=5 // pred_check_branch
        %264 = sbr.rel (%p261) target = $region36
      $region35: #{distributed_attention_global0_forward.1} parent=5 // pred_region
        %s265 = ssub.s32 %s13, 1
        %s266 = sand.u32 %s133, 1
        %s267 = scalar_lea.sflag [#allocation7], %s266
        %s268 = sand.u32 %s133, 1
        %s269 = smul.addr %s268, 1024
        %s270 = scalar_lea.vmem [#allocation6], %s269
        // Predicated region
        $region37: #{distributed_attention_global0_forward.1} parent=35 // pred_check
          %p271 = pneg %p146
        $region38: #{distributed_attention_global0_forward.1} parent=35 // pred_check_branch
          %273 = sbr.rel (%p271) target = $region40
        $region39: #{distributed_attention_global0_forward.1} parent=35 // pred_region
          %275 = dma.done %s267, 16384
        $region40: #{distributed_attention_global0_forward.1} parent=35 // pred_fallthru
          _
        %s276 = smul.u32 32, %s24
        %p277 = scmp.lt.s32.totalorder %s23, 1
        %s278 = scalar_select %p277, %s23, 1
        %p279 = scmp.lt.s32.totalorder %s276, 31
        %s280 = scalar_select %p279, %s276, 31
        %s281 = smul.addr %s278, 32
        %s282 = sadd.s32 %s280, %s281
        %s283 = smul.addr %s282, 4
        %s284 = scalar_lea.vmem %s0, %s283
        %p285 = pneg %p60
        %p286 = pneg %p57
        %s287 = smul.u32 32, %s25
        %p288 = scmp.lt.s32.totalorder %s23, 1
        %s289 = scalar_select %p288, %s23, 1
        %p290 = scmp.lt.s32.totalorder %s287, 31
        %s291 = scalar_select %p290, %s287, 31
        %s292 = smul.addr %s289, 32
        %s293 = sadd.s32 %s291, %s292
        %s294 = smul.addr %s293, 4
        %s295 = scalar_lea.vmem %s1, %s294
        %p296 = pneg %p88
        %p297 = pneg %p85
        %s298 = smul.u32 32, %s25
        %p299 = scmp.lt.s32.totalorder %s23, 1
        %s300 = scalar_select %p299, %s23, 1
        %p301 = scmp.lt.s32.totalorder %s298, 31
        %s302 = scalar_select %p301, %s298, 31
        %s303 = smul.addr %s300, 32
        %s304 = sadd.s32 %s302, %s303
        %s305 = smul.addr %s304, 4
        %s306 = scalar_lea.vmem %s2, %s305
        %p307 = pneg %p116
        %p308 = pneg %p113
        %s309 = sand.u32 %s133, 1
        %s310 = scalar_lea.sflag [#allocation7], %s309
        %s311 = sand.u32 %s133, 1
        %s312 = smul.addr %s311, 1024
        %s313 = scalar_lea.vmem [#allocation6], %s312
        %p314 = pneg %p146
        %p315 = pneg %p143
        %p316 = pneg %p174
        %p317 = pneg %p171
        %s318 = smul.u32 32, %s24
        %p319 = scmp.lt.s32.totalorder %s23, 1
        %s320 = scalar_select %p319, %s23, 1
        %p321 = scmp.lt.s32.totalorder %s318, 31
        %s322 = scalar_select %p321, %s318, 31
        %s323 = smul.addr %s320, 32
        %s324 = sadd.s32 %s322, %s323
        %s325 = smul.addr %s324, 4
        %s326 = scalar_lea.vmem %s4, %s325
        %s327 = smul.u32 32, %s24
        %p328 = scmp.lt.s32.totalorder %s23, 1
        %s329 = scalar_select %p328, %s23, 1
        %p330 = scmp.lt.s32.totalorder %s327, 31
        %s331 = scalar_select %p330, %s327, 31
        %s332 = smul.addr %s329, 32
        %s333 = sadd.s32 %s331, %s332
        %s334 = smul.addr %s333, 4
        %s335 = scalar_lea.vmem %s0, %s334
        %s336 = smul.u32 32, %s24
        %s337 = smul.u32 32, %s25
        %p338 = scmp.lt.s32.totalorder %s23, 1
        %s339 = scalar_select %p338, %s23, 1
        %p340 = scmp.lt.s32.totalorder %s337, 31
        %s341 = scalar_select %p340, %s337, 31
        %s342 = smul.addr %s339, 32
        %s343 = sadd.s32 %s341, %s342
        %s344 = smul.addr %s343, 4
        %s345 = scalar_lea.vmem %s1, %s344
        %s346 = smul.u32 32, %s25
        %s347 = smul.u32 32, %s25
        %p348 = scmp.lt.s32.totalorder %s23, 1
        %s349 = scalar_select %p348, %s23, 1
        %p350 = scmp.lt.s32.totalorder %s347, 31
        %s351 = scalar_select %p350, %s347, 31
        %s352 = smul.addr %s349, 32
        %s353 = sadd.s32 %s351, %s352
        %s354 = smul.addr %s353, 4
        %s355 = scalar_lea.vmem %s2, %s354
        %s356 = smul.u32 32, %s25
        %s357 = smul.u32 32, %s24
        %s358 = smul.u32 2, %s25
        %s359 = smul.u32 32, %s24
        %p360 = scmp.lt.s32.totalorder %s23, 1
        %s361 = scalar_select %p360, %s23, 1
        %p362 = scmp.lt.s32.totalorder %s359, 31
        %s363 = scalar_select %p362, %s359, 31
        %s364 = smul.addr %s361, 32
        %s365 = sadd.s32 %s363, %s364
        %s366 = smul.addr %s365, 4
        %s367 = scalar_lea.vmem %s4, %s366
        %s368 = smul.u32 32, %s24
        %p369 = scmp.eq.s32.totalorder %s25, 0
        // Predicated region
        $region41: #{distributed_attention_global0_forward.1} parent=35 // pred_check
          %p370 = pneg %p369
        $region42: #{distributed_attention_global0_forward.1} parent=35 // pred_check_branch
          %372 = sbr.rel (%p370) target = $region44
        $region43: #{distributed_attention_global0_forward.1} parent=35 // pred_region
          %vm373 = vcmask 7168
          %374 = vst.msk [vmem:[#allocation3] sm:$0xff] %vm373, -inf
          %375 = vst.msk [vmem:[#allocation3 + $0x8] sm:$0xff] %vm373, -inf
          %376 = vst.msk [vmem:[#allocation3 + $0x10] sm:$0xff] %vm373, -inf
          %377 = vst.msk [vmem:[#allocation3 + $0x18] sm:$0xff] %vm373, -inf
          %378 = vst.msk [vmem:[#allocation3 + $0x20] sm:$0xff] %vm373, -inf
          %379 = vst.msk [vmem:[#allocation3 + $0x28] sm:$0xff] %vm373, -inf
          %380 = vst.msk [vmem:[#allocation3 + $0x30] sm:$0xff] %vm373, -inf
          %381 = vst.msk [vmem:[#allocation3 + $0x38] sm:$0xff] %vm373, -inf
          %382 = vst.msk [vmem:[#allocation3 + $0x40] sm:$0xff] %vm373, -inf
          %383 = vst.msk [vmem:[#allocation3 + $0x48] sm:$0xff] %vm373, -inf
          %384 = vst.msk [vmem:[#allocation3 + $0x50] sm:$0xff] %vm373, -inf
          %385 = vst.msk [vmem:[#allocation3 + $0x58] sm:$0xff] %vm373, -inf
          %386 = vst.msk [vmem:[#allocation3 + $0x60] sm:$0xff] %vm373, -inf
          %387 = vst.msk [vmem:[#allocation3 + $0x68] sm:$0xff] %vm373, -inf
          %388 = vst.msk [vmem:[#allocation3 + $0x70] sm:$0xff] %vm373, -inf
          %389 = vst.msk [vmem:[#allocation3 + $0x78] sm:$0xff] %vm373, -inf
          %390 = vst.msk [vmem:[#allocation3 + $0x80] sm:$0xff] %vm373, -inf
          %391 = vst.msk [vmem:[#allocation3 + $0x88] sm:$0xff] %vm373, -inf
          %392 = vst.msk [vmem:[#allocation3 + $0x90] sm:$0xff] %vm373, -inf
          %393 = vst.msk [vmem:[#allocation3 + $0x98] sm:$0xff] %vm373, -inf
          %394 = vst.msk [vmem:[#allocation3 + $0xa0] sm:$0xff] %vm373, -inf
          %395 = vst.msk [vmem:[#allocation3 + $0xa8] sm:$0xff] %vm373, -inf
          %396 = vst.msk [vmem:[#allocation3 + $0xb0] sm:$0xff] %vm373, -inf
          %397 = vst.msk [vmem:[#allocation3 + $0xb8] sm:$0xff] %vm373, -inf
          %398 = vst.msk [vmem:[#allocation3 + $0xc0] sm:$0xff] %vm373, -inf
          %399 = vst.msk [vmem:[#allocation3 + $0xc8] sm:$0xff] %vm373, -inf
          %400 = vst.msk [vmem:[#allocation3 + $0xd0] sm:$0xff] %vm373, -inf
          %401 = vst.msk [vmem:[#allocation3 + $0xd8] sm:$0xff] %vm373, -inf
          %402 = vst.msk [vmem:[#allocation3 + $0xe0] sm:$0xff] %vm373, -inf
          %403 = vst.msk [vmem:[#allocation3 + $0xe8] sm:$0xff] %vm373, -inf
          %404 = vst.msk [vmem:[#allocation3 + $0xf0] sm:$0xff] %vm373, -inf
          %405 = vst.msk [vmem:[#allocation3 + $0xf8] sm:$0xff] %vm373, -inf
          %406 = vst.msk [vmem:[#allocation3 + $0x100] sm:$0xff] %vm373, -inf
          %407 = vst.msk [vmem:[#allocation3 + $0x108] sm:$0xff] %vm373, -inf
          %408 = vst.msk [vmem:[#allocation3 + $0x110] sm:$0xff] %vm373, -inf
          %409 = vst.msk [vmem:[#allocation3 + $0x118] sm:$0xff] %vm373, -inf
          %410 = vst.msk [vmem:[#allocation3 + $0x120] sm:$0xff] %vm373, -inf
          %411 = vst.msk [vmem:[#allocation3 + $0x128] sm:$0xff] %vm373, -inf
          %412 = vst.msk [vmem:[#allocation3 + $0x130] sm:$0xff] %vm373, -inf
          %413 = vst.msk [vmem:[#allocation3 + $0x138] sm:$0xff] %vm373, -inf
          %414 = vst.msk [vmem:[#allocation3 + $0x140] sm:$0xff] %vm373, -inf
          %415 = vst.msk [vmem:[#allocation3 + $0x148] sm:$0xff] %vm373, -inf
          %416 = vst.msk [vmem:[#allocation3 + $0x150] sm:$0xff] %vm373, -inf
          %417 = vst.msk [vmem:[#allocation3 + $0x158] sm:$0xff] %vm373, -inf
          %418 = vst.msk [vmem:[#allocation3 + $0x160] sm:$0xff] %vm373, -inf
          %419 = vst.msk [vmem:[#allocation3 + $0x168] sm:$0xff] %vm373, -inf
          %420 = vst.msk [vmem:[#allocation3 + $0x170] sm:$0xff] %vm373, -inf
          %421 = vst.msk [vmem:[#allocation3 + $0x178] sm:$0xff] %vm373, -inf
          %422 = vst.msk [vmem:[#allocation3 + $0x180] sm:$0xff] %vm373, -inf
          %423 = vst.msk [vmem:[#allocation3 + $0x188] sm:$0xff] %vm373, -inf
          %424 = vst.msk [vmem:[#allocation3 + $0x190] sm:$0xff] %vm373, -inf
          %425 = vst.msk [vmem:[#allocation3 + $0x198] sm:$0xff] %vm373, -inf
          %426 = vst.msk [vmem:[#allocation3 + $0x1a0] sm:$0xff] %vm373, -inf
          %427 = vst.msk [vmem:[#allocation3 + $0x1a8] sm:$0xff] %vm373, -inf
          %428 = vst.msk [vmem:[#allocation3 + $0x1b0] sm:$0xff] %vm373, -inf
          %429 = vst.msk [vmem:[#allocation3 + $0x1b8] sm:$0xff] %vm373, -inf
          %430 = vst.msk [vmem:[#allocation3 + $0x1c0] sm:$0xff] %vm373, -inf
          %431 = vst.msk [vmem:[#allocation3 + $0x1c8] sm:$0xff] %vm373, -inf
          %432 = vst.msk [vmem:[#allocation3 + $0x1d0] sm:$0xff] %vm373, -inf
          %433 = vst.msk [vmem:[#allocation3 + $0x1d8] sm:$0xff] %vm373, -inf
          %434 = vst.msk [vmem:[#allocation3 + $0x1e0] sm:$0xff] %vm373, -inf
          %435 = vst.msk [vmem:[#allocation3 + $0x1e8] sm:$0xff] %vm373, -inf
          %436 = vst.msk [vmem:[#allocation3 + $0x1f0] sm:$0xff] %vm373, -inf
          %437 = vst.msk [vmem:[#allocation3 + $0x1f8] sm:$0xff] %vm373, -inf
          %438 = vst.msk [vmem:[#allocation3 + $0x200] sm:$0xff] %vm373, -inf
          %439 = vst.msk [vmem:[#allocation3 + $0x208] sm:$0xff] %vm373, -inf
          %440 = vst.msk [vmem:[#allocation3 + $0x210] sm:$0xff] %vm373, -inf
          %441 = vst.msk [vmem:[#allocation3 + $0x218] sm:$0xff] %vm373, -inf
          %442 = vst.msk [vmem:[#allocation3 + $0x220] sm:$0xff] %vm373, -inf
          %443 = vst.msk [vmem:[#allocation3 + $0x228] sm:$0xff] %vm373, -inf
          %444 = vst.msk [vmem:[#allocation3 + $0x230] sm:$0xff] %vm373, -inf
          %445 = vst.msk [vmem:[#allocation3 + $0x238] sm:$0xff] %vm373, -inf
          %446 = vst.msk [vmem:[#allocation3 + $0x240] sm:$0xff] %vm373, -inf
          %447 = vst.msk [vmem:[#allocation3 + $0x248] sm:$0xff] %vm373, -inf
          %448 = vst.msk [vmem:[#allocation3 + $0x250] sm:$0xff] %vm373, -inf
          %449 = vst.msk [vmem:[#allocation3 + $0x258] sm:$0xff] %vm373, -inf
          %450 = vst.msk [vmem:[#allocation3 + $0x260] sm:$0xff] %vm373, -inf
          %451 = vst.msk [vmem:[#allocation3 + $0x268] sm:$0xff] %vm373, -inf
          %452 = vst.msk [vmem:[#allocation3 + $0x270] sm:$0xff] %vm373, -inf
          %453 = vst.msk [vmem:[#allocation3 + $0x278] sm:$0xff] %vm373, -inf
          %454 = vst.msk [vmem:[#allocation3 + $0x280] sm:$0xff] %vm373, -inf
          %455 = vst.msk [vmem:[#allocation3 + $0x288] sm:$0xff] %vm373, -inf
          %456 = vst.msk [vmem:[#allocation3 + $0x290] sm:$0xff] %vm373, -inf
          %457 = vst.msk [vmem:[#allocation3 + $0x298] sm:$0xff] %vm373, -inf
          %458 = vst.msk [vmem:[#allocation3 + $0x2a0] sm:$0xff] %vm373, -inf
          %459 = vst.msk [vmem:[#allocation3 + $0x2a8] sm:$0xff] %vm373, -inf
          %460 = vst.msk [vmem:[#allocation3 + $0x2b0] sm:$0xff] %vm373, -inf
          %461 = vst.msk [vmem:[#allocation3 + $0x2b8] sm:$0xff] %vm373, -inf
          %462 = vst.msk [vmem:[#allocation3 + $0x2c0] sm:$0xff] %vm373, -inf
          %463 = vst.msk [vmem:[#allocation3 + $0x2c8] sm:$0xff] %vm373, -inf
          %464 = vst.msk [vmem:[#allocation3 + $0x2d0] sm:$0xff] %vm373, -inf
          %465 = vst.msk [vmem:[#allocation3 + $0x2d8] sm:$0xff] %vm373, -inf
          %466 = vst.msk [vmem:[#allocation3 + $0x2e0] sm:$0xff] %vm373, -inf
          %467 = vst.msk [vmem:[#allocation3 + $0x2e8] sm:$0xff] %vm373, -inf
          %468 = vst.msk [vmem:[#allocation3 + $0x2f0] sm:$0xff] %vm373, -inf
          %469 = vst.msk [vmem:[#allocation3 + $0x2f8] sm:$0xff] %vm373, -inf
          %470 = vst.msk [vmem:[#allocation3 + $0x300] sm:$0xff] %vm373, -inf
          %471 = vst.msk [vmem:[#allocation3 + $0x308] sm:$0xff] %vm373, -inf
          %472 = vst.msk [vmem:[#allocation3 + $0x310] sm:$0xff] %vm373, -inf
          %473 = vst.msk [vmem:[#allocation3 + $0x318] sm:$0xff] %vm373, -inf
          %474 = vst.msk [vmem:[#allocation3 + $0x320] sm:$0xff] %vm373, -inf
          %475 = vst.msk [vmem:[#allocation3 + $0x328] sm:$0xff] %vm373, -inf
          %476 = vst.msk [vmem:[#allocation3 + $0x330] sm:$0xff] %vm373, -inf
          %477 = vst.msk [vmem:[#allocation3 + $0x338] sm:$0xff] %vm373, -inf
          %478 = vst.msk [vmem:[#allocation3 + $0x340] sm:$0xff] %vm373, -inf
          %479 = vst.msk [vmem:[#allocation3 + $0x348] sm:$0xff] %vm373, -inf
          %480 = vst.msk [vmem:[#allocation3 + $0x350] sm:$0xff] %vm373, -inf
          %481 = vst.msk [vmem:[#allocation3 + $0x358] sm:$0xff] %vm373, -inf
          %482 = vst.msk [vmem:[#allocation3 + $0x360] sm:$0xff] %vm373, -inf
          %483 = vst.msk [vmem:[#allocation3 + $0x368] sm:$0xff] %vm373, -inf
          %484 = vst.msk [vmem:[#allocation3 + $0x370] sm:$0xff] %vm373, -inf
          %485 = vst.msk [vmem:[#allocation3 + $0x378] sm:$0xff] %vm373, -inf
          %486 = vst.msk [vmem:[#allocation3 + $0x380] sm:$0xff] %vm373, -inf
          %487 = vst.msk [vmem:[#allocation3 + $0x388] sm:$0xff] %vm373, -inf
          %488 = vst.msk [vmem:[#allocation3 + $0x390] sm:$0xff] %vm373, -inf
          %489 = vst.msk [vmem:[#allocation3 + $0x398] sm:$0xff] %vm373, -inf
          %490 = vst.msk [vmem:[#allocation3 + $0x3a0] sm:$0xff] %vm373, -inf
          %491 = vst.msk [vmem:[#allocation3 + $0x3a8] sm:$0xff] %vm373, -inf
          %492 = vst.msk [vmem:[#allocation3 + $0x3b0] sm:$0xff] %vm373, -inf
          %493 = vst.msk [vmem:[#allocation3 + $0x3b8] sm:$0xff] %vm373, -inf
          %494 = vst.msk [vmem:[#allocation3 + $0x3c0] sm:$0xff] %vm373, -inf
          %495 = vst.msk [vmem:[#allocation3 + $0x3c8] sm:$0xff] %vm373, -inf
          %496 = vst.msk [vmem:[#allocation3 + $0x3d0] sm:$0xff] %vm373, -inf
          %497 = vst.msk [vmem:[#allocation3 + $0x3d8] sm:$0xff] %vm373, -inf
          %498 = vst.msk [vmem:[#allocation3 + $0x3e0] sm:$0xff] %vm373, -inf
          %499 = vst.msk [vmem:[#allocation3 + $0x3e8] sm:$0xff] %vm373, -inf
          %500 = vst.msk [vmem:[#allocation3 + $0x3f0] sm:$0xff] %vm373, -inf
          %501 = vst.msk [vmem:[#allocation3 + $0x3f8] sm:$0xff] %vm373, -inf
          %502 = vst.msk [vmem:[#allocation4] sm:$0xff] %vm373, 0.0
          %503 = vst.msk [vmem:[#allocation4 + $0x8] sm:$0xff] %vm373, 0.0
          %504 = vst.msk [vmem:[#allocation4 + $0x10] sm:$0xff] %vm373, 0.0
          %505 = vst.msk [vmem:[#allocation4 + $0x18] sm:$0xff] %vm373, 0.0
          %506 = vst.msk [vmem:[#allocation4 + $0x20] sm:$0xff] %vm373, 0.0
          %507 = vst.msk [vmem:[#allocation4 + $0x28] sm:$0xff] %vm373, 0.0
          %508 = vst.msk [vmem:[#allocation4 + $0x30] sm:$0xff] %vm373, 0.0
          %509 = vst.msk [vmem:[#allocation4 + $0x38] sm:$0xff] %vm373, 0.0
          %510 = vst.msk [vmem:[#allocation4 + $0x40] sm:$0xff] %vm373, 0.0
          %511 = vst.msk [vmem:[#allocation4 + $0x48] sm:$0xff] %vm373, 0.0
          %512 = vst.msk [vmem:[#allocation4 + $0x50] sm:$0xff] %vm373, 0.0
          %513 = vst.msk [vmem:[#allocation4 + $0x58] sm:$0xff] %vm373, 0.0
          %514 = vst.msk [vmem:[#allocation4 + $0x60] sm:$0xff] %vm373, 0.0
          %515 = vst.msk [vmem:[#allocation4 + $0x68] sm:$0xff] %vm373, 0.0
          %516 = vst.msk [vmem:[#allocation4 + $0x70] sm:$0xff] %vm373, 0.0
          %517 = vst.msk [vmem:[#allocation4 + $0x78] sm:$0xff] %vm373, 0.0
          %518 = vst.msk [vmem:[#allocation4 + $0x80] sm:$0xff] %vm373, 0.0
          %519 = vst.msk [vmem:[#allocation4 + $0x88] sm:$0xff] %vm373, 0.0
          %520 = vst.msk [vmem:[#allocation4 + $0x90] sm:$0xff] %vm373, 0.0
          %521 = vst.msk [vmem:[#allocation4 + $0x98] sm:$0xff] %vm373, 0.0
          %522 = vst.msk [vmem:[#allocation4 + $0xa0] sm:$0xff] %vm373, 0.0
          %523 = vst.msk [vmem:[#allocation4 + $0xa8] sm:$0xff] %vm373, 0.0
          %524 = vst.msk [vmem:[#allocation4 + $0xb0] sm:$0xff] %vm373, 0.0
          %525 = vst.msk [vmem:[#allocation4 + $0xb8] sm:$0xff] %vm373, 0.0
          %526 = vst.msk [vmem:[#allocation4 + $0xc0] sm:$0xff] %vm373, 0.0
          %527 = vst.msk [vmem:[#allocation4 + $0xc8] sm:$0xff] %vm373, 0.0
          %528 = vst.msk [vmem:[#allocation4 + $0xd0] sm:$0xff] %vm373, 0.0
          %529 = vst.msk [vmem:[#allocation4 + $0xd8] sm:$0xff] %vm373, 0.0
          %530 = vst.msk [vmem:[#allocation4 + $0xe0] sm:$0xff] %vm373, 0.0
          %531 = vst.msk [vmem:[#allocation4 + $0xe8] sm:$0xff] %vm373, 0.0
          %532 = vst.msk [vmem:[#allocation4 + $0xf0] sm:$0xff] %vm373, 0.0
          %533 = vst.msk [vmem:[#allocation4 + $0xf8] sm:$0xff] %vm373, 0.0
          %534 = vst.msk [vmem:[#allocation4 + $0x100] sm:$0xff] %vm373, 0.0
          %535 = vst.msk [vmem:[#allocation4 + $0x108] sm:$0xff] %vm373, 0.0
          %536 = vst.msk [vmem:[#allocation4 + $0x110] sm:$0xff] %vm373, 0.0
          %537 = vst.msk [vmem:[#allocation4 + $0x118] sm:$0xff] %vm373, 0.0
          %538 = vst.msk [vmem:[#allocation4 + $0x120] sm:$0xff] %vm373, 0.0
          %539 = vst.msk [vmem:[#allocation4 + $0x128] sm:$0xff] %vm373, 0.0
          %540 = vst.msk [vmem:[#allocation4 + $0x130] sm:$0xff] %vm373, 0.0
          %541 = vst.msk [vmem:[#allocation4 + $0x138] sm:$0xff] %vm373, 0.0
          %542 = vst.msk [vmem:[#allocation4 + $0x140] sm:$0xff] %vm373, 0.0
          %543 = vst.msk [vmem:[#allocation4 + $0x148] sm:$0xff] %vm373, 0.0
          %544 = vst.msk [vmem:[#allocation4 + $0x150] sm:$0xff] %vm373, 0.0
          %545 = vst.msk [vmem:[#allocation4 + $0x158] sm:$0xff] %vm373, 0.0
          %546 = vst.msk [vmem:[#allocation4 + $0x160] sm:$0xff] %vm373, 0.0
          %547 = vst.msk [vmem:[#allocation4 + $0x168] sm:$0xff] %vm373, 0.0
          %548 = vst.msk [vmem:[#allocation4 + $0x170] sm:$0xff] %vm373, 0.0
          %549 = vst.msk [vmem:[#allocation4 + $0x178] sm:$0xff] %vm373, 0.0
          %550 = vst.msk [vmem:[#allocation4 + $0x180] sm:$0xff] %vm373, 0.0
          %551 = vst.msk [vmem:[#allocation4 + $0x188] sm:$0xff] %vm373, 0.0
          %552 = vst.msk [vmem:[#allocation4 + $0x190] sm:$0xff] %vm373, 0.0
          %553 = vst.msk [vmem:[#allocation4 + $0x198] sm:$0xff] %vm373, 0.0
          %554 = vst.msk [vmem:[#allocation4 + $0x1a0] sm:$0xff] %vm373, 0.0
          %555 = vst.msk [vmem:[#allocation4 + $0x1a8] sm:$0xff] %vm373, 0.0
          %556 = vst.msk [vmem:[#allocation4 + $0x1b0] sm:$0xff] %vm373, 0.0
          %557 = vst.msk [vmem:[#allocation4 + $0x1b8] sm:$0xff] %vm373, 0.0
          %558 = vst.msk [vmem:[#allocation4 + $0x1c0] sm:$0xff] %vm373, 0.0
          %559 = vst.msk [vmem:[#allocation4 + $0x1c8] sm:$0xff] %vm373, 0.0
          %560 = vst.msk [vmem:[#allocation4 + $0x1d0] sm:$0xff] %vm373, 0.0
          %561 = vst.msk [vmem:[#allocation4 + $0x1d8] sm:$0xff] %vm373, 0.0
          %562 = vst.msk [vmem:[#allocation4 + $0x1e0] sm:$0xff] %vm373, 0.0
          %563 = vst.msk [vmem:[#allocation4 + $0x1e8] sm:$0xff] %vm373, 0.0
          %564 = vst.msk [vmem:[#allocation4 + $0x1f0] sm:$0xff] %vm373, 0.0
          %565 = vst.msk [vmem:[#allocation4 + $0x1f8] sm:$0xff] %vm373, 0.0
          %566 = vst.msk [vmem:[#allocation4 + $0x200] sm:$0xff] %vm373, 0.0
          %567 = vst.msk [vmem:[#allocation4 + $0x208] sm:$0xff] %vm373, 0.0
          %568 = vst.msk [vmem:[#allocation4 + $0x210] sm:$0xff] %vm373, 0.0
          %569 = vst.msk [vmem:[#allocation4 + $0x218] sm:$0xff] %vm373, 0.0
          %570 = vst.msk [vmem:[#allocation4 + $0x220] sm:$0xff] %vm373, 0.0
          %571 = vst.msk [vmem:[#allocation4 + $0x228] sm:$0xff] %vm373, 0.0
          %572 = vst.msk [vmem:[#allocation4 + $0x230] sm:$0xff] %vm373, 0.0
          %573 = vst.msk [vmem:[#allocation4 + $0x238] sm:$0xff] %vm373, 0.0
          %574 = vst.msk [vmem:[#allocation4 + $0x240] sm:$0xff] %vm373, 0.0
          %575 = vst.msk [vmem:[#allocation4 + $0x248] sm:$0xff] %vm373, 0.0
          %576 = vst.msk [vmem:[#allocation4 + $0x250] sm:$0xff] %vm373, 0.0
          %577 = vst.msk [vmem:[#allocation4 + $0x258] sm:$0xff] %vm373, 0.0
          %578 = vst.msk [vmem:[#allocation4 + $0x260] sm:$0xff] %vm373, 0.0
          %579 = vst.msk [vmem:[#allocation4 + $0x268] sm:$0xff] %vm373, 0.0
          %580 = vst.msk [vmem:[#allocation4 + $0x270] sm:$0xff] %vm373, 0.0
          %581 = vst.msk [vmem:[#allocation4 + $0x278] sm:$0xff] %vm373, 0.0
          %582 = vst.msk [vmem:[#allocation4 + $0x280] sm:$0xff] %vm373, 0.0
          %583 = vst.msk [vmem:[#allocation4 + $0x288] sm:$0xff] %vm373, 0.0
          %584 = vst.msk [vmem:[#allocation4 + $0x290] sm:$0xff] %vm373, 0.0
          %585 = vst.msk [vmem:[#allocation4 + $0x298] sm:$0xff] %vm373, 0.0
          %586 = vst.msk [vmem:[#allocation4 + $0x2a0] sm:$0xff] %vm373, 0.0
          %587 = vst.msk [vmem:[#allocation4 + $0x2a8] sm:$0xff] %vm373, 0.0
          %588 = vst.msk [vmem:[#allocation4 + $0x2b0] sm:$0xff] %vm373, 0.0
          %589 = vst.msk [vmem:[#allocation4 + $0x2b8] sm:$0xff] %vm373, 0.0
          %590 = vst.msk [vmem:[#allocation4 + $0x2c0] sm:$0xff] %vm373, 0.0
          %591 = vst.msk [vmem:[#allocation4 + $0x2c8] sm:$0xff] %vm373, 0.0
          %592 = vst.msk [vmem:[#allocation4 + $0x2d0] sm:$0xff] %vm373, 0.0
          %593 = vst.msk [vmem:[#allocation4 + $0x2d8] sm:$0xff] %vm373, 0.0
          %594 = vst.msk [vmem:[#allocation4 + $0x2e0] sm:$0xff] %vm373, 0.0
          %595 = vst.msk [vmem:[#allocation4 + $0x2e8] sm:$0xff] %vm373, 0.0
          %596 = vst.msk [vmem:[#allocation4 + $0x2f0] sm:$0xff] %vm373, 0.0
          %597 = vst.msk [vmem:[#allocation4 + $0x2f8] sm:$0xff] %vm373, 0.0
          %598 = vst.msk [vmem:[#allocation4 + $0x300] sm:$0xff] %vm373, 0.0
          %599 = vst.msk [vmem:[#allocation4 + $0x308] sm:$0xff] %vm373, 0.0
          %600 = vst.msk [vmem:[#allocation4 + $0x310] sm:$0xff] %vm373, 0.0
          %601 = vst.msk [vmem:[#allocation4 + $0x318] sm:$0xff] %vm373, 0.0
          %602 = vst.msk [vmem:[#allocation4 + $0x320] sm:$0xff] %vm373, 0.0
          %603 = vst.msk [vmem:[#allocation4 + $0x328] sm:$0xff] %vm373, 0.0
          %604 = vst.msk [vmem:[#allocation4 + $0x330] sm:$0xff] %vm373, 0.0
          %605 = vst.msk [vmem:[#allocation4 + $0x338] sm:$0xff] %vm373, 0.0
          %606 = vst.msk [vmem:[#allocation4 + $0x340] sm:$0xff] %vm373, 0.0
          %607 = vst.msk [vmem:[#allocation4 + $0x348] sm:$0xff] %vm373, 0.0
          %608 = vst.msk [vmem:[#allocation4 + $0x350] sm:$0xff] %vm373, 0.0
          %609 = vst.msk [vmem:[#allocation4 + $0x358] sm:$0xff] %vm373, 0.0
          %610 = vst.msk [vmem:[#allocation4 + $0x360] sm:$0xff] %vm373, 0.0
          %611 = vst.msk [vmem:[#allocation4 + $0x368] sm:$0xff] %vm373, 0.0
          %612 = vst.msk [vmem:[#allocation4 + $0x370] sm:$0xff] %vm373, 0.0
          %613 = vst.msk [vmem:[#allocation4 + $0x378] sm:$0xff] %vm373, 0.0
          %614 = vst.msk [vmem:[#allocation4 + $0x380] sm:$0xff] %vm373, 0.0
          %615 = vst.msk [vmem:[#allocation4 + $0x388] sm:$0xff] %vm373, 0.0
          %616 = vst.msk [vmem:[#allocation4 + $0x390] sm:$0xff] %vm373, 0.0
          %617 = vst.msk [vmem:[#allocation4 + $0x398] sm:$0xff] %vm373, 0.0
          %618 = vst.msk [vmem:[#allocation4 + $0x3a0] sm:$0xff] %vm373, 0.0
          %619 = vst.msk [vmem:[#allocation4 + $0x3a8] sm:$0xff] %vm373, 0.0
          %620 = vst.msk [vmem:[#allocation4 + $0x3b0] sm:$0xff] %vm373, 0.0
          %621 = vst.msk [vmem:[#allocation4 + $0x3b8] sm:$0xff] %vm373, 0.0
          %622 = vst.msk [vmem:[#allocation4 + $0x3c0] sm:$0xff] %vm373, 0.0
          %623 = vst.msk [vmem:[#allocation4 + $0x3c8] sm:$0xff] %vm373, 0.0
          %624 = vst.msk [vmem:[#allocation4 + $0x3d0] sm:$0xff] %vm373, 0.0
          %625 = vst.msk [vmem:[#allocation4 + $0x3d8] sm:$0xff] %vm373, 0.0
          %626 = vst.msk [vmem:[#allocation4 + $0x3e0] sm:$0xff] %vm373, 0.0
          %627 = vst.msk [vmem:[#allocation4 + $0x3e8] sm:$0xff] %vm373, 0.0
          %628 = vst.msk [vmem:[#allocation4 + $0x3f0] sm:$0xff] %vm373, 0.0
          %629 = vst.msk [vmem:[#allocation4 + $0x3f8] sm:$0xff] %vm373, 0.0
          %630 = vst [vmem:[#allocation5] sm:$0xff] 0.0
          %631 = vst [vmem:[#allocation5 + $0x8] sm:$0xff] 0.0
          %632 = vst [vmem:[#allocation5 + $0x10] sm:$0xff] 0.0
          %633 = vst [vmem:[#allocation5 + $0x18] sm:$0xff] 0.0
          %634 = vst [vmem:[#allocation5 + $0x20] sm:$0xff] 0.0
          %635 = vst [vmem:[#allocation5 + $0x28] sm:$0xff] 0.0
          %636 = vst [vmem:[#allocation5 + $0x30] sm:$0xff] 0.0
          %637 = vst [vmem:[#allocation5 + $0x38] sm:$0xff] 0.0
          %638 = vst [vmem:[#allocation5 + $0x40] sm:$0xff] 0.0
          %639 = vst [vmem:[#allocation5 + $0x48] sm:$0xff] 0.0
          %640 = vst [vmem:[#allocation5 + $0x50] sm:$0xff] 0.0
          %641 = vst [vmem:[#allocation5 + $0x58] sm:$0xff] 0.0
          %642 = vst [vmem:[#allocation5 + $0x60] sm:$0xff] 0.0
          %643 = vst [vmem:[#allocation5 + $0x68] sm:$0xff] 0.0
          %644 = vst [vmem:[#allocation5 + $0x70] sm:$0xff] 0.0
          %645 = vst [vmem:[#allocation5 + $0x78] sm:$0xff] 0.0
          %646 = vst [vmem:[#allocation5 + $0x80] sm:$0xff] 0.0
          %647 = vst [vmem:[#allocation5 + $0x88] sm:$0xff] 0.0
          %648 = vst [vmem:[#allocation5 + $0x90] sm:$0xff] 0.0
          %649 = vst [vmem:[#allocation5 + $0x98] sm:$0xff] 0.0
          %650 = vst [vmem:[#allocation5 + $0xa0] sm:$0xff] 0.0
          %651 = vst [vmem:[#allocation5 + $0xa8] sm:$0xff] 0.0
          %652 = vst [vmem:[#allocation5 + $0xb0] sm:$0xff] 0.0
          %653 = vst [vmem:[#allocation5 + $0xb8] sm:$0xff] 0.0
          %654 = vst [vmem:[#allocation5 + $0xc0] sm:$0xff] 0.0
          %655 = vst [vmem:[#allocation5 + $0xc8] sm:$0xff] 0.0
          %656 = vst [vmem:[#allocation5 + $0xd0] sm:$0xff] 0.0
          %657 = vst [vmem:[#allocation5 + $0xd8] sm:$0xff] 0.0
          %658 = vst [vmem:[#allocation5 + $0xe0] sm:$0xff] 0.0
          %659 = vst [vmem:[#allocation5 + $0xe8] sm:$0xff] 0.0
          %660 = vst [vmem:[#allocation5 + $0xf0] sm:$0xff] 0.0
          %661 = vst [vmem:[#allocation5 + $0xf8] sm:$0xff] 0.0
          %v662 = vld [vmem:[%s335] sm:$0xf]
          %v663 = vld [vmem:[%s335 + $0x4] sm:$0xf]
          %v664 = vld [vmem:[%s335 + $0x8] sm:$0xf]
          %v665 = vld [vmem:[%s335 + $0xc] sm:$0xf]
          %v666 = vld [vmem:[%s335 + $0x10] sm:$0xf]
          %v667 = vld [vmem:[%s335 + $0x14] sm:$0xf]
          %v668 = vld [vmem:[%s335 + $0x18] sm:$0xf]
          %v669 = vld [vmem:[%s335 + $0x1c] sm:$0xf]
          %v670 = vld [vmem:[%s335 + $0x20] sm:$0xf]
          %v671 = vld [vmem:[%s335 + $0x24] sm:$0xf]
          %v672 = vld [vmem:[%s335 + $0x28] sm:$0xf]
          %v673 = vld [vmem:[%s335 + $0x2c] sm:$0xf]
          %v674 = vld [vmem:[%s335 + $0x30] sm:$0xf]
          %v675 = vld [vmem:[%s335 + $0x34] sm:$0xf]
          %v676 = vld [vmem:[%s335 + $0x38] sm:$0xf]
          %v677 = vld [vmem:[%s335 + $0x3c] sm:$0xf]
          %v678 = vld [vmem:[%s335 + $0x40] sm:$0xf]
          %v679 = vld [vmem:[%s335 + $0x44] sm:$0xf]
          %v680 = vld [vmem:[%s335 + $0x48] sm:$0xf]
          %v681 = vld [vmem:[%s335 + $0x4c] sm:$0xf]
          %v682 = vld [vmem:[%s335 + $0x50] sm:$0xf]
          %v683 = vld [vmem:[%s335 + $0x54] sm:$0xf]
          %v684 = vld [vmem:[%s335 + $0x58] sm:$0xf]
          %v685 = vld [vmem:[%s335 + $0x5c] sm:$0xf]
          %v686 = vld [vmem:[%s335 + $0x60] sm:$0xf]
          %v687 = vld [vmem:[%s335 + $0x64] sm:$0xf]
          %v688 = vld [vmem:[%s335 + $0x68] sm:$0xf]
          %v689 = vld [vmem:[%s335 + $0x6c] sm:$0xf]
          %v690 = vld [vmem:[%s335 + $0x70] sm:$0xf]
          %v691 = vld [vmem:[%s335 + $0x74] sm:$0xf]
          %v692 = vld [vmem:[%s335 + $0x78] sm:$0xf]
          %v693 = vld [vmem:[%s335 + $0x7c] sm:$0xf]
          %v694 = vunpack.c.l.bf16 %v662
          %v695 = vunpack.c.l.bf16 %v663
          %v696 = vunpack.c.l.bf16 %v664
          %v697 = vunpack.c.l.bf16 %v665
          %v698 = vunpack.c.l.bf16 %v666
          %v699 = vunpack.c.l.bf16 %v667
          %v700 = vunpack.c.l.bf16 %v668
          %v701 = vunpack.c.l.bf16 %v669
          %v702 = vunpack.c.l.bf16 %v670
          %v703 = vunpack.c.l.bf16 %v671
          %v704 = vunpack.c.l.bf16 %v672
          %v705 = vunpack.c.l.bf16 %v673
          %v706 = vunpack.c.l.bf16 %v674
          %v707 = vunpack.c.l.bf16 %v675
          %v708 = vunpack.c.l.bf16 %v676
          %v709 = vunpack.c.l.bf16 %v677
          %v710 = vunpack.c.l.bf16 %v678
          %v711 = vunpack.c.l.bf16 %v679
          %v712 = vunpack.c.l.bf16 %v680
          %v713 = vunpack.c.l.bf16 %v681
          %v714 = vunpack.c.l.bf16 %v682
          %v715 = vunpack.c.l.bf16 %v683
          %v716 = vunpack.c.l.bf16 %v684
          %v717 = vunpack.c.l.bf16 %v685
          %v718 = vunpack.c.l.bf16 %v686
          %v719 = vunpack.c.l.bf16 %v687
          %v720 = vunpack.c.l.bf16 %v688
          %v721 = vunpack.c.l.bf16 %v689
          %v722 = vunpack.c.l.bf16 %v690
          %v723 = vunpack.c.l.bf16 %v691
          %v724 = vunpack.c.l.bf16 %v692
          %v725 = vunpack.c.l.bf16 %v693
          %v726 = vmul.f32 %v694, 0.17677669
          %v727 = vmul.f32 %v695, 0.17677669
          %v728 = vmul.f32 %v696, 0.17677669
          %v729 = vmul.f32 %v697, 0.17677669
          %v730 = vmul.f32 %v698, 0.17677669
          %v731 = vmul.f32 %v699, 0.17677669
          %v732 = vmul.f32 %v700, 0.17677669
          %v733 = vmul.f32 %v701, 0.17677669
          %v734 = vmul.f32 %v702, 0.17677669
          %v735 = vmul.f32 %v703, 0.17677669
          %v736 = vmul.f32 %v704, 0.17677669
          %v737 = vmul.f32 %v705, 0.17677669
          %v738 = vmul.f32 %v706, 0.17677669
          %v739 = vmul.f32 %v707, 0.17677669
          %v740 = vmul.f32 %v708, 0.17677669
          %v741 = vmul.f32 %v709, 0.17677669
          %v742 = vmul.f32 %v710, 0.17677669
          %v743 = vmul.f32 %v711, 0.17677669
          %v744 = vmul.f32 %v712, 0.17677669
          %v745 = vmul.f32 %v713, 0.17677669
          %v746 = vmul.f32 %v714, 0.17677669
          %v747 = vmul.f32 %v715, 0.17677669
          %v748 = vmul.f32 %v716, 0.17677669
          %v749 = vmul.f32 %v717, 0.17677669
          %v750 = vmul.f32 %v718, 0.17677669
          %v751 = vmul.f32 %v719, 0.17677669
          %v752 = vmul.f32 %v720, 0.17677669
          %v753 = vmul.f32 %v721, 0.17677669
          %v754 = vmul.f32 %v722, 0.17677669
          %v755 = vmul.f32 %v723, 0.17677669
          %v756 = vmul.f32 %v724, 0.17677669
          %v757 = vmul.f32 %v725, 0.17677669
          %v758 = vpack.c.bf16 %v726, %v726
          %v759 = vpack.c.bf16 %v727, %v727
          %v760 = vpack.c.bf16 %v728, %v728
          %v761 = vpack.c.bf16 %v729, %v729
          %v762 = vpack.c.bf16 %v730, %v730
          %v763 = vpack.c.bf16 %v731, %v731
          %v764 = vpack.c.bf16 %v732, %v732
          %v765 = vpack.c.bf16 %v733, %v733
          %v766 = vpack.c.bf16 %v734, %v734
          %v767 = vpack.c.bf16 %v735, %v735
          %v768 = vpack.c.bf16 %v736, %v736
          %v769 = vpack.c.bf16 %v737, %v737
          %v770 = vpack.c.bf16 %v738, %v738
          %v771 = vpack.c.bf16 %v739, %v739
          %v772 = vpack.c.bf16 %v740, %v740
          %v773 = vpack.c.bf16 %v741, %v741
          %v774 = vpack.c.bf16 %v742, %v742
          %v775 = vpack.c.bf16 %v743, %v743
          %v776 = vpack.c.bf16 %v744, %v744
          %v777 = vpack.c.bf16 %v745, %v745
          %v778 = vpack.c.bf16 %v746, %v746
          %v779 = vpack.c.bf16 %v747, %v747
          %v780 = vpack.c.bf16 %v748, %v748
          %v781 = vpack.c.bf16 %v749, %v749
          %v782 = vpack.c.bf16 %v750, %v750
          %v783 = vpack.c.bf16 %v751, %v751
          %v784 = vpack.c.bf16 %v752, %v752
          %v785 = vpack.c.bf16 %v753, %v753
          %v786 = vpack.c.bf16 %v754, %v754
          %v787 = vpack.c.bf16 %v755, %v755
          %v788 = vpack.c.bf16 %v756, %v756
          %v789 = vpack.c.bf16 %v757, %v757
          %vm790 = vcmask 257024
          %791 = vst.msk [vmem:[#allocation2] sm:$0xf] %vm790, %v758
          %792 = vst.msk [vmem:[#allocation2 + $0x4] sm:$0xf] %vm790, %v759
          %793 = vst.msk [vmem:[#allocation2 + $0x8] sm:$0xf] %vm790, %v760
          %794 = vst.msk [vmem:[#allocation2 + $0xc] sm:$0xf] %vm790, %v761
          %795 = vst.msk [vmem:[#allocation2 + $0x10] sm:$0xf] %vm790, %v762
          %796 = vst.msk [vmem:[#allocation2 + $0x14] sm:$0xf] %vm790, %v763
          %797 = vst.msk [vmem:[#allocation2 + $0x18] sm:$0xf] %vm790, %v764
          %798 = vst.msk [vmem:[#allocation2 + $0x1c] sm:$0xf] %vm790, %v765
          %799 = vst.msk [vmem:[#allocation2 + $0x20] sm:$0xf] %vm790, %v766
          %800 = vst.msk [vmem:[#allocation2 + $0x24] sm:$0xf] %vm790, %v767
          %801 = vst.msk [vmem:[#allocation2 + $0x28] sm:$0xf] %vm790, %v768
          %802 = vst.msk [vmem:[#allocation2 + $0x2c] sm:$0xf] %vm790, %v769
          %803 = vst.msk [vmem:[#allocation2 + $0x30] sm:$0xf] %vm790, %v770
          %804 = vst.msk [vmem:[#allocation2 + $0x34] sm:$0xf] %vm790, %v771
          %805 = vst.msk [vmem:[#allocation2 + $0x38] sm:$0xf] %vm790, %v772
          %806 = vst.msk [vmem:[#allocation2 + $0x3c] sm:$0xf] %vm790, %v773
          %807 = vst.msk [vmem:[#allocation2 + $0x40] sm:$0xf] %vm790, %v774
          %808 = vst.msk [vmem:[#allocation2 + $0x44] sm:$0xf] %vm790, %v775
          %809 = vst.msk [vmem:[#allocation2 + $0x48] sm:$0xf] %vm790, %v776
          %810 = vst.msk [vmem:[#allocation2 + $0x4c] sm:$0xf] %vm790, %v777
          %811 = vst.msk [vmem:[#allocation2 + $0x50] sm:$0xf] %vm790, %v778
          %812 = vst.msk [vmem:[#allocation2 + $0x54] sm:$0xf] %vm790, %v779
          %813 = vst.msk [vmem:[#allocation2 + $0x58] sm:$0xf] %vm790, %v780
          %814 = vst.msk [vmem:[#allocation2 + $0x5c] sm:$0xf] %vm790, %v781
          %815 = vst.msk [vmem:[#allocation2 + $0x60] sm:$0xf] %vm790, %v782
          %816 = vst.msk [vmem:[#allocation2 + $0x64] sm:$0xf] %vm790, %v783
          %817 = vst.msk [vmem:[#allocation2 + $0x68] sm:$0xf] %vm790, %v784
          %818 = vst.msk [vmem:[#allocation2 + $0x6c] sm:$0xf] %vm790, %v785
          %819 = vst.msk [vmem:[#allocation2 + $0x70] sm:$0xf] %vm790, %v786
          %820 = vst.msk [vmem:[#allocation2 + $0x74] sm:$0xf] %vm790, %v787
          %821 = vst.msk [vmem:[#allocation2 + $0x78] sm:$0xf] %vm790, %v788
          %822 = vst.msk [vmem:[#allocation2 + $0x7c] sm:$0xf] %vm790, %v789
          %855 = vrot.lane.b32.xlu0 %v758, 96
          %v856 = vpop.permute.xlu0 %855
          %857 = vrot.lane.b32.xlu0 %v759, 96
          %v858 = vpop.permute.xlu0 %857
          %859 = vrot.lane.b32.xlu0 %v760, 96
          %v860 = vpop.permute.xlu0 %859
          %861 = vrot.lane.b32.xlu0 %v761, 96
          %v862 = vpop.permute.xlu0 %861
          %863 = vrot.lane.b32.xlu0 %v762, 96
          %v864 = vpop.permute.xlu0 %863
          %865 = vrot.lane.b32.xlu0 %v763, 96
          %v866 = vpop.permute.xlu0 %865
          %867 = vrot.lane.b32.xlu0 %v764, 96
          %v868 = vpop.permute.xlu0 %867
          %869 = vrot.lane.b32.xlu0 %v765, 96
          %v870 = vpop.permute.xlu0 %869
          %871 = vrot.lane.b32.xlu0 %v766, 96
          %v872 = vpop.permute.xlu0 %871
          %873 = vrot.lane.b32.xlu0 %v767, 96
          %v874 = vpop.permute.xlu0 %873
          %875 = vrot.lane.b32.xlu0 %v768, 96
          %v876 = vpop.permute.xlu0 %875
          %877 = vrot.lane.b32.xlu0 %v769, 96
          %v878 = vpop.permute.xlu0 %877
          %879 = vrot.lane.b32.xlu0 %v770, 96
          %v880 = vpop.permute.xlu0 %879
          %881 = vrot.lane.b32.xlu0 %v771, 96
          %v882 = vpop.permute.xlu0 %881
          %883 = vrot.lane.b32.xlu0 %v772, 96
          %v884 = vpop.permute.xlu0 %883
          %885 = vrot.lane.b32.xlu0 %v773, 96
          %v886 = vpop.permute.xlu0 %885
          %887 = vrot.lane.b32.xlu0 %v774, 96
          %v888 = vpop.permute.xlu0 %887
          %889 = vrot.lane.b32.xlu0 %v775, 96
          %v890 = vpop.permute.xlu0 %889
          %891 = vrot.lane.b32.xlu0 %v776, 96
          %v892 = vpop.permute.xlu0 %891
          %893 = vrot.lane.b32.xlu0 %v777, 96
          %v894 = vpop.permute.xlu0 %893
          %895 = vrot.lane.b32.xlu0 %v778, 96
          %v896 = vpop.permute.xlu0 %895
          %897 = vrot.lane.b32.xlu0 %v779, 96
          %v898 = vpop.permute.xlu0 %897
          %899 = vrot.lane.b32.xlu0 %v780, 96
          %v900 = vpop.permute.xlu0 %899
          %901 = vrot.lane.b32.xlu0 %v781, 96
          %v902 = vpop.permute.xlu0 %901
          %903 = vrot.lane.b32.xlu0 %v782, 96
          %v904 = vpop.permute.xlu0 %903
          %905 = vrot.lane.b32.xlu0 %v783, 96
          %v906 = vpop.permute.xlu0 %905
          %907 = vrot.lane.b32.xlu0 %v784, 96
          %v908 = vpop.permute.xlu0 %907
          %909 = vrot.lane.b32.xlu0 %v785, 96
          %v910 = vpop.permute.xlu0 %909
          %911 = vrot.lane.b32.xlu0 %v786, 96
          %v912 = vpop.permute.xlu0 %911
          %913 = vrot.lane.b32.xlu0 %v787, 96
          %v914 = vpop.permute.xlu0 %913
          %915 = vrot.lane.b32.xlu0 %v788, 96
          %v916 = vpop.permute.xlu0 %915
          %917 = vrot.lane.b32.xlu0 %v789, 96
          %v918 = vpop.permute.xlu0 %917
          %s951 = scalar_lea.vmem [#allocation2], 128
          %952 = vst.msk [vmem:[%s951] sm:$0xf] %vm790, %v856
          %953 = vst.msk [vmem:[%s951 + $0x4] sm:$0xf] %vm790, %v858
          %954 = vst.msk [vmem:[%s951 + $0x8] sm:$0xf] %vm790, %v860
          %955 = vst.msk [vmem:[%s951 + $0xc] sm:$0xf] %vm790, %v862
          %956 = vst.msk [vmem:[%s951 + $0x10] sm:$0xf] %vm790, %v864
          %957 = vst.msk [vmem:[%s951 + $0x14] sm:$0xf] %vm790, %v866
          %958 = vst.msk [vmem:[%s951 + $0x18] sm:$0xf] %vm790, %v868
          %959 = vst.msk [vmem:[%s951 + $0x1c] sm:$0xf] %vm790, %v870
          %960 = vst.msk [vmem:[%s951 + $0x20] sm:$0xf] %vm790, %v872
          %961 = vst.msk [vmem:[%s951 + $0x24] sm:$0xf] %vm790, %v874
          %962 = vst.msk [vmem:[%s951 + $0x28] sm:$0xf] %vm790, %v876
          %963 = vst.msk [vmem:[%s951 + $0x2c] sm:$0xf] %vm790, %v878
          %964 = vst.msk [vmem:[%s951 + $0x30] sm:$0xf] %vm790, %v880
          %965 = vst.msk [vmem:[%s951 + $0x34] sm:$0xf] %vm790, %v882
          %966 = vst.msk [vmem:[%s951 + $0x38] sm:$0xf] %vm790, %v884
          %967 = vst.msk [vmem:[%s951 + $0x3c] sm:$0xf] %vm790, %v886
          %968 = vst.msk [vmem:[%s951 + $0x40] sm:$0xf] %vm790, %v888
          %969 = vst.msk [vmem:[%s951 + $0x44] sm:$0xf] %vm790, %v890
          %970 = vst.msk [vmem:[%s951 + $0x48] sm:$0xf] %vm790, %v892
          %971 = vst.msk [vmem:[%s951 + $0x4c] sm:$0xf] %vm790, %v894
          %972 = vst.msk [vmem:[%s951 + $0x50] sm:$0xf] %vm790, %v896
          %973 = vst.msk [vmem:[%s951 + $0x54] sm:$0xf] %vm790, %v898
          %974 = vst.msk [vmem:[%s951 + $0x58] sm:$0xf] %vm790, %v900
          %975 = vst.msk [vmem:[%s951 + $0x5c] sm:$0xf] %vm790, %v902
          %976 = vst.msk [vmem:[%s951 + $0x60] sm:$0xf] %vm790, %v904
          %977 = vst.msk [vmem:[%s951 + $0x64] sm:$0xf] %vm790, %v906
          %978 = vst.msk [vmem:[%s951 + $0x68] sm:$0xf] %vm790, %v908
          %979 = vst.msk [vmem:[%s951 + $0x6c] sm:$0xf] %vm790, %v910
          %980 = vst.msk [vmem:[%s951 + $0x70] sm:$0xf] %vm790, %v912
          %981 = vst.msk [vmem:[%s951 + $0x74] sm:$0xf] %vm790, %v914
          %982 = vst.msk [vmem:[%s951 + $0x78] sm:$0xf] %vm790, %v916
          %983 = vst.msk [vmem:[%s951 + $0x7c] sm:$0xf] %vm790, %v918
          %984 = vrot.lane.b32.xlu0 %v758, 64
          %v985 = vpop.permute.xlu0 %984
          %986 = vrot.lane.b32.xlu0 %v759, 64
          %v987 = vpop.permute.xlu0 %986
          %988 = vrot.lane.b32.xlu0 %v760, 64
          %v989 = vpop.permute.xlu0 %988
          %990 = vrot.lane.b32.xlu0 %v761, 64
          %v991 = vpop.permute.xlu0 %990
          %992 = vrot.lane.b32.xlu0 %v762, 64
          %v993 = vpop.permute.xlu0 %992
          %994 = vrot.lane.b32.xlu0 %v763, 64
          %v995 = vpop.permute.xlu0 %994
          %996 = vrot.lane.b32.xlu0 %v764, 64
          %v997 = vpop.permute.xlu0 %996
          %998 = vrot.lane.b32.xlu0 %v765, 64
          %v999 = vpop.permute.xlu0 %998
          %1000 = vrot.lane.b32.xlu0 %v766, 64
          %v1001 = vpop.permute.xlu0 %1000
          %1002 = vrot.lane.b32.xlu0 %v767, 64
          %v1003 = vpop.permute.xlu0 %1002
          %1004 = vrot.lane.b32.xlu0 %v768, 64
          %v1005 = vpop.permute.xlu0 %1004
          %1006 = vrot.lane.b32.xlu0 %v769, 64
          %v1007 = vpop.permute.xlu0 %1006
          %1008 = vrot.lane.b32.xlu0 %v770, 64
          %v1009 = vpop.permute.xlu0 %1008
          %1010 = vrot.lane.b32.xlu0 %v771, 64
          %v1011 = vpop.permute.xlu0 %1010
          %1012 = vrot.lane.b32.xlu0 %v772, 64
          %v1013 = vpop.permute.xlu0 %1012
          %1014 = vrot.lane.b32.xlu0 %v773, 64
          %v1015 = vpop.permute.xlu0 %1014
          %1016 = vrot.lane.b32.xlu0 %v774, 64
          %v1017 = vpop.permute.xlu0 %1016
          %1018 = vrot.lane.b32.xlu0 %v775, 64
          %v1019 = vpop.permute.xlu0 %1018
          %1020 = vrot.lane.b32.xlu0 %v776, 64
          %v1021 = vpop.permute.xlu0 %1020
          %1022 = vrot.lane.b32.xlu0 %v777, 64
          %v1023 = vpop.permute.xlu0 %1022
          %1024 = vrot.lane.b32.xlu0 %v778, 64
          %v1025 = vpop.permute.xlu0 %1024
          %1026 = vrot.lane.b32.xlu0 %v779, 64
          %v1027 = vpop.permute.xlu0 %1026
          %1028 = vrot.lane.b32.xlu0 %v780, 64
          %v1029 = vpop.permute.xlu0 %1028
          %1030 = vrot.lane.b32.xlu0 %v781, 64
          %v1031 = vpop.permute.xlu0 %1030
          %1032 = vrot.lane.b32.xlu0 %v782, 64
          %v1033 = vpop.permute.xlu0 %1032
          %1034 = vrot.lane.b32.xlu0 %v783, 64
          %v1035 = vpop.permute.xlu0 %1034
          %1036 = vrot.lane.b32.xlu0 %v784, 64
          %v1037 = vpop.permute.xlu0 %1036
          %1038 = vrot.lane.b32.xlu0 %v785, 64
          %v1039 = vpop.permute.xlu0 %1038
          %1040 = vrot.lane.b32.xlu0 %v786, 64
          %v1041 = vpop.permute.xlu0 %1040
          %1042 = vrot.lane.b32.xlu0 %v787, 64
          %v1043 = vpop.permute.xlu0 %1042
          %1044 = vrot.lane.b32.xlu0 %v788, 64
          %v1045 = vpop.permute.xlu0 %1044
          %1046 = vrot.lane.b32.xlu0 %v789, 64
          %v1047 = vpop.permute.xlu0 %1046
          %s1080 = scalar_lea.vmem [#allocation2], 256
          %1081 = vst.msk [vmem:[%s1080] sm:$0xf] %vm790, %v985
          %1082 = vst.msk [vmem:[%s1080 + $0x4] sm:$0xf] %vm790, %v987
          %1083 = vst.msk [vmem:[%s1080 + $0x8] sm:$0xf] %vm790, %v989
          %1084 = vst.msk [vmem:[%s1080 + $0xc] sm:$0xf] %vm790, %v991
          %1085 = vst.msk [vmem:[%s1080 + $0x10] sm:$0xf] %vm790, %v993
          %1086 = vst.msk [vmem:[%s1080 + $0x14] sm:$0xf] %vm790, %v995
          %1087 = vst.msk [vmem:[%s1080 + $0x18] sm:$0xf] %vm790, %v997
          %1088 = vst.msk [vmem:[%s1080 + $0x1c] sm:$0xf] %vm790, %v999
          %1089 = vst.msk [vmem:[%s1080 + $0x20] sm:$0xf] %vm790, %v1001
          %1090 = vst.msk [vmem:[%s1080 + $0x24] sm:$0xf] %vm790, %v1003
          %1091 = vst.msk [vmem:[%s1080 + $0x28] sm:$0xf] %vm790, %v1005
          %1092 = vst.msk [vmem:[%s1080 + $0x2c] sm:$0xf] %vm790, %v1007
          %1093 = vst.msk [vmem:[%s1080 + $0x30] sm:$0xf] %vm790, %v1009
          %1094 = vst.msk [vmem:[%s1080 + $0x34] sm:$0xf] %vm790, %v1011
          %1095 = vst.msk [vmem:[%s1080 + $0x38] sm:$0xf] %vm790, %v1013
          %1096 = vst.msk [vmem:[%s1080 + $0x3c] sm:$0xf] %vm790, %v1015
          %1097 = vst.msk [vmem:[%s1080 + $0x40] sm:$0xf] %vm790, %v1017
          %1098 = vst.msk [vmem:[%s1080 + $0x44] sm:$0xf] %vm790, %v1019
          %1099 = vst.msk [vmem:[%s1080 + $0x48] sm:$0xf] %vm790, %v1021
          %1100 = vst.msk [vmem:[%s1080 + $0x4c] sm:$0xf] %vm790, %v1023
          %1101 = vst.msk [vmem:[%s1080 + $0x50] sm:$0xf] %vm790, %v1025
          %1102 = vst.msk [vmem:[%s1080 + $0x54] sm:$0xf] %vm790, %v1027
          %1103 = vst.msk [vmem:[%s1080 + $0x58] sm:$0xf] %vm790, %v1029
          %1104 = vst.msk [vmem:[%s1080 + $0x5c] sm:$0xf] %vm790, %v1031
          %1105 = vst.msk [vmem:[%s1080 + $0x60] sm:$0xf] %vm790, %v1033
          %1106 = vst.msk [vmem:[%s1080 + $0x64] sm:$0xf] %vm790, %v1035
          %1107 = vst.msk [vmem:[%s1080 + $0x68] sm:$0xf] %vm790, %v1037
          %1108 = vst.msk [vmem:[%s1080 + $0x6c] sm:$0xf] %vm790, %v1039
          %1109 = vst.msk [vmem:[%s1080 + $0x70] sm:$0xf] %vm790, %v1041
          %1110 = vst.msk [vmem:[%s1080 + $0x74] sm:$0xf] %vm790, %v1043
          %1111 = vst.msk [vmem:[%s1080 + $0x78] sm:$0xf] %vm790, %v1045
          %1112 = vst.msk [vmem:[%s1080 + $0x7c] sm:$0xf] %vm790, %v1047
          %1113 = vrot.lane.b32.xlu0 %v758, 32
          %v1114 = vpop.permute.xlu0 %1113
          %1115 = vrot.lane.b32.xlu0 %v759, 32
          %v1116 = vpop.permute.xlu0 %1115
          %1117 = vrot.lane.b32.xlu0 %v760, 32
          %v1118 = vpop.permute.xlu0 %1117
          %1119 = vrot.lane.b32.xlu0 %v761, 32
          %v1120 = vpop.permute.xlu0 %1119
          %1121 = vrot.lane.b32.xlu0 %v762, 32
          %v1122 = vpop.permute.xlu0 %1121
          %1123 = vrot.lane.b32.xlu0 %v763, 32
          %v1124 = vpop.permute.xlu0 %1123
          %1125 = vrot.lane.b32.xlu0 %v764, 32
          %v1126 = vpop.permute.xlu0 %1125
          %1127 = vrot.lane.b32.xlu0 %v765, 32
          %v1128 = vpop.permute.xlu0 %1127
          %1129 = vrot.lane.b32.xlu0 %v766, 32
          %v1130 = vpop.permute.xlu0 %1129
          %1131 = vrot.lane.b32.xlu0 %v767, 32
          %v1132 = vpop.permute.xlu0 %1131
          %1133 = vrot.lane.b32.xlu0 %v768, 32
          %v1134 = vpop.permute.xlu0 %1133
          %1135 = vrot.lane.b32.xlu0 %v769, 32
          %v1136 = vpop.permute.xlu0 %1135
          %1137 = vrot.lane.b32.xlu0 %v770, 32
          %v1138 = vpop.permute.xlu0 %1137
          %1139 = vrot.lane.b32.xlu0 %v771, 32
          %v1140 = vpop.permute.xlu0 %1139
          %1141 = vrot.lane.b32.xlu0 %v772, 32
          %v1142 = vpop.permute.xlu0 %1141
          %1143 = vrot.lane.b32.xlu0 %v773, 32
          %v1144 = vpop.permute.xlu0 %1143
          %1145 = vrot.lane.b32.xlu0 %v774, 32
          %v1146 = vpop.permute.xlu0 %1145
          %1147 = vrot.lane.b32.xlu0 %v775, 32
          %v1148 = vpop.permute.xlu0 %1147
          %1149 = vrot.lane.b32.xlu0 %v776, 32
          %v1150 = vpop.permute.xlu0 %1149
          %1151 = vrot.lane.b32.xlu0 %v777, 32
          %v1152 = vpop.permute.xlu0 %1151
          %1153 = vrot.lane.b32.xlu0 %v778, 32
          %v1154 = vpop.permute.xlu0 %1153
          %1155 = vrot.lane.b32.xlu0 %v779, 32
          %v1156 = vpop.permute.xlu0 %1155
          %1157 = vrot.lane.b32.xlu0 %v780, 32
          %v1158 = vpop.permute.xlu0 %1157
          %1159 = vrot.lane.b32.xlu0 %v781, 32
          %v1160 = vpop.permute.xlu0 %1159
          %1161 = vrot.lane.b32.xlu0 %v782, 32
          %v1162 = vpop.permute.xlu0 %1161
          %1163 = vrot.lane.b32.xlu0 %v783, 32
          %v1164 = vpop.permute.xlu0 %1163
          %1165 = vrot.lane.b32.xlu0 %v784, 32
          %v1166 = vpop.permute.xlu0 %1165
          %1167 = vrot.lane.b32.xlu0 %v785, 32
          %v1168 = vpop.permute.xlu0 %1167
          %1169 = vrot.lane.b32.xlu0 %v786, 32
          %v1170 = vpop.permute.xlu0 %1169
          %1171 = vrot.lane.b32.xlu0 %v787, 32
          %v1172 = vpop.permute.xlu0 %1171
          %1173 = vrot.lane.b32.xlu0 %v788, 32
          %v1174 = vpop.permute.xlu0 %1173
          %1175 = vrot.lane.b32.xlu0 %v789, 32
          %v1176 = vpop.permute.xlu0 %1175
          %s1209 = scalar_lea.vmem [#allocation2], 384
          %1210 = vst.msk [vmem:[%s1209] sm:$0xf] %vm790, %v1114
          %1211 = vst.msk [vmem:[%s1209 + $0x4] sm:$0xf] %vm790, %v1116
          %1212 = vst.msk [vmem:[%s1209 + $0x8] sm:$0xf] %vm790, %v1118
          %1213 = vst.msk [vmem:[%s1209 + $0xc] sm:$0xf] %vm790, %v1120
          %1214 = vst.msk [vmem:[%s1209 + $0x10] sm:$0xf] %vm790, %v1122
          %1215 = vst.msk [vmem:[%s1209 + $0x14] sm:$0xf] %vm790, %v1124
          %1216 = vst.msk [vmem:[%s1209 + $0x18] sm:$0xf] %vm790, %v1126
          %1217 = vst.msk [vmem:[%s1209 + $0x1c] sm:$0xf] %vm790, %v1128
          %1218 = vst.msk [vmem:[%s1209 + $0x20] sm:$0xf] %vm790, %v1130
          %1219 = vst.msk [vmem:[%s1209 + $0x24] sm:$0xf] %vm790, %v1132
          %1220 = vst.msk [vmem:[%s1209 + $0x28] sm:$0xf] %vm790, %v1134
          %1221 = vst.msk [vmem:[%s1209 + $0x2c] sm:$0xf] %vm790, %v1136
          %1222 = vst.msk [vmem:[%s1209 + $0x30] sm:$0xf] %vm790, %v1138
          %1223 = vst.msk [vmem:[%s1209 + $0x34] sm:$0xf] %vm790, %v1140
          %1224 = vst.msk [vmem:[%s1209 + $0x38] sm:$0xf] %vm790, %v1142
          %1225 = vst.msk [vmem:[%s1209 + $0x3c] sm:$0xf] %vm790, %v1144
          %1226 = vst.msk [vmem:[%s1209 + $0x40] sm:$0xf] %vm790, %v1146
          %1227 = vst.msk [vmem:[%s1209 + $0x44] sm:$0xf] %vm790, %v1148
          %1228 = vst.msk [vmem:[%s1209 + $0x48] sm:$0xf] %vm790, %v1150
          %1229 = vst.msk [vmem:[%s1209 + $0x4c] sm:$0xf] %vm790, %v1152
          %1230 = vst.msk [vmem:[%s1209 + $0x50] sm:$0xf] %vm790, %v1154
          %1231 = vst.msk [vmem:[%s1209 + $0x54] sm:$0xf] %vm790, %v1156
          %1232 = vst.msk [vmem:[%s1209 + $0x58] sm:$0xf] %vm790, %v1158
          %1233 = vst.msk [vmem:[%s1209 + $0x5c] sm:$0xf] %vm790, %v1160
          %1234 = vst.msk [vmem:[%s1209 + $0x60] sm:$0xf] %vm790, %v1162
          %1235 = vst.msk [vmem:[%s1209 + $0x64] sm:$0xf] %vm790, %v1164
          %1236 = vst.msk [vmem:[%s1209 + $0x68] sm:$0xf] %vm790, %v1166
          %1237 = vst.msk [vmem:[%s1209 + $0x6c] sm:$0xf] %vm790, %v1168
          %1238 = vst.msk [vmem:[%s1209 + $0x70] sm:$0xf] %vm790, %v1170
          %1239 = vst.msk [vmem:[%s1209 + $0x74] sm:$0xf] %vm790, %v1172
          %1240 = vst.msk [vmem:[%s1209 + $0x78] sm:$0xf] %vm790, %v1174
          %1241 = vst.msk [vmem:[%s1209 + $0x7c] sm:$0xf] %vm790, %v1176
        $region44: #{distributed_attention_global0_forward.1} parent=35 // pred_fallthru
          _
        %v1242 = vld [vmem:[%s345] sm:$0xf]
        %v1243 = vld [vmem:[%s345 + $0x4] sm:$0xf]
        %v1244 = vld [vmem:[%s345 + $0x8] sm:$0xf]
        %v1245 = vld [vmem:[%s345 + $0xc] sm:$0xf]
        %v1246 = vld [vmem:[%s345 + $0x10] sm:$0xf]
        %v1247 = vld [vmem:[%s345 + $0x14] sm:$0xf]
        %v1248 = vld [vmem:[%s345 + $0x18] sm:$0xf]
        %v1249 = vld [vmem:[%s345 + $0x1c] sm:$0xf]
        %v1250 = vld [vmem:[%s345 + $0x20] sm:$0xf]
        %v1251 = vld [vmem:[%s345 + $0x24] sm:$0xf]
        %v1252 = vld [vmem:[%s345 + $0x28] sm:$0xf]
        %v1253 = vld [vmem:[%s345 + $0x2c] sm:$0xf]
        %v1254 = vld [vmem:[%s345 + $0x30] sm:$0xf]
        %v1255 = vld [vmem:[%s345 + $0x34] sm:$0xf]
        %v1256 = vld [vmem:[%s345 + $0x38] sm:$0xf]
        %v1257 = vld [vmem:[%s345 + $0x3c] sm:$0xf]
        %v1258 = vld [vmem:[%s345 + $0x40] sm:$0xf]
        %v1259 = vld [vmem:[%s345 + $0x44] sm:$0xf]
        %v1260 = vld [vmem:[%s345 + $0x48] sm:$0xf]
        %v1261 = vld [vmem:[%s345 + $0x4c] sm:$0xf]
        %v1262 = vld [vmem:[%s345 + $0x50] sm:$0xf]
        %v1263 = vld [vmem:[%s345 + $0x54] sm:$0xf]
        %v1264 = vld [vmem:[%s345 + $0x58] sm:$0xf]
        %v1265 = vld [vmem:[%s345 + $0x5c] sm:$0xf]
        %v1266 = vld [vmem:[%s345 + $0x60] sm:$0xf]
        %v1267 = vld [vmem:[%s345 + $0x64] sm:$0xf]
        %v1268 = vld [vmem:[%s345 + $0x68] sm:$0xf]
        %v1269 = vld [vmem:[%s345 + $0x6c] sm:$0xf]
        %v1270 = vld [vmem:[%s345 + $0x70] sm:$0xf]
        %v1271 = vld [vmem:[%s345 + $0x74] sm:$0xf]
        %v1272 = vld [vmem:[%s345 + $0x78] sm:$0xf]
        %v1273 = vld [vmem:[%s345 + $0x7c] sm:$0xf]
        %v1274 = vld [vmem:[%s355] sm:$0xf]
        %v1275 = vld [vmem:[%s355 + $0x4] sm:$0xf]
        %v1276 = vld [vmem:[%s355 + $0x8] sm:$0xf]
        %v1277 = vld [vmem:[%s355 + $0xc] sm:$0xf]
        %v1278 = vld [vmem:[%s355 + $0x10] sm:$0xf]
        %v1279 = vld [vmem:[%s355 + $0x14] sm:$0xf]
        %v1280 = vld [vmem:[%s355 + $0x18] sm:$0xf]
        %v1281 = vld [vmem:[%s355 + $0x1c] sm:$0xf]
        %v1282 = vld [vmem:[%s355 + $0x20] sm:$0xf]
        %v1283 = vld [vmem:[%s355 + $0x24] sm:$0xf]
        %v1284 = vld [vmem:[%s355 + $0x28] sm:$0xf]
        %v1285 = vld [vmem:[%s355 + $0x2c] sm:$0xf]
        %v1286 = vld [vmem:[%s355 + $0x30] sm:$0xf]
        %v1287 = vld [vmem:[%s355 + $0x34] sm:$0xf]
        %v1288 = vld [vmem:[%s355 + $0x38] sm:$0xf]
        %v1289 = vld [vmem:[%s355 + $0x3c] sm:$0xf]
        %v1290 = vld [vmem:[%s355 + $0x40] sm:$0xf]
        %v1291 = vld [vmem:[%s355 + $0x44] sm:$0xf]
        %v1292 = vld [vmem:[%s355 + $0x48] sm:$0xf]
        %v1293 = vld [vmem:[%s355 + $0x4c] sm:$0xf]
        %v1294 = vld [vmem:[%s355 + $0x50] sm:$0xf]
        %v1295 = vld [vmem:[%s355 + $0x54] sm:$0xf]
        %v1296 = vld [vmem:[%s355 + $0x58] sm:$0xf]
        %v1297 = vld [vmem:[%s355 + $0x5c] sm:$0xf]
        %v1298 = vld [vmem:[%s355 + $0x60] sm:$0xf]
        %v1299 = vld [vmem:[%s355 + $0x64] sm:$0xf]
        %v1300 = vld [vmem:[%s355 + $0x68] sm:$0xf]
        %v1301 = vld [vmem:[%s355 + $0x6c] sm:$0xf]
        %v1302 = vld [vmem:[%s355 + $0x70] sm:$0xf]
        %v1303 = vld [vmem:[%s355 + $0x74] sm:$0xf]
        %v1304 = vld [vmem:[%s355 + $0x78] sm:$0xf]
        %v1305 = vld [vmem:[%s355 + $0x7c] sm:$0xf]
        %v1306 = vld [vmem:[#allocation2] sm:$0xf]
        %v1307 = vld [vmem:[#allocation2 + $0x4] sm:$0xf]
        %v1308 = vld [vmem:[#allocation2 + $0x8] sm:$0xf]
        %v1309 = vld [vmem:[#allocation2 + $0xc] sm:$0xf]
        %v1310 = vld [vmem:[#allocation2 + $0x10] sm:$0xf]
        %v1311 = vld [vmem:[#allocation2 + $0x14] sm:$0xf]
        %v1312 = vld [vmem:[#allocation2 + $0x18] sm:$0xf]
        %v1313 = vld [vmem:[#allocation2 + $0x1c] sm:$0xf]
        %v1314 = vld [vmem:[#allocation2 + $0x20] sm:$0xf]
        %v1315 = vld [vmem:[#allocation2 + $0x24] sm:$0xf]
        %v1316 = vld [vmem:[#allocation2 + $0x28] sm:$0xf]
        %v1317 = vld [vmem:[#allocation2 + $0x2c] sm:$0xf]
        %v1318 = vld [vmem:[#allocation2 + $0x30] sm:$0xf]
        %v1319 = vld [vmem:[#allocation2 + $0x34] sm:$0xf]
        %v1320 = vld [vmem:[#allocation2 + $0x38] sm:$0xf]
        %v1321 = vld [vmem:[#allocation2 + $0x3c] sm:$0xf]
        %v1322 = vld [vmem:[#allocation2 + $0x40] sm:$0xf]
        %v1323 = vld [vmem:[#allocation2 + $0x44] sm:$0xf]
        %v1324 = vld [vmem:[#allocation2 + $0x48] sm:$0xf]
        %v1325 = vld [vmem:[#allocation2 + $0x4c] sm:$0xf]
        %v1326 = vld [vmem:[#allocation2 + $0x50] sm:$0xf]
        %v1327 = vld [vmem:[#allocation2 + $0x54] sm:$0xf]
        %v1328 = vld [vmem:[#allocation2 + $0x58] sm:$0xf]
        %v1329 = vld [vmem:[#allocation2 + $0x5c] sm:$0xf]
        %v1330 = vld [vmem:[#allocation2 + $0x60] sm:$0xf]
        %v1331 = vld [vmem:[#allocation2 + $0x64] sm:$0xf]
        %v1332 = vld [vmem:[#allocation2 + $0x68] sm:$0xf]
        %v1333 = vld [vmem:[#allocation2 + $0x6c] sm:$0xf]
        %v1334 = vld [vmem:[#allocation2 + $0x70] sm:$0xf]
        %v1335 = vld [vmem:[#allocation2 + $0x74] sm:$0xf]
        %v1336 = vld [vmem:[#allocation2 + $0x78] sm:$0xf]
        %v1337 = vld [vmem:[#allocation2 + $0x7c] sm:$0xf]
        %v1338 = vld [vmem:[%s270] sm:$0xff]
        %v1339 = vld [vmem:[%s270 + $0x8] sm:$0xff]
        %v1340 = vld [vmem:[%s270 + $0x10] sm:$0xff]
        %v1341 = vld [vmem:[%s270 + $0x18] sm:$0xff]
        %v1342 = vld [vmem:[%s270 + $0x20] sm:$0xff]
        %v1343 = vld [vmem:[%s270 + $0x28] sm:$0xff]
        %v1344 = vld [vmem:[%s270 + $0x30] sm:$0xff]
        %v1345 = vld [vmem:[%s270 + $0x38] sm:$0xff]
        %v1346 = vld [vmem:[%s270 + $0x40] sm:$0xff]
        %v1347 = vld [vmem:[%s270 + $0x48] sm:$0xff]
        %v1348 = vld [vmem:[%s270 + $0x50] sm:$0xff]
        %v1349 = vld [vmem:[%s270 + $0x58] sm:$0xff]
        %v1350 = vld [vmem:[%s270 + $0x60] sm:$0xff]
        %v1351 = vld [vmem:[%s270 + $0x68] sm:$0xff]
        %v1352 = vld [vmem:[%s270 + $0x70] sm:$0xff]
        %v1353 = vld [vmem:[%s270 + $0x78] sm:$0xff]
        %v1354 = vld [vmem:[%s270 + $0x80] sm:$0xff]
        %v1355 = vld [vmem:[%s270 + $0x88] sm:$0xff]
        %v1356 = vld [vmem:[%s270 + $0x90] sm:$0xff]
        %v1357 = vld [vmem:[%s270 + $0x98] sm:$0xff]
        %v1358 = vld [vmem:[%s270 + $0xa0] sm:$0xff]
        %v1359 = vld [vmem:[%s270 + $0xa8] sm:$0xff]
        %v1360 = vld [vmem:[%s270 + $0xb0] sm:$0xff]
        %v1361 = vld [vmem:[%s270 + $0xb8] sm:$0xff]
        %v1362 = vld [vmem:[%s270 + $0xc0] sm:$0xff]
        %v1363 = vld [vmem:[%s270 + $0xc8] sm:$0xff]
        %v1364 = vld [vmem:[%s270 + $0xd0] sm:$0xff]
        %v1365 = vld [vmem:[%s270 + $0xd8] sm:$0xff]
        %v1366 = vld [vmem:[%s270 + $0xe0] sm:$0xff]
        %v1367 = vld [vmem:[%s270 + $0xe8] sm:$0xff]
        %v1368 = vld [vmem:[%s270 + $0xf0] sm:$0xff]
        %v1369 = vld [vmem:[%s270 + $0xf8] sm:$0xff]
        %v1370 = vunpack.c.l.bf16 %v1338
        %v1371 = vunpack.c.h.bf16 %v1338
        %v1372 = vunpack.c.l.bf16 %v1339
        %v1373 = vunpack.c.h.bf16 %v1339
        %v1374 = vunpack.c.l.bf16 %v1340
        %v1375 = vunpack.c.h.bf16 %v1340
        %v1376 = vunpack.c.l.bf16 %v1341
        %v1377 = vunpack.c.h.bf16 %v1341
        %v1378 = vunpack.c.l.bf16 %v1342
        %v1379 = vunpack.c.h.bf16 %v1342
        %v1380 = vunpack.c.l.bf16 %v1343
        %v1381 = vunpack.c.h.bf16 %v1343
        %v1382 = vunpack.c.l.bf16 %v1344
        %v1383 = vunpack.c.h.bf16 %v1344
        %v1384 = vunpack.c.l.bf16 %v1345
        %v1385 = vunpack.c.h.bf16 %v1345
        %v1386 = vunpack.c.l.bf16 %v1346
        %v1387 = vunpack.c.h.bf16 %v1346
        %v1388 = vunpack.c.l.bf16 %v1347
        %v1389 = vunpack.c.h.bf16 %v1347
        %v1390 = vunpack.c.l.bf16 %v1348
        %v1391 = vunpack.c.h.bf16 %v1348
        %v1392 = vunpack.c.l.bf16 %v1349
        %v1393 = vunpack.c.h.bf16 %v1349
        %v1394 = vunpack.c.l.bf16 %v1350
        %v1395 = vunpack.c.h.bf16 %v1350
        %v1396 = vunpack.c.l.bf16 %v1351
        %v1397 = vunpack.c.h.bf16 %v1351
        %v1398 = vunpack.c.l.bf16 %v1352
        %v1399 = vunpack.c.h.bf16 %v1352
        %v1400 = vunpack.c.l.bf16 %v1353
        %v1401 = vunpack.c.h.bf16 %v1353
        %v1402 = vunpack.c.l.bf16 %v1354
        %v1403 = vunpack.c.h.bf16 %v1354
        %v1404 = vunpack.c.l.bf16 %v1355
        %v1405 = vunpack.c.h.bf16 %v1355
        %v1406 = vunpack.c.l.bf16 %v1356
        %v1407 = vunpack.c.h.bf16 %v1356
        %v1408 = vunpack.c.l.bf16 %v1357
        %v1409 = vunpack.c.h.bf16 %v1357
        %v1410 = vunpack.c.l.bf16 %v1358
        %v1411 = vunpack.c.h.bf16 %v1358
        %v1412 = vunpack.c.l.bf16 %v1359
        %v1413 = vunpack.c.h.bf16 %v1359
        %v1414 = vunpack.c.l.bf16 %v1360
        %v1415 = vunpack.c.h.bf16 %v1360
        %v1416 = vunpack.c.l.bf16 %v1361
        %v1417 = vunpack.c.h.bf16 %v1361
        %v1418 = vunpack.c.l.bf16 %v1362
        %v1419 = vunpack.c.h.bf16 %v1362
        %v1420 = vunpack.c.l.bf16 %v1363
        %v1421 = vunpack.c.h.bf16 %v1363
        %v1422 = vunpack.c.l.bf16 %v1364
        %v1423 = vunpack.c.h.bf16 %v1364
        %v1424 = vunpack.c.l.bf16 %v1365
        %v1425 = vunpack.c.h.bf16 %v1365
        %v1426 = vunpack.c.l.bf16 %v1366
        %v1427 = vunpack.c.h.bf16 %v1366
        %v1428 = vunpack.c.l.bf16 %v1367
        %v1429 = vunpack.c.h.bf16 %v1367
        %v1430 = vunpack.c.l.bf16 %v1368
        %v1431 = vunpack.c.h.bf16 %v1368
        %v1432 = vunpack.c.l.bf16 %v1369
        %v1433 = vunpack.c.h.bf16 %v1369
        %v1466 = vunpack.c.l.b16 %v1306
        %v1467 = vunpack.c.l.b16 %v1307
        %v1468 = vunpack.c.l.b16 %v1308
        %v1469 = vunpack.c.l.b16 %v1309
        %v1470 = vunpack.c.l.b16 %v1310
        %v1471 = vunpack.c.l.b16 %v1311
        %v1472 = vunpack.c.l.b16 %v1312
        %v1473 = vunpack.c.l.b16 %v1313
        %v1474 = vunpack.c.l.b16 %v1314
        %v1475 = vunpack.c.l.b16 %v1315
        %v1476 = vunpack.c.l.b16 %v1316
        %v1477 = vunpack.c.l.b16 %v1317
        %v1478 = vunpack.c.l.b16 %v1318
        %v1479 = vunpack.c.l.b16 %v1319
        %v1480 = vunpack.c.l.b16 %v1320
        %v1481 = vunpack.c.l.b16 %v1321
        %v1482 = vunpack.c.l.b16 %v1322
        %v1483 = vunpack.c.l.b16 %v1323
        %v1484 = vunpack.c.l.b16 %v1324
        %v1485 = vunpack.c.l.b16 %v1325
        %v1486 = vunpack.c.l.b16 %v1326
        %v1487 = vunpack.c.l.b16 %v1327
        %v1488 = vunpack.c.l.b16 %v1328
        %v1489 = vunpack.c.l.b16 %v1329
        %v1490 = vunpack.c.l.b16 %v1330
        %v1491 = vunpack.c.l.b16 %v1331
        %v1492 = vunpack.c.l.b16 %v1332
        %v1493 = vunpack.c.l.b16 %v1333
        %v1494 = vunpack.c.l.b16 %v1334
        %v1495 = vunpack.c.l.b16 %v1335
        %v1496 = vunpack.c.l.b16 %v1336
        %v1497 = vunpack.c.l.b16 %v1337
        %v1498 = vpack.c.b16 %v1467, %v1466
        %v1499 = vpack.c.b16 %v1469, %v1468
        %v1500 = vpack.c.b16 %v1471, %v1470
        %v1501 = vpack.c.b16 %v1473, %v1472
        %v1502 = vpack.c.b16 %v1475, %v1474
        %v1503 = vpack.c.b16 %v1477, %v1476
        %v1504 = vpack.c.b16 %v1479, %v1478
        %v1505 = vpack.c.b16 %v1481, %v1480
        %v1506 = vpack.c.b16 %v1483, %v1482
        %v1507 = vpack.c.b16 %v1485, %v1484
        %v1508 = vpack.c.b16 %v1487, %v1486
        %v1509 = vpack.c.b16 %v1489, %v1488
        %v1510 = vpack.c.b16 %v1491, %v1490
        %v1511 = vpack.c.b16 %v1493, %v1492
        %v1512 = vpack.c.b16 %v1495, %v1494
        %v1513 = vpack.c.b16 %v1497, %v1496
        %v1546 = vunpack.c.l.b16 %v1242
        %v1547 = vunpack.c.l.b16 %v1243
        %v1548 = vunpack.c.l.b16 %v1244
        %v1549 = vunpack.c.l.b16 %v1245
        %v1550 = vunpack.c.l.b16 %v1246
        %v1551 = vunpack.c.l.b16 %v1247
        %v1552 = vunpack.c.l.b16 %v1248
        %v1553 = vunpack.c.l.b16 %v1249
        %v1554 = vunpack.c.l.b16 %v1250
        %v1555 = vunpack.c.l.b16 %v1251
        %v1556 = vunpack.c.l.b16 %v1252
        %v1557 = vunpack.c.l.b16 %v1253
        %v1558 = vunpack.c.l.b16 %v1254
        %v1559 = vunpack.c.l.b16 %v1255
        %v1560 = vunpack.c.l.b16 %v1256
        %v1561 = vunpack.c.l.b16 %v1257
        %v1562 = vunpack.c.l.b16 %v1258
        %v1563 = vunpack.c.l.b16 %v1259
        %v1564 = vunpack.c.l.b16 %v1260
        %v1565 = vunpack.c.l.b16 %v1261
        %v1566 = vunpack.c.l.b16 %v1262
        %v1567 = vunpack.c.l.b16 %v1263
        %v1568 = vunpack.c.l.b16 %v1264
        %v1569 = vunpack.c.l.b16 %v1265
        %v1570 = vunpack.c.l.b16 %v1266
        %v1571 = vunpack.c.l.b16 %v1267
        %v1572 = vunpack.c.l.b16 %v1268
        %v1573 = vunpack.c.l.b16 %v1269
        %v1574 = vunpack.c.l.b16 %v1270
        %v1575 = vunpack.c.l.b16 %v1271
        %v1576 = vunpack.c.l.b16 %v1272
        %v1577 = vunpack.c.l.b16 %v1273
        %v1578 = vpack.c.b16 %v1547, %v1546
        %v1579 = vpack.c.b16 %v1549, %v1548
        %v1580 = vpack.c.b16 %v1551, %v1550
        %v1581 = vpack.c.b16 %v1553, %v1552
        %v1582 = vpack.c.b16 %v1555, %v1554
        %v1583 = vpack.c.b16 %v1557, %v1556
        %v1584 = vpack.c.b16 %v1559, %v1558
        %v1585 = vpack.c.b16 %v1561, %v1560
        %v1586 = vpack.c.b16 %v1563, %v1562
        %v1587 = vpack.c.b16 %v1565, %v1564
        %v1588 = vpack.c.b16 %v1567, %v1566
        %v1589 = vpack.c.b16 %v1569, %v1568
        %v1590 = vpack.c.b16 %v1571, %v1570
        %v1591 = vpack.c.b16 %v1573, %v1572
        %v1592 = vpack.c.b16 %v1575, %v1574
        %v1593 = vpack.c.b16 %v1577, %v1576
        %vm1594 = vcmask 261120
        %v1596 = vsel %vm1594, %v1498, 0
        %v1599 = vsel %vm1594, %v1499, 0
        %v1602 = vsel %vm1594, %v1500, 0
        %v1605 = vsel %vm1594, %v1501, 0
        %v1608 = vsel %vm1594, %v1502, 0
        %v1611 = vsel %vm1594, %v1503, 0
        %v1614 = vsel %vm1594, %v1504, 0
        %v1617 = vsel %vm1594, %v1505, 0
        %v1620 = vsel %vm1594, %v1506, 0
        %v1623 = vsel %vm1594, %v1507, 0
        %v1626 = vsel %vm1594, %v1508, 0
        %v1629 = vsel %vm1594, %v1509, 0
        %v1632 = vsel %vm1594, %v1510, 0
        %v1635 = vsel %vm1594, %v1511, 0
        %v1638 = vsel %vm1594, %v1512, 0
        %v1641 = vsel %vm1594, %v1513, 0
        %v1644 = vsel %vm1594, %v1578, 0
        %v1647 = vsel %vm1594, %v1579, 0
        %v1650 = vsel %vm1594, %v1580, 0
        %v1653 = vsel %vm1594, %v1581, 0
        %v1656 = vsel %vm1594, %v1582, 0
        %v1659 = vsel %vm1594, %v1583, 0
        %v1662 = vsel %vm1594, %v1584, 0
        %v1665 = vsel %vm1594, %v1585, 0
        %v1668 = vsel %vm1594, %v1586, 0
        %v1671 = vsel %vm1594, %v1587, 0
        %v1674 = vsel %vm1594, %v1588, 0
        %v1677 = vsel %vm1594, %v1589, 0
        %v1680 = vsel %vm1594, %v1590, 0
        %v1683 = vsel %vm1594, %v1591, 0
        %v1686 = vsel %vm1594, %v1592, 0
        %v1689 = vsel %vm1594, %v1593, 0
        %1691 = vmatpush.bf16.xpose.msra.mxu0 %v1665
        %1692 = vmatpush.bf16.xpose.msra.mxu0 %v1662
        %1693 = vmatpush.bf16.xpose.msra.mxu0 %v1659
        %1694 = vmatpush.bf16.xpose.msra.mxu0 %v1656
        %1695 = vmatpush.bf16.xpose.msra.mxu0 %v1653
        %1696 = vmatpush.bf16.xpose.msra.mxu0 %v1650
        %1697 = vmatpush.bf16.xpose.msra.mxu0 %v1647
        %1698 = vmatpush.bf16.xpose.msra.mxu0 %v1644
        %1699 = vmatmul.bf16.gmra.mxu0 %v1596
        %v1700 = vpop.f32.mrf.mxu0
        %v1701 = vadd.f32 %v1370, %v1700
        %v1702 = vpop.f32.mrf.mxu0
        %v1703 = vadd.f32 %v1372, %v1702
        %1704 = vmatmul.bf16.gmra.mxu0 %v1599
        %v1705 = vpop.f32.mrf.mxu0
        %v1706 = vadd.f32 %v1374, %v1705
        %v1707 = vpop.f32.mrf.mxu0
        %v1708 = vadd.f32 %v1376, %v1707
        %1709 = vmatmul.bf16.gmra.mxu0 %v1602
        %v1710 = vpop.f32.mrf.mxu0
        %v1711 = vadd.f32 %v1378, %v1710
        %v1712 = vpop.f32.mrf.mxu0
        %v1713 = vadd.f32 %v1380, %v1712
        %1714 = vmatmul.bf16.gmra.mxu0 %v1605
        %v1715 = vpop.f32.mrf.mxu0
        %v1716 = vadd.f32 %v1382, %v1715
        %v1717 = vpop.f32.mrf.mxu0
        %v1718 = vadd.f32 %v1384, %v1717
        %1719 = vmatmul.bf16.gmra.mxu0 %v1608
        %v1720 = vpop.f32.mrf.mxu0
        %v1721 = vadd.f32 %v1386, %v1720
        %v1722 = vpop.f32.mrf.mxu0
        %v1723 = vadd.f32 %v1388, %v1722
        %1724 = vmatmul.bf16.gmra.mxu0 %v1611
        %v1725 = vpop.f32.mrf.mxu0
        %v1726 = vadd.f32 %v1390, %v1725
        %v1727 = vpop.f32.mrf.mxu0
        %v1728 = vadd.f32 %v1392, %v1727
        %1729 = vmatmul.bf16.gmra.mxu0 %v1614
        %v1730 = vpop.f32.mrf.mxu0
        %v1731 = vadd.f32 %v1394, %v1730
        %v1732 = vpop.f32.mrf.mxu0
        %v1733 = vadd.f32 %v1396, %v1732
        %1734 = vmatmul.bf16.gmra.mxu0 %v1617
        %v1735 = vpop.f32.mrf.mxu0
        %v1736 = vadd.f32 %v1398, %v1735
        %v1737 = vpop.f32.mrf.mxu0
        %v1738 = vadd.f32 %v1400, %v1737
        %1739 = vmatmul.bf16.gmra.mxu0 %v1620
        %v1740 = vpop.f32.mrf.mxu0
        %v1741 = vadd.f32 %v1402, %v1740
        %v1742 = vpop.f32.mrf.mxu0
        %v1743 = vadd.f32 %v1404, %v1742
        %1744 = vmatmul.bf16.gmra.mxu0 %v1623
        %v1745 = vpop.f32.mrf.mxu0
        %v1746 = vadd.f32 %v1406, %v1745
        %v1747 = vpop.f32.mrf.mxu0
        %v1748 = vadd.f32 %v1408, %v1747
        %1749 = vmatmul.bf16.gmra.mxu0 %v1626
        %v1750 = vpop.f32.mrf.mxu0
        %v1751 = vadd.f32 %v1410, %v1750
        %v1752 = vpop.f32.mrf.mxu0
        %v1753 = vadd.f32 %v1412, %v1752
        %1754 = vmatmul.bf16.gmra.mxu0 %v1629
        %v1755 = vpop.f32.mrf.mxu0
        %v1756 = vadd.f32 %v1414, %v1755
        %v1757 = vpop.f32.mrf.mxu0
        %v1758 = vadd.f32 %v1416, %v1757
        %1759 = vmatmul.bf16.gmra.mxu0 %v1632
        %v1760 = vpop.f32.mrf.mxu0
        %v1761 = vadd.f32 %v1418, %v1760
        %v1762 = vpop.f32.mrf.mxu0
        %v1763 = vadd.f32 %v1420, %v1762
        %1764 = vmatmul.bf16.gmra.mxu0 %v1635
        %v1765 = vpop.f32.mrf.mxu0
        %v1766 = vadd.f32 %v1422, %v1765
        %v1767 = vpop.f32.mrf.mxu0
        %v1768 = vadd.f32 %v1424, %v1767
        %1769 = vmatmul.bf16.gmra.mxu0 %v1638
        %v1770 = vpop.f32.mrf.mxu0
        %v1771 = vadd.f32 %v1426, %v1770
        %v1772 = vpop.f32.mrf.mxu0
        %v1773 = vadd.f32 %v1428, %v1772
        %1774 = vmatmul.bf16.gmra.mxu0 %v1641
        %v1775 = vpop.f32.mrf.mxu0
        %v1776 = vadd.f32 %v1430, %v1775
        %v1777 = vpop.f32.mrf.mxu0
        %v1778 = vadd.f32 %v1432, %v1777
        %1779 = vdwg.mxu0
        %1780 = vmatpush.bf16.xpose.msra.mxu0 %v1689
        %1781 = vmatpush.bf16.xpose.msra.mxu0 %v1686
        %1782 = vmatpush.bf16.xpose.msra.mxu0 %v1683
        %1783 = vmatpush.bf16.xpose.msra.mxu0 %v1680
        %1784 = vmatpush.bf16.xpose.msra.mxu0 %v1677
        %1785 = vmatpush.bf16.xpose.msra.mxu0 %v1674
        %1786 = vmatpush.bf16.xpose.msra.mxu0 %v1671
        %1787 = vmatpush.bf16.xpose.msra.mxu0 %v1668
        %1788 = vmatmul.bf16.gmra.mxu0 %v1596
        %v1789 = vpop.f32.mrf.mxu0
        %v1790 = vadd.f32 %v1371, %v1789
        %v1791 = vpop.f32.mrf.mxu0
        %v1792 = vadd.f32 %v1373, %v1791
        %1793 = vmatmul.bf16.gmra.mxu0 %v1599
        %v1794 = vpop.f32.mrf.mxu0
        %v1795 = vadd.f32 %v1375, %v1794
        %v1796 = vpop.f32.mrf.mxu0
        %v1797 = vadd.f32 %v1377, %v1796
        %1798 = vmatmul.bf16.gmra.mxu0 %v1602
        %v1799 = vpop.f32.mrf.mxu0
        %v1800 = vadd.f32 %v1379, %v1799
        %v1801 = vpop.f32.mrf.mxu0
        %v1802 = vadd.f32 %v1381, %v1801
        %1803 = vmatmul.bf16.gmra.mxu0 %v1605
        %v1804 = vpop.f32.mrf.mxu0
        %v1805 = vadd.f32 %v1383, %v1804
        %v1806 = vpop.f32.mrf.mxu0
        %v1807 = vadd.f32 %v1385, %v1806
        %1808 = vmatmul.bf16.gmra.mxu0 %v1608
        %v1809 = vpop.f32.mrf.mxu0
        %v1810 = vadd.f32 %v1387, %v1809
        %v1811 = vpop.f32.mrf.mxu0
        %v1812 = vadd.f32 %v1389, %v1811
        %1813 = vmatmul.bf16.gmra.mxu0 %v1611
        %v1814 = vpop.f32.mrf.mxu0
        %v1815 = vadd.f32 %v1391, %v1814
        %v1816 = vpop.f32.mrf.mxu0
        %v1817 = vadd.f32 %v1393, %v1816
        %1818 = vmatmul.bf16.gmra.mxu0 %v1614
        %v1819 = vpop.f32.mrf.mxu0
        %v1820 = vadd.f32 %v1395, %v1819
        %v1821 = vpop.f32.mrf.mxu0
        %v1822 = vadd.f32 %v1397, %v1821
        %1823 = vmatmul.bf16.gmra.mxu0 %v1617
        %v1824 = vpop.f32.mrf.mxu0
        %v1825 = vadd.f32 %v1399, %v1824
        %v1826 = vpop.f32.mrf.mxu0
        %v1827 = vadd.f32 %v1401, %v1826
        %1828 = vmatmul.bf16.gmra.mxu0 %v1620
        %v1829 = vpop.f32.mrf.mxu0
        %v1830 = vadd.f32 %v1403, %v1829
        %v1831 = vpop.f32.mrf.mxu0
        %v1832 = vadd.f32 %v1405, %v1831
        %1833 = vmatmul.bf16.gmra.mxu0 %v1623
        %v1834 = vpop.f32.mrf.mxu0
        %v1835 = vadd.f32 %v1407, %v1834
        %v1836 = vpop.f32.mrf.mxu0
        %v1837 = vadd.f32 %v1409, %v1836
        %1838 = vmatmul.bf16.gmra.mxu0 %v1626
        %v1839 = vpop.f32.mrf.mxu0
        %v1840 = vadd.f32 %v1411, %v1839
        %v1841 = vpop.f32.mrf.mxu0
        %v1842 = vadd.f32 %v1413, %v1841
        %1843 = vmatmul.bf16.gmra.mxu0 %v1629
        %v1844 = vpop.f32.mrf.mxu0
        %v1845 = vadd.f32 %v1415, %v1844
        %v1846 = vpop.f32.mrf.mxu0
        %v1847 = vadd.f32 %v1417, %v1846
        %1848 = vmatmul.bf16.gmra.mxu0 %v1632
        %v1849 = vpop.f32.mrf.mxu0
        %v1850 = vadd.f32 %v1419, %v1849
        %v1851 = vpop.f32.mrf.mxu0
        %v1852 = vadd.f32 %v1421, %v1851
        %1853 = vmatmul.bf16.gmra.mxu0 %v1635
        %v1854 = vpop.f32.mrf.mxu0
        %v1855 = vadd.f32 %v1423, %v1854
        %v1856 = vpop.f32.mrf.mxu0
        %v1857 = vadd.f32 %v1425, %v1856
        %1858 = vmatmul.bf16.gmra.mxu0 %v1638
        %v1859 = vpop.f32.mrf.mxu0
        %v1860 = vadd.f32 %v1427, %v1859
        %v1861 = vpop.f32.mrf.mxu0
        %v1862 = vadd.f32 %v1429, %v1861
        %1863 = vmatmul.bf16.gmra.mxu0 %v1641
        %v1864 = vpop.f32.mrf.mxu0
        %v1865 = vadd.f32 %v1431, %v1864
        %v1866 = vpop.f32.mrf.mxu0
        %v1867 = vadd.f32 %v1433, %v1866
        %1868 = vdwg.mxu0
        %v1869 = vld [vmem:[#allocation3] sm:$0xff]
        %v1870 = vld [vmem:[#allocation3 + $0x8] sm:$0xff]
        %v1871 = vld [vmem:[#allocation3 + $0x10] sm:$0xff]
        %v1872 = vld [vmem:[#allocation3 + $0x18] sm:$0xff]
        %v1873 = vld [vmem:[#allocation3 + $0x20] sm:$0xff]
        %v1874 = vld [vmem:[#allocation3 + $0x28] sm:$0xff]
        %v1875 = vld [vmem:[#allocation3 + $0x30] sm:$0xff]
        %v1876 = vld [vmem:[#allocation3 + $0x38] sm:$0xff]
        %v1877 = vld [vmem:[#allocation3 + $0x40] sm:$0xff]
        %v1878 = vld [vmem:[#allocation3 + $0x48] sm:$0xff]
        %v1879 = vld [vmem:[#allocation3 + $0x50] sm:$0xff]
        %v1880 = vld [vmem:[#allocation3 + $0x58] sm:$0xff]
        %v1881 = vld [vmem:[#allocation3 + $0x60] sm:$0xff]
        %v1882 = vld [vmem:[#allocation3 + $0x68] sm:$0xff]
        %v1883 = vld [vmem:[#allocation3 + $0x70] sm:$0xff]
        %v1884 = vld [vmem:[#allocation3 + $0x78] sm:$0xff]
        %v1885 = vld [vmem:[#allocation3 + $0x80] sm:$0xff]
        %v1886 = vld [vmem:[#allocation3 + $0x88] sm:$0xff]
        %v1887 = vld [vmem:[#allocation3 + $0x90] sm:$0xff]
        %v1888 = vld [vmem:[#allocation3 + $0x98] sm:$0xff]
        %v1889 = vld [vmem:[#allocation3 + $0xa0] sm:$0xff]
        %v1890 = vld [vmem:[#allocation3 + $0xa8] sm:$0xff]
        %v1891 = vld [vmem:[#allocation3 + $0xb0] sm:$0xff]
        %v1892 = vld [vmem:[#allocation3 + $0xb8] sm:$0xff]
        %v1893 = vld [vmem:[#allocation3 + $0xc0] sm:$0xff]
        %v1894 = vld [vmem:[#allocation3 + $0xc8] sm:$0xff]
        %v1895 = vld [vmem:[#allocation3 + $0xd0] sm:$0xff]
        %v1896 = vld [vmem:[#allocation3 + $0xd8] sm:$0xff]
        %v1897 = vld [vmem:[#allocation3 + $0xe0] sm:$0xff]
        %v1898 = vld [vmem:[#allocation3 + $0xe8] sm:$0xff]
        %v1899 = vld [vmem:[#allocation3 + $0xf0] sm:$0xff]
        %v1900 = vld [vmem:[#allocation3 + $0xf8] sm:$0xff]
        %v1901 = vmax.f32 %v1701, %v1790
        %1902 = vmax.xlane.f32.xlu0 %v1901
        %v1903 = vpop.xlane.xlu0 %1902
        %v1904 = vmax.f32 %v1703, %v1792
        %1905 = vmax.xlane.f32.xlu0 %v1904
        %v1906 = vpop.xlane.xlu0 %1905
        %v1907 = vmax.f32 %v1706, %v1795
        %1908 = vmax.xlane.f32.xlu0 %v1907
        %v1909 = vpop.xlane.xlu0 %1908
        %v1910 = vmax.f32 %v1708, %v1797
        %1911 = vmax.xlane.f32.xlu0 %v1910
        %v1912 = vpop.xlane.xlu0 %1911
        %v1913 = vmax.f32 %v1711, %v1800
        %1914 = vmax.xlane.f32.xlu0 %v1913
        %v1915 = vpop.xlane.xlu0 %1914
        %v1916 = vmax.f32 %v1713, %v1802
        %1917 = vmax.xlane.f32.xlu0 %v1916
        %v1918 = vpop.xlane.xlu0 %1917
        %v1919 = vmax.f32 %v1716, %v1805
        %1920 = vmax.xlane.f32.xlu0 %v1919
        %v1921 = vpop.xlane.xlu0 %1920
        %v1922 = vmax.f32 %v1718, %v1807
        %1923 = vmax.xlane.f32.xlu0 %v1922
        %v1924 = vpop.xlane.xlu0 %1923
        %v1925 = vmax.f32 %v1721, %v1810
        %1926 = vmax.xlane.f32.xlu0 %v1925
        %v1927 = vpop.xlane.xlu0 %1926
        %v1928 = vmax.f32 %v1723, %v1812
        %1929 = vmax.xlane.f32.xlu0 %v1928
        %v1930 = vpop.xlane.xlu0 %1929
        %v1931 = vmax.f32 %v1726, %v1815
        %1932 = vmax.xlane.f32.xlu0 %v1931
        %v1933 = vpop.xlane.xlu0 %1932
        %v1934 = vmax.f32 %v1728, %v1817
        %1935 = vmax.xlane.f32.xlu0 %v1934
        %v1936 = vpop.xlane.xlu0 %1935
        %v1937 = vmax.f32 %v1731, %v1820
        %1938 = vmax.xlane.f32.xlu0 %v1937
        %v1939 = vpop.xlane.xlu0 %1938
        %v1940 = vmax.f32 %v1733, %v1822
        %1941 = vmax.xlane.f32.xlu0 %v1940
        %v1942 = vpop.xlane.xlu0 %1941
        %v1943 = vmax.f32 %v1736, %v1825
        %1944 = vmax.xlane.f32.xlu0 %v1943
        %v1945 = vpop.xlane.xlu0 %1944
        %v1946 = vmax.f32 %v1738, %v1827
        %1947 = vmax.xlane.f32.xlu0 %v1946
        %v1948 = vpop.xlane.xlu0 %1947
        %v1949 = vmax.f32 %v1741, %v1830
        %1950 = vmax.xlane.f32.xlu0 %v1949
        %v1951 = vpop.xlane.xlu0 %1950
        %v1952 = vmax.f32 %v1743, %v1832
        %1953 = vmax.xlane.f32.xlu0 %v1952
        %v1954 = vpop.xlane.xlu0 %1953
        %v1955 = vmax.f32 %v1746, %v1835
        %1956 = vmax.xlane.f32.xlu0 %v1955
        %v1957 = vpop.xlane.xlu0 %1956
        %v1958 = vmax.f32 %v1748, %v1837
        %1959 = vmax.xlane.f32.xlu0 %v1958
        %v1960 = vpop.xlane.xlu0 %1959
        %v1961 = vmax.f32 %v1751, %v1840
        %1962 = vmax.xlane.f32.xlu0 %v1961
        %v1963 = vpop.xlane.xlu0 %1962
        %v1964 = vmax.f32 %v1753, %v1842
        %1965 = vmax.xlane.f32.xlu0 %v1964
        %v1966 = vpop.xlane.xlu0 %1965
        %v1967 = vmax.f32 %v1756, %v1845
        %1968 = vmax.xlane.f32.xlu0 %v1967
        %v1969 = vpop.xlane.xlu0 %1968
        %v1970 = vmax.f32 %v1758, %v1847
        %1971 = vmax.xlane.f32.xlu0 %v1970
        %v1972 = vpop.xlane.xlu0 %1971
        %v1973 = vmax.f32 %v1761, %v1850
        %1974 = vmax.xlane.f32.xlu0 %v1973
        %v1975 = vpop.xlane.xlu0 %1974
        %v1976 = vmax.f32 %v1763, %v1852
        %1977 = vmax.xlane.f32.xlu0 %v1976
        %v1978 = vpop.xlane.xlu0 %1977
        %v1979 = vmax.f32 %v1766, %v1855
        %1980 = vmax.xlane.f32.xlu0 %v1979
        %v1981 = vpop.xlane.xlu0 %1980
        %v1982 = vmax.f32 %v1768, %v1857
        %1983 = vmax.xlane.f32.xlu0 %v1982
        %v1984 = vpop.xlane.xlu0 %1983
        %v1985 = vmax.f32 %v1771, %v1860
        %1986 = vmax.xlane.f32.xlu0 %v1985
        %v1987 = vpop.xlane.xlu0 %1986
        %v1988 = vmax.f32 %v1773, %v1862
        %1989 = vmax.xlane.f32.xlu0 %v1988
        %v1990 = vpop.xlane.xlu0 %1989
        %v1991 = vmax.f32 %v1776, %v1865
        %1992 = vmax.xlane.f32.xlu0 %v1991
        %v1993 = vpop.xlane.xlu0 %1992
        %v1994 = vmax.f32 %v1778, %v1867
        %1995 = vmax.xlane.f32.xlu0 %v1994
        %v1996 = vpop.xlane.xlu0 %1995
        %v1997 = vmax.f32 %v1869, %v1903
        %v1998 = vmax.f32 %v1870, %v1906
        %v1999 = vmax.f32 %v1871, %v1909
        %v2000 = vmax.f32 %v1872, %v1912
        %v2001 = vmax.f32 %v1873, %v1915
        %v2002 = vmax.f32 %v1874, %v1918
        %v2003 = vmax.f32 %v1875, %v1921
        %v2004 = vmax.f32 %v1876, %v1924
        %v2005 = vmax.f32 %v1877, %v1927
        %v2006 = vmax.f32 %v1878, %v1930
        %v2007 = vmax.f32 %v1879, %v1933
        %v2008 = vmax.f32 %v1880, %v1936
        %v2009 = vmax.f32 %v1881, %v1939
        %v2010 = vmax.f32 %v1882, %v1942
        %v2011 = vmax.f32 %v1883, %v1945
        %v2012 = vmax.f32 %v1884, %v1948
        %v2013 = vmax.f32 %v1885, %v1951
        %v2014 = vmax.f32 %v1886, %v1954
        %v2015 = vmax.f32 %v1887, %v1957
        %v2016 = vmax.f32 %v1888, %v1960
        %v2017 = vmax.f32 %v1889, %v1963
        %v2018 = vmax.f32 %v1890, %v1966
        %v2019 = vmax.f32 %v1891, %v1969
        %v2020 = vmax.f32 %v1892, %v1972
        %v2021 = vmax.f32 %v1893, %v1975
        %v2022 = vmax.f32 %v1894, %v1978
        %v2023 = vmax.f32 %v1895, %v1981
        %v2024 = vmax.f32 %v1896, %v1984
        %v2025 = vmax.f32 %v1897, %v1987
        %v2026 = vmax.f32 %v1898, %v1990
        %v2027 = vmax.f32 %v1899, %v1993
        %v2028 = vmax.f32 %v1900, %v1996
        %vm2029 = vcmp.eq.f32.partialorder %v1997, -inf
        %vm2030 = vcmp.eq.f32.partialorder %v1998, -inf
        %vm2031 = vcmp.eq.f32.partialorder %v1999, -inf
        %vm2032 = vcmp.eq.f32.partialorder %v2000, -inf
        %vm2033 = vcmp.eq.f32.partialorder %v2001, -inf
        %vm2034 = vcmp.eq.f32.partialorder %v2002, -inf
        %vm2035 = vcmp.eq.f32.partialorder %v2003, -inf
        %vm2036 = vcmp.eq.f32.partialorder %v2004, -inf
        %vm2037 = vcmp.eq.f32.partialorder %v2005, -inf
        %vm2038 = vcmp.eq.f32.partialorder %v2006, -inf
        %vm2039 = vcmp.eq.f32.partialorder %v2007, -inf
        %vm2040 = vcmp.eq.f32.partialorder %v2008, -inf
        %vm2041 = vcmp.eq.f32.partialorder %v2009, -inf
        %vm2042 = vcmp.eq.f32.partialorder %v2010, -inf
        %vm2043 = vcmp.eq.f32.partialorder %v2011, -inf
        %vm2044 = vcmp.eq.f32.partialorder %v2012, -inf
        %vm2045 = vcmp.eq.f32.partialorder %v2013, -inf
        %vm2046 = vcmp.eq.f32.partialorder %v2014, -inf
        %vm2047 = vcmp.eq.f32.partialorder %v2015, -inf
        %vm2048 = vcmp.eq.f32.partialorder %v2016, -inf
        %vm2049 = vcmp.eq.f32.partialorder %v2017, -inf
        %vm2050 = vcmp.eq.f32.partialorder %v2018, -inf
        %vm2051 = vcmp.eq.f32.partialorder %v2019, -inf
        %vm2052 = vcmp.eq.f32.partialorder %v2020, -inf
        %vm2053 = vcmp.eq.f32.partialorder %v2021, -inf
        %vm2054 = vcmp.eq.f32.partialorder %v2022, -inf
        %vm2055 = vcmp.eq.f32.partialorder %v2023, -inf
        %vm2056 = vcmp.eq.f32.partialorder %v2024, -inf
        %vm2057 = vcmp.eq.f32.partialorder %v2025, -inf
        %vm2058 = vcmp.eq.f32.partialorder %v2026, -inf
        %vm2059 = vcmp.eq.f32.partialorder %v2027, -inf
        %vm2060 = vcmp.eq.f32.partialorder %v2028, -inf
        %v2061 = vsel %vm2029, 0.0, %v1997
        %v2062 = vsel %vm2030, 0.0, %v1998
        %v2063 = vsel %vm2031, 0.0, %v1999
        %v2064 = vsel %vm2032, 0.0, %v2000
        %v2065 = vsel %vm2033, 0.0, %v2001
        %v2066 = vsel %vm2034, 0.0, %v2002
        %v2067 = vsel %vm2035, 0.0, %v2003
        %v2068 = vsel %vm2036, 0.0, %v2004
        %v2069 = vsel %vm2037, 0.0, %v2005
        %v2070 = vsel %vm2038, 0.0, %v2006
        %v2071 = vsel %vm2039, 0.0, %v2007
        %v2072 = vsel %vm2040, 0.0, %v2008
        %v2073 = vsel %vm2041, 0.0, %v2009
        %v2074 = vsel %vm2042, 0.0, %v2010
        %v2075 = vsel %vm2043, 0.0, %v2011
        %v2076 = vsel %vm2044, 0.0, %v2012
        %v2077 = vsel %vm2045, 0.0, %v2013
        %v2078 = vsel %vm2046, 0.0, %v2014
        %v2079 = vsel %vm2047, 0.0, %v2015
        %v2080 = vsel %vm2048, 0.0, %v2016
        %v2081 = vsel %vm2049, 0.0, %v2017
        %v2082 = vsel %vm2050, 0.0, %v2018
        %v2083 = vsel %vm2051, 0.0, %v2019
        %v2084 = vsel %vm2052, 0.0, %v2020
        %v2085 = vsel %vm2053, 0.0, %v2021
        %v2086 = vsel %vm2054, 0.0, %v2022
        %v2087 = vsel %vm2055, 0.0, %v2023
        %v2088 = vsel %vm2056, 0.0, %v2024
        %v2089 = vsel %vm2057, 0.0, %v2025
        %v2090 = vsel %vm2058, 0.0, %v2026
        %v2091 = vsel %vm2059, 0.0, %v2027
        %v2092 = vsel %vm2060, 0.0, %v2028
        %v2093 = vsub.f32 %v1869, %v2061
        %v2094 = vsub.f32 %v1870, %v2062
        %v2095 = vsub.f32 %v1871, %v2063
        %v2096 = vsub.f32 %v1872, %v2064
        %v2097 = vsub.f32 %v1873, %v2065
        %v2098 = vsub.f32 %v1874, %v2066
        %v2099 = vsub.f32 %v1875, %v2067
        %v2100 = vsub.f32 %v1876, %v2068
        %v2101 = vsub.f32 %v1877, %v2069
        %v2102 = vsub.f32 %v1878, %v2070
        %v2103 = vsub.f32 %v1879, %v2071
        %v2104 = vsub.f32 %v1880, %v2072
        %v2105 = vsub.f32 %v1881, %v2073
        %v2106 = vsub.f32 %v1882, %v2074
        %v2107 = vsub.f32 %v1883, %v2075
        %v2108 = vsub.f32 %v1884, %v2076
        %v2109 = vsub.f32 %v1885, %v2077
        %v2110 = vsub.f32 %v1886, %v2078
        %v2111 = vsub.f32 %v1887, %v2079
        %v2112 = vsub.f32 %v1888, %v2080
        %v2113 = vsub.f32 %v1889, %v2081
        %v2114 = vsub.f32 %v1890, %v2082
        %v2115 = vsub.f32 %v1891, %v2083
        %v2116 = vsub.f32 %v1892, %v2084
        %v2117 = vsub.f32 %v1893, %v2085
        %v2118 = vsub.f32 %v1894, %v2086
        %v2119 = vsub.f32 %v1895, %v2087
        %v2120 = vsub.f32 %v1896, %v2088
        %v2121 = vsub.f32 %v1897, %v2089
        %v2122 = vsub.f32 %v1898, %v2090
        %v2123 = vsub.f32 %v1899, %v2091
        %v2124 = vsub.f32 %v1900, %v2092
        %v2125 = vmul.f32 %v2093, 1.442695
        %v2126 = vpow.pop %v2125
        %v2127 = vmul.f32 %v2094, 1.442695
        %v2128 = vpow.pop %v2127
        %v2129 = vmul.f32 %v2095, 1.442695
        %v2130 = vpow.pop %v2129
        %v2131 = vmul.f32 %v2096, 1.442695
        %v2132 = vpow.pop %v2131
        %v2133 = vmul.f32 %v2097, 1.442695
        %v2134 = vpow.pop %v2133
        %v2135 = vmul.f32 %v2098, 1.442695
        %v2136 = vpow.pop %v2135
        %v2137 = vmul.f32 %v2099, 1.442695
        %v2138 = vpow.pop %v2137
        %v2139 = vmul.f32 %v2100, 1.442695
        %v2140 = vpow.pop %v2139
        %v2141 = vmul.f32 %v2101, 1.442695
        %v2142 = vpow.pop %v2141
        %v2143 = vmul.f32 %v2102, 1.442695
        %v2144 = vpow.pop %v2143
        %v2145 = vmul.f32 %v2103, 1.442695
        %v2146 = vpow.pop %v2145
        %v2147 = vmul.f32 %v2104, 1.442695
        %v2148 = vpow.pop %v2147
        %v2149 = vmul.f32 %v2105, 1.442695
        %v2150 = vpow.pop %v2149
        %v2151 = vmul.f32 %v2106, 1.442695
        %v2152 = vpow.pop %v2151
        %v2153 = vmul.f32 %v2107, 1.442695
        %v2154 = vpow.pop %v2153
        %v2155 = vmul.f32 %v2108, 1.442695
        %v2156 = vpow.pop %v2155
        %v2157 = vmul.f32 %v2109, 1.442695
        %v2158 = vpow.pop %v2157
        %v2159 = vmul.f32 %v2110, 1.442695
        %v2160 = vpow.pop %v2159
        %v2161 = vmul.f32 %v2111, 1.442695
        %v2162 = vpow.pop %v2161
        %v2163 = vmul.f32 %v2112, 1.442695
        %v2164 = vpow.pop %v2163
        %v2165 = vmul.f32 %v2113, 1.442695
        %v2166 = vpow.pop %v2165
        %v2167 = vmul.f32 %v2114, 1.442695
        %v2168 = vpow.pop %v2167
        %v2169 = vmul.f32 %v2115, 1.442695
        %v2170 = vpow.pop %v2169
        %v2171 = vmul.f32 %v2116, 1.442695
        %v2172 = vpow.pop %v2171
        %v2173 = vmul.f32 %v2117, 1.442695
        %v2174 = vpow.pop %v2173
        %v2175 = vmul.f32 %v2118, 1.442695
        %v2176 = vpow.pop %v2175
        %v2177 = vmul.f32 %v2119, 1.442695
        %v2178 = vpow.pop %v2177
        %v2179 = vmul.f32 %v2120, 1.442695
        %v2180 = vpow.pop %v2179
        %v2181 = vmul.f32 %v2121, 1.442695
        %v2182 = vpow.pop %v2181
        %v2183 = vmul.f32 %v2122, 1.442695
        %v2184 = vpow.pop %v2183
        %v2185 = vmul.f32 %v2123, 1.442695
        %v2186 = vpow.pop %v2185
        %v2187 = vmul.f32 %v2124, 1.442695
        %v2188 = vpow.pop %v2187
        %2190 = vset.pattern.permute.xlu0 0
        %2191 = vperm.xlu0 %2190, %v2061
        %v2192 = vpop.permute.xlu0 %2191
        %2195 = vset.pattern.permute.xlu0 0
        %2196 = vperm.xlu0 %2195, %v2062
        %v2197 = vpop.permute.xlu0 %2196
        %2200 = vset.pattern.permute.xlu0 0
        %2201 = vperm.xlu0 %2200, %v2063
        %v2202 = vpop.permute.xlu0 %2201
        %2205 = vset.pattern.permute.xlu0 0
        %2206 = vperm.xlu0 %2205, %v2064
        %v2207 = vpop.permute.xlu0 %2206
        %2210 = vset.pattern.permute.xlu0 0
        %2211 = vperm.xlu0 %2210, %v2065
        %v2212 = vpop.permute.xlu0 %2211
        %2215 = vset.pattern.permute.xlu0 0
        %2216 = vperm.xlu0 %2215, %v2066
        %v2217 = vpop.permute.xlu0 %2216
        %2220 = vset.pattern.permute.xlu0 0
        %2221 = vperm.xlu0 %2220, %v2067
        %v2222 = vpop.permute.xlu0 %2221
        %2225 = vset.pattern.permute.xlu0 0
        %2226 = vperm.xlu0 %2225, %v2068
        %v2227 = vpop.permute.xlu0 %2226
        %2230 = vset.pattern.permute.xlu0 0
        %2231 = vperm.xlu0 %2230, %v2069
        %v2232 = vpop.permute.xlu0 %2231
        %2235 = vset.pattern.permute.xlu0 0
        %2236 = vperm.xlu0 %2235, %v2070
        %v2237 = vpop.permute.xlu0 %2236
        %2240 = vset.pattern.permute.xlu0 0
        %2241 = vperm.xlu0 %2240, %v2071
        %v2242 = vpop.permute.xlu0 %2241
        %2245 = vset.pattern.permute.xlu0 0
        %2246 = vperm.xlu0 %2245, %v2072
        %v2247 = vpop.permute.xlu0 %2246
        %2250 = vset.pattern.permute.xlu0 0
        %2251 = vperm.xlu0 %2250, %v2073
        %v2252 = vpop.permute.xlu0 %2251
        %2255 = vset.pattern.permute.xlu0 0
        %2256 = vperm.xlu0 %2255, %v2074
        %v2257 = vpop.permute.xlu0 %2256
        %2260 = vset.pattern.permute.xlu0 0
        %2261 = vperm.xlu0 %2260, %v2075
        %v2262 = vpop.permute.xlu0 %2261
        %2265 = vset.pattern.permute.xlu0 0
        %2266 = vperm.xlu0 %2265, %v2076
        %v2267 = vpop.permute.xlu0 %2266
        %2270 = vset.pattern.permute.xlu0 0
        %2271 = vperm.xlu0 %2270, %v2077
        %v2272 = vpop.permute.xlu0 %2271
        %2275 = vset.pattern.permute.xlu0 0
        %2276 = vperm.xlu0 %2275, %v2078
        %v2277 = vpop.permute.xlu0 %2276
        %2280 = vset.pattern.permute.xlu0 0
        %2281 = vperm.xlu0 %2280, %v2079
        %v2282 = vpop.permute.xlu0 %2281
        %2285 = vset.pattern.permute.xlu0 0
        %2286 = vperm.xlu0 %2285, %v2080
        %v2287 = vpop.permute.xlu0 %2286
        %2290 = vset.pattern.permute.xlu0 0
        %2291 = vperm.xlu0 %2290, %v2081
        %v2292 = vpop.permute.xlu0 %2291
        %2295 = vset.pattern.permute.xlu0 0
        %2296 = vperm.xlu0 %2295, %v2082
        %v2297 = vpop.permute.xlu0 %2296
        %2300 = vset.pattern.permute.xlu0 0
        %2301 = vperm.xlu0 %2300, %v2083
        %v2302 = vpop.permute.xlu0 %2301
        %2305 = vset.pattern.permute.xlu0 0
        %2306 = vperm.xlu0 %2305, %v2084
        %v2307 = vpop.permute.xlu0 %2306
        %2310 = vset.pattern.permute.xlu0 0
        %2311 = vperm.xlu0 %2310, %v2085
        %v2312 = vpop.permute.xlu0 %2311
        %2315 = vset.pattern.permute.xlu0 0
        %2316 = vperm.xlu0 %2315, %v2086
        %v2317 = vpop.permute.xlu0 %2316
        %2320 = vset.pattern.permute.xlu0 0
        %2321 = vperm.xlu0 %2320, %v2087
        %v2322 = vpop.permute.xlu0 %2321
        %2325 = vset.pattern.permute.xlu0 0
        %2326 = vperm.xlu0 %2325, %v2088
        %v2327 = vpop.permute.xlu0 %2326
        %2330 = vset.pattern.permute.xlu0 0
        %2331 = vperm.xlu0 %2330, %v2089
        %v2332 = vpop.permute.xlu0 %2331
        %2335 = vset.pattern.permute.xlu0 0
        %2336 = vperm.xlu0 %2335, %v2090
        %v2337 = vpop.permute.xlu0 %2336
        %2340 = vset.pattern.permute.xlu0 0
        %2341 = vperm.xlu0 %2340, %v2091
        %v2342 = vpop.permute.xlu0 %2341
        %2345 = vset.pattern.permute.xlu0 0
        %2346 = vperm.xlu0 %2345, %v2092
        %v2347 = vpop.permute.xlu0 %2346
        %v2349 = vsub.f32 %v1701, %v2192
        %v2350 = vsub.f32 %v1790, %v2192
        %v2351 = vsub.f32 %v1703, %v2197
        %v2352 = vsub.f32 %v1792, %v2197
        %v2353 = vsub.f32 %v1706, %v2202
        %v2354 = vsub.f32 %v1795, %v2202
        %v2355 = vsub.f32 %v1708, %v2207
        %v2356 = vsub.f32 %v1797, %v2207
        %v2357 = vsub.f32 %v1711, %v2212
        %v2358 = vsub.f32 %v1800, %v2212
        %v2359 = vsub.f32 %v1713, %v2217
        %v2360 = vsub.f32 %v1802, %v2217
        %v2361 = vsub.f32 %v1716, %v2222
        %v2362 = vsub.f32 %v1805, %v2222
        %v2363 = vsub.f32 %v1718, %v2227
        %v2364 = vsub.f32 %v1807, %v2227
        %v2365 = vsub.f32 %v1721, %v2232
        %v2366 = vsub.f32 %v1810, %v2232
        %v2367 = vsub.f32 %v1723, %v2237
        %v2368 = vsub.f32 %v1812, %v2237
        %v2369 = vsub.f32 %v1726, %v2242
        %v2370 = vsub.f32 %v1815, %v2242
        %v2371 = vsub.f32 %v1728, %v2247
        %v2372 = vsub.f32 %v1817, %v2247
        %v2373 = vsub.f32 %v1731, %v2252
        %v2374 = vsub.f32 %v1820, %v2252
        %v2375 = vsub.f32 %v1733, %v2257
        %v2376 = vsub.f32 %v1822, %v2257
        %v2377 = vsub.f32 %v1736, %v2262
        %v2378 = vsub.f32 %v1825, %v2262
        %v2379 = vsub.f32 %v1738, %v2267
        %v2380 = vsub.f32 %v1827, %v2267
        %v2381 = vsub.f32 %v1741, %v2272
        %v2382 = vsub.f32 %v1830, %v2272
        %v2383 = vsub.f32 %v1743, %v2277
        %v2384 = vsub.f32 %v1832, %v2277
        %v2385 = vsub.f32 %v1746, %v2282
        %v2386 = vsub.f32 %v1835, %v2282
        %v2387 = vsub.f32 %v1748, %v2287
        %v2388 = vsub.f32 %v1837, %v2287
        %v2389 = vsub.f32 %v1751, %v2292
        %v2390 = vsub.f32 %v1840, %v2292
        %v2391 = vsub.f32 %v1753, %v2297
        %v2392 = vsub.f32 %v1842, %v2297
        %v2393 = vsub.f32 %v1756, %v2302
        %v2394 = vsub.f32 %v1845, %v2302
        %v2395 = vsub.f32 %v1758, %v2307
        %v2396 = vsub.f32 %v1847, %v2307
        %v2397 = vsub.f32 %v1761, %v2312
        %v2398 = vsub.f32 %v1850, %v2312
        %v2399 = vsub.f32 %v1763, %v2317
        %v2400 = vsub.f32 %v1852, %v2317
        %v2401 = vsub.f32 %v1766, %v2322
        %v2402 = vsub.f32 %v1855, %v2322
        %v2403 = vsub.f32 %v1768, %v2327
        %v2404 = vsub.f32 %v1857, %v2327
        %v2405 = vsub.f32 %v1771, %v2332
        %v2406 = vsub.f32 %v1860, %v2332
        %v2407 = vsub.f32 %v1773, %v2337
        %v2408 = vsub.f32 %v1862, %v2337
        %v2409 = vsub.f32 %v1776, %v2342
        %v2410 = vsub.f32 %v1865, %v2342
        %v2411 = vsub.f32 %v1778, %v2347
        %v2412 = vsub.f32 %v1867, %v2347
        %v2413 = vmul.f32 %v2349, 1.442695
        %v2414 = vpow.pop %v2413
        %v2415 = vmul.f32 %v2350, 1.442695
        %v2416 = vpow.pop %v2415
        %v2417 = vmul.f32 %v2351, 1.442695
        %v2418 = vpow.pop %v2417
        %v2419 = vmul.f32 %v2352, 1.442695
        %v2420 = vpow.pop %v2419
        %v2421 = vmul.f32 %v2353, 1.442695
        %v2422 = vpow.pop %v2421
        %v2423 = vmul.f32 %v2354, 1.442695
        %v2424 = vpow.pop %v2423
        %v2425 = vmul.f32 %v2355, 1.442695
        %v2426 = vpow.pop %v2425
        %v2427 = vmul.f32 %v2356, 1.442695
        %v2428 = vpow.pop %v2427
        %v2429 = vmul.f32 %v2357, 1.442695
        %v2430 = vpow.pop %v2429
        %v2431 = vmul.f32 %v2358, 1.442695
        %v2432 = vpow.pop %v2431
        %v2433 = vmul.f32 %v2359, 1.442695
        %v2434 = vpow.pop %v2433
        %v2435 = vmul.f32 %v2360, 1.442695
        %v2436 = vpow.pop %v2435
        %v2437 = vmul.f32 %v2361, 1.442695
        %v2438 = vpow.pop %v2437
        %v2439 = vmul.f32 %v2362, 1.442695
        %v2440 = vpow.pop %v2439
        %v2441 = vmul.f32 %v2363, 1.442695
        %v2442 = vpow.pop %v2441
        %v2443 = vmul.f32 %v2364, 1.442695
        %v2444 = vpow.pop %v2443
        %v2445 = vmul.f32 %v2365, 1.442695
        %v2446 = vpow.pop %v2445
        %v2447 = vmul.f32 %v2366, 1.442695
        %v2448 = vpow.pop %v2447
        %v2449 = vmul.f32 %v2367, 1.442695
        %v2450 = vpow.pop %v2449
        %v2451 = vmul.f32 %v2368, 1.442695
        %v2452 = vpow.pop %v2451
        %v2453 = vmul.f32 %v2369, 1.442695
        %v2454 = vpow.pop %v2453
        %v2455 = vmul.f32 %v2370, 1.442695
        %v2456 = vpow.pop %v2455
        %v2457 = vmul.f32 %v2371, 1.442695
        %v2458 = vpow.pop %v2457
        %v2459 = vmul.f32 %v2372, 1.442695
        %v2460 = vpow.pop %v2459
        %v2461 = vmul.f32 %v2373, 1.442695
        %v2462 = vpow.pop %v2461
        %v2463 = vmul.f32 %v2374, 1.442695
        %v2464 = vpow.pop %v2463
        %v2465 = vmul.f32 %v2375, 1.442695
        %v2466 = vpow.pop %v2465
        %v2467 = vmul.f32 %v2376, 1.442695
        %v2468 = vpow.pop %v2467
        %v2469 = vmul.f32 %v2377, 1.442695
        %v2470 = vpow.pop %v2469
        %v2471 = vmul.f32 %v2378, 1.442695
        %v2472 = vpow.pop %v2471
        %v2473 = vmul.f32 %v2379, 1.442695
        %v2474 = vpow.pop %v2473
        %v2475 = vmul.f32 %v2380, 1.442695
        %v2476 = vpow.pop %v2475
        %v2477 = vmul.f32 %v2381, 1.442695
        %v2478 = vpow.pop %v2477
        %v2479 = vmul.f32 %v2382, 1.442695
        %v2480 = vpow.pop %v2479
        %v2481 = vmul.f32 %v2383, 1.442695
        %v2482 = vpow.pop %v2481
        %v2483 = vmul.f32 %v2384, 1.442695
        %v2484 = vpow.pop %v2483
        %v2485 = vmul.f32 %v2385, 1.442695
        %v2486 = vpow.pop %v2485
        %v2487 = vmul.f32 %v2386, 1.442695
        %v2488 = vpow.pop %v2487
        %v2489 = vmul.f32 %v2387, 1.442695
        %v2490 = vpow.pop %v2489
        %v2491 = vmul.f32 %v2388, 1.442695
        %v2492 = vpow.pop %v2491
        %v2493 = vmul.f32 %v2389, 1.442695
        %v2494 = vpow.pop %v2493
        %v2495 = vmul.f32 %v2390, 1.442695
        %v2496 = vpow.pop %v2495
        %v2497 = vmul.f32 %v2391, 1.442695
        %v2498 = vpow.pop %v2497
        %v2499 = vmul.f32 %v2392, 1.442695
        %v2500 = vpow.pop %v2499
        %v2501 = vmul.f32 %v2393, 1.442695
        %v2502 = vpow.pop %v2501
        %v2503 = vmul.f32 %v2394, 1.442695
        %v2504 = vpow.pop %v2503
        %v2505 = vmul.f32 %v2395, 1.442695
        %v2506 = vpow.pop %v2505
        %v2507 = vmul.f32 %v2396, 1.442695
        %v2508 = vpow.pop %v2507
        %v2509 = vmul.f32 %v2397, 1.442695
        %v2510 = vpow.pop %v2509
        %v2511 = vmul.f32 %v2398, 1.442695
        %v2512 = vpow.pop %v2511
        %v2513 = vmul.f32 %v2399, 1.442695
        %v2514 = vpow.pop %v2513
        %v2515 = vmul.f32 %v2400, 1.442695
        %v2516 = vpow.pop %v2515
        %v2517 = vmul.f32 %v2401, 1.442695
        %v2518 = vpow.pop %v2517
        %v2519 = vmul.f32 %v2402, 1.442695
        %v2520 = vpow.pop %v2519
        %v2521 = vmul.f32 %v2403, 1.442695
        %v2522 = vpow.pop %v2521
        %v2523 = vmul.f32 %v2404, 1.442695
        %v2524 = vpow.pop %v2523
        %v2525 = vmul.f32 %v2405, 1.442695
        %v2526 = vpow.pop %v2525
        %v2527 = vmul.f32 %v2406, 1.442695
        %v2528 = vpow.pop %v2527
        %v2529 = vmul.f32 %v2407, 1.442695
        %v2530 = vpow.pop %v2529
        %v2531 = vmul.f32 %v2408, 1.442695
        %v2532 = vpow.pop %v2531
        %v2533 = vmul.f32 %v2409, 1.442695
        %v2534 = vpow.pop %v2533
        %v2535 = vmul.f32 %v2410, 1.442695
        %v2536 = vpow.pop %v2535
        %v2537 = vmul.f32 %v2411, 1.442695
        %v2538 = vpow.pop %v2537
        %v2539 = vmul.f32 %v2412, 1.442695
        %v2540 = vpow.pop %v2539
        %v2541 = vld [vmem:[#allocation4] sm:$0xff]
        %v2542 = vld [vmem:[#allocation4 + $0x8] sm:$0xff]
        %v2543 = vld [vmem:[#allocation4 + $0x10] sm:$0xff]
        %v2544 = vld [vmem:[#allocation4 + $0x18] sm:$0xff]
        %v2545 = vld [vmem:[#allocation4 + $0x20] sm:$0xff]
        %v2546 = vld [vmem:[#allocation4 + $0x28] sm:$0xff]
        %v2547 = vld [vmem:[#allocation4 + $0x30] sm:$0xff]
        %v2548 = vld [vmem:[#allocation4 + $0x38] sm:$0xff]
        %v2549 = vld [vmem:[#allocation4 + $0x40] sm:$0xff]
        %v2550 = vld [vmem:[#allocation4 + $0x48] sm:$0xff]
        %v2551 = vld [vmem:[#allocation4 + $0x50] sm:$0xff]
        %v2552 = vld [vmem:[#allocation4 + $0x58] sm:$0xff]
        %v2553 = vld [vmem:[#allocation4 + $0x60] sm:$0xff]
        %v2554 = vld [vmem:[#allocation4 + $0x68] sm:$0xff]
        %v2555 = vld [vmem:[#allocation4 + $0x70] sm:$0xff]
        %v2556 = vld [vmem:[#allocation4 + $0x78] sm:$0xff]
        %v2557 = vld [vmem:[#allocation4 + $0x80] sm:$0xff]
        %v2558 = vld [vmem:[#allocation4 + $0x88] sm:$0xff]
        %v2559 = vld [vmem:[#allocation4 + $0x90] sm:$0xff]
        %v2560 = vld [vmem:[#allocation4 + $0x98] sm:$0xff]
        %v2561 = vld [vmem:[#allocation4 + $0xa0] sm:$0xff]
        %v2562 = vld [vmem:[#allocation4 + $0xa8] sm:$0xff]
        %v2563 = vld [vmem:[#allocation4 + $0xb0] sm:$0xff]
        %v2564 = vld [vmem:[#allocation4 + $0xb8] sm:$0xff]
        %v2565 = vld [vmem:[#allocation4 + $0xc0] sm:$0xff]
        %v2566 = vld [vmem:[#allocation4 + $0xc8] sm:$0xff]
        %v2567 = vld [vmem:[#allocation4 + $0xd0] sm:$0xff]
        %v2568 = vld [vmem:[#allocation4 + $0xd8] sm:$0xff]
        %v2569 = vld [vmem:[#allocation4 + $0xe0] sm:$0xff]
        %v2570 = vld [vmem:[#allocation4 + $0xe8] sm:$0xff]
        %v2571 = vld [vmem:[#allocation4 + $0xf0] sm:$0xff]
        %v2572 = vld [vmem:[#allocation4 + $0xf8] sm:$0xff]
        %v2573 = vmul.f32 %v2126, %v2541
        %v2574 = vmul.f32 %v2128, %v2542
        %v2575 = vmul.f32 %v2130, %v2543
        %v2576 = vmul.f32 %v2132, %v2544
        %v2577 = vmul.f32 %v2134, %v2545
        %v2578 = vmul.f32 %v2136, %v2546
        %v2579 = vmul.f32 %v2138, %v2547
        %v2580 = vmul.f32 %v2140, %v2548
        %v2581 = vmul.f32 %v2142, %v2549
        %v2582 = vmul.f32 %v2144, %v2550
        %v2583 = vmul.f32 %v2146, %v2551
        %v2584 = vmul.f32 %v2148, %v2552
        %v2585 = vmul.f32 %v2150, %v2553
        %v2586 = vmul.f32 %v2152, %v2554
        %v2587 = vmul.f32 %v2154, %v2555
        %v2588 = vmul.f32 %v2156, %v2556
        %v2589 = vmul.f32 %v2158, %v2557
        %v2590 = vmul.f32 %v2160, %v2558
        %v2591 = vmul.f32 %v2162, %v2559
        %v2592 = vmul.f32 %v2164, %v2560
        %v2593 = vmul.f32 %v2166, %v2561
        %v2594 = vmul.f32 %v2168, %v2562
        %v2595 = vmul.f32 %v2170, %v2563
        %v2596 = vmul.f32 %v2172, %v2564
        %v2597 = vmul.f32 %v2174, %v2565
        %v2598 = vmul.f32 %v2176, %v2566
        %v2599 = vmul.f32 %v2178, %v2567
        %v2600 = vmul.f32 %v2180, %v2568
        %v2601 = vmul.f32 %v2182, %v2569
        %v2602 = vmul.f32 %v2184, %v2570
        %v2603 = vmul.f32 %v2186, %v2571
        %v2604 = vmul.f32 %v2188, %v2572
        %v2605 = vadd.f32 %v2414, %v2416
        %2606 = vadd.xlane.f32.xlu0 %v2605
        %v2607 = vpop.xlane.xlu0 %2606
        %v2608 = vadd.f32 %v2418, %v2420
        %2609 = vadd.xlane.f32.xlu0 %v2608
        %v2610 = vpop.xlane.xlu0 %2609
        %v2611 = vadd.f32 %v2422, %v2424
        %2612 = vadd.xlane.f32.xlu0 %v2611
        %v2613 = vpop.xlane.xlu0 %2612
        %v2614 = vadd.f32 %v2426, %v2428
        %2615 = vadd.xlane.f32.xlu0 %v2614
        %v2616 = vpop.xlane.xlu0 %2615
        %v2617 = vadd.f32 %v2430, %v2432
        %2618 = vadd.xlane.f32.xlu0 %v2617
        %v2619 = vpop.xlane.xlu0 %2618
        %v2620 = vadd.f32 %v2434, %v2436
        %2621 = vadd.xlane.f32.xlu0 %v2620
        %v2622 = vpop.xlane.xlu0 %2621
        %v2623 = vadd.f32 %v2438, %v2440
        %2624 = vadd.xlane.f32.xlu0 %v2623
        %v2625 = vpop.xlane.xlu0 %2624
        %v2626 = vadd.f32 %v2442, %v2444
        %2627 = vadd.xlane.f32.xlu0 %v2626
        %v2628 = vpop.xlane.xlu0 %2627
        %v2629 = vadd.f32 %v2446, %v2448
        %2630 = vadd.xlane.f32.xlu0 %v2629
        %v2631 = vpop.xlane.xlu0 %2630
        %v2632 = vadd.f32 %v2450, %v2452
        %2633 = vadd.xlane.f32.xlu0 %v2632
        %v2634 = vpop.xlane.xlu0 %2633
        %v2635 = vadd.f32 %v2454, %v2456
        %2636 = vadd.xlane.f32.xlu0 %v2635
        %v2637 = vpop.xlane.xlu0 %2636
        %v2638 = vadd.f32 %v2458, %v2460
        %2639 = vadd.xlane.f32.xlu0 %v2638
        %v2640 = vpop.xlane.xlu0 %2639
        %v2641 = vadd.f32 %v2462, %v2464
        %2642 = vadd.xlane.f32.xlu0 %v2641
        %v2643 = vpop.xlane.xlu0 %2642
        %v2644 = vadd.f32 %v2466, %v2468
        %2645 = vadd.xlane.f32.xlu0 %v2644
        %v2646 = vpop.xlane.xlu0 %2645
        %v2647 = vadd.f32 %v2470, %v2472
        %2648 = vadd.xlane.f32.xlu0 %v2647
        %v2649 = vpop.xlane.xlu0 %2648
        %v2650 = vadd.f32 %v2474, %v2476
        %2651 = vadd.xlane.f32.xlu0 %v2650
        %v2652 = vpop.xlane.xlu0 %2651
        %v2653 = vadd.f32 %v2478, %v2480
        %2654 = vadd.xlane.f32.xlu0 %v2653
        %v2655 = vpop.xlane.xlu0 %2654
        %v2656 = vadd.f32 %v2482, %v2484
        %2657 = vadd.xlane.f32.xlu0 %v2656
        %v2658 = vpop.xlane.xlu0 %2657
        %v2659 = vadd.f32 %v2486, %v2488
        %2660 = vadd.xlane.f32.xlu0 %v2659
        %v2661 = vpop.xlane.xlu0 %2660
        %v2662 = vadd.f32 %v2490, %v2492
        %2663 = vadd.xlane.f32.xlu0 %v2662
        %v2664 = vpop.xlane.xlu0 %2663
        %v2665 = vadd.f32 %v2494, %v2496
        %2666 = vadd.xlane.f32.xlu0 %v2665
        %v2667 = vpop.xlane.xlu0 %2666
        %v2668 = vadd.f32 %v2498, %v2500
        %2669 = vadd.xlane.f32.xlu0 %v2668
        %v2670 = vpop.xlane.xlu0 %2669
        %v2671 = vadd.f32 %v2502, %v2504
        %2672 = vadd.xlane.f32.xlu0 %v2671
        %v2673 = vpop.xlane.xlu0 %2672
        %v2674 = vadd.f32 %v2506, %v2508
        %2675 = vadd.xlane.f32.xlu0 %v2674
        %v2676 = vpop.xlane.xlu0 %2675
        %v2677 = vadd.f32 %v2510, %v2512
        %2678 = vadd.xlane.f32.xlu0 %v2677
        %v2679 = vpop.xlane.xlu0 %2678
        %v2680 = vadd.f32 %v2514, %v2516
        %2681 = vadd.xlane.f32.xlu0 %v2680
        %v2682 = vpop.xlane.xlu0 %2681
        %v2683 = vadd.f32 %v2518, %v2520
        %2684 = vadd.xlane.f32.xlu0 %v2683
        %v2685 = vpop.xlane.xlu0 %2684
        %v2686 = vadd.f32 %v2522, %v2524
        %2687 = vadd.xlane.f32.xlu0 %v2686
        %v2688 = vpop.xlane.xlu0 %2687
        %v2689 = vadd.f32 %v2526, %v2528
        %2690 = vadd.xlane.f32.xlu0 %v2689
        %v2691 = vpop.xlane.xlu0 %2690
        %v2692 = vadd.f32 %v2530, %v2532
        %2693 = vadd.xlane.f32.xlu0 %v2692
        %v2694 = vpop.xlane.xlu0 %2693
        %v2695 = vadd.f32 %v2534, %v2536
        %2696 = vadd.xlane.f32.xlu0 %v2695
        %v2697 = vpop.xlane.xlu0 %2696
        %v2698 = vadd.f32 %v2538, %v2540
        %2699 = vadd.xlane.f32.xlu0 %v2698
        %v2700 = vpop.xlane.xlu0 %2699
        %v2701 = vadd.f32 %v2573, %v2607
        %v2702 = vadd.f32 %v2574, %v2610
        %v2703 = vadd.f32 %v2575, %v2613
        %v2704 = vadd.f32 %v2576, %v2616
        %v2705 = vadd.f32 %v2577, %v2619
        %v2706 = vadd.f32 %v2578, %v2622
        %v2707 = vadd.f32 %v2579, %v2625
        %v2708 = vadd.f32 %v2580, %v2628
        %v2709 = vadd.f32 %v2581, %v2631
        %v2710 = vadd.f32 %v2582, %v2634
        %v2711 = vadd.f32 %v2583, %v2637
        %v2712 = vadd.f32 %v2584, %v2640
        %v2713 = vadd.f32 %v2585, %v2643
        %v2714 = vadd.f32 %v2586, %v2646
        %v2715 = vadd.f32 %v2587, %v2649
        %v2716 = vadd.f32 %v2588, %v2652
        %v2717 = vadd.f32 %v2589, %v2655
        %v2718 = vadd.f32 %v2590, %v2658
        %v2719 = vadd.f32 %v2591, %v2661
        %v2720 = vadd.f32 %v2592, %v2664
        %v2721 = vadd.f32 %v2593, %v2667
        %v2722 = vadd.f32 %v2594, %v2670
        %v2723 = vadd.f32 %v2595, %v2673
        %v2724 = vadd.f32 %v2596, %v2676
        %v2725 = vadd.f32 %v2597, %v2679
        %v2726 = vadd.f32 %v2598, %v2682
        %v2727 = vadd.f32 %v2599, %v2685
        %v2728 = vadd.f32 %v2600, %v2688
        %v2729 = vadd.f32 %v2601, %v2691
        %v2730 = vadd.f32 %v2602, %v2694
        %v2731 = vadd.f32 %v2603, %v2697
        %v2732 = vadd.f32 %v2604, %v2700
        %vm2733 = vcmask 7168
        %2734 = vst.msk [vmem:[#allocation4] sm:$0xff] %vm2733, %v2701
        %2735 = vst.msk [vmem:[#allocation4 + $0x8] sm:$0xff] %vm2733, %v2702
        %2736 = vst.msk [vmem:[#allocation4 + $0x10] sm:$0xff] %vm2733, %v2703
        %2737 = vst.msk [vmem:[#allocation4 + $0x18] sm:$0xff] %vm2733, %v2704
        %2738 = vst.msk [vmem:[#allocation4 + $0x20] sm:$0xff] %vm2733, %v2705
        %2739 = vst.msk [vmem:[#allocation4 + $0x28] sm:$0xff] %vm2733, %v2706
        %2740 = vst.msk [vmem:[#allocation4 + $0x30] sm:$0xff] %vm2733, %v2707
        %2741 = vst.msk [vmem:[#allocation4 + $0x38] sm:$0xff] %vm2733, %v2708
        %2742 = vst.msk [vmem:[#allocation4 + $0x40] sm:$0xff] %vm2733, %v2709
        %2743 = vst.msk [vmem:[#allocation4 + $0x48] sm:$0xff] %vm2733, %v2710
        %2744 = vst.msk [vmem:[#allocation4 + $0x50] sm:$0xff] %vm2733, %v2711
        %2745 = vst.msk [vmem:[#allocation4 + $0x58] sm:$0xff] %vm2733, %v2712
        %2746 = vst.msk [vmem:[#allocation4 + $0x60] sm:$0xff] %vm2733, %v2713
        %2747 = vst.msk [vmem:[#allocation4 + $0x68] sm:$0xff] %vm2733, %v2714
        %2748 = vst.msk [vmem:[#allocation4 + $0x70] sm:$0xff] %vm2733, %v2715
        %2749 = vst.msk [vmem:[#allocation4 + $0x78] sm:$0xff] %vm2733, %v2716
        %2750 = vst.msk [vmem:[#allocation4 + $0x80] sm:$0xff] %vm2733, %v2717
        %2751 = vst.msk [vmem:[#allocation4 + $0x88] sm:$0xff] %vm2733, %v2718
        %2752 = vst.msk [vmem:[#allocation4 + $0x90] sm:$0xff] %vm2733, %v2719
        %2753 = vst.msk [vmem:[#allocation4 + $0x98] sm:$0xff] %vm2733, %v2720
        %2754 = vst.msk [vmem:[#allocation4 + $0xa0] sm:$0xff] %vm2733, %v2721
        %2755 = vst.msk [vmem:[#allocation4 + $0xa8] sm:$0xff] %vm2733, %v2722
        %2756 = vst.msk [vmem:[#allocation4 + $0xb0] sm:$0xff] %vm2733, %v2723
        %2757 = vst.msk [vmem:[#allocation4 + $0xb8] sm:$0xff] %vm2733, %v2724
        %2758 = vst.msk [vmem:[#allocation4 + $0xc0] sm:$0xff] %vm2733, %v2725
        %2759 = vst.msk [vmem:[#allocation4 + $0xc8] sm:$0xff] %vm2733, %v2726
        %2760 = vst.msk [vmem:[#allocation4 + $0xd0] sm:$0xff] %vm2733, %v2727
        %2761 = vst.msk [vmem:[#allocation4 + $0xd8] sm:$0xff] %vm2733, %v2728
        %2762 = vst.msk [vmem:[#allocation4 + $0xe0] sm:$0xff] %vm2733, %v2729
        %2763 = vst.msk [vmem:[#allocation4 + $0xe8] sm:$0xff] %vm2733, %v2730
        %2764 = vst.msk [vmem:[#allocation4 + $0xf0] sm:$0xff] %vm2733, %v2731
        %2765 = vst.msk [vmem:[#allocation4 + $0xf8] sm:$0xff] %vm2733, %v2732
        %2766 = vst.msk [vmem:[#allocation3] sm:$0xff] %vm2733, %v1997
        %2767 = vst.msk [vmem:[#allocation3 + $0x8] sm:$0xff] %vm2733, %v1998
        %2768 = vst.msk [vmem:[#allocation3 + $0x10] sm:$0xff] %vm2733, %v1999
        %2769 = vst.msk [vmem:[#allocation3 + $0x18] sm:$0xff] %vm2733, %v2000
        %2770 = vst.msk [vmem:[#allocation3 + $0x20] sm:$0xff] %vm2733, %v2001
        %2771 = vst.msk [vmem:[#allocation3 + $0x28] sm:$0xff] %vm2733, %v2002
        %2772 = vst.msk [vmem:[#allocation3 + $0x30] sm:$0xff] %vm2733, %v2003
        %2773 = vst.msk [vmem:[#allocation3 + $0x38] sm:$0xff] %vm2733, %v2004
        %2774 = vst.msk [vmem:[#allocation3 + $0x40] sm:$0xff] %vm2733, %v2005
        %2775 = vst.msk [vmem:[#allocation3 + $0x48] sm:$0xff] %vm2733, %v2006
        %2776 = vst.msk [vmem:[#allocation3 + $0x50] sm:$0xff] %vm2733, %v2007
        %2777 = vst.msk [vmem:[#allocation3 + $0x58] sm:$0xff] %vm2733, %v2008
        %2778 = vst.msk [vmem:[#allocation3 + $0x60] sm:$0xff] %vm2733, %v2009
        %2779 = vst.msk [vmem:[#allocation3 + $0x68] sm:$0xff] %vm2733, %v2010
        %2780 = vst.msk [vmem:[#allocation3 + $0x70] sm:$0xff] %vm2733, %v2011
        %2781 = vst.msk [vmem:[#allocation3 + $0x78] sm:$0xff] %vm2733, %v2012
        %2782 = vst.msk [vmem:[#allocation3 + $0x80] sm:$0xff] %vm2733, %v2013
        %2783 = vst.msk [vmem:[#allocation3 + $0x88] sm:$0xff] %vm2733, %v2014
        %2784 = vst.msk [vmem:[#allocation3 + $0x90] sm:$0xff] %vm2733, %v2015
        %2785 = vst.msk [vmem:[#allocation3 + $0x98] sm:$0xff] %vm2733, %v2016
        %2786 = vst.msk [vmem:[#allocation3 + $0xa0] sm:$0xff] %vm2733, %v2017
        %2787 = vst.msk [vmem:[#allocation3 + $0xa8] sm:$0xff] %vm2733, %v2018
        %2788 = vst.msk [vmem:[#allocation3 + $0xb0] sm:$0xff] %vm2733, %v2019
        %2789 = vst.msk [vmem:[#allocation3 + $0xb8] sm:$0xff] %vm2733, %v2020
        %2790 = vst.msk [vmem:[#allocation3 + $0xc0] sm:$0xff] %vm2733, %v2021
        %2791 = vst.msk [vmem:[#allocation3 + $0xc8] sm:$0xff] %vm2733, %v2022
        %2792 = vst.msk [vmem:[#allocation3 + $0xd0] sm:$0xff] %vm2733, %v2023
        %2793 = vst.msk [vmem:[#allocation3 + $0xd8] sm:$0xff] %vm2733, %v2024
        %2794 = vst.msk [vmem:[#allocation3 + $0xe0] sm:$0xff] %vm2733, %v2025
        %2795 = vst.msk [vmem:[#allocation3 + $0xe8] sm:$0xff] %vm2733, %v2026
        %2796 = vst.msk [vmem:[#allocation3 + $0xf0] sm:$0xff] %vm2733, %v2027
        %2797 = vst.msk [vmem:[#allocation3 + $0xf8] sm:$0xff] %vm2733, %v2028
        %v2798 = vpack.c.bf16 %v2418, %v2414
        %v2799 = vpack.c.bf16 %v2420, %v2416
        %v2800 = vpack.c.bf16 %v2426, %v2422
        %v2801 = vpack.c.bf16 %v2428, %v2424
        %v2802 = vpack.c.bf16 %v2434, %v2430
        %v2803 = vpack.c.bf16 %v2436, %v2432
        %v2804 = vpack.c.bf16 %v2442, %v2438
        %v2805 = vpack.c.bf16 %v2444, %v2440
        %v2806 = vpack.c.bf16 %v2450, %v2446
        %v2807 = vpack.c.bf16 %v2452, %v2448
        %v2808 = vpack.c.bf16 %v2458, %v2454
        %v2809 = vpack.c.bf16 %v2460, %v2456
        %v2810 = vpack.c.bf16 %v2466, %v2462
        %v2811 = vpack.c.bf16 %v2468, %v2464
        %v2812 = vpack.c.bf16 %v2474, %v2470
        %v2813 = vpack.c.bf16 %v2476, %v2472
        %v2814 = vpack.c.bf16 %v2482, %v2478
        %v2815 = vpack.c.bf16 %v2484, %v2480
        %v2816 = vpack.c.bf16 %v2490, %v2486
        %v2817 = vpack.c.bf16 %v2492, %v2488
        %v2818 = vpack.c.bf16 %v2498, %v2494
        %v2819 = vpack.c.bf16 %v2500, %v2496
        %v2820 = vpack.c.bf16 %v2506, %v2502
        %v2821 = vpack.c.bf16 %v2508, %v2504
        %v2822 = vpack.c.bf16 %v2514, %v2510
        %v2823 = vpack.c.bf16 %v2516, %v2512
        %v2824 = vpack.c.bf16 %v2522, %v2518
        %v2825 = vpack.c.bf16 %v2524, %v2520
        %v2826 = vpack.c.bf16 %v2530, %v2526
        %v2827 = vpack.c.bf16 %v2532, %v2528
        %v2828 = vpack.c.bf16 %v2538, %v2534
        %v2829 = vpack.c.bf16 %v2540, %v2536
        %v2862 = vunpack.c.l.b16 %v1274
        %v2863 = vunpack.c.l.b16 %v1275
        %v2864 = vunpack.c.l.b16 %v1276
        %v2865 = vunpack.c.l.b16 %v1277
        %v2866 = vunpack.c.l.b16 %v1278
        %v2867 = vunpack.c.l.b16 %v1279
        %v2868 = vunpack.c.l.b16 %v1280
        %v2869 = vunpack.c.l.b16 %v1281
        %v2870 = vunpack.c.l.b16 %v1282
        %v2871 = vunpack.c.l.b16 %v1283
        %v2872 = vunpack.c.l.b16 %v1284
        %v2873 = vunpack.c.l.b16 %v1285
        %v2874 = vunpack.c.l.b16 %v1286
        %v2875 = vunpack.c.l.b16 %v1287
        %v2876 = vunpack.c.l.b16 %v1288
        %v2877 = vunpack.c.l.b16 %v1289
        %v2878 = vunpack.c.l.b16 %v1290
        %v2879 = vunpack.c.l.b16 %v1291
        %v2880 = vunpack.c.l.b16 %v1292
        %v2881 = vunpack.c.l.b16 %v1293
        %v2882 = vunpack.c.l.b16 %v1294
        %v2883 = vunpack.c.l.b16 %v1295
        %v2884 = vunpack.c.l.b16 %v1296
        %v2885 = vunpack.c.l.b16 %v1297
        %v2886 = vunpack.c.l.b16 %v1298
        %v2887 = vunpack.c.l.b16 %v1299
        %v2888 = vunpack.c.l.b16 %v1300
        %v2889 = vunpack.c.l.b16 %v1301
        %v2890 = vunpack.c.l.b16 %v1302
        %v2891 = vunpack.c.l.b16 %v1303
        %v2892 = vunpack.c.l.b16 %v1304
        %v2893 = vunpack.c.l.b16 %v1305
        %v2894 = vpack.c.b16 %v2863, %v2862
        %v2895 = vpack.c.b16 %v2865, %v2864
        %v2896 = vpack.c.b16 %v2867, %v2866
        %v2897 = vpack.c.b16 %v2869, %v2868
        %v2898 = vpack.c.b16 %v2871, %v2870
        %v2899 = vpack.c.b16 %v2873, %v2872
        %v2900 = vpack.c.b16 %v2875, %v2874
        %v2901 = vpack.c.b16 %v2877, %v2876
        %v2902 = vpack.c.b16 %v2879, %v2878
        %v2903 = vpack.c.b16 %v2881, %v2880
        %v2904 = vpack.c.b16 %v2883, %v2882
        %v2905 = vpack.c.b16 %v2885, %v2884
        %v2906 = vpack.c.b16 %v2887, %v2886
        %v2907 = vpack.c.b16 %v2889, %v2888
        %v2908 = vpack.c.b16 %v2891, %v2890
        %v2909 = vpack.c.b16 %v2893, %v2892
        %2926 = vmatpush.bf16.msra.mxu0 %v2901
        %2927 = vmatpush.bf16.msra.mxu0 %v2900
        %2928 = vmatpush.bf16.msra.mxu0 %v2899
        %2929 = vmatpush.bf16.msra.mxu0 %v2898
        %2930 = vmatpush.bf16.msra.mxu0 %v2897
        %2931 = vmatpush.bf16.msra.mxu0 %v2896
        %2932 = vmatpush.bf16.msra.mxu0 %v2895
        %2933 = vmatpush.bf16.msra.mxu0 %v2894
        %2934 = vmatmul.bf16.gmra.mxu0 %v2798
        %v2935 = vpop.f32.mrf.mxu0
        %v2936 = vadd.f32 0.0, %v2935
        %v2937 = vpop.f32.mrf.mxu0
        %v2938 = vadd.f32 0.0, %v2937
        %2939 = vmatmul.bf16.gmra.mxu0 %v2800
        %v2940 = vpop.f32.mrf.mxu0
        %v2941 = vadd.f32 0.0, %v2940
        %v2942 = vpop.f32.mrf.mxu0
        %v2943 = vadd.f32 0.0, %v2942
        %2944 = vmatmul.bf16.gmra.mxu0 %v2802
        %v2945 = vpop.f32.mrf.mxu0
        %v2946 = vadd.f32 0.0, %v2945
        %v2947 = vpop.f32.mrf.mxu0
        %v2948 = vadd.f32 0.0, %v2947
        %2949 = vmatmul.bf16.gmra.mxu0 %v2804
        %v2950 = vpop.f32.mrf.mxu0
        %v2951 = vadd.f32 0.0, %v2950
        %v2952 = vpop.f32.mrf.mxu0
        %v2953 = vadd.f32 0.0, %v2952
        %2954 = vmatmul.bf16.gmra.mxu0 %v2806
        %v2955 = vpop.f32.mrf.mxu0
        %v2956 = vadd.f32 0.0, %v2955
        %v2957 = vpop.f32.mrf.mxu0
        %v2958 = vadd.f32 0.0, %v2957
        %2959 = vmatmul.bf16.gmra.mxu0 %v2808
        %v2960 = vpop.f32.mrf.mxu0
        %v2961 = vadd.f32 0.0, %v2960
        %v2962 = vpop.f32.mrf.mxu0
        %v2963 = vadd.f32 0.0, %v2962
        %2964 = vmatmul.bf16.gmra.mxu0 %v2810
        %v2965 = vpop.f32.mrf.mxu0
        %v2966 = vadd.f32 0.0, %v2965
        %v2967 = vpop.f32.mrf.mxu0
        %v2968 = vadd.f32 0.0, %v2967
        %2969 = vmatmul.bf16.gmra.mxu0 %v2812
        %v2970 = vpop.f32.mrf.mxu0
        %v2971 = vadd.f32 0.0, %v2970
        %v2972 = vpop.f32.mrf.mxu0
        %v2973 = vadd.f32 0.0, %v2972
        %2974 = vmatmul.bf16.gmra.mxu0 %v2814
        %v2975 = vpop.f32.mrf.mxu0
        %v2976 = vadd.f32 0.0, %v2975
        %v2977 = vpop.f32.mrf.mxu0
        %v2978 = vadd.f32 0.0, %v2977
        %2979 = vmatmul.bf16.gmra.mxu0 %v2816
        %v2980 = vpop.f32.mrf.mxu0
        %v2981 = vadd.f32 0.0, %v2980
        %v2982 = vpop.f32.mrf.mxu0
        %v2983 = vadd.f32 0.0, %v2982
        %2984 = vmatmul.bf16.gmra.mxu0 %v2818
        %v2985 = vpop.f32.mrf.mxu0
        %v2986 = vadd.f32 0.0, %v2985
        %v2987 = vpop.f32.mrf.mxu0
        %v2988 = vadd.f32 0.0, %v2987
        %2989 = vmatmul.bf16.gmra.mxu0 %v2820
        %v2990 = vpop.f32.mrf.mxu0
        %v2991 = vadd.f32 0.0, %v2990
        %v2992 = vpop.f32.mrf.mxu0
        %v2993 = vadd.f32 0.0, %v2992
        %2994 = vmatmul.bf16.gmra.mxu0 %v2822
        %v2995 = vpop.f32.mrf.mxu0
        %v2996 = vadd.f32 0.0, %v2995
        %v2997 = vpop.f32.mrf.mxu0
        %v2998 = vadd.f32 0.0, %v2997
        %2999 = vmatmul.bf16.gmra.mxu0 %v2824
        %v3000 = vpop.f32.mrf.mxu0
        %v3001 = vadd.f32 0.0, %v3000
        %v3002 = vpop.f32.mrf.mxu0
        %v3003 = vadd.f32 0.0, %v3002
        %3004 = vmatmul.bf16.gmra.mxu0 %v2826
        %v3005 = vpop.f32.mrf.mxu0
        %v3006 = vadd.f32 0.0, %v3005
        %v3007 = vpop.f32.mrf.mxu0
        %v3008 = vadd.f32 0.0, %v3007
        %3009 = vmatmul.bf16.gmra.mxu0 %v2828
        %v3010 = vpop.f32.mrf.mxu0
        %v3011 = vadd.f32 0.0, %v3010
        %v3012 = vpop.f32.mrf.mxu0
        %v3013 = vadd.f32 0.0, %v3012
        %3014 = vdwg.mxu0
        %3015 = vmatpush.bf16.msra.mxu0 %v2909
        %3016 = vmatpush.bf16.msra.mxu0 %v2908
        %3017 = vmatpush.bf16.msra.mxu0 %v2907
        %3018 = vmatpush.bf16.msra.mxu0 %v2906
        %3019 = vmatpush.bf16.msra.mxu0 %v2905
        %3020 = vmatpush.bf16.msra.mxu0 %v2904
        %3021 = vmatpush.bf16.msra.mxu0 %v2903
        %3022 = vmatpush.bf16.msra.mxu0 %v2902
        %3023 = vmatmul.bf16.gmra.mxu0 %v2799
        %v3024 = vpop.f32.mrf.mxu0
        %v3025 = vadd.f32 %v2936, %v3024
        %v3026 = vpop.f32.mrf.mxu0
        %v3027 = vadd.f32 %v2938, %v3026
        %3028 = vmatmul.bf16.gmra.mxu0 %v2801
        %v3029 = vpop.f32.mrf.mxu0
        %v3030 = vadd.f32 %v2941, %v3029
        %v3031 = vpop.f32.mrf.mxu0
        %v3032 = vadd.f32 %v2943, %v3031
        %3033 = vmatmul.bf16.gmra.mxu0 %v2803
        %v3034 = vpop.f32.mrf.mxu0
        %v3035 = vadd.f32 %v2946, %v3034
        %v3036 = vpop.f32.mrf.mxu0
        %v3037 = vadd.f32 %v2948, %v3036
        %3038 = vmatmul.bf16.gmra.mxu0 %v2805
        %v3039 = vpop.f32.mrf.mxu0
        %v3040 = vadd.f32 %v2951, %v3039
        %v3041 = vpop.f32.mrf.mxu0
        %v3042 = vadd.f32 %v2953, %v3041
        %3043 = vmatmul.bf16.gmra.mxu0 %v2807
        %v3044 = vpop.f32.mrf.mxu0
        %v3045 = vadd.f32 %v2956, %v3044
        %v3046 = vpop.f32.mrf.mxu0
        %v3047 = vadd.f32 %v2958, %v3046
        %3048 = vmatmul.bf16.gmra.mxu0 %v2809
        %v3049 = vpop.f32.mrf.mxu0
        %v3050 = vadd.f32 %v2961, %v3049
        %v3051 = vpop.f32.mrf.mxu0
        %v3052 = vadd.f32 %v2963, %v3051
        %3053 = vmatmul.bf16.gmra.mxu0 %v2811
        %v3054 = vpop.f32.mrf.mxu0
        %v3055 = vadd.f32 %v2966, %v3054
        %v3056 = vpop.f32.mrf.mxu0
        %v3057 = vadd.f32 %v2968, %v3056
        %3058 = vmatmul.bf16.gmra.mxu0 %v2813
        %v3059 = vpop.f32.mrf.mxu0
        %v3060 = vadd.f32 %v2971, %v3059
        %v3061 = vpop.f32.mrf.mxu0
        %v3062 = vadd.f32 %v2973, %v3061
        %3063 = vmatmul.bf16.gmra.mxu0 %v2815
        %v3064 = vpop.f32.mrf.mxu0
        %v3065 = vadd.f32 %v2976, %v3064
        %v3066 = vpop.f32.mrf.mxu0
        %v3067 = vadd.f32 %v2978, %v3066
        %3068 = vmatmul.bf16.gmra.mxu0 %v2817
        %v3069 = vpop.f32.mrf.mxu0
        %v3070 = vadd.f32 %v2981, %v3069
        %v3071 = vpop.f32.mrf.mxu0
        %v3072 = vadd.f32 %v2983, %v3071
        %3073 = vmatmul.bf16.gmra.mxu0 %v2819
        %v3074 = vpop.f32.mrf.mxu0
        %v3075 = vadd.f32 %v2986, %v3074
        %v3076 = vpop.f32.mrf.mxu0
        %v3077 = vadd.f32 %v2988, %v3076
        %3078 = vmatmul.bf16.gmra.mxu0 %v2821
        %v3079 = vpop.f32.mrf.mxu0
        %v3080 = vadd.f32 %v2991, %v3079
        %v3081 = vpop.f32.mrf.mxu0
        %v3082 = vadd.f32 %v2993, %v3081
        %3083 = vmatmul.bf16.gmra.mxu0 %v2823
        %v3084 = vpop.f32.mrf.mxu0
        %v3085 = vadd.f32 %v2996, %v3084
        %v3086 = vpop.f32.mrf.mxu0
        %v3087 = vadd.f32 %v2998, %v3086
        %3088 = vmatmul.bf16.gmra.mxu0 %v2825
        %v3089 = vpop.f32.mrf.mxu0
        %v3090 = vadd.f32 %v3001, %v3089
        %v3091 = vpop.f32.mrf.mxu0
        %v3092 = vadd.f32 %v3003, %v3091
        %3093 = vmatmul.bf16.gmra.mxu0 %v2827
        %v3094 = vpop.f32.mrf.mxu0
        %v3095 = vadd.f32 %v3006, %v3094
        %v3096 = vpop.f32.mrf.mxu0
        %v3097 = vadd.f32 %v3008, %v3096
        %3098 = vmatmul.bf16.gmra.mxu0 %v2829
        %v3099 = vpop.f32.mrf.mxu0
        %v3100 = vadd.f32 %v3011, %v3099
        %v3101 = vpop.f32.mrf.mxu0
        %v3102 = vadd.f32 %v3013, %v3101
        %3103 = vdwg.mxu0
        %3105 = vset.pattern.permute.xlu0 0
        %3106 = vperm.xlu0 %3105, %v2126
        %v3107 = vpop.permute.xlu0 %3106
        %3110 = vset.pattern.permute.xlu0 0
        %3111 = vperm.xlu0 %3110, %v2128
        %v3112 = vpop.permute.xlu0 %3111
        %3115 = vset.pattern.permute.xlu0 0
        %3116 = vperm.xlu0 %3115, %v2130
        %v3117 = vpop.permute.xlu0 %3116
        %3120 = vset.pattern.permute.xlu0 0
        %3121 = vperm.xlu0 %3120, %v2132
        %v3122 = vpop.permute.xlu0 %3121
        %3125 = vset.pattern.permute.xlu0 0
        %3126 = vperm.xlu0 %3125, %v2134
        %v3127 = vpop.permute.xlu0 %3126
        %3130 = vset.pattern.permute.xlu0 0
        %3131 = vperm.xlu0 %3130, %v2136
        %v3132 = vpop.permute.xlu0 %3131
        %3135 = vset.pattern.permute.xlu0 0
        %3136 = vperm.xlu0 %3135, %v2138
        %v3137 = vpop.permute.xlu0 %3136
        %3140 = vset.pattern.permute.xlu0 0
        %3141 = vperm.xlu0 %3140, %v2140
        %v3142 = vpop.permute.xlu0 %3141
        %3145 = vset.pattern.permute.xlu0 0
        %3146 = vperm.xlu0 %3145, %v2142
        %v3147 = vpop.permute.xlu0 %3146
        %3150 = vset.pattern.permute.xlu0 0
        %3151 = vperm.xlu0 %3150, %v2144
        %v3152 = vpop.permute.xlu0 %3151
        %3155 = vset.pattern.permute.xlu0 0
        %3156 = vperm.xlu0 %3155, %v2146
        %v3157 = vpop.permute.xlu0 %3156
        %3160 = vset.pattern.permute.xlu0 0
        %3161 = vperm.xlu0 %3160, %v2148
        %v3162 = vpop.permute.xlu0 %3161
        %3165 = vset.pattern.permute.xlu0 0
        %3166 = vperm.xlu0 %3165, %v2150
        %v3167 = vpop.permute.xlu0 %3166
        %3170 = vset.pattern.permute.xlu0 0
        %3171 = vperm.xlu0 %3170, %v2152
        %v3172 = vpop.permute.xlu0 %3171
        %3175 = vset.pattern.permute.xlu0 0
        %3176 = vperm.xlu0 %3175, %v2154
        %v3177 = vpop.permute.xlu0 %3176
        %3180 = vset.pattern.permute.xlu0 0
        %3181 = vperm.xlu0 %3180, %v2156
        %v3182 = vpop.permute.xlu0 %3181
        %3185 = vset.pattern.permute.xlu0 0
        %3186 = vperm.xlu0 %3185, %v2158
        %v3187 = vpop.permute.xlu0 %3186
        %3190 = vset.pattern.permute.xlu0 0
        %3191 = vperm.xlu0 %3190, %v2160
        %v3192 = vpop.permute.xlu0 %3191
        %3195 = vset.pattern.permute.xlu0 0
        %3196 = vperm.xlu0 %3195, %v2162
        %v3197 = vpop.permute.xlu0 %3196
        %3200 = vset.pattern.permute.xlu0 0
        %3201 = vperm.xlu0 %3200, %v2164
        %v3202 = vpop.permute.xlu0 %3201
        %3205 = vset.pattern.permute.xlu0 0
        %3206 = vperm.xlu0 %3205, %v2166
        %v3207 = vpop.permute.xlu0 %3206
        %3210 = vset.pattern.permute.xlu0 0
        %3211 = vperm.xlu0 %3210, %v2168
        %v3212 = vpop.permute.xlu0 %3211
        %3215 = vset.pattern.permute.xlu0 0
        %3216 = vperm.xlu0 %3215, %v2170
        %v3217 = vpop.permute.xlu0 %3216
        %3220 = vset.pattern.permute.xlu0 0
        %3221 = vperm.xlu0 %3220, %v2172
        %v3222 = vpop.permute.xlu0 %3221
        %3225 = vset.pattern.permute.xlu0 0
        %3226 = vperm.xlu0 %3225, %v2174
        %v3227 = vpop.permute.xlu0 %3226
        %3230 = vset.pattern.permute.xlu0 0
        %3231 = vperm.xlu0 %3230, %v2176
        %v3232 = vpop.permute.xlu0 %3231
        %3235 = vset.pattern.permute.xlu0 0
        %3236 = vperm.xlu0 %3235, %v2178
        %v3237 = vpop.permute.xlu0 %3236
        %3240 = vset.pattern.permute.xlu0 0
        %3241 = vperm.xlu0 %3240, %v2180
        %v3242 = vpop.permute.xlu0 %3241
        %3245 = vset.pattern.permute.xlu0 0
        %3246 = vperm.xlu0 %3245, %v2182
        %v3247 = vpop.permute.xlu0 %3246
        %3250 = vset.pattern.permute.xlu0 0
        %3251 = vperm.xlu0 %3250, %v2184
        %v3252 = vpop.permute.xlu0 %3251
        %3255 = vset.pattern.permute.xlu0 0
        %3256 = vperm.xlu0 %3255, %v2186
        %v3257 = vpop.permute.xlu0 %3256
        %3260 = vset.pattern.permute.xlu0 0
        %3261 = vperm.xlu0 %3260, %v2188
        %v3262 = vpop.permute.xlu0 %3261
        %s3264 = scalar_lea.vmem [#allocation2], 128
        %v3265 = vld [vmem:[%s3264] sm:$0xf]
        %v3266 = vld [vmem:[%s3264 + $0x4] sm:$0xf]
        %v3267 = vld [vmem:[%s3264 + $0x8] sm:$0xf]
        %v3268 = vld [vmem:[%s3264 + $0xc] sm:$0xf]
        %v3269 = vld [vmem:[%s3264 + $0x10] sm:$0xf]
        %v3270 = vld [vmem:[%s3264 + $0x14] sm:$0xf]
        %v3271 = vld [vmem:[%s3264 + $0x18] sm:$0xf]
        %v3272 = vld [vmem:[%s3264 + $0x1c] sm:$0xf]
        %v3273 = vld [vmem:[%s3264 + $0x20] sm:$0xf]
        %v3274 = vld [vmem:[%s3264 + $0x24] sm:$0xf]
        %v3275 = vld [vmem:[%s3264 + $0x28] sm:$0xf]
        %v3276 = vld [vmem:[%s3264 + $0x2c] sm:$0xf]
        %v3277 = vld [vmem:[%s3264 + $0x30] sm:$0xf]
        %v3278 = vld [vmem:[%s3264 + $0x34] sm:$0xf]
        %v3279 = vld [vmem:[%s3264 + $0x38] sm:$0xf]
        %v3280 = vld [vmem:[%s3264 + $0x3c] sm:$0xf]
        %v3281 = vld [vmem:[%s3264 + $0x40] sm:$0xf]
        %v3282 = vld [vmem:[%s3264 + $0x44] sm:$0xf]
        %v3283 = vld [vmem:[%s3264 + $0x48] sm:$0xf]
        %v3284 = vld [vmem:[%s3264 + $0x4c] sm:$0xf]
        %v3285 = vld [vmem:[%s3264 + $0x50] sm:$0xf]
        %v3286 = vld [vmem:[%s3264 + $0x54] sm:$0xf]
        %v3287 = vld [vmem:[%s3264 + $0x58] sm:$0xf]
        %v3288 = vld [vmem:[%s3264 + $0x5c] sm:$0xf]
        %v3289 = vld [vmem:[%s3264 + $0x60] sm:$0xf]
        %v3290 = vld [vmem:[%s3264 + $0x64] sm:$0xf]
        %v3291 = vld [vmem:[%s3264 + $0x68] sm:$0xf]
        %v3292 = vld [vmem:[%s3264 + $0x6c] sm:$0xf]
        %v3293 = vld [vmem:[%s3264 + $0x70] sm:$0xf]
        %v3294 = vld [vmem:[%s3264 + $0x74] sm:$0xf]
        %v3295 = vld [vmem:[%s3264 + $0x78] sm:$0xf]
        %v3296 = vld [vmem:[%s3264 + $0x7c] sm:$0xf]
        %s3297 = scalar_lea.vmem %s270, 256 [#allocation6]
        %v3298 = vld [vmem:[%s3297] sm:$0xff]
        %v3299 = vld [vmem:[%s3297 + $0x8] sm:$0xff]
        %v3300 = vld [vmem:[%s3297 + $0x10] sm:$0xff]
        %v3301 = vld [vmem:[%s3297 + $0x18] sm:$0xff]
        %v3302 = vld [vmem:[%s3297 + $0x20] sm:$0xff]
        %v3303 = vld [vmem:[%s3297 + $0x28] sm:$0xff]
        %v3304 = vld [vmem:[%s3297 + $0x30] sm:$0xff]
        %v3305 = vld [vmem:[%s3297 + $0x38] sm:$0xff]
        %v3306 = vld [vmem:[%s3297 + $0x40] sm:$0xff]
        %v3307 = vld [vmem:[%s3297 + $0x48] sm:$0xff]
        %v3308 = vld [vmem:[%s3297 + $0x50] sm:$0xff]
        %v3309 = vld [vmem:[%s3297 + $0x58] sm:$0xff]
        %v3310 = vld [vmem:[%s3297 + $0x60] sm:$0xff]
        %v3311 = vld [vmem:[%s3297 + $0x68] sm:$0xff]
        %v3312 = vld [vmem:[%s3297 + $0x70] sm:$0xff]
        %v3313 = vld [vmem:[%s3297 + $0x78] sm:$0xff]
        %v3314 = vld [vmem:[%s3297 + $0x80] sm:$0xff]
        %v3315 = vld [vmem:[%s3297 + $0x88] sm:$0xff]
        %v3316 = vld [vmem:[%s3297 + $0x90] sm:$0xff]
        %v3317 = vld [vmem:[%s3297 + $0x98] sm:$0xff]
        %v3318 = vld [vmem:[%s3297 + $0xa0] sm:$0xff]
        %v3319 = vld [vmem:[%s3297 + $0xa8] sm:$0xff]
        %v3320 = vld [vmem:[%s3297 + $0xb0] sm:$0xff]
        %v3321 = vld [vmem:[%s3297 + $0xb8] sm:$0xff]
        %v3322 = vld [vmem:[%s3297 + $0xc0] sm:$0xff]
        %v3323 = vld [vmem:[%s3297 + $0xc8] sm:$0xff]
        %v3324 = vld [vmem:[%s3297 + $0xd0] sm:$0xff]
        %v3325 = vld [vmem:[%s3297 + $0xd8] sm:$0xff]
        %v3326 = vld [vmem:[%s3297 + $0xe0] sm:$0xff]
        %v3327 = vld [vmem:[%s3297 + $0xe8] sm:$0xff]
        %v3328 = vld [vmem:[%s3297 + $0xf0] sm:$0xff]
        %v3329 = vld [vmem:[%s3297 + $0xf8] sm:$0xff]
        %v3330 = vunpack.c.l.bf16 %v3298
        %v3331 = vunpack.c.h.bf16 %v3298
        %v3332 = vunpack.c.l.bf16 %v3299
        %v3333 = vunpack.c.h.bf16 %v3299
        %v3334 = vunpack.c.l.bf16 %v3300
        %v3335 = vunpack.c.h.bf16 %v3300
        %v3336 = vunpack.c.l.bf16 %v3301
        %v3337 = vunpack.c.h.bf16 %v3301
        %v3338 = vunpack.c.l.bf16 %v3302
        %v3339 = vunpack.c.h.bf16 %v3302
        %v3340 = vunpack.c.l.bf16 %v3303
        %v3341 = vunpack.c.h.bf16 %v3303
        %v3342 = vunpack.c.l.bf16 %v3304
        %v3343 = vunpack.c.h.bf16 %v3304
        %v3344 = vunpack.c.l.bf16 %v3305
        %v3345 = vunpack.c.h.bf16 %v3305
        %v3346 = vunpack.c.l.bf16 %v3306
        %v3347 = vunpack.c.h.bf16 %v3306
        %v3348 = vunpack.c.l.bf16 %v3307
        %v3349 = vunpack.c.h.bf16 %v3307
        %v3350 = vunpack.c.l.bf16 %v3308
        %v3351 = vunpack.c.h.bf16 %v3308
        %v3352 = vunpack.c.l.bf16 %v3309
        %v3353 = vunpack.c.h.bf16 %v3309
        %v3354 = vunpack.c.l.bf16 %v3310
        %v3355 = vunpack.c.h.bf16 %v3310
        %v3356 = vunpack.c.l.bf16 %v3311
        %v3357 = vunpack.c.h.bf16 %v3311
        %v3358 = vunpack.c.l.bf16 %v3312
        %v3359 = vunpack.c.h.bf16 %v3312
        %v3360 = vunpack.c.l.bf16 %v3313
        %v3361 = vunpack.c.h.bf16 %v3313
        %v3362 = vunpack.c.l.bf16 %v3314
        %v3363 = vunpack.c.h.bf16 %v3314
        %v3364 = vunpack.c.l.bf16 %v3315
        %v3365 = vunpack.c.h.bf16 %v3315
        %v3366 = vunpack.c.l.bf16 %v3316
        %v3367 = vunpack.c.h.bf16 %v3316
        %v3368 = vunpack.c.l.bf16 %v3317
        %v3369 = vunpack.c.h.bf16 %v3317
        %v3370 = vunpack.c.l.bf16 %v3318
        %v3371 = vunpack.c.h.bf16 %v3318
        %v3372 = vunpack.c.l.bf16 %v3319
        %v3373 = vunpack.c.h.bf16 %v3319
        %v3374 = vunpack.c.l.bf16 %v3320
        %v3375 = vunpack.c.h.bf16 %v3320
        %v3376 = vunpack.c.l.bf16 %v3321
        %v3377 = vunpack.c.h.bf16 %v3321
        %v3378 = vunpack.c.l.bf16 %v3322
        %v3379 = vunpack.c.h.bf16 %v3322
        %v3380 = vunpack.c.l.bf16 %v3323
        %v3381 = vunpack.c.h.bf16 %v3323
        %v3382 = vunpack.c.l.bf16 %v3324
        %v3383 = vunpack.c.h.bf16 %v3324
        %v3384 = vunpack.c.l.bf16 %v3325
        %v3385 = vunpack.c.h.bf16 %v3325
        %v3386 = vunpack.c.l.bf16 %v3326
        %v3387 = vunpack.c.h.bf16 %v3326
        %v3388 = vunpack.c.l.bf16 %v3327
        %v3389 = vunpack.c.h.bf16 %v3327
        %v3390 = vunpack.c.l.bf16 %v3328
        %v3391 = vunpack.c.h.bf16 %v3328
        %v3392 = vunpack.c.l.bf16 %v3329
        %v3393 = vunpack.c.h.bf16 %v3329
        %v3426 = vunpack.c.l.b16 %v3265
        %v3427 = vunpack.c.l.b16 %v3266
        %v3428 = vunpack.c.l.b16 %v3267
        %v3429 = vunpack.c.l.b16 %v3268
        %v3430 = vunpack.c.l.b16 %v3269
        %v3431 = vunpack.c.l.b16 %v3270
        %v3432 = vunpack.c.l.b16 %v3271
        %v3433 = vunpack.c.l.b16 %v3272
        %v3434 = vunpack.c.l.b16 %v3273
        %v3435 = vunpack.c.l.b16 %v3274
        %v3436 = vunpack.c.l.b16 %v3275
        %v3437 = vunpack.c.l.b16 %v3276
        %v3438 = vunpack.c.l.b16 %v3277
        %v3439 = vunpack.c.l.b16 %v3278
        %v3440 = vunpack.c.l.b16 %v3279
        %v3441 = vunpack.c.l.b16 %v3280
        %v3442 = vunpack.c.l.b16 %v3281
        %v3443 = vunpack.c.l.b16 %v3282
        %v3444 = vunpack.c.l.b16 %v3283
        %v3445 = vunpack.c.l.b16 %v3284
        %v3446 = vunpack.c.l.b16 %v3285
        %v3447 = vunpack.c.l.b16 %v3286
        %v3448 = vunpack.c.l.b16 %v3287
        %v3449 = vunpack.c.l.b16 %v3288
        %v3450 = vunpack.c.l.b16 %v3289
        %v3451 = vunpack.c.l.b16 %v3290
        %v3452 = vunpack.c.l.b16 %v3291
        %v3453 = vunpack.c.l.b16 %v3292
        %v3454 = vunpack.c.l.b16 %v3293
        %v3455 = vunpack.c.l.b16 %v3294
        %v3456 = vunpack.c.l.b16 %v3295
        %v3457 = vunpack.c.l.b16 %v3296
        %v3458 = vpack.c.b16 %v3427, %v3426
        %v3459 = vpack.c.b16 %v3429, %v3428
        %v3460 = vpack.c.b16 %v3431, %v3430
        %v3461 = vpack.c.b16 %v3433, %v3432
        %v3462 = vpack.c.b16 %v3435, %v3434
        %v3463 = vpack.c.b16 %v3437, %v3436
        %v3464 = vpack.c.b16 %v3439, %v3438
        %v3465 = vpack.c.b16 %v3441, %v3440
        %v3466 = vpack.c.b16 %v3443, %v3442
        %v3467 = vpack.c.b16 %v3445, %v3444
        %v3468 = vpack.c.b16 %v3447, %v3446
        %v3469 = vpack.c.b16 %v3449, %v3448
        %v3470 = vpack.c.b16 %v3451, %v3450
        %v3471 = vpack.c.b16 %v3453, %v3452
        %v3472 = vpack.c.b16 %v3455, %v3454
        %v3473 = vpack.c.b16 %v3457, %v3456
        %3474 = vrot.lane.b32.xlu0 %v1578, 96
        %v3475 = vpop.permute.xlu0 %3474
        %3476 = vrot.lane.b32.xlu0 %v1579, 96
        %v3477 = vpop.permute.xlu0 %3476
        %3478 = vrot.lane.b32.xlu0 %v1580, 96
        %v3479 = vpop.permute.xlu0 %3478
        %3480 = vrot.lane.b32.xlu0 %v1581, 96
        %v3481 = vpop.permute.xlu0 %3480
        %3482 = vrot.lane.b32.xlu0 %v1582, 96
        %v3483 = vpop.permute.xlu0 %3482
        %3484 = vrot.lane.b32.xlu0 %v1583, 96
        %v3485 = vpop.permute.xlu0 %3484
        %3486 = vrot.lane.b32.xlu0 %v1584, 96
        %v3487 = vpop.permute.xlu0 %3486
        %3488 = vrot.lane.b32.xlu0 %v1585, 96
        %v3489 = vpop.permute.xlu0 %3488
        %3490 = vrot.lane.b32.xlu0 %v1586, 96
        %v3491 = vpop.permute.xlu0 %3490
        %3492 = vrot.lane.b32.xlu0 %v1587, 96
        %v3493 = vpop.permute.xlu0 %3492
        %3494 = vrot.lane.b32.xlu0 %v1588, 96
        %v3495 = vpop.permute.xlu0 %3494
        %3496 = vrot.lane.b32.xlu0 %v1589, 96
        %v3497 = vpop.permute.xlu0 %3496
        %3498 = vrot.lane.b32.xlu0 %v1590, 96
        %v3499 = vpop.permute.xlu0 %3498
        %3500 = vrot.lane.b32.xlu0 %v1591, 96
        %v3501 = vpop.permute.xlu0 %3500
        %3502 = vrot.lane.b32.xlu0 %v1592, 96
        %v3503 = vpop.permute.xlu0 %3502
        %3504 = vrot.lane.b32.xlu0 %v1593, 96
        %v3505 = vpop.permute.xlu0 %3504
        %v3507 = vsel %vm1594, %v3458, 0
        %v3510 = vsel %vm1594, %v3459, 0
        %v3513 = vsel %vm1594, %v3460, 0
        %v3516 = vsel %vm1594, %v3461, 0
        %v3519 = vsel %vm1594, %v3462, 0
        %v3522 = vsel %vm1594, %v3463, 0
        %v3525 = vsel %vm1594, %v3464, 0
        %v3528 = vsel %vm1594, %v3465, 0
        %v3531 = vsel %vm1594, %v3466, 0
        %v3534 = vsel %vm1594, %v3467, 0
        %v3537 = vsel %vm1594, %v3468, 0
        %v3540 = vsel %vm1594, %v3469, 0
        %v3543 = vsel %vm1594, %v3470, 0
        %v3546 = vsel %vm1594, %v3471, 0
        %v3549 = vsel %vm1594, %v3472, 0
        %v3552 = vsel %vm1594, %v3473, 0
        %v3555 = vsel %vm1594, %v3475, 0
        %v3558 = vsel %vm1594, %v3477, 0
        %v3561 = vsel %vm1594, %v3479, 0
        %v3564 = vsel %vm1594, %v3481, 0
        %v3567 = vsel %vm1594, %v3483, 0
        %v3570 = vsel %vm1594, %v3485, 0
        %v3573 = vsel %vm1594, %v3487, 0
        %v3576 = vsel %vm1594, %v3489, 0
        %v3579 = vsel %vm1594, %v3491, 0
        %v3582 = vsel %vm1594, %v3493, 0
        %v3585 = vsel %vm1594, %v3495, 0
        %v3588 = vsel %vm1594, %v3497, 0
        %v3591 = vsel %vm1594, %v3499, 0
        %v3594 = vsel %vm1594, %v3501, 0
        %v3597 = vsel %vm1594, %v3503, 0
        %v3600 = vsel %vm1594, %v3505, 0
        %3602 = vmatpush.bf16.xpose.msra.mxu0 %v3576
        %3603 = vmatpush.bf16.xpose.msra.mxu0 %v3573
        %3604 = vmatpush.bf16.xpose.msra.mxu0 %v3570
        %3605 = vmatpush.bf16.xpose.msra.mxu0 %v3567
        %3606 = vmatpush.bf16.xpose.msra.mxu0 %v3564
        %3607 = vmatpush.bf16.xpose.msra.mxu0 %v3561
        %3608 = vmatpush.bf16.xpose.msra.mxu0 %v3558
        %3609 = vmatpush.bf16.xpose.msra.mxu0 %v3555
        %3610 = vmatmul.bf16.gmra.mxu0 %v3507
        %v3611 = vpop.f32.mrf.mxu0
        %v3612 = vadd.f32 %v3330, %v3611
        %v3613 = vpop.f32.mrf.mxu0
        %v3614 = vadd.f32 %v3332, %v3613
        %3615 = vmatmul.bf16.gmra.mxu0 %v3510
        %v3616 = vpop.f32.mrf.mxu0
        %v3617 = vadd.f32 %v3334, %v3616
        %v3618 = vpop.f32.mrf.mxu0
        %v3619 = vadd.f32 %v3336, %v3618
        %3620 = vmatmul.bf16.gmra.mxu0 %v3513
        %v3621 = vpop.f32.mrf.mxu0
        %v3622 = vadd.f32 %v3338, %v3621
        %v3623 = vpop.f32.mrf.mxu0
        %v3624 = vadd.f32 %v3340, %v3623
        %3625 = vmatmul.bf16.gmra.mxu0 %v3516
        %v3626 = vpop.f32.mrf.mxu0
        %v3627 = vadd.f32 %v3342, %v3626
        %v3628 = vpop.f32.mrf.mxu0
        %v3629 = vadd.f32 %v3344, %v3628
        %3630 = vmatmul.bf16.gmra.mxu0 %v3519
        %v3631 = vpop.f32.mrf.mxu0
        %v3632 = vadd.f32 %v3346, %v3631
        %v3633 = vpop.f32.mrf.mxu0
        %v3634 = vadd.f32 %v3348, %v3633
        %3635 = vmatmul.bf16.gmra.mxu0 %v3522
        %v3636 = vpop.f32.mrf.mxu0
        %v3637 = vadd.f32 %v3350, %v3636
        %v3638 = vpop.f32.mrf.mxu0
        %v3639 = vadd.f32 %v3352, %v3638
        %3640 = vmatmul.bf16.gmra.mxu0 %v3525
        %v3641 = vpop.f32.mrf.mxu0
        %v3642 = vadd.f32 %v3354, %v3641
        %v3643 = vpop.f32.mrf.mxu0
        %v3644 = vadd.f32 %v3356, %v3643
        %3645 = vmatmul.bf16.gmra.mxu0 %v3528
        %v3646 = vpop.f32.mrf.mxu0
        %v3647 = vadd.f32 %v3358, %v3646
        %v3648 = vpop.f32.mrf.mxu0
        %v3649 = vadd.f32 %v3360, %v3648
        %3650 = vmatmul.bf16.gmra.mxu0 %v3531
        %v3651 = vpop.f32.mrf.mxu0
        %v3652 = vadd.f32 %v3362, %v3651
        %v3653 = vpop.f32.mrf.mxu0
        %v3654 = vadd.f32 %v3364, %v3653
        %3655 = vmatmul.bf16.gmra.mxu0 %v3534
        %v3656 = vpop.f32.mrf.mxu0
        %v3657 = vadd.f32 %v3366, %v3656
        %v3658 = vpop.f32.mrf.mxu0
        %v3659 = vadd.f32 %v3368, %v3658
        %3660 = vmatmul.bf16.gmra.mxu0 %v3537
        %v3661 = vpop.f32.mrf.mxu0
        %v3662 = vadd.f32 %v3370, %v3661
        %v3663 = vpop.f32.mrf.mxu0
        %v3664 = vadd.f32 %v3372, %v3663
        %3665 = vmatmul.bf16.gmra.mxu0 %v3540
        %v3666 = vpop.f32.mrf.mxu0
        %v3667 = vadd.f32 %v3374, %v3666
        %v3668 = vpop.f32.mrf.mxu0
        %v3669 = vadd.f32 %v3376, %v3668
        %3670 = vmatmul.bf16.gmra.mxu0 %v3543
        %v3671 = vpop.f32.mrf.mxu0
        %v3672 = vadd.f32 %v3378, %v3671
        %v3673 = vpop.f32.mrf.mxu0
        %v3674 = vadd.f32 %v3380, %v3673
        %3675 = vmatmul.bf16.gmra.mxu0 %v3546
        %v3676 = vpop.f32.mrf.mxu0
        %v3677 = vadd.f32 %v3382, %v3676
        %v3678 = vpop.f32.mrf.mxu0
        %v3679 = vadd.f32 %v3384, %v3678
        %3680 = vmatmul.bf16.gmra.mxu0 %v3549
        %v3681 = vpop.f32.mrf.mxu0
        %v3682 = vadd.f32 %v3386, %v3681
        %v3683 = vpop.f32.mrf.mxu0
        %v3684 = vadd.f32 %v3388, %v3683
        %3685 = vmatmul.bf16.gmra.mxu0 %v3552
        %v3686 = vpop.f32.mrf.mxu0
        %v3687 = vadd.f32 %v3390, %v3686
        %v3688 = vpop.f32.mrf.mxu0
        %v3689 = vadd.f32 %v3392, %v3688
        %3690 = vdwg.mxu0
        %3691 = vmatpush.bf16.xpose.msra.mxu0 %v3600
        %3692 = vmatpush.bf16.xpose.msra.mxu0 %v3597
        %3693 = vmatpush.bf16.xpose.msra.mxu0 %v3594
        %3694 = vmatpush.bf16.xpose.msra.mxu0 %v3591
        %3695 = vmatpush.bf16.xpose.msra.mxu0 %v3588
        %3696 = vmatpush.bf16.xpose.msra.mxu0 %v3585
        %3697 = vmatpush.bf16.xpose.msra.mxu0 %v3582
        %3698 = vmatpush.bf16.xpose.msra.mxu0 %v3579
        %3699 = vmatmul.bf16.gmra.mxu0 %v3507
        %v3700 = vpop.f32.mrf.mxu0
        %v3701 = vadd.f32 %v3331, %v3700
        %v3702 = vpop.f32.mrf.mxu0
        %v3703 = vadd.f32 %v3333, %v3702
        %3704 = vmatmul.bf16.gmra.mxu0 %v3510
        %v3705 = vpop.f32.mrf.mxu0
        %v3706 = vadd.f32 %v3335, %v3705
        %v3707 = vpop.f32.mrf.mxu0
        %v3708 = vadd.f32 %v3337, %v3707
        %3709 = vmatmul.bf16.gmra.mxu0 %v3513
        %v3710 = vpop.f32.mrf.mxu0
        %v3711 = vadd.f32 %v3339, %v3710
        %v3712 = vpop.f32.mrf.mxu0
        %v3713 = vadd.f32 %v3341, %v3712
        %3714 = vmatmul.bf16.gmra.mxu0 %v3516
        %v3715 = vpop.f32.mrf.mxu0
        %v3716 = vadd.f32 %v3343, %v3715
        %v3717 = vpop.f32.mrf.mxu0
        %v3718 = vadd.f32 %v3345, %v3717
        %3719 = vmatmul.bf16.gmra.mxu0 %v3519
        %v3720 = vpop.f32.mrf.mxu0
        %v3721 = vadd.f32 %v3347, %v3720
        %v3722 = vpop.f32.mrf.mxu0
        %v3723 = vadd.f32 %v3349, %v3722
        %3724 = vmatmul.bf16.gmra.mxu0 %v3522
        %v3725 = vpop.f32.mrf.mxu0
        %v3726 = vadd.f32 %v3351, %v3725
        %v3727 = vpop.f32.mrf.mxu0
        %v3728 = vadd.f32 %v3353, %v3727
        %3729 = vmatmul.bf16.gmra.mxu0 %v3525
        %v3730 = vpop.f32.mrf.mxu0
        %v3731 = vadd.f32 %v3355, %v3730
        %v3732 = vpop.f32.mrf.mxu0
        %v3733 = vadd.f32 %v3357, %v3732
        %3734 = vmatmul.bf16.gmra.mxu0 %v3528
        %v3735 = vpop.f32.mrf.mxu0
        %v3736 = vadd.f32 %v3359, %v3735
        %v3737 = vpop.f32.mrf.mxu0
        %v3738 = vadd.f32 %v3361, %v3737
        %3739 = vmatmul.bf16.gmra.mxu0 %v3531
        %v3740 = vpop.f32.mrf.mxu0
        %v3741 = vadd.f32 %v3363, %v3740
        %v3742 = vpop.f32.mrf.mxu0
        %v3743 = vadd.f32 %v3365, %v3742
        %3744 = vmatmul.bf16.gmra.mxu0 %v3534
        %v3745 = vpop.f32.mrf.mxu0
        %v3746 = vadd.f32 %v3367, %v3745
        %v3747 = vpop.f32.mrf.mxu0
        %v3748 = vadd.f32 %v3369, %v3747
        %3749 = vmatmul.bf16.gmra.mxu0 %v3537
        %v3750 = vpop.f32.mrf.mxu0
        %v3751 = vadd.f32 %v3371, %v3750
        %v3752 = vpop.f32.mrf.mxu0
        %v3753 = vadd.f32 %v3373, %v3752
        %3754 = vmatmul.bf16.gmra.mxu0 %v3540
        %v3755 = vpop.f32.mrf.mxu0
        %v3756 = vadd.f32 %v3375, %v3755
        %v3757 = vpop.f32.mrf.mxu0
        %v3758 = vadd.f32 %v3377, %v3757
        %3759 = vmatmul.bf16.gmra.mxu0 %v3543
        %v3760 = vpop.f32.mrf.mxu0
        %v3761 = vadd.f32 %v3379, %v3760
        %v3762 = vpop.f32.mrf.mxu0
        %v3763 = vadd.f32 %v3381, %v3762
        %3764 = vmatmul.bf16.gmra.mxu0 %v3546
        %v3765 = vpop.f32.mrf.mxu0
        %v3766 = vadd.f32 %v3383, %v3765
        %v3767 = vpop.f32.mrf.mxu0
        %v3768 = vadd.f32 %v3385, %v3767
        %3769 = vmatmul.bf16.gmra.mxu0 %v3549
        %v3770 = vpop.f32.mrf.mxu0
        %v3771 = vadd.f32 %v3387, %v3770
        %v3772 = vpop.f32.mrf.mxu0
        %v3773 = vadd.f32 %v3389, %v3772
        %3774 = vmatmul.bf16.gmra.mxu0 %v3552
        %v3775 = vpop.f32.mrf.mxu0
        %v3776 = vadd.f32 %v3391, %v3775
        %v3777 = vpop.f32.mrf.mxu0
        %v3778 = vadd.f32 %v3393, %v3777
        %3779 = vdwg.mxu0
        %s3780 = scalar_lea.vmem [#allocation3], 256
        %v3781 = vld [vmem:[%s3780] sm:$0xff]
        %v3782 = vld [vmem:[%s3780 + $0x8] sm:$0xff]
        %v3783 = vld [vmem:[%s3780 + $0x10] sm:$0xff]
        %v3784 = vld [vmem:[%s3780 + $0x18] sm:$0xff]
        %v3785 = vld [vmem:[%s3780 + $0x20] sm:$0xff]
        %v3786 = vld [vmem:[%s3780 + $0x28] sm:$0xff]
        %v3787 = vld [vmem:[%s3780 + $0x30] sm:$0xff]
        %v3788 = vld [vmem:[%s3780 + $0x38] sm:$0xff]
        %v3789 = vld [vmem:[%s3780 + $0x40] sm:$0xff]
        %v3790 = vld [vmem:[%s3780 + $0x48] sm:$0xff]
        %v3791 = vld [vmem:[%s3780 + $0x50] sm:$0xff]
        %v3792 = vld [vmem:[%s3780 + $0x58] sm:$0xff]
        %v3793 = vld [vmem:[%s3780 + $0x60] sm:$0xff]
        %v3794 = vld [vmem:[%s3780 + $0x68] sm:$0xff]
        %v3795 = vld [vmem:[%s3780 + $0x70] sm:$0xff]
        %v3796 = vld [vmem:[%s3780 + $0x78] sm:$0xff]
        %v3797 = vld [vmem:[%s3780 + $0x80] sm:$0xff]
        %v3798 = vld [vmem:[%s3780 + $0x88] sm:$0xff]
        %v3799 = vld [vmem:[%s3780 + $0x90] sm:$0xff]
        %v3800 = vld [vmem:[%s3780 + $0x98] sm:$0xff]
        %v3801 = vld [vmem:[%s3780 + $0xa0] sm:$0xff]
        %v3802 = vld [vmem:[%s3780 + $0xa8] sm:$0xff]
        %v3803 = vld [vmem:[%s3780 + $0xb0] sm:$0xff]
        %v3804 = vld [vmem:[%s3780 + $0xb8] sm:$0xff]
        %v3805 = vld [vmem:[%s3780 + $0xc0] sm:$0xff]
        %v3806 = vld [vmem:[%s3780 + $0xc8] sm:$0xff]
        %v3807 = vld [vmem:[%s3780 + $0xd0] sm:$0xff]
        %v3808 = vld [vmem:[%s3780 + $0xd8] sm:$0xff]
        %v3809 = vld [vmem:[%s3780 + $0xe0] sm:$0xff]
        %v3810 = vld [vmem:[%s3780 + $0xe8] sm:$0xff]
        %v3811 = vld [vmem:[%s3780 + $0xf0] sm:$0xff]
        %v3812 = vld [vmem:[%s3780 + $0xf8] sm:$0xff]
        %v3813 = vmax.f32 %v3612, %v3701
        %3814 = vmax.xlane.f32.xlu0 %v3813
        %v3815 = vpop.xlane.xlu0 %3814
        %v3816 = vmax.f32 %v3614, %v3703
        %3817 = vmax.xlane.f32.xlu0 %v3816
        %v3818 = vpop.xlane.xlu0 %3817
        %v3819 = vmax.f32 %v3617, %v3706
        %3820 = vmax.xlane.f32.xlu0 %v3819
        %v3821 = vpop.xlane.xlu0 %3820
        %v3822 = vmax.f32 %v3619, %v3708
        %3823 = vmax.xlane.f32.xlu0 %v3822
        %v3824 = vpop.xlane.xlu0 %3823
        %v3825 = vmax.f32 %v3622, %v3711
        %3826 = vmax.xlane.f32.xlu0 %v3825
        %v3827 = vpop.xlane.xlu0 %3826
        %v3828 = vmax.f32 %v3624, %v3713
        %3829 = vmax.xlane.f32.xlu0 %v3828
        %v3830 = vpop.xlane.xlu0 %3829
        %v3831 = vmax.f32 %v3627, %v3716
        %3832 = vmax.xlane.f32.xlu0 %v3831
        %v3833 = vpop.xlane.xlu0 %3832
        %v3834 = vmax.f32 %v3629, %v3718
        %3835 = vmax.xlane.f32.xlu0 %v3834
        %v3836 = vpop.xlane.xlu0 %3835
        %v3837 = vmax.f32 %v3632, %v3721
        %3838 = vmax.xlane.f32.xlu0 %v3837
        %v3839 = vpop.xlane.xlu0 %3838
        %v3840 = vmax.f32 %v3634, %v3723
        %3841 = vmax.xlane.f32.xlu0 %v3840
        %v3842 = vpop.xlane.xlu0 %3841
        %v3843 = vmax.f32 %v3637, %v3726
        %3844 = vmax.xlane.f32.xlu0 %v3843
        %v3845 = vpop.xlane.xlu0 %3844
        %v3846 = vmax.f32 %v3639, %v3728
        %3847 = vmax.xlane.f32.xlu0 %v3846
        %v3848 = vpop.xlane.xlu0 %3847
        %v3849 = vmax.f32 %v3642, %v3731
        %3850 = vmax.xlane.f32.xlu0 %v3849
        %v3851 = vpop.xlane.xlu0 %3850
        %v3852 = vmax.f32 %v3644, %v3733
        %3853 = vmax.xlane.f32.xlu0 %v3852
        %v3854 = vpop.xlane.xlu0 %3853
        %v3855 = vmax.f32 %v3647, %v3736
        %3856 = vmax.xlane.f32.xlu0 %v3855
        %v3857 = vpop.xlane.xlu0 %3856
        %v3858 = vmax.f32 %v3649, %v3738
        %3859 = vmax.xlane.f32.xlu0 %v3858
        %v3860 = vpop.xlane.xlu0 %3859
        %v3861 = vmax.f32 %v3652, %v3741
        %3862 = vmax.xlane.f32.xlu0 %v3861
        %v3863 = vpop.xlane.xlu0 %3862
        %v3864 = vmax.f32 %v3654, %v3743
        %3865 = vmax.xlane.f32.xlu0 %v3864
        %v3866 = vpop.xlane.xlu0 %3865
        %v3867 = vmax.f32 %v3657, %v3746
        %3868 = vmax.xlane.f32.xlu0 %v3867
        %v3869 = vpop.xlane.xlu0 %3868
        %v3870 = vmax.f32 %v3659, %v3748
        %3871 = vmax.xlane.f32.xlu0 %v3870
        %v3872 = vpop.xlane.xlu0 %3871
        %v3873 = vmax.f32 %v3662, %v3751
        %3874 = vmax.xlane.f32.xlu0 %v3873
        %v3875 = vpop.xlane.xlu0 %3874
        %v3876 = vmax.f32 %v3664, %v3753
        %3877 = vmax.xlane.f32.xlu0 %v3876
        %v3878 = vpop.xlane.xlu0 %3877
        %v3879 = vmax.f32 %v3667, %v3756
        %3880 = vmax.xlane.f32.xlu0 %v3879
        %v3881 = vpop.xlane.xlu0 %3880
        %v3882 = vmax.f32 %v3669, %v3758
        %3883 = vmax.xlane.f32.xlu0 %v3882
        %v3884 = vpop.xlane.xlu0 %3883
        %v3885 = vmax.f32 %v3672, %v3761
        %3886 = vmax.xlane.f32.xlu0 %v3885
        %v3887 = vpop.xlane.xlu0 %3886
        %v3888 = vmax.f32 %v3674, %v3763
        %3889 = vmax.xlane.f32.xlu0 %v3888
        %v3890 = vpop.xlane.xlu0 %3889
        %v3891 = vmax.f32 %v3677, %v3766
        %3892 = vmax.xlane.f32.xlu0 %v3891
        %v3893 = vpop.xlane.xlu0 %3892
        %v3894 = vmax.f32 %v3679, %v3768
        %3895 = vmax.xlane.f32.xlu0 %v3894
        %v3896 = vpop.xlane.xlu0 %3895
        %v3897 = vmax.f32 %v3682, %v3771
        %3898 = vmax.xlane.f32.xlu0 %v3897
        %v3899 = vpop.xlane.xlu0 %3898
        %v3900 = vmax.f32 %v3684, %v3773
        %3901 = vmax.xlane.f32.xlu0 %v3900
        %v3902 = vpop.xlane.xlu0 %3901
        %v3903 = vmax.f32 %v3687, %v3776
        %3904 = vmax.xlane.f32.xlu0 %v3903
        %v3905 = vpop.xlane.xlu0 %3904
        %v3906 = vmax.f32 %v3689, %v3778
        %3907 = vmax.xlane.f32.xlu0 %v3906
        %v3908 = vpop.xlane.xlu0 %3907
        %v3909 = vmax.f32 %v3781, %v3815
        %v3910 = vmax.f32 %v3782, %v3818
        %v3911 = vmax.f32 %v3783, %v3821
        %v3912 = vmax.f32 %v3784, %v3824
        %v3913 = vmax.f32 %v3785, %v3827
        %v3914 = vmax.f32 %v3786, %v3830
        %v3915 = vmax.f32 %v3787, %v3833
        %v3916 = vmax.f32 %v3788, %v3836
        %v3917 = vmax.f32 %v3789, %v3839
        %v3918 = vmax.f32 %v3790, %v3842
        %v3919 = vmax.f32 %v3791, %v3845
        %v3920 = vmax.f32 %v3792, %v3848
        %v3921 = vmax.f32 %v3793, %v3851
        %v3922 = vmax.f32 %v3794, %v3854
        %v3923 = vmax.f32 %v3795, %v3857
        %v3924 = vmax.f32 %v3796, %v3860
        %v3925 = vmax.f32 %v3797, %v3863
        %v3926 = vmax.f32 %v3798, %v3866
        %v3927 = vmax.f32 %v3799, %v3869
        %v3928 = vmax.f32 %v3800, %v3872
        %v3929 = vmax.f32 %v3801, %v3875
        %v3930 = vmax.f32 %v3802, %v3878
        %v3931 = vmax.f32 %v3803, %v3881
        %v3932 = vmax.f32 %v3804, %v3884
        %v3933 = vmax.f32 %v3805, %v3887
        %v3934 = vmax.f32 %v3806, %v3890
        %v3935 = vmax.f32 %v3807, %v3893
        %v3936 = vmax.f32 %v3808, %v3896
        %v3937 = vmax.f32 %v3809, %v3899
        %v3938 = vmax.f32 %v3810, %v3902
        %v3939 = vmax.f32 %v3811, %v3905
        %v3940 = vmax.f32 %v3812, %v3908
        %vm3941 = vcmp.eq.f32.partialorder %v3909, -inf
        %vm3942 = vcmp.eq.f32.partialorder %v3910, -inf
        %vm3943 = vcmp.eq.f32.partialorder %v3911, -inf
        %vm3944 = vcmp.eq.f32.partialorder %v3912, -inf
        %vm3945 = vcmp.eq.f32.partialorder %v3913, -inf
        %vm3946 = vcmp.eq.f32.partialorder %v3914, -inf
        %vm3947 = vcmp.eq.f32.partialorder %v3915, -inf
        %vm3948 = vcmp.eq.f32.partialorder %v3916, -inf
        %vm3949 = vcmp.eq.f32.partialorder %v3917, -inf
        %vm3950 = vcmp.eq.f32.partialorder %v3918, -inf
        %vm3951 = vcmp.eq.f32.partialorder %v3919, -inf
        %vm3952 = vcmp.eq.f32.partialorder %v3920, -inf
        %vm3953 = vcmp.eq.f32.partialorder %v3921, -inf
        %vm3954 = vcmp.eq.f32.partialorder %v3922, -inf
        %vm3955 = vcmp.eq.f32.partialorder %v3923, -inf
        %vm3956 = vcmp.eq.f32.partialorder %v3924, -inf
        %vm3957 = vcmp.eq.f32.partialorder %v3925, -inf
        %vm3958 = vcmp.eq.f32.partialorder %v3926, -inf
        %vm3959 = vcmp.eq.f32.partialorder %v3927, -inf
        %vm3960 = vcmp.eq.f32.partialorder %v3928, -inf
        %vm3961 = vcmp.eq.f32.partialorder %v3929, -inf
        %vm3962 = vcmp.eq.f32.partialorder %v3930, -inf
        %vm3963 = vcmp.eq.f32.partialorder %v3931, -inf
        %vm3964 = vcmp.eq.f32.partialorder %v3932, -inf
        %vm3965 = vcmp.eq.f32.partialorder %v3933, -inf
        %vm3966 = vcmp.eq.f32.partialorder %v3934, -inf
        %vm3967 = vcmp.eq.f32.partialorder %v3935, -inf
        %vm3968 = vcmp.eq.f32.partialorder %v3936, -inf
        %vm3969 = vcmp.eq.f32.partialorder %v3937, -inf
        %vm3970 = vcmp.eq.f32.partialorder %v3938, -inf
        %vm3971 = vcmp.eq.f32.partialorder %v3939, -inf
        %vm3972 = vcmp.eq.f32.partialorder %v3940, -inf
        %v3973 = vsel %vm3941, 0.0, %v3909
        %v3974 = vsel %vm3942, 0.0, %v3910
        %v3975 = vsel %vm3943, 0.0, %v3911
        %v3976 = vsel %vm3944, 0.0, %v3912
        %v3977 = vsel %vm3945, 0.0, %v3913
        %v3978 = vsel %vm3946, 0.0, %v3914
        %v3979 = vsel %vm3947, 0.0, %v3915
        %v3980 = vsel %vm3948, 0.0, %v3916
        %v3981 = vsel %vm3949, 0.0, %v3917
        %v3982 = vsel %vm3950, 0.0, %v3918
        %v3983 = vsel %vm3951, 0.0, %v3919
        %v3984 = vsel %vm3952, 0.0, %v3920
        %v3985 = vsel %vm3953, 0.0, %v3921
        %v3986 = vsel %vm3954, 0.0, %v3922
        %v3987 = vsel %vm3955, 0.0, %v3923
        %v3988 = vsel %vm3956, 0.0, %v3924
        %v3989 = vsel %vm3957, 0.0, %v3925
        %v3990 = vsel %vm3958, 0.0, %v3926
        %v3991 = vsel %vm3959, 0.0, %v3927
        %v3992 = vsel %vm3960, 0.0, %v3928
        %v3993 = vsel %vm3961, 0.0, %v3929
        %v3994 = vsel %vm3962, 0.0, %v3930
        %v3995 = vsel %vm3963, 0.0, %v3931
        %v3996 = vsel %vm3964, 0.0, %v3932
        %v3997 = vsel %vm3965, 0.0, %v3933
        %v3998 = vsel %vm3966, 0.0, %v3934
        %v3999 = vsel %vm3967, 0.0, %v3935
        %v4000 = vsel %vm3968, 0.0, %v3936
        %v4001 = vsel %vm3969, 0.0, %v3937
        %v4002 = vsel %vm3970, 0.0, %v3938
        %v4003 = vsel %vm3971, 0.0, %v3939
        %v4004 = vsel %vm3972, 0.0, %v3940
        %v4005 = vsub.f32 %v3781, %v3973
        %v4006 = vsub.f32 %v3782, %v3974
        %v4007 = vsub.f32 %v3783, %v3975
        %v4008 = vsub.f32 %v3784, %v3976
        %v4009 = vsub.f32 %v3785, %v3977
        %v4010 = vsub.f32 %v3786, %v3978
        %v4011 = vsub.f32 %v3787, %v3979
        %v4012 = vsub.f32 %v3788, %v3980
        %v4013 = vsub.f32 %v3789, %v3981
        %v4014 = vsub.f32 %v3790, %v3982
        %v4015 = vsub.f32 %v3791, %v3983
        %v4016 = vsub.f32 %v3792, %v3984
        %v4017 = vsub.f32 %v3793, %v3985
        %v4018 = vsub.f32 %v3794, %v3986
        %v4019 = vsub.f32 %v3795, %v3987
        %v4020 = vsub.f32 %v3796, %v3988
        %v4021 = vsub.f32 %v3797, %v3989
        %v4022 = vsub.f32 %v3798, %v3990
        %v4023 = vsub.f32 %v3799, %v3991
        %v4024 = vsub.f32 %v3800, %v3992
        %v4025 = vsub.f32 %v3801, %v3993
        %v4026 = vsub.f32 %v3802, %v3994
        %v4027 = vsub.f32 %v3803, %v3995
        %v4028 = vsub.f32 %v3804, %v3996
        %v4029 = vsub.f32 %v3805, %v3997
        %v4030 = vsub.f32 %v3806, %v3998
        %v4031 = vsub.f32 %v3807, %v3999
        %v4032 = vsub.f32 %v3808, %v4000
        %v4033 = vsub.f32 %v3809, %v4001
        %v4034 = vsub.f32 %v3810, %v4002
        %v4035 = vsub.f32 %v3811, %v4003
        %v4036 = vsub.f32 %v3812, %v4004
        %v4037 = vmul.f32 %v4005, 1.442695
        %v4038 = vpow.pop %v4037
        %v4039 = vmul.f32 %v4006, 1.442695
        %v4040 = vpow.pop %v4039
        %v4041 = vmul.f32 %v4007, 1.442695
        %v4042 = vpow.pop %v4041
        %v4043 = vmul.f32 %v4008, 1.442695
        %v4044 = vpow.pop %v4043
        %v4045 = vmul.f32 %v4009, 1.442695
        %v4046 = vpow.pop %v4045
        %v4047 = vmul.f32 %v4010, 1.442695
        %v4048 = vpow.pop %v4047
        %v4049 = vmul.f32 %v4011, 1.442695
        %v4050 = vpow.pop %v4049
        %v4051 = vmul.f32 %v4012, 1.442695
        %v4052 = vpow.pop %v4051
        %v4053 = vmul.f32 %v4013, 1.442695
        %v4054 = vpow.pop %v4053
        %v4055 = vmul.f32 %v4014, 1.442695
        %v4056 = vpow.pop %v4055
        %v4057 = vmul.f32 %v4015, 1.442695
        %v4058 = vpow.pop %v4057
        %v4059 = vmul.f32 %v4016, 1.442695
        %v4060 = vpow.pop %v4059
        %v4061 = vmul.f32 %v4017, 1.442695
        %v4062 = vpow.pop %v4061
        %v4063 = vmul.f32 %v4018, 1.442695
        %v4064 = vpow.pop %v4063
        %v4065 = vmul.f32 %v4019, 1.442695
        %v4066 = vpow.pop %v4065
        %v4067 = vmul.f32 %v4020, 1.442695
        %v4068 = vpow.pop %v4067
        %v4069 = vmul.f32 %v4021, 1.442695
        %v4070 = vpow.pop %v4069
        %v4071 = vmul.f32 %v4022, 1.442695
        %v4072 = vpow.pop %v4071
        %v4073 = vmul.f32 %v4023, 1.442695
        %v4074 = vpow.pop %v4073
        %v4075 = vmul.f32 %v4024, 1.442695
        %v4076 = vpow.pop %v4075
        %v4077 = vmul.f32 %v4025, 1.442695
        %v4078 = vpow.pop %v4077
        %v4079 = vmul.f32 %v4026, 1.442695
        %v4080 = vpow.pop %v4079
        %v4081 = vmul.f32 %v4027, 1.442695
        %v4082 = vpow.pop %v4081
        %v4083 = vmul.f32 %v4028, 1.442695
        %v4084 = vpow.pop %v4083
        %v4085 = vmul.f32 %v4029, 1.442695
        %v4086 = vpow.pop %v4085
        %v4087 = vmul.f32 %v4030, 1.442695
        %v4088 = vpow.pop %v4087
        %v4089 = vmul.f32 %v4031, 1.442695
        %v4090 = vpow.pop %v4089
        %v4091 = vmul.f32 %v4032, 1.442695
        %v4092 = vpow.pop %v4091
        %v4093 = vmul.f32 %v4033, 1.442695
        %v4094 = vpow.pop %v4093
        %v4095 = vmul.f32 %v4034, 1.442695
        %v4096 = vpow.pop %v4095
        %v4097 = vmul.f32 %v4035, 1.442695
        %v4098 = vpow.pop %v4097
        %v4099 = vmul.f32 %v4036, 1.442695
        %v4100 = vpow.pop %v4099
        %4102 = vset.pattern.permute.xlu0 0
        %4103 = vperm.xlu0 %4102, %v3973
        %v4104 = vpop.permute.xlu0 %4103
        %4107 = vset.pattern.permute.xlu0 0
        %4108 = vperm.xlu0 %4107, %v3974
        %v4109 = vpop.permute.xlu0 %4108
        %4112 = vset.pattern.permute.xlu0 0
        %4113 = vperm.xlu0 %4112, %v3975
        %v4114 = vpop.permute.xlu0 %4113
        %4117 = vset.pattern.permute.xlu0 0
        %4118 = vperm.xlu0 %4117, %v3976
        %v4119 = vpop.permute.xlu0 %4118
        %4122 = vset.pattern.permute.xlu0 0
        %4123 = vperm.xlu0 %4122, %v3977
        %v4124 = vpop.permute.xlu0 %4123
        %4127 = vset.pattern.permute.xlu0 0
        %4128 = vperm.xlu0 %4127, %v3978
        %v4129 = vpop.permute.xlu0 %4128
        %4132 = vset.pattern.permute.xlu0 0
        %4133 = vperm.xlu0 %4132, %v3979
        %v4134 = vpop.permute.xlu0 %4133
        %4137 = vset.pattern.permute.xlu0 0
        %4138 = vperm.xlu0 %4137, %v3980
        %v4139 = vpop.permute.xlu0 %4138
        %4142 = vset.pattern.permute.xlu0 0
        %4143 = vperm.xlu0 %4142, %v3981
        %v4144 = vpop.permute.xlu0 %4143
        %4147 = vset.pattern.permute.xlu0 0
        %4148 = vperm.xlu0 %4147, %v3982
        %v4149 = vpop.permute.xlu0 %4148
        %4152 = vset.pattern.permute.xlu0 0
        %4153 = vperm.xlu0 %4152, %v3983
        %v4154 = vpop.permute.xlu0 %4153
        %4157 = vset.pattern.permute.xlu0 0
        %4158 = vperm.xlu0 %4157, %v3984
        %v4159 = vpop.permute.xlu0 %4158
        %4162 = vset.pattern.permute.xlu0 0
        %4163 = vperm.xlu0 %4162, %v3985
        %v4164 = vpop.permute.xlu0 %4163
        %4167 = vset.pattern.permute.xlu0 0
        %4168 = vperm.xlu0 %4167, %v3986
        %v4169 = vpop.permute.xlu0 %4168
        %4172 = vset.pattern.permute.xlu0 0
        %4173 = vperm.xlu0 %4172, %v3987
        %v4174 = vpop.permute.xlu0 %4173
        %4177 = vset.pattern.permute.xlu0 0
        %4178 = vperm.xlu0 %4177, %v3988
        %v4179 = vpop.permute.xlu0 %4178
        %4182 = vset.pattern.permute.xlu0 0
        %4183 = vperm.xlu0 %4182, %v3989
        %v4184 = vpop.permute.xlu0 %4183
        %4187 = vset.pattern.permute.xlu0 0
        %4188 = vperm.xlu0 %4187, %v3990
        %v4189 = vpop.permute.xlu0 %4188
        %4192 = vset.pattern.permute.xlu0 0
        %4193 = vperm.xlu0 %4192, %v3991
        %v4194 = vpop.permute.xlu0 %4193
        %4197 = vset.pattern.permute.xlu0 0
        %4198 = vperm.xlu0 %4197, %v3992
        %v4199 = vpop.permute.xlu0 %4198
        %4202 = vset.pattern.permute.xlu0 0
        %4203 = vperm.xlu0 %4202, %v3993
        %v4204 = vpop.permute.xlu0 %4203
        %4207 = vset.pattern.permute.xlu0 0
        %4208 = vperm.xlu0 %4207, %v3994
        %v4209 = vpop.permute.xlu0 %4208
        %4212 = vset.pattern.permute.xlu0 0
        %4213 = vperm.xlu0 %4212, %v3995
        %v4214 = vpop.permute.xlu0 %4213
        %4217 = vset.pattern.permute.xlu0 0
        %4218 = vperm.xlu0 %4217, %v3996
        %v4219 = vpop.permute.xlu0 %4218
        %4222 = vset.pattern.permute.xlu0 0
        %4223 = vperm.xlu0 %4222, %v3997
        %v4224 = vpop.permute.xlu0 %4223
        %4227 = vset.pattern.permute.xlu0 0
        %4228 = vperm.xlu0 %4227, %v3998
        %v4229 = vpop.permute.xlu0 %4228
        %4232 = vset.pattern.permute.xlu0 0
        %4233 = vperm.xlu0 %4232, %v3999
        %v4234 = vpop.permute.xlu0 %4233
        %4237 = vset.pattern.permute.xlu0 0
        %4238 = vperm.xlu0 %4237, %v4000
        %v4239 = vpop.permute.xlu0 %4238
        %4242 = vset.pattern.permute.xlu0 0
        %4243 = vperm.xlu0 %4242, %v4001
        %v4244 = vpop.permute.xlu0 %4243
        %4247 = vset.pattern.permute.xlu0 0
        %4248 = vperm.xlu0 %4247, %v4002
        %v4249 = vpop.permute.xlu0 %4248
        %4252 = vset.pattern.permute.xlu0 0
        %4253 = vperm.xlu0 %4252, %v4003
        %v4254 = vpop.permute.xlu0 %4253
        %4257 = vset.pattern.permute.xlu0 0
        %4258 = vperm.xlu0 %4257, %v4004
        %v4259 = vpop.permute.xlu0 %4258
        %v4261 = vsub.f32 %v3612, %v4104
        %v4262 = vsub.f32 %v3701, %v4104
        %v4263 = vsub.f32 %v3614, %v4109
        %v4264 = vsub.f32 %v3703, %v4109
        %v4265 = vsub.f32 %v3617, %v4114
        %v4266 = vsub.f32 %v3706, %v4114
        %v4267 = vsub.f32 %v3619, %v4119
        %v4268 = vsub.f32 %v3708, %v4119
        %v4269 = vsub.f32 %v3622, %v4124
        %v4270 = vsub.f32 %v3711, %v4124
        %v4271 = vsub.f32 %v3624, %v4129
        %v4272 = vsub.f32 %v3713, %v4129
        %v4273 = vsub.f32 %v3627, %v4134
        %v4274 = vsub.f32 %v3716, %v4134
        %v4275 = vsub.f32 %v3629, %v4139
        %v4276 = vsub.f32 %v3718, %v4139
        %v4277 = vsub.f32 %v3632, %v4144
        %v4278 = vsub.f32 %v3721, %v4144
        %v4279 = vsub.f32 %v3634, %v4149
        %v4280 = vsub.f32 %v3723, %v4149
        %v4281 = vsub.f32 %v3637, %v4154
        %v4282 = vsub.f32 %v3726, %v4154
        %v4283 = vsub.f32 %v3639, %v4159
        %v4284 = vsub.f32 %v3728, %v4159
        %v4285 = vsub.f32 %v3642, %v4164
        %v4286 = vsub.f32 %v3731, %v4164
        %v4287 = vsub.f32 %v3644, %v4169
        %v4288 = vsub.f32 %v3733, %v4169
        %v4289 = vsub.f32 %v3647, %v4174
        %v4290 = vsub.f32 %v3736, %v4174
        %v4291 = vsub.f32 %v3649, %v4179
        %v4292 = vsub.f32 %v3738, %v4179
        %v4293 = vsub.f32 %v3652, %v4184
        %v4294 = vsub.f32 %v3741, %v4184
        %v4295 = vsub.f32 %v3654, %v4189
        %v4296 = vsub.f32 %v3743, %v4189
        %v4297 = vsub.f32 %v3657, %v4194
        %v4298 = vsub.f32 %v3746, %v4194
        %v4299 = vsub.f32 %v3659, %v4199
        %v4300 = vsub.f32 %v3748, %v4199
        %v4301 = vsub.f32 %v3662, %v4204
        %v4302 = vsub.f32 %v3751, %v4204
        %v4303 = vsub.f32 %v3664, %v4209
        %v4304 = vsub.f32 %v3753, %v4209
        %v4305 = vsub.f32 %v3667, %v4214
        %v4306 = vsub.f32 %v3756, %v4214
        %v4307 = vsub.f32 %v3669, %v4219
        %v4308 = vsub.f32 %v3758, %v4219
        %v4309 = vsub.f32 %v3672, %v4224
        %v4310 = vsub.f32 %v3761, %v4224
        %v4311 = vsub.f32 %v3674, %v4229
        %v4312 = vsub.f32 %v3763, %v4229
        %v4313 = vsub.f32 %v3677, %v4234
        %v4314 = vsub.f32 %v3766, %v4234
        %v4315 = vsub.f32 %v3679, %v4239
        %v4316 = vsub.f32 %v3768, %v4239
        %v4317 = vsub.f32 %v3682, %v4244
        %v4318 = vsub.f32 %v3771, %v4244
        %v4319 = vsub.f32 %v3684, %v4249
        %v4320 = vsub.f32 %v3773, %v4249
        %v4321 = vsub.f32 %v3687, %v4254
        %v4322 = vsub.f32 %v3776, %v4254
        %v4323 = vsub.f32 %v3689, %v4259
        %v4324 = vsub.f32 %v3778, %v4259
        %v4325 = vmul.f32 %v4261, 1.442695
        %v4326 = vpow.pop %v4325
        %v4327 = vmul.f32 %v4262, 1.442695
        %v4328 = vpow.pop %v4327
        %v4329 = vmul.f32 %v4263, 1.442695
        %v4330 = vpow.pop %v4329
        %v4331 = vmul.f32 %v4264, 1.442695
        %v4332 = vpow.pop %v4331
        %v4333 = vmul.f32 %v4265, 1.442695
        %v4334 = vpow.pop %v4333
        %v4335 = vmul.f32 %v4266, 1.442695
        %v4336 = vpow.pop %v4335
        %v4337 = vmul.f32 %v4267, 1.442695
        %v4338 = vpow.pop %v4337
        %v4339 = vmul.f32 %v4268, 1.442695
        %v4340 = vpow.pop %v4339
        %v4341 = vmul.f32 %v4269, 1.442695
        %v4342 = vpow.pop %v4341
        %v4343 = vmul.f32 %v4270, 1.442695
        %v4344 = vpow.pop %v4343
        %v4345 = vmul.f32 %v4271, 1.442695
        %v4346 = vpow.pop %v4345
        %v4347 = vmul.f32 %v4272, 1.442695
        %v4348 = vpow.pop %v4347
        %v4349 = vmul.f32 %v4273, 1.442695
        %v4350 = vpow.pop %v4349
        %v4351 = vmul.f32 %v4274, 1.442695
        %v4352 = vpow.pop %v4351
        %v4353 = vmul.f32 %v4275, 1.442695
        %v4354 = vpow.pop %v4353
        %v4355 = vmul.f32 %v4276, 1.442695
        %v4356 = vpow.pop %v4355
        %v4357 = vmul.f32 %v4277, 1.442695
        %v4358 = vpow.pop %v4357
        %v4359 = vmul.f32 %v4278, 1.442695
        %v4360 = vpow.pop %v4359
        %v4361 = vmul.f32 %v4279, 1.442695
        %v4362 = vpow.pop %v4361
        %v4363 = vmul.f32 %v4280, 1.442695
        %v4364 = vpow.pop %v4363
        %v4365 = vmul.f32 %v4281, 1.442695
        %v4366 = vpow.pop %v4365
        %v4367 = vmul.f32 %v4282, 1.442695
        %v4368 = vpow.pop %v4367
        %v4369 = vmul.f32 %v4283, 1.442695
        %v4370 = vpow.pop %v4369
        %v4371 = vmul.f32 %v4284, 1.442695
        %v4372 = vpow.pop %v4371
        %v4373 = vmul.f32 %v4285, 1.442695
        %v4374 = vpow.pop %v4373
        %v4375 = vmul.f32 %v4286, 1.442695
        %v4376 = vpow.pop %v4375
        %v4377 = vmul.f32 %v4287, 1.442695
        %v4378 = vpow.pop %v4377
        %v4379 = vmul.f32 %v4288, 1.442695
        %v4380 = vpow.pop %v4379
        %v4381 = vmul.f32 %v4289, 1.442695
        %v4382 = vpow.pop %v4381
        %v4383 = vmul.f32 %v4290, 1.442695
        %v4384 = vpow.pop %v4383
        %v4385 = vmul.f32 %v4291, 1.442695
        %v4386 = vpow.pop %v4385
        %v4387 = vmul.f32 %v4292, 1.442695
        %v4388 = vpow.pop %v4387
        %v4389 = vmul.f32 %v4293, 1.442695
        %v4390 = vpow.pop %v4389
        %v4391 = vmul.f32 %v4294, 1.442695
        %v4392 = vpow.pop %v4391
        %v4393 = vmul.f32 %v4295, 1.442695
        %v4394 = vpow.pop %v4393
        %v4395 = vmul.f32 %v4296, 1.442695
        %v4396 = vpow.pop %v4395
        %v4397 = vmul.f32 %v4297, 1.442695
        %v4398 = vpow.pop %v4397
        %v4399 = vmul.f32 %v4298, 1.442695
        %v4400 = vpow.pop %v4399
        %v4401 = vmul.f32 %v4299, 1.442695
        %v4402 = vpow.pop %v4401
        %v4403 = vmul.f32 %v4300, 1.442695
        %v4404 = vpow.pop %v4403
        %v4405 = vmul.f32 %v4301, 1.442695
        %v4406 = vpow.pop %v4405
        %v4407 = vmul.f32 %v4302, 1.442695
        %v4408 = vpow.pop %v4407
        %v4409 = vmul.f32 %v4303, 1.442695
        %v4410 = vpow.pop %v4409
        %v4411 = vmul.f32 %v4304, 1.442695
        %v4412 = vpow.pop %v4411
        %v4413 = vmul.f32 %v4305, 1.442695
        %v4414 = vpow.pop %v4413
        %v4415 = vmul.f32 %v4306, 1.442695
        %v4416 = vpow.pop %v4415
        %v4417 = vmul.f32 %v4307, 1.442695
        %v4418 = vpow.pop %v4417
        %v4419 = vmul.f32 %v4308, 1.442695
        %v4420 = vpow.pop %v4419
        %v4421 = vmul.f32 %v4309, 1.442695
        %v4422 = vpow.pop %v4421
        %v4423 = vmul.f32 %v4310, 1.442695
        %v4424 = vpow.pop %v4423
        %v4425 = vmul.f32 %v4311, 1.442695
        %v4426 = vpow.pop %v4425
        %v4427 = vmul.f32 %v4312, 1.442695
        %v4428 = vpow.pop %v4427
        %v4429 = vmul.f32 %v4313, 1.442695
        %v4430 = vpow.pop %v4429
        %v4431 = vmul.f32 %v4314, 1.442695
        %v4432 = vpow.pop %v4431
        %v4433 = vmul.f32 %v4315, 1.442695
        %v4434 = vpow.pop %v4433
        %v4435 = vmul.f32 %v4316, 1.442695
        %v4436 = vpow.pop %v4435
        %v4437 = vmul.f32 %v4317, 1.442695
        %v4438 = vpow.pop %v4437
        %v4439 = vmul.f32 %v4318, 1.442695
        %v4440 = vpow.pop %v4439
        %v4441 = vmul.f32 %v4319, 1.442695
        %v4442 = vpow.pop %v4441
        %v4443 = vmul.f32 %v4320, 1.442695
        %v4444 = vpow.pop %v4443
        %v4445 = vmul.f32 %v4321, 1.442695
        %v4446 = vpow.pop %v4445
        %v4447 = vmul.f32 %v4322, 1.442695
        %v4448 = vpow.pop %v4447
        %v4449 = vmul.f32 %v4323, 1.442695
        %v4450 = vpow.pop %v4449
        %v4451 = vmul.f32 %v4324, 1.442695
        %v4452 = vpow.pop %v4451
        %s4453 = scalar_lea.vmem [#allocation4], 256
        %v4454 = vld [vmem:[%s4453] sm:$0xff]
        %v4455 = vld [vmem:[%s4453 + $0x8] sm:$0xff]
        %v4456 = vld [vmem:[%s4453 + $0x10] sm:$0xff]
        %v4457 = vld [vmem:[%s4453 + $0x18] sm:$0xff]
        %v4458 = vld [vmem:[%s4453 + $0x20] sm:$0xff]
        %v4459 = vld [vmem:[%s4453 + $0x28] sm:$0xff]
        %v4460 = vld [vmem:[%s4453 + $0x30] sm:$0xff]
        %v4461 = vld [vmem:[%s4453 + $0x38] sm:$0xff]
        %v4462 = vld [vmem:[%s4453 + $0x40] sm:$0xff]
        %v4463 = vld [vmem:[%s4453 + $0x48] sm:$0xff]
        %v4464 = vld [vmem:[%s4453 + $0x50] sm:$0xff]
        %v4465 = vld [vmem:[%s4453 + $0x58] sm:$0xff]
        %v4466 = vld [vmem:[%s4453 + $0x60] sm:$0xff]
        %v4467 = vld [vmem:[%s4453 + $0x68] sm:$0xff]
        %v4468 = vld [vmem:[%s4453 + $0x70] sm:$0xff]
        %v4469 = vld [vmem:[%s4453 + $0x78] sm:$0xff]
        %v4470 = vld [vmem:[%s4453 + $0x80] sm:$0xff]
        %v4471 = vld [vmem:[%s4453 + $0x88] sm:$0xff]
        %v4472 = vld [vmem:[%s4453 + $0x90] sm:$0xff]
        %v4473 = vld [vmem:[%s4453 + $0x98] sm:$0xff]
        %v4474 = vld [vmem:[%s4453 + $0xa0] sm:$0xff]
        %v4475 = vld [vmem:[%s4453 + $0xa8] sm:$0xff]
        %v4476 = vld [vmem:[%s4453 + $0xb0] sm:$0xff]
        %v4477 = vld [vmem:[%s4453 + $0xb8] sm:$0xff]
        %v4478 = vld [vmem:[%s4453 + $0xc0] sm:$0xff]
        %v4479 = vld [vmem:[%s4453 + $0xc8] sm:$0xff]
        %v4480 = vld [vmem:[%s4453 + $0xd0] sm:$0xff]
        %v4481 = vld [vmem:[%s4453 + $0xd8] sm:$0xff]
        %v4482 = vld [vmem:[%s4453 + $0xe0] sm:$0xff]
        %v4483 = vld [vmem:[%s4453 + $0xe8] sm:$0xff]
        %v4484 = vld [vmem:[%s4453 + $0xf0] sm:$0xff]
        %v4485 = vld [vmem:[%s4453 + $0xf8] sm:$0xff]
        %v4486 = vmul.f32 %v4038, %v4454
        %v4487 = vmul.f32 %v4040, %v4455
        %v4488 = vmul.f32 %v4042, %v4456
        %v4489 = vmul.f32 %v4044, %v4457
        %v4490 = vmul.f32 %v4046, %v4458
        %v4491 = vmul.f32 %v4048, %v4459
        %v4492 = vmul.f32 %v4050, %v4460
        %v4493 = vmul.f32 %v4052, %v4461
        %v4494 = vmul.f32 %v4054, %v4462
        %v4495 = vmul.f32 %v4056, %v4463
        %v4496 = vmul.f32 %v4058, %v4464
        %v4497 = vmul.f32 %v4060, %v4465
        %v4498 = vmul.f32 %v4062, %v4466
        %v4499 = vmul.f32 %v4064, %v4467
        %v4500 = vmul.f32 %v4066, %v4468
        %v4501 = vmul.f32 %v4068, %v4469
        %v4502 = vmul.f32 %v4070, %v4470
        %v4503 = vmul.f32 %v4072, %v4471
        %v4504 = vmul.f32 %v4074, %v4472
        %v4505 = vmul.f32 %v4076, %v4473
        %v4506 = vmul.f32 %v4078, %v4474
        %v4507 = vmul.f32 %v4080, %v4475
        %v4508 = vmul.f32 %v4082, %v4476
        %v4509 = vmul.f32 %v4084, %v4477
        %v4510 = vmul.f32 %v4086, %v4478
        %v4511 = vmul.f32 %v4088, %v4479
        %v4512 = vmul.f32 %v4090, %v4480
        %v4513 = vmul.f32 %v4092, %v4481
        %v4514 = vmul.f32 %v4094, %v4482
        %v4515 = vmul.f32 %v4096, %v4483
        %v4516 = vmul.f32 %v4098, %v4484
        %v4517 = vmul.f32 %v4100, %v4485
        %v4518 = vadd.f32 %v4326, %v4328
        %4519 = vadd.xlane.f32.xlu0 %v4518
        %v4520 = vpop.xlane.xlu0 %4519
        %v4521 = vadd.f32 %v4330, %v4332
        %4522 = vadd.xlane.f32.xlu0 %v4521
        %v4523 = vpop.xlane.xlu0 %4522
        %v4524 = vadd.f32 %v4334, %v4336
        %4525 = vadd.xlane.f32.xlu0 %v4524
        %v4526 = vpop.xlane.xlu0 %4525
        %v4527 = vadd.f32 %v4338, %v4340
        %4528 = vadd.xlane.f32.xlu0 %v4527
        %v4529 = vpop.xlane.xlu0 %4528
        %v4530 = vadd.f32 %v4342, %v4344
        %4531 = vadd.xlane.f32.xlu0 %v4530
        %v4532 = vpop.xlane.xlu0 %4531
        %v4533 = vadd.f32 %v4346, %v4348
        %4534 = vadd.xlane.f32.xlu0 %v4533
        %v4535 = vpop.xlane.xlu0 %4534
        %v4536 = vadd.f32 %v4350, %v4352
        %4537 = vadd.xlane.f32.xlu0 %v4536
        %v4538 = vpop.xlane.xlu0 %4537
        %v4539 = vadd.f32 %v4354, %v4356
        %4540 = vadd.xlane.f32.xlu0 %v4539
        %v4541 = vpop.xlane.xlu0 %4540
        %v4542 = vadd.f32 %v4358, %v4360
        %4543 = vadd.xlane.f32.xlu0 %v4542
        %v4544 = vpop.xlane.xlu0 %4543
        %v4545 = vadd.f32 %v4362, %v4364
        %4546 = vadd.xlane.f32.xlu0 %v4545
        %v4547 = vpop.xlane.xlu0 %4546
        %v4548 = vadd.f32 %v4366, %v4368
        %4549 = vadd.xlane.f32.xlu0 %v4548
        %v4550 = vpop.xlane.xlu0 %4549
        %v4551 = vadd.f32 %v4370, %v4372
        %4552 = vadd.xlane.f32.xlu0 %v4551
        %v4553 = vpop.xlane.xlu0 %4552
        %v4554 = vadd.f32 %v4374, %v4376
        %4555 = vadd.xlane.f32.xlu0 %v4554
        %v4556 = vpop.xlane.xlu0 %4555
        %v4557 = vadd.f32 %v4378, %v4380
        %4558 = vadd.xlane.f32.xlu0 %v4557
        %v4559 = vpop.xlane.xlu0 %4558
        %v4560 = vadd.f32 %v4382, %v4384
        %4561 = vadd.xlane.f32.xlu0 %v4560
        %v4562 = vpop.xlane.xlu0 %4561
        %v4563 = vadd.f32 %v4386, %v4388
        %4564 = vadd.xlane.f32.xlu0 %v4563
        %v4565 = vpop.xlane.xlu0 %4564
        %v4566 = vadd.f32 %v4390, %v4392
        %4567 = vadd.xlane.f32.xlu0 %v4566
        %v4568 = vpop.xlane.xlu0 %4567
        %v4569 = vadd.f32 %v4394, %v4396
        %4570 = vadd.xlane.f32.xlu0 %v4569
        %v4571 = vpop.xlane.xlu0 %4570
        %v4572 = vadd.f32 %v4398, %v4400
        %4573 = vadd.xlane.f32.xlu0 %v4572
        %v4574 = vpop.xlane.xlu0 %4573
        %v4575 = vadd.f32 %v4402, %v4404
        %4576 = vadd.xlane.f32.xlu0 %v4575
        %v4577 = vpop.xlane.xlu0 %4576
        %v4578 = vadd.f32 %v4406, %v4408
        %4579 = vadd.xlane.f32.xlu0 %v4578
        %v4580 = vpop.xlane.xlu0 %4579
        %v4581 = vadd.f32 %v4410, %v4412
        %4582 = vadd.xlane.f32.xlu0 %v4581
        %v4583 = vpop.xlane.xlu0 %4582
        %v4584 = vadd.f32 %v4414, %v4416
        %4585 = vadd.xlane.f32.xlu0 %v4584
        %v4586 = vpop.xlane.xlu0 %4585
        %v4587 = vadd.f32 %v4418, %v4420
        %4588 = vadd.xlane.f32.xlu0 %v4587
        %v4589 = vpop.xlane.xlu0 %4588
        %v4590 = vadd.f32 %v4422, %v4424
        %4591 = vadd.xlane.f32.xlu0 %v4590
        %v4592 = vpop.xlane.xlu0 %4591
        %v4593 = vadd.f32 %v4426, %v4428
        %4594 = vadd.xlane.f32.xlu0 %v4593
        %v4595 = vpop.xlane.xlu0 %4594
        %v4596 = vadd.f32 %v4430, %v4432
        %4597 = vadd.xlane.f32.xlu0 %v4596
        %v4598 = vpop.xlane.xlu0 %4597
        %v4599 = vadd.f32 %v4434, %v4436
        %4600 = vadd.xlane.f32.xlu0 %v4599
        %v4601 = vpop.xlane.xlu0 %4600
        %v4602 = vadd.f32 %v4438, %v4440
        %4603 = vadd.xlane.f32.xlu0 %v4602
        %v4604 = vpop.xlane.xlu0 %4603
        %v4605 = vadd.f32 %v4442, %v4444
        %4606 = vadd.xlane.f32.xlu0 %v4605
        %v4607 = vpop.xlane.xlu0 %4606
        %v4608 = vadd.f32 %v4446, %v4448
        %4609 = vadd.xlane.f32.xlu0 %v4608
        %v4610 = vpop.xlane.xlu0 %4609
        %v4611 = vadd.f32 %v4450, %v4452
        %4612 = vadd.xlane.f32.xlu0 %v4611
        %v4613 = vpop.xlane.xlu0 %4612
        %v4614 = vadd.f32 %v4486, %v4520
        %v4615 = vadd.f32 %v4487, %v4523
        %v4616 = vadd.f32 %v4488, %v4526
        %v4617 = vadd.f32 %v4489, %v4529
        %v4618 = vadd.f32 %v4490, %v4532
        %v4619 = vadd.f32 %v4491, %v4535
        %v4620 = vadd.f32 %v4492, %v4538
        %v4621 = vadd.f32 %v4493, %v4541
        %v4622 = vadd.f32 %v4494, %v4544
        %v4623 = vadd.f32 %v4495, %v4547
        %v4624 = vadd.f32 %v4496, %v4550
        %v4625 = vadd.f32 %v4497, %v4553
        %v4626 = vadd.f32 %v4498, %v4556
        %v4627 = vadd.f32 %v4499, %v4559
        %v4628 = vadd.f32 %v4500, %v4562
        %v4629 = vadd.f32 %v4501, %v4565
        %v4630 = vadd.f32 %v4502, %v4568
        %v4631 = vadd.f32 %v4503, %v4571
        %v4632 = vadd.f32 %v4504, %v4574
        %v4633 = vadd.f32 %v4505, %v4577
        %v4634 = vadd.f32 %v4506, %v4580
        %v4635 = vadd.f32 %v4507, %v4583
        %v4636 = vadd.f32 %v4508, %v4586
        %v4637 = vadd.f32 %v4509, %v4589
        %v4638 = vadd.f32 %v4510, %v4592
        %v4639 = vadd.f32 %v4511, %v4595
        %v4640 = vadd.f32 %v4512, %v4598
        %v4641 = vadd.f32 %v4513, %v4601
        %v4642 = vadd.f32 %v4514, %v4604
        %v4643 = vadd.f32 %v4515, %v4607
        %v4644 = vadd.f32 %v4516, %v4610
        %v4645 = vadd.f32 %v4517, %v4613
        %4646 = vst.msk [vmem:[%s4453] sm:$0xff] %vm2733, %v4614
        %4647 = vst.msk [vmem:[%s4453 + $0x8] sm:$0xff] %vm2733, %v4615
        %4648 = vst.msk [vmem:[%s4453 + $0x10] sm:$0xff] %vm2733, %v4616
        %4649 = vst.msk [vmem:[%s4453 + $0x18] sm:$0xff] %vm2733, %v4617
        %4650 = vst.msk [vmem:[%s4453 + $0x20] sm:$0xff] %vm2733, %v4618
        %4651 = vst.msk [vmem:[%s4453 + $0x28] sm:$0xff] %vm2733, %v4619
        %4652 = vst.msk [vmem:[%s4453 + $0x30] sm:$0xff] %vm2733, %v4620
        %4653 = vst.msk [vmem:[%s4453 + $0x38] sm:$0xff] %vm2733, %v4621
        %4654 = vst.msk [vmem:[%s4453 + $0x40] sm:$0xff] %vm2733, %v4622
        %4655 = vst.msk [vmem:[%s4453 + $0x48] sm:$0xff] %vm2733, %v4623
        %4656 = vst.msk [vmem:[%s4453 + $0x50] sm:$0xff] %vm2733, %v4624
        %4657 = vst.msk [vmem:[%s4453 + $0x58] sm:$0xff] %vm2733, %v4625
        %4658 = vst.msk [vmem:[%s4453 + $0x60] sm:$0xff] %vm2733, %v4626
        %4659 = vst.msk [vmem:[%s4453 + $0x68] sm:$0xff] %vm2733, %v4627
        %4660 = vst.msk [vmem:[%s4453 + $0x70] sm:$0xff] %vm2733, %v4628
        %4661 = vst.msk [vmem:[%s4453 + $0x78] sm:$0xff] %vm2733, %v4629
        %4662 = vst.msk [vmem:[%s4453 + $0x80] sm:$0xff] %vm2733, %v4630
        %4663 = vst.msk [vmem:[%s4453 + $0x88] sm:$0xff] %vm2733, %v4631
        %4664 = vst.msk [vmem:[%s4453 + $0x90] sm:$0xff] %vm2733, %v4632
        %4665 = vst.msk [vmem:[%s4453 + $0x98] sm:$0xff] %vm2733, %v4633
        %4666 = vst.msk [vmem:[%s4453 + $0xa0] sm:$0xff] %vm2733, %v4634
        %4667 = vst.msk [vmem:[%s4453 + $0xa8] sm:$0xff] %vm2733, %v4635
        %4668 = vst.msk [vmem:[%s4453 + $0xb0] sm:$0xff] %vm2733, %v4636
        %4669 = vst.msk [vmem:[%s4453 + $0xb8] sm:$0xff] %vm2733, %v4637
        %4670 = vst.msk [vmem:[%s4453 + $0xc0] sm:$0xff] %vm2733, %v4638
        %4671 = vst.msk [vmem:[%s4453 + $0xc8] sm:$0xff] %vm2733, %v4639
        %4672 = vst.msk [vmem:[%s4453 + $0xd0] sm:$0xff] %vm2733, %v4640
        %4673 = vst.msk [vmem:[%s4453 + $0xd8] sm:$0xff] %vm2733, %v4641
        %4674 = vst.msk [vmem:[%s4453 + $0xe0] sm:$0xff] %vm2733, %v4642
        %4675 = vst.msk [vmem:[%s4453 + $0xe8] sm:$0xff] %vm2733, %v4643
        %4676 = vst.msk [vmem:[%s4453 + $0xf0] sm:$0xff] %vm2733, %v4644
        %4677 = vst.msk [vmem:[%s4453 + $0xf8] sm:$0xff] %vm2733, %v4645
        %4678 = vst.msk [vmem:[%s3780] sm:$0xff] %vm2733, %v3909
        %4679 = vst.msk [vmem:[%s3780 + $0x8] sm:$0xff] %vm2733, %v3910
        %4680 = vst.msk [vmem:[%s3780 + $0x10] sm:$0xff] %vm2733, %v3911
        %4681 = vst.msk [vmem:[%s3780 + $0x18] sm:$0xff] %vm2733, %v3912
        %4682 = vst.msk [vmem:[%s3780 + $0x20] sm:$0xff] %vm2733, %v3913
        %4683 = vst.msk [vmem:[%s3780 + $0x28] sm:$0xff] %vm2733, %v3914
        %4684 = vst.msk [vmem:[%s3780 + $0x30] sm:$0xff] %vm2733, %v3915
        %4685 = vst.msk [vmem:[%s3780 + $0x38] sm:$0xff] %vm2733, %v3916
        %4686 = vst.msk [vmem:[%s3780 + $0x40] sm:$0xff] %vm2733, %v3917
        %4687 = vst.msk [vmem:[%s3780 + $0x48] sm:$0xff] %vm2733, %v3918
        %4688 = vst.msk [vmem:[%s3780 + $0x50] sm:$0xff] %vm2733, %v3919
        %4689 = vst.msk [vmem:[%s3780 + $0x58] sm:$0xff] %vm2733, %v3920
        %4690 = vst.msk [vmem:[%s3780 + $0x60] sm:$0xff] %vm2733, %v3921
        %4691 = vst.msk [vmem:[%s3780 + $0x68] sm:$0xff] %vm2733, %v3922
        %4692 = vst.msk [vmem:[%s3780 + $0x70] sm:$0xff] %vm2733, %v3923
        %4693 = vst.msk [vmem:[%s3780 + $0x78] sm:$0xff] %vm2733, %v3924
        %4694 = vst.msk [vmem:[%s3780 + $0x80] sm:$0xff] %vm2733, %v3925
        %4695 = vst.msk [vmem:[%s3780 + $0x88] sm:$0xff] %vm2733, %v3926
        %4696 = vst.msk [vmem:[%s3780 + $0x90] sm:$0xff] %vm2733, %v3927
        %4697 = vst.msk [vmem:[%s3780 + $0x98] sm:$0xff] %vm2733, %v3928
        %4698 = vst.msk [vmem:[%s3780 + $0xa0] sm:$0xff] %vm2733, %v3929
        %4699 = vst.msk [vmem:[%s3780 + $0xa8] sm:$0xff] %vm2733, %v3930
        %4700 = vst.msk [vmem:[%s3780 + $0xb0] sm:$0xff] %vm2733, %v3931
        %4701 = vst.msk [vmem:[%s3780 + $0xb8] sm:$0xff] %vm2733, %v3932
        %4702 = vst.msk [vmem:[%s3780 + $0xc0] sm:$0xff] %vm2733, %v3933
        %4703 = vst.msk [vmem:[%s3780 + $0xc8] sm:$0xff] %vm2733, %v3934
        %4704 = vst.msk [vmem:[%s3780 + $0xd0] sm:$0xff] %vm2733, %v3935
        %4705 = vst.msk [vmem:[%s3780 + $0xd8] sm:$0xff] %vm2733, %v3936
        %4706 = vst.msk [vmem:[%s3780 + $0xe0] sm:$0xff] %vm2733, %v3937
        %4707 = vst.msk [vmem:[%s3780 + $0xe8] sm:$0xff] %vm2733, %v3938
        %4708 = vst.msk [vmem:[%s3780 + $0xf0] sm:$0xff] %vm2733, %v3939
        %4709 = vst.msk [vmem:[%s3780 + $0xf8] sm:$0xff] %vm2733, %v3940
        %v4710 = vpack.c.bf16 %v4330, %v4326
        %v4711 = vpack.c.bf16 %v4332, %v4328
        %v4712 = vpack.c.bf16 %v4338, %v4334
        %v4713 = vpack.c.bf16 %v4340, %v4336
        %v4714 = vpack.c.bf16 %v4346, %v4342
        %v4715 = vpack.c.bf16 %v4348, %v4344
        %v4716 = vpack.c.bf16 %v4354, %v4350
        %v4717 = vpack.c.bf16 %v4356, %v4352
        %v4718 = vpack.c.bf16 %v4362, %v4358
        %v4719 = vpack.c.bf16 %v4364, %v4360
        %v4720 = vpack.c.bf16 %v4370, %v4366
        %v4721 = vpack.c.bf16 %v4372, %v4368
        %v4722 = vpack.c.bf16 %v4378, %v4374
        %v4723 = vpack.c.bf16 %v4380, %v4376
        %v4724 = vpack.c.bf16 %v4386, %v4382
        %v4725 = vpack.c.bf16 %v4388, %v4384
        %v4726 = vpack.c.bf16 %v4394, %v4390
        %v4727 = vpack.c.bf16 %v4396, %v4392
        %v4728 = vpack.c.bf16 %v4402, %v4398
        %v4729 = vpack.c.bf16 %v4404, %v4400
        %v4730 = vpack.c.bf16 %v4410, %v4406
        %v4731 = vpack.c.bf16 %v4412, %v4408
        %v4732 = vpack.c.bf16 %v4418, %v4414
        %v4733 = vpack.c.bf16 %v4420, %v4416
        %v4734 = vpack.c.bf16 %v4426, %v4422
        %v4735 = vpack.c.bf16 %v4428, %v4424
        %v4736 = vpack.c.bf16 %v4434, %v4430
        %v4737 = vpack.c.bf16 %v4436, %v4432
        %v4738 = vpack.c.bf16 %v4442, %v4438
        %v4739 = vpack.c.bf16 %v4444, %v4440
        %v4740 = vpack.c.bf16 %v4450, %v4446
        %v4741 = vpack.c.bf16 %v4452, %v4448
        %4742 = vrot.lane.b32.xlu0 %v2894, 96
        %v4743 = vpop.permute.xlu0 %4742
        %4744 = vrot.lane.b32.xlu0 %v2895, 96
        %v4745 = vpop.permute.xlu0 %4744
        %4746 = vrot.lane.b32.xlu0 %v2896, 96
        %v4747 = vpop.permute.xlu0 %4746
        %4748 = vrot.lane.b32.xlu0 %v2897, 96
        %v4749 = vpop.permute.xlu0 %4748
        %4750 = vrot.lane.b32.xlu0 %v2898, 96
        %v4751 = vpop.permute.xlu0 %4750
        %4752 = vrot.lane.b32.xlu0 %v2899, 96
        %v4753 = vpop.permute.xlu0 %4752
        %4754 = vrot.lane.b32.xlu0 %v2900, 96
        %v4755 = vpop.permute.xlu0 %4754
        %4756 = vrot.lane.b32.xlu0 %v2901, 96
        %v4757 = vpop.permute.xlu0 %4756
        %4758 = vrot.lane.b32.xlu0 %v2902, 96
        %v4759 = vpop.permute.xlu0 %4758
        %4760 = vrot.lane.b32.xlu0 %v2903, 96
        %v4761 = vpop.permute.xlu0 %4760
        %4762 = vrot.lane.b32.xlu0 %v2904, 96
        %v4763 = vpop.permute.xlu0 %4762
        %4764 = vrot.lane.b32.xlu0 %v2905, 96
        %v4765 = vpop.permute.xlu0 %4764
        %4766 = vrot.lane.b32.xlu0 %v2906, 96
        %v4767 = vpop.permute.xlu0 %4766
        %4768 = vrot.lane.b32.xlu0 %v2907, 96
        %v4769 = vpop.permute.xlu0 %4768
        %4770 = vrot.lane.b32.xlu0 %v2908, 96
        %v4771 = vpop.permute.xlu0 %4770
        %4772 = vrot.lane.b32.xlu0 %v2909, 96
        %v4773 = vpop.permute.xlu0 %4772
        %4790 = vmatpush.bf16.msra.mxu0 %v4757
        %4791 = vmatpush.bf16.msra.mxu0 %v4755
        %4792 = vmatpush.bf16.msra.mxu0 %v4753
        %4793 = vmatpush.bf16.msra.mxu0 %v4751
        %4794 = vmatpush.bf16.msra.mxu0 %v4749
        %4795 = vmatpush.bf16.msra.mxu0 %v4747
        %4796 = vmatpush.bf16.msra.mxu0 %v4745
        %4797 = vmatpush.bf16.msra.mxu0 %v4743
        %4798 = vmatmul.bf16.gmra.mxu0 %v4710
        %v4799 = vpop.f32.mrf.mxu0
        %v4800 = vadd.f32 0.0, %v4799
        %v4801 = vpop.f32.mrf.mxu0
        %v4802 = vadd.f32 0.0, %v4801
        %4803 = vmatmul.bf16.gmra.mxu0 %v4712
        %v4804 = vpop.f32.mrf.mxu0
        %v4805 = vadd.f32 0.0, %v4804
        %v4806 = vpop.f32.mrf.mxu0
        %v4807 = vadd.f32 0.0, %v4806
        %4808 = vmatmul.bf16.gmra.mxu0 %v4714
        %v4809 = vpop.f32.mrf.mxu0
        %v4810 = vadd.f32 0.0, %v4809
        %v4811 = vpop.f32.mrf.mxu0
        %v4812 = vadd.f32 0.0, %v4811
        %4813 = vmatmul.bf16.gmra.mxu0 %v4716
        %v4814 = vpop.f32.mrf.mxu0
        %v4815 = vadd.f32 0.0, %v4814
        %v4816 = vpop.f32.mrf.mxu0
        %v4817 = vadd.f32 0.0, %v4816
        %4818 = vmatmul.bf16.gmra.mxu0 %v4718
        %v4819 = vpop.f32.mrf.mxu0
        %v4820 = vadd.f32 0.0, %v4819
        %v4821 = vpop.f32.mrf.mxu0
        %v4822 = vadd.f32 0.0, %v4821
        %4823 = vmatmul.bf16.gmra.mxu0 %v4720
        %v4824 = vpop.f32.mrf.mxu0
        %v4825 = vadd.f32 0.0, %v4824
        %v4826 = vpop.f32.mrf.mxu0
        %v4827 = vadd.f32 0.0, %v4826
        %4828 = vmatmul.bf16.gmra.mxu0 %v4722
        %v4829 = vpop.f32.mrf.mxu0
        %v4830 = vadd.f32 0.0, %v4829
        %v4831 = vpop.f32.mrf.mxu0
        %v4832 = vadd.f32 0.0, %v4831
        %4833 = vmatmul.bf16.gmra.mxu0 %v4724
        %v4834 = vpop.f32.mrf.mxu0
        %v4835 = vadd.f32 0.0, %v4834
        %v4836 = vpop.f32.mrf.mxu0
        %v4837 = vadd.f32 0.0, %v4836
        %4838 = vmatmul.bf16.gmra.mxu0 %v4726
        %v4839 = vpop.f32.mrf.mxu0
        %v4840 = vadd.f32 0.0, %v4839
        %v4841 = vpop.f32.mrf.mxu0
        %v4842 = vadd.f32 0.0, %v4841
        %4843 = vmatmul.bf16.gmra.mxu0 %v4728
        %v4844 = vpop.f32.mrf.mxu0
        %v4845 = vadd.f32 0.0, %v4844
        %v4846 = vpop.f32.mrf.mxu0
        %v4847 = vadd.f32 0.0, %v4846
        %4848 = vmatmul.bf16.gmra.mxu0 %v4730
        %v4849 = vpop.f32.mrf.mxu0
        %v4850 = vadd.f32 0.0, %v4849
        %v4851 = vpop.f32.mrf.mxu0
        %v4852 = vadd.f32 0.0, %v4851
        %4853 = vmatmul.bf16.gmra.mxu0 %v4732
        %v4854 = vpop.f32.mrf.mxu0
        %v4855 = vadd.f32 0.0, %v4854
        %v4856 = vpop.f32.mrf.mxu0
        %v4857 = vadd.f32 0.0, %v4856
        %4858 = vmatmul.bf16.gmra.mxu0 %v4734
        %v4859 = vpop.f32.mrf.mxu0
        %v4860 = vadd.f32 0.0, %v4859
        %v4861 = vpop.f32.mrf.mxu0
        %v4862 = vadd.f32 0.0, %v4861
        %4863 = vmatmul.bf16.gmra.mxu0 %v4736
        %v4864 = vpop.f32.mrf.mxu0
        %v4865 = vadd.f32 0.0, %v4864
        %v4866 = vpop.f32.mrf.mxu0
        %v4867 = vadd.f32 0.0, %v4866
        %4868 = vmatmul.bf16.gmra.mxu0 %v4738
        %v4869 = vpop.f32.mrf.mxu0
        %v4870 = vadd.f32 0.0, %v4869
        %v4871 = vpop.f32.mrf.mxu0
        %v4872 = vadd.f32 0.0, %v4871
        %4873 = vmatmul.bf16.gmra.mxu0 %v4740
        %v4874 = vpop.f32.mrf.mxu0
        %v4875 = vadd.f32 0.0, %v4874
        %v4876 = vpop.f32.mrf.mxu0
        %v4877 = vadd.f32 0.0, %v4876
        %4878 = vdwg.mxu0
        %4879 = vmatpush.bf16.msra.mxu0 %v4773
        %4880 = vmatpush.bf16.msra.mxu0 %v4771
        %4881 = vmatpush.bf16.msra.mxu0 %v4769
        %4882 = vmatpush.bf16.msra.mxu0 %v4767
        %4883 = vmatpush.bf16.msra.mxu0 %v4765
        %4884 = vmatpush.bf16.msra.mxu0 %v4763
        %4885 = vmatpush.bf16.msra.mxu0 %v4761
        %4886 = vmatpush.bf16.msra.mxu0 %v4759
        %4887 = vmatmul.bf16.gmra.mxu0 %v4711
        %v4888 = vpop.f32.mrf.mxu0
        %v4889 = vadd.f32 %v4800, %v4888
        %v4890 = vpop.f32.mrf.mxu0
        %v4891 = vadd.f32 %v4802, %v4890
        %4892 = vmatmul.bf16.gmra.mxu0 %v4713
        %v4893 = vpop.f32.mrf.mxu0
        %v4894 = vadd.f32 %v4805, %v4893
        %v4895 = vpop.f32.mrf.mxu0
        %v4896 = vadd.f32 %v4807, %v4895
        %4897 = vmatmul.bf16.gmra.mxu0 %v4715
        %v4898 = vpop.f32.mrf.mxu0
        %v4899 = vadd.f32 %v4810, %v4898
        %v4900 = vpop.f32.mrf.mxu0
        %v4901 = vadd.f32 %v4812, %v4900
        %4902 = vmatmul.bf16.gmra.mxu0 %v4717
        %v4903 = vpop.f32.mrf.mxu0
        %v4904 = vadd.f32 %v4815, %v4903
        %v4905 = vpop.f32.mrf.mxu0
        %v4906 = vadd.f32 %v4817, %v4905
        %4907 = vmatmul.bf16.gmra.mxu0 %v4719
        %v4908 = vpop.f32.mrf.mxu0
        %v4909 = vadd.f32 %v4820, %v4908
        %v4910 = vpop.f32.mrf.mxu0
        %v4911 = vadd.f32 %v4822, %v4910
        %4912 = vmatmul.bf16.gmra.mxu0 %v4721
        %v4913 = vpop.f32.mrf.mxu0
        %v4914 = vadd.f32 %v4825, %v4913
        %v4915 = vpop.f32.mrf.mxu0
        %v4916 = vadd.f32 %v4827, %v4915
        %4917 = vmatmul.bf16.gmra.mxu0 %v4723
        %v4918 = vpop.f32.mrf.mxu0
        %v4919 = vadd.f32 %v4830, %v4918
        %v4920 = vpop.f32.mrf.mxu0
        %v4921 = vadd.f32 %v4832, %v4920
        %4922 = vmatmul.bf16.gmra.mxu0 %v4725
        %v4923 = vpop.f32.mrf.mxu0
        %v4924 = vadd.f32 %v4835, %v4923
        %v4925 = vpop.f32.mrf.mxu0
        %v4926 = vadd.f32 %v4837, %v4925
        %4927 = vmatmul.bf16.gmra.mxu0 %v4727
        %v4928 = vpop.f32.mrf.mxu0
        %v4929 = vadd.f32 %v4840, %v4928
        %v4930 = vpop.f32.mrf.mxu0
        %v4931 = vadd.f32 %v4842, %v4930
        %4932 = vmatmul.bf16.gmra.mxu0 %v4729
        %v4933 = vpop.f32.mrf.mxu0
        %v4934 = vadd.f32 %v4845, %v4933
        %v4935 = vpop.f32.mrf.mxu0
        %v4936 = vadd.f32 %v4847, %v4935
        %4937 = vmatmul.bf16.gmra.mxu0 %v4731
        %v4938 = vpop.f32.mrf.mxu0
        %v4939 = vadd.f32 %v4850, %v4938
        %v4940 = vpop.f32.mrf.mxu0
        %v4941 = vadd.f32 %v4852, %v4940
        %4942 = vmatmul.bf16.gmra.mxu0 %v4733
        %v4943 = vpop.f32.mrf.mxu0
        %v4944 = vadd.f32 %v4855, %v4943
        %v4945 = vpop.f32.mrf.mxu0
        %v4946 = vadd.f32 %v4857, %v4945
        %4947 = vmatmul.bf16.gmra.mxu0 %v4735
        %v4948 = vpop.f32.mrf.mxu0
        %v4949 = vadd.f32 %v4860, %v4948
        %v4950 = vpop.f32.mrf.mxu0
        %v4951 = vadd.f32 %v4862, %v4950
        %4952 = vmatmul.bf16.gmra.mxu0 %v4737
        %v4953 = vpop.f32.mrf.mxu0
        %v4954 = vadd.f32 %v4865, %v4953
        %v4955 = vpop.f32.mrf.mxu0
        %v4956 = vadd.f32 %v4867, %v4955
        %4957 = vmatmul.bf16.gmra.mxu0 %v4739
        %v4958 = vpop.f32.mrf.mxu0
        %v4959 = vadd.f32 %v4870, %v4958
        %v4960 = vpop.f32.mrf.mxu0
        %v4961 = vadd.f32 %v4872, %v4960
        %4962 = vmatmul.bf16.gmra.mxu0 %v4741
        %v4963 = vpop.f32.mrf.mxu0
        %v4964 = vadd.f32 %v4875, %v4963
        %v4965 = vpop.f32.mrf.mxu0
        %v4966 = vadd.f32 %v4877, %v4965
        %4967 = vdwg.mxu0
        %4969 = vset.pattern.permute.xlu0 0
        %4970 = vperm.xlu0 %4969, %v4038
        %v4971 = vpop.permute.xlu0 %4970
        %4974 = vset.pattern.permute.xlu0 0
        %4975 = vperm.xlu0 %4974, %v4040
        %v4976 = vpop.permute.xlu0 %4975
        %4979 = vset.pattern.permute.xlu0 0
        %4980 = vperm.xlu0 %4979, %v4042
        %v4981 = vpop.permute.xlu0 %4980
        %4984 = vset.pattern.permute.xlu0 0
        %4985 = vperm.xlu0 %4984, %v4044
        %v4986 = vpop.permute.xlu0 %4985
        %4989 = vset.pattern.permute.xlu0 0
        %4990 = vperm.xlu0 %4989, %v4046
        %v4991 = vpop.permute.xlu0 %4990
        %4994 = vset.pattern.permute.xlu0 0
        %4995 = vperm.xlu0 %4994, %v4048
        %v4996 = vpop.permute.xlu0 %4995
        %4999 = vset.pattern.permute.xlu0 0
        %5000 = vperm.xlu0 %4999, %v4050
        %v5001 = vpop.permute.xlu0 %5000
        %5004 = vset.pattern.permute.xlu0 0
        %5005 = vperm.xlu0 %5004, %v4052
        %v5006 = vpop.permute.xlu0 %5005
        %5009 = vset.pattern.permute.xlu0 0
        %5010 = vperm.xlu0 %5009, %v4054
        %v5011 = vpop.permute.xlu0 %5010
        %5014 = vset.pattern.permute.xlu0 0
        %5015 = vperm.xlu0 %5014, %v4056
        %v5016 = vpop.permute.xlu0 %5015
        %5019 = vset.pattern.permute.xlu0 0
        %5020 = vperm.xlu0 %5019, %v4058
        %v5021 = vpop.permute.xlu0 %5020
        %5024 = vset.pattern.permute.xlu0 0
        %5025 = vperm.xlu0 %5024, %v4060
        %v5026 = vpop.permute.xlu0 %5025
        %5029 = vset.pattern.permute.xlu0 0
        %5030 = vperm.xlu0 %5029, %v4062
        %v5031 = vpop.permute.xlu0 %5030
        %5034 = vset.pattern.permute.xlu0 0
        %5035 = vperm.xlu0 %5034, %v4064
        %v5036 = vpop.permute.xlu0 %5035
        %5039 = vset.pattern.permute.xlu0 0
        %5040 = vperm.xlu0 %5039, %v4066
        %v5041 = vpop.permute.xlu0 %5040
        %5044 = vset.pattern.permute.xlu0 0
        %5045 = vperm.xlu0 %5044, %v4068
        %v5046 = vpop.permute.xlu0 %5045
        %5049 = vset.pattern.permute.xlu0 0
        %5050 = vperm.xlu0 %5049, %v4070
        %v5051 = vpop.permute.xlu0 %5050
        %5054 = vset.pattern.permute.xlu0 0
        %5055 = vperm.xlu0 %5054, %v4072
        %v5056 = vpop.permute.xlu0 %5055
        %5059 = vset.pattern.permute.xlu0 0
        %5060 = vperm.xlu0 %5059, %v4074
        %v5061 = vpop.permute.xlu0 %5060
        %5064 = vset.pattern.permute.xlu0 0
        %5065 = vperm.xlu0 %5064, %v4076
        %v5066 = vpop.permute.xlu0 %5065
        %5069 = vset.pattern.permute.xlu0 0
        %5070 = vperm.xlu0 %5069, %v4078
        %v5071 = vpop.permute.xlu0 %5070
        %5074 = vset.pattern.permute.xlu0 0
        %5075 = vperm.xlu0 %5074, %v4080
        %v5076 = vpop.permute.xlu0 %5075
        %5079 = vset.pattern.permute.xlu0 0
        %5080 = vperm.xlu0 %5079, %v4082
        %v5081 = vpop.permute.xlu0 %5080
        %5084 = vset.pattern.permute.xlu0 0
        %5085 = vperm.xlu0 %5084, %v4084
        %v5086 = vpop.permute.xlu0 %5085
        %5089 = vset.pattern.permute.xlu0 0
        %5090 = vperm.xlu0 %5089, %v4086
        %v5091 = vpop.permute.xlu0 %5090
        %5094 = vset.pattern.permute.xlu0 0
        %5095 = vperm.xlu0 %5094, %v4088
        %v5096 = vpop.permute.xlu0 %5095
        %5099 = vset.pattern.permute.xlu0 0
        %5100 = vperm.xlu0 %5099, %v4090
        %v5101 = vpop.permute.xlu0 %5100
        %5104 = vset.pattern.permute.xlu0 0
        %5105 = vperm.xlu0 %5104, %v4092
        %v5106 = vpop.permute.xlu0 %5105
        %5109 = vset.pattern.permute.xlu0 0
        %5110 = vperm.xlu0 %5109, %v4094
        %v5111 = vpop.permute.xlu0 %5110
        %5114 = vset.pattern.permute.xlu0 0
        %5115 = vperm.xlu0 %5114, %v4096
        %v5116 = vpop.permute.xlu0 %5115
        %5119 = vset.pattern.permute.xlu0 0
        %5120 = vperm.xlu0 %5119, %v4098
        %v5121 = vpop.permute.xlu0 %5120
        %5124 = vset.pattern.permute.xlu0 0
        %5125 = vperm.xlu0 %5124, %v4100
        %v5126 = vpop.permute.xlu0 %5125
        %s5128 = scalar_lea.vmem [#allocation2], 256
        %v5129 = vld [vmem:[%s5128] sm:$0xf]
        %v5130 = vld [vmem:[%s5128 + $0x4] sm:$0xf]
        %v5131 = vld [vmem:[%s5128 + $0x8] sm:$0xf]
        %v5132 = vld [vmem:[%s5128 + $0xc] sm:$0xf]
        %v5133 = vld [vmem:[%s5128 + $0x10] sm:$0xf]
        %v5134 = vld [vmem:[%s5128 + $0x14] sm:$0xf]
        %v5135 = vld [vmem:[%s5128 + $0x18] sm:$0xf]
        %v5136 = vld [vmem:[%s5128 + $0x1c] sm:$0xf]
        %v5137 = vld [vmem:[%s5128 + $0x20] sm:$0xf]
        %v5138 = vld [vmem:[%s5128 + $0x24] sm:$0xf]
        %v5139 = vld [vmem:[%s5128 + $0x28] sm:$0xf]
        %v5140 = vld [vmem:[%s5128 + $0x2c] sm:$0xf]
        %v5141 = vld [vmem:[%s5128 + $0x30] sm:$0xf]
        %v5142 = vld [vmem:[%s5128 + $0x34] sm:$0xf]
        %v5143 = vld [vmem:[%s5128 + $0x38] sm:$0xf]
        %v5144 = vld [vmem:[%s5128 + $0x3c] sm:$0xf]
        %v5145 = vld [vmem:[%s5128 + $0x40] sm:$0xf]
        %v5146 = vld [vmem:[%s5128 + $0x44] sm:$0xf]
        %v5147 = vld [vmem:[%s5128 + $0x48] sm:$0xf]
        %v5148 = vld [vmem:[%s5128 + $0x4c] sm:$0xf]
        %v5149 = vld [vmem:[%s5128 + $0x50] sm:$0xf]
        %v5150 = vld [vmem:[%s5128 + $0x54] sm:$0xf]
        %v5151 = vld [vmem:[%s5128 + $0x58] sm:$0xf]
        %v5152 = vld [vmem:[%s5128 + $0x5c] sm:$0xf]
        %v5153 = vld [vmem:[%s5128 + $0x60] sm:$0xf]
        %v5154 = vld [vmem:[%s5128 + $0x64] sm:$0xf]
        %v5155 = vld [vmem:[%s5128 + $0x68] sm:$0xf]
        %v5156 = vld [vmem:[%s5128 + $0x6c] sm:$0xf]
        %v5157 = vld [vmem:[%s5128 + $0x70] sm:$0xf]
        %v5158 = vld [vmem:[%s5128 + $0x74] sm:$0xf]
        %v5159 = vld [vmem:[%s5128 + $0x78] sm:$0xf]
        %v5160 = vld [vmem:[%s5128 + $0x7c] sm:$0xf]
        %s5161 = scalar_lea.vmem %s270, 512 [#allocation6]
        %v5162 = vld [vmem:[%s5161] sm:$0xff]
        %v5163 = vld [vmem:[%s5161 + $0x8] sm:$0xff]
        %v5164 = vld [vmem:[%s5161 + $0x10] sm:$0xff]
        %v5165 = vld [vmem:[%s5161 + $0x18] sm:$0xff]
        %v5166 = vld [vmem:[%s5161 + $0x20] sm:$0xff]
        %v5167 = vld [vmem:[%s5161 + $0x28] sm:$0xff]
        %v5168 = vld [vmem:[%s5161 + $0x30] sm:$0xff]
        %v5169 = vld [vmem:[%s5161 + $0x38] sm:$0xff]
        %v5170 = vld [vmem:[%s5161 + $0x40] sm:$0xff]
        %v5171 = vld [vmem:[%s5161 + $0x48] sm:$0xff]
        %v5172 = vld [vmem:[%s5161 + $0x50] sm:$0xff]
        %v5173 = vld [vmem:[%s5161 + $0x58] sm:$0xff]
        %v5174 = vld [vmem:[%s5161 + $0x60] sm:$0xff]
        %v5175 = vld [vmem:[%s5161 + $0x68] sm:$0xff]
        %v5176 = vld [vmem:[%s5161 + $0x70] sm:$0xff]
        %v5177 = vld [vmem:[%s5161 + $0x78] sm:$0xff]
        %v5178 = vld [vmem:[%s5161 + $0x80] sm:$0xff]
        %v5179 = vld [vmem:[%s5161 + $0x88] sm:$0xff]
        %v5180 = vld [vmem:[%s5161 + $0x90] sm:$0xff]
        %v5181 = vld [vmem:[%s5161 + $0x98] sm:$0xff]
        %v5182 = vld [vmem:[%s5161 + $0xa0] sm:$0xff]
        %v5183 = vld [vmem:[%s5161 + $0xa8] sm:$0xff]
        %v5184 = vld [vmem:[%s5161 + $0xb0] sm:$0xff]
        %v5185 = vld [vmem:[%s5161 + $0xb8] sm:$0xff]
        %v5186 = vld [vmem:[%s5161 + $0xc0] sm:$0xff]
        %v5187 = vld [vmem:[%s5161 + $0xc8] sm:$0xff]
        %v5188 = vld [vmem:[%s5161 + $0xd0] sm:$0xff]
        %v5189 = vld [vmem:[%s5161 + $0xd8] sm:$0xff]
        %v5190 = vld [vmem:[%s5161 + $0xe0] sm:$0xff]
        %v5191 = vld [vmem:[%s5161 + $0xe8] sm:$0xff]
        %v5192 = vld [vmem:[%s5161 + $0xf0] sm:$0xff]
        %v5193 = vld [vmem:[%s5161 + $0xf8] sm:$0xff]
        %v5194 = vunpack.c.l.bf16 %v5162
        %v5195 = vunpack.c.h.bf16 %v5162
        %v5196 = vunpack.c.l.bf16 %v5163
        %v5197 = vunpack.c.h.bf16 %v5163
        %v5198 = vunpack.c.l.bf16 %v5164
        %v5199 = vunpack.c.h.bf16 %v5164
        %v5200 = vunpack.c.l.bf16 %v5165
        %v5201 = vunpack.c.h.bf16 %v5165
        %v5202 = vunpack.c.l.bf16 %v5166
        %v5203 = vunpack.c.h.bf16 %v5166
        %v5204 = vunpack.c.l.bf16 %v5167
        %v5205 = vunpack.c.h.bf16 %v5167
        %v5206 = vunpack.c.l.bf16 %v5168
        %v5207 = vunpack.c.h.bf16 %v5168
        %v5208 = vunpack.c.l.bf16 %v5169
        %v5209 = vunpack.c.h.bf16 %v5169
        %v5210 = vunpack.c.l.bf16 %v5170
        %v5211 = vunpack.c.h.bf16 %v5170
        %v5212 = vunpack.c.l.bf16 %v5171
        %v5213 = vunpack.c.h.bf16 %v5171
        %v5214 = vunpack.c.l.bf16 %v5172
        %v5215 = vunpack.c.h.bf16 %v5172
        %v5216 = vunpack.c.l.bf16 %v5173
        %v5217 = vunpack.c.h.bf16 %v5173
        %v5218 = vunpack.c.l.bf16 %v5174
        %v5219 = vunpack.c.h.bf16 %v5174
        %v5220 = vunpack.c.l.bf16 %v5175
        %v5221 = vunpack.c.h.bf16 %v5175
        %v5222 = vunpack.c.l.bf16 %v5176
        %v5223 = vunpack.c.h.bf16 %v5176
        %v5224 = vunpack.c.l.bf16 %v5177
        %v5225 = vunpack.c.h.bf16 %v5177
        %v5226 = vunpack.c.l.bf16 %v5178
        %v5227 = vunpack.c.h.bf16 %v5178
        %v5228 = vunpack.c.l.bf16 %v5179
        %v5229 = vunpack.c.h.bf16 %v5179
        %v5230 = vunpack.c.l.bf16 %v5180
        %v5231 = vunpack.c.h.bf16 %v5180
        %v5232 = vunpack.c.l.bf16 %v5181
        %v5233 = vunpack.c.h.bf16 %v5181
        %v5234 = vunpack.c.l.bf16 %v5182
        %v5235 = vunpack.c.h.bf16 %v5182
        %v5236 = vunpack.c.l.bf16 %v5183
        %v5237 = vunpack.c.h.bf16 %v5183
        %v5238 = vunpack.c.l.bf16 %v5184
        %v5239 = vunpack.c.h.bf16 %v5184
        %v5240 = vunpack.c.l.bf16 %v5185
        %v5241 = vunpack.c.h.bf16 %v5185
        %v5242 = vunpack.c.l.bf16 %v5186
        %v5243 = vunpack.c.h.bf16 %v5186
        %v5244 = vunpack.c.l.bf16 %v5187
        %v5245 = vunpack.c.h.bf16 %v5187
        %v5246 = vunpack.c.l.bf16 %v5188
        %v5247 = vunpack.c.h.bf16 %v5188
        %v5248 = vunpack.c.l.bf16 %v5189
        %v5249 = vunpack.c.h.bf16 %v5189
        %v5250 = vunpack.c.l.bf16 %v5190
        %v5251 = vunpack.c.h.bf16 %v5190
        %v5252 = vunpack.c.l.bf16 %v5191
        %v5253 = vunpack.c.h.bf16 %v5191
        %v5254 = vunpack.c.l.bf16 %v5192
        %v5255 = vunpack.c.h.bf16 %v5192
        %v5256 = vunpack.c.l.bf16 %v5193
        %v5257 = vunpack.c.h.bf16 %v5193
        %v5290 = vunpack.c.l.b16 %v5129
        %v5291 = vunpack.c.l.b16 %v5130
        %v5292 = vunpack.c.l.b16 %v5131
        %v5293 = vunpack.c.l.b16 %v5132
        %v5294 = vunpack.c.l.b16 %v5133
        %v5295 = vunpack.c.l.b16 %v5134
        %v5296 = vunpack.c.l.b16 %v5135
        %v5297 = vunpack.c.l.b16 %v5136
        %v5298 = vunpack.c.l.b16 %v5137
        %v5299 = vunpack.c.l.b16 %v5138
        %v5300 = vunpack.c.l.b16 %v5139
        %v5301 = vunpack.c.l.b16 %v5140
        %v5302 = vunpack.c.l.b16 %v5141
        %v5303 = vunpack.c.l.b16 %v5142
        %v5304 = vunpack.c.l.b16 %v5143
        %v5305 = vunpack.c.l.b16 %v5144
        %v5306 = vunpack.c.l.b16 %v5145
        %v5307 = vunpack.c.l.b16 %v5146
        %v5308 = vunpack.c.l.b16 %v5147
        %v5309 = vunpack.c.l.b16 %v5148
        %v5310 = vunpack.c.l.b16 %v5149
        %v5311 = vunpack.c.l.b16 %v5150
        %v5312 = vunpack.c.l.b16 %v5151
        %v5313 = vunpack.c.l.b16 %v5152
        %v5314 = vunpack.c.l.b16 %v5153
        %v5315 = vunpack.c.l.b16 %v5154
        %v5316 = vunpack.c.l.b16 %v5155
        %v5317 = vunpack.c.l.b16 %v5156
        %v5318 = vunpack.c.l.b16 %v5157
        %v5319 = vunpack.c.l.b16 %v5158
        %v5320 = vunpack.c.l.b16 %v5159
        %v5321 = vunpack.c.l.b16 %v5160
        %v5322 = vpack.c.b16 %v5291, %v5290
        %v5323 = vpack.c.b16 %v5293, %v5292
        %v5324 = vpack.c.b16 %v5295, %v5294
        %v5325 = vpack.c.b16 %v5297, %v5296
        %v5326 = vpack.c.b16 %v5299, %v5298
        %v5327 = vpack.c.b16 %v5301, %v5300
        %v5328 = vpack.c.b16 %v5303, %v5302
        %v5329 = vpack.c.b16 %v5305, %v5304
        %v5330 = vpack.c.b16 %v5307, %v5306
        %v5331 = vpack.c.b16 %v5309, %v5308
        %v5332 = vpack.c.b16 %v5311, %v5310
        %v5333 = vpack.c.b16 %v5313, %v5312
        %v5334 = vpack.c.b16 %v5315, %v5314
        %v5335 = vpack.c.b16 %v5317, %v5316
        %v5336 = vpack.c.b16 %v5319, %v5318
        %v5337 = vpack.c.b16 %v5321, %v5320
        %5338 = vrot.lane.b32.xlu0 %v1578, 64
        %v5339 = vpop.permute.xlu0 %5338
        %5340 = vrot.lane.b32.xlu0 %v1579, 64
        %v5341 = vpop.permute.xlu0 %5340
        %5342 = vrot.lane.b32.xlu0 %v1580, 64
        %v5343 = vpop.permute.xlu0 %5342
        %5344 = vrot.lane.b32.xlu0 %v1581, 64
        %v5345 = vpop.permute.xlu0 %5344
        %5346 = vrot.lane.b32.xlu0 %v1582, 64
        %v5347 = vpop.permute.xlu0 %5346
        %5348 = vrot.lane.b32.xlu0 %v1583, 64
        %v5349 = vpop.permute.xlu0 %5348
        %5350 = vrot.lane.b32.xlu0 %v1584, 64
        %v5351 = vpop.permute.xlu0 %5350
        %5352 = vrot.lane.b32.xlu0 %v1585, 64
        %v5353 = vpop.permute.xlu0 %5352
        %5354 = vrot.lane.b32.xlu0 %v1586, 64
        %v5355 = vpop.permute.xlu0 %5354
        %5356 = vrot.lane.b32.xlu0 %v1587, 64
        %v5357 = vpop.permute.xlu0 %5356
        %5358 = vrot.lane.b32.xlu0 %v1588, 64
        %v5359 = vpop.permute.xlu0 %5358
        %5360 = vrot.lane.b32.xlu0 %v1589, 64
        %v5361 = vpop.permute.xlu0 %5360
        %5362 = vrot.lane.b32.xlu0 %v1590, 64
        %v5363 = vpop.permute.xlu0 %5362
        %5364 = vrot.lane.b32.xlu0 %v1591, 64
        %v5365 = vpop.permute.xlu0 %5364
        %5366 = vrot.lane.b32.xlu0 %v1592, 64
        %v5367 = vpop.permute.xlu0 %5366
        %5368 = vrot.lane.b32.xlu0 %v1593, 64
        %v5369 = vpop.permute.xlu0 %5368
        %v5371 = vsel %vm1594, %v5322, 0
        %v5374 = vsel %vm1594, %v5323, 0
        %v5377 = vsel %vm1594, %v5324, 0
        %v5380 = vsel %vm1594, %v5325, 0
        %v5383 = vsel %vm1594, %v5326, 0
        %v5386 = vsel %vm1594, %v5327, 0
        %v5389 = vsel %vm1594, %v5328, 0
        %v5392 = vsel %vm1594, %v5329, 0
        %v5395 = vsel %vm1594, %v5330, 0
        %v5398 = vsel %vm1594, %v5331, 0
        %v5401 = vsel %vm1594, %v5332, 0
        %v5404 = vsel %vm1594, %v5333, 0
        %v5407 = vsel %vm1594, %v5334, 0
        %v5410 = vsel %vm1594, %v5335, 0
        %v5413 = vsel %vm1594, %v5336, 0
        %v5416 = vsel %vm1594, %v5337, 0
        %v5419 = vsel %vm1594, %v5339, 0
        %v5422 = vsel %vm1594, %v5341, 0
        %v5425 = vsel %vm1594, %v5343, 0
        %v5428 = vsel %vm1594, %v5345, 0
        %v5431 = vsel %vm1594, %v5347, 0
        %v5434 = vsel %vm1594, %v5349, 0
        %v5437 = vsel %vm1594, %v5351, 0
        %v5440 = vsel %vm1594, %v5353, 0
        %v5443 = vsel %vm1594, %v5355, 0
        %v5446 = vsel %vm1594, %v5357, 0
        %v5449 = vsel %vm1594, %v5359, 0
        %v5452 = vsel %vm1594, %v5361, 0
        %v5455 = vsel %vm1594, %v5363, 0
        %v5458 = vsel %vm1594, %v5365, 0
        %v5461 = vsel %vm1594, %v5367, 0
        %v5464 = vsel %vm1594, %v5369, 0
        %5466 = vmatpush.bf16.xpose.msra.mxu0 %v5440
        %5467 = vmatpush.bf16.xpose.msra.mxu0 %v5437
        %5468 = vmatpush.bf16.xpose.msra.mxu0 %v5434
        %5469 = vmatpush.bf16.xpose.msra.mxu0 %v5431
        %5470 = vmatpush.bf16.xpose.msra.mxu0 %v5428
        %5471 = vmatpush.bf16.xpose.msra.mxu0 %v5425
        %5472 = vmatpush.bf16.xpose.msra.mxu0 %v5422
        %5473 = vmatpush.bf16.xpose.msra.mxu0 %v5419
        %5474 = vmatmul.bf16.gmra.mxu0 %v5371
        %v5475 = vpop.f32.mrf.mxu0
        %v5476 = vadd.f32 %v5194, %v5475
        %v5477 = vpop.f32.mrf.mxu0
        %v5478 = vadd.f32 %v5196, %v5477
        %5479 = vmatmul.bf16.gmra.mxu0 %v5374
        %v5480 = vpop.f32.mrf.mxu0
        %v5481 = vadd.f32 %v5198, %v5480
        %v5482 = vpop.f32.mrf.mxu0
        %v5483 = vadd.f32 %v5200, %v5482
        %5484 = vmatmul.bf16.gmra.mxu0 %v5377
        %v5485 = vpop.f32.mrf.mxu0
        %v5486 = vadd.f32 %v5202, %v5485
        %v5487 = vpop.f32.mrf.mxu0
        %v5488 = vadd.f32 %v5204, %v5487
        %5489 = vmatmul.bf16.gmra.mxu0 %v5380
        %v5490 = vpop.f32.mrf.mxu0
        %v5491 = vadd.f32 %v5206, %v5490
        %v5492 = vpop.f32.mrf.mxu0
        %v5493 = vadd.f32 %v5208, %v5492
        %5494 = vmatmul.bf16.gmra.mxu0 %v5383
        %v5495 = vpop.f32.mrf.mxu0
        %v5496 = vadd.f32 %v5210, %v5495
        %v5497 = vpop.f32.mrf.mxu0
        %v5498 = vadd.f32 %v5212, %v5497
        %5499 = vmatmul.bf16.gmra.mxu0 %v5386
        %v5500 = vpop.f32.mrf.mxu0
        %v5501 = vadd.f32 %v5214, %v5500
        %v5502 = vpop.f32.mrf.mxu0
        %v5503 = vadd.f32 %v5216, %v5502
        %5504 = vmatmul.bf16.gmra.mxu0 %v5389
        %v5505 = vpop.f32.mrf.mxu0
        %v5506 = vadd.f32 %v5218, %v5505
        %v5507 = vpop.f32.mrf.mxu0
        %v5508 = vadd.f32 %v5220, %v5507
        %5509 = vmatmul.bf16.gmra.mxu0 %v5392
        %v5510 = vpop.f32.mrf.mxu0
        %v5511 = vadd.f32 %v5222, %v5510
        %v5512 = vpop.f32.mrf.mxu0
        %v5513 = vadd.f32 %v5224, %v5512
        %5514 = vmatmul.bf16.gmra.mxu0 %v5395
        %v5515 = vpop.f32.mrf.mxu0
        %v5516 = vadd.f32 %v5226, %v5515
        %v5517 = vpop.f32.mrf.mxu0
        %v5518 = vadd.f32 %v5228, %v5517
        %5519 = vmatmul.bf16.gmra.mxu0 %v5398
        %v5520 = vpop.f32.mrf.mxu0
        %v5521 = vadd.f32 %v5230, %v5520
        %v5522 = vpop.f32.mrf.mxu0
        %v5523 = vadd.f32 %v5232, %v5522
        %5524 = vmatmul.bf16.gmra.mxu0 %v5401
        %v5525 = vpop.f32.mrf.mxu0
        %v5526 = vadd.f32 %v5234, %v5525
        %v5527 = vpop.f32.mrf.mxu0
        %v5528 = vadd.f32 %v5236, %v5527
        %5529 = vmatmul.bf16.gmra.mxu0 %v5404
        %v5530 = vpop.f32.mrf.mxu0
        %v5531 = vadd.f32 %v5238, %v5530
        %v5532 = vpop.f32.mrf.mxu0
        %v5533 = vadd.f32 %v5240, %v5532
        %5534 = vmatmul.bf16.gmra.mxu0 %v5407
        %v5535 = vpop.f32.mrf.mxu0
        %v5536 = vadd.f32 %v5242, %v5535
        %v5537 = vpop.f32.mrf.mxu0
        %v5538 = vadd.f32 %v5244, %v5537
        %5539 = vmatmul.bf16.gmra.mxu0 %v5410
        %v5540 = vpop.f32.mrf.mxu0
        %v5541 = vadd.f32 %v5246, %v5540
        %v5542 = vpop.f32.mrf.mxu0
        %v5543 = vadd.f32 %v5248, %v5542
        %5544 = vmatmul.bf16.gmra.mxu0 %v5413
        %v5545 = vpop.f32.mrf.mxu0
        %v5546 = vadd.f32 %v5250, %v5545
        %v5547 = vpop.f32.mrf.mxu0
        %v5548 = vadd.f32 %v5252, %v5547
        %5549 = vmatmul.bf16.gmra.mxu0 %v5416
        %v5550 = vpop.f32.mrf.mxu0
        %v5551 = vadd.f32 %v5254, %v5550
        %v5552 = vpop.f32.mrf.mxu0
        %v5553 = vadd.f32 %v5256, %v5552
        %5554 = vdwg.mxu0
        %5555 = vmatpush.bf16.xpose.msra.mxu0 %v5464
        %5556 = vmatpush.bf16.xpose.msra.mxu0 %v5461
        %5557 = vmatpush.bf16.xpose.msra.mxu0 %v5458
        %5558 = vmatpush.bf16.xpose.msra.mxu0 %v5455
        %5559 = vmatpush.bf16.xpose.msra.mxu0 %v5452
        %5560 = vmatpush.bf16.xpose.msra.mxu0 %v5449
        %5561 = vmatpush.bf16.xpose.msra.mxu0 %v5446
        %5562 = vmatpush.bf16.xpose.msra.mxu0 %v5443
        %5563 = vmatmul.bf16.gmra.mxu0 %v5371
        %v5564 = vpop.f32.mrf.mxu0
        %v5565 = vadd.f32 %v5195, %v5564
        %v5566 = vpop.f32.mrf.mxu0
        %v5567 = vadd.f32 %v5197, %v5566
        %5568 = vmatmul.bf16.gmra.mxu0 %v5374
        %v5569 = vpop.f32.mrf.mxu0
        %v5570 = vadd.f32 %v5199, %v5569
        %v5571 = vpop.f32.mrf.mxu0
        %v5572 = vadd.f32 %v5201, %v5571
        %5573 = vmatmul.bf16.gmra.mxu0 %v5377
        %v5574 = vpop.f32.mrf.mxu0
        %v5575 = vadd.f32 %v5203, %v5574
        %v5576 = vpop.f32.mrf.mxu0
        %v5577 = vadd.f32 %v5205, %v5576
        %5578 = vmatmul.bf16.gmra.mxu0 %v5380
        %v5579 = vpop.f32.mrf.mxu0
        %v5580 = vadd.f32 %v5207, %v5579
        %v5581 = vpop.f32.mrf.mxu0
        %v5582 = vadd.f32 %v5209, %v5581
        %5583 = vmatmul.bf16.gmra.mxu0 %v5383
        %v5584 = vpop.f32.mrf.mxu0
        %v5585 = vadd.f32 %v5211, %v5584
        %v5586 = vpop.f32.mrf.mxu0
        %v5587 = vadd.f32 %v5213, %v5586
        %5588 = vmatmul.bf16.gmra.mxu0 %v5386
        %v5589 = vpop.f32.mrf.mxu0
        %v5590 = vadd.f32 %v5215, %v5589
        %v5591 = vpop.f32.mrf.mxu0
        %v5592 = vadd.f32 %v5217, %v5591
        %5593 = vmatmul.bf16.gmra.mxu0 %v5389
        %v5594 = vpop.f32.mrf.mxu0
        %v5595 = vadd.f32 %v5219, %v5594
        %v5596 = vpop.f32.mrf.mxu0
        %v5597 = vadd.f32 %v5221, %v5596
        %5598 = vmatmul.bf16.gmra.mxu0 %v5392
        %v5599 = vpop.f32.mrf.mxu0
        %v5600 = vadd.f32 %v5223, %v5599
        %v5601 = vpop.f32.mrf.mxu0
        %v5602 = vadd.f32 %v5225, %v5601
        %5603 = vmatmul.bf16.gmra.mxu0 %v5395
        %v5604 = vpop.f32.mrf.mxu0
        %v5605 = vadd.f32 %v5227, %v5604
        %v5606 = vpop.f32.mrf.mxu0
        %v5607 = vadd.f32 %v5229, %v5606
        %5608 = vmatmul.bf16.gmra.mxu0 %v5398
        %v5609 = vpop.f32.mrf.mxu0
        %v5610 = vadd.f32 %v5231, %v5609
        %v5611 = vpop.f32.mrf.mxu0
        %v5612 = vadd.f32 %v5233, %v5611
        %5613 = vmatmul.bf16.gmra.mxu0 %v5401
        %v5614 = vpop.f32.mrf.mxu0
        %v5615 = vadd.f32 %v5235, %v5614
        %v5616 = vpop.f32.mrf.mxu0
        %v5617 = vadd.f32 %v5237, %v5616
        %5618 = vmatmul.bf16.gmra.mxu0 %v5404
        %v5619 = vpop.f32.mrf.mxu0
        %v5620 = vadd.f32 %v5239, %v5619
        %v5621 = vpop.f32.mrf.mxu0
        %v5622 = vadd.f32 %v5241, %v5621
        %5623 = vmatmul.bf16.gmra.mxu0 %v5407
        %v5624 = vpop.f32.mrf.mxu0
        %v5625 = vadd.f32 %v5243, %v5624
        %v5626 = vpop.f32.mrf.mxu0
        %v5627 = vadd.f32 %v5245, %v5626
        %5628 = vmatmul.bf16.gmra.mxu0 %v5410
        %v5629 = vpop.f32.mrf.mxu0
        %v5630 = vadd.f32 %v5247, %v5629
        %v5631 = vpop.f32.mrf.mxu0
        %v5632 = vadd.f32 %v5249, %v5631
        %5633 = vmatmul.bf16.gmra.mxu0 %v5413
        %v5634 = vpop.f32.mrf.mxu0
        %v5635 = vadd.f32 %v5251, %v5634
        %v5636 = vpop.f32.mrf.mxu0
        %v5637 = vadd.f32 %v5253, %v5636
        %5638 = vmatmul.bf16.gmra.mxu0 %v5416
        %v5639 = vpop.f32.mrf.mxu0
        %v5640 = vadd.f32 %v5255, %v5639
        %v5641 = vpop.f32.mrf.mxu0
        %v5642 = vadd.f32 %v5257, %v5641
        %5643 = vdwg.mxu0
        %s5644 = scalar_lea.vmem [#allocation3], 512
        %v5645 = vld [vmem:[%s5644] sm:$0xff]
        %v5646 = vld [vmem:[%s5644 + $0x8] sm:$0xff]
        %v5647 = vld [vmem:[%s5644 + $0x10] sm:$0xff]
        %v5648 = vld [vmem:[%s5644 + $0x18] sm:$0xff]
        %v5649 = vld [vmem:[%s5644 + $0x20] sm:$0xff]
        %v5650 = vld [vmem:[%s5644 + $0x28] sm:$0xff]
        %v5651 = vld [vmem:[%s5644 + $0x30] sm:$0xff]
        %v5652 = vld [vmem:[%s5644 + $0x38] sm:$0xff]
        %v5653 = vld [vmem:[%s5644 + $0x40] sm:$0xff]
        %v5654 = vld [vmem:[%s5644 + $0x48] sm:$0xff]
        %v5655 = vld [vmem:[%s5644 + $0x50] sm:$0xff]
        %v5656 = vld [vmem:[%s5644 + $0x58] sm:$0xff]
        %v5657 = vld [vmem:[%s5644 + $0x60] sm:$0xff]
        %v5658 = vld [vmem:[%s5644 + $0x68] sm:$0xff]
        %v5659 = vld [vmem:[%s5644 + $0x70] sm:$0xff]
        %v5660 = vld [vmem:[%s5644 + $0x78] sm:$0xff]
        %v5661 = vld [vmem:[%s5644 + $0x80] sm:$0xff]
        %v5662 = vld [vmem:[%s5644 + $0x88] sm:$0xff]
        %v5663 = vld [vmem:[%s5644 + $0x90] sm:$0xff]
        %v5664 = vld [vmem:[%s5644 + $0x98] sm:$0xff]
        %v5665 = vld [vmem:[%s5644 + $0xa0] sm:$0xff]
        %v5666 = vld [vmem:[%s5644 + $0xa8] sm:$0xff]
        %v5667 = vld [vmem:[%s5644 + $0xb0] sm:$0xff]
        %v5668 = vld [vmem:[%s5644 + $0xb8] sm:$0xff]
        %v5669 = vld [vmem:[%s5644 + $0xc0] sm:$0xff]
        %v5670 = vld [vmem:[%s5644 + $0xc8] sm:$0xff]
        %v5671 = vld [vmem:[%s5644 + $0xd0] sm:$0xff]
        %v5672 = vld [vmem:[%s5644 + $0xd8] sm:$0xff]
        %v5673 = vld [vmem:[%s5644 + $0xe0] sm:$0xff]
        %v5674 = vld [vmem:[%s5644 + $0xe8] sm:$0xff]
        %v5675 = vld [vmem:[%s5644 + $0xf0] sm:$0xff]
        %v5676 = vld [vmem:[%s5644 + $0xf8] sm:$0xff]
        %v5677 = vmax.f32 %v5476, %v5565
        %5678 = vmax.xlane.f32.xlu0 %v5677
        %v5679 = vpop.xlane.xlu0 %5678
        %v5680 = vmax.f32 %v5478, %v5567
        %5681 = vmax.xlane.f32.xlu0 %v5680
        %v5682 = vpop.xlane.xlu0 %5681
        %v5683 = vmax.f32 %v5481, %v5570
        %5684 = vmax.xlane.f32.xlu0 %v5683
        %v5685 = vpop.xlane.xlu0 %5684
        %v5686 = vmax.f32 %v5483, %v5572
        %5687 = vmax.xlane.f32.xlu0 %v5686
        %v5688 = vpop.xlane.xlu0 %5687
        %v5689 = vmax.f32 %v5486, %v5575
        %5690 = vmax.xlane.f32.xlu0 %v5689
        %v5691 = vpop.xlane.xlu0 %5690
        %v5692 = vmax.f32 %v5488, %v5577
        %5693 = vmax.xlane.f32.xlu0 %v5692
        %v5694 = vpop.xlane.xlu0 %5693
        %v5695 = vmax.f32 %v5491, %v5580
        %5696 = vmax.xlane.f32.xlu0 %v5695
        %v5697 = vpop.xlane.xlu0 %5696
        %v5698 = vmax.f32 %v5493, %v5582
        %5699 = vmax.xlane.f32.xlu0 %v5698
        %v5700 = vpop.xlane.xlu0 %5699
        %v5701 = vmax.f32 %v5496, %v5585
        %5702 = vmax.xlane.f32.xlu0 %v5701
        %v5703 = vpop.xlane.xlu0 %5702
        %v5704 = vmax.f32 %v5498, %v5587
        %5705 = vmax.xlane.f32.xlu0 %v5704
        %v5706 = vpop.xlane.xlu0 %5705
        %v5707 = vmax.f32 %v5501, %v5590
        %5708 = vmax.xlane.f32.xlu0 %v5707
        %v5709 = vpop.xlane.xlu0 %5708
        %v5710 = vmax.f32 %v5503, %v5592
        %5711 = vmax.xlane.f32.xlu0 %v5710
        %v5712 = vpop.xlane.xlu0 %5711
        %v5713 = vmax.f32 %v5506, %v5595
        %5714 = vmax.xlane.f32.xlu0 %v5713
        %v5715 = vpop.xlane.xlu0 %5714
        %v5716 = vmax.f32 %v5508, %v5597
        %5717 = vmax.xlane.f32.xlu0 %v5716
        %v5718 = vpop.xlane.xlu0 %5717
        %v5719 = vmax.f32 %v5511, %v5600
        %5720 = vmax.xlane.f32.xlu0 %v5719
        %v5721 = vpop.xlane.xlu0 %5720
        %v5722 = vmax.f32 %v5513, %v5602
        %5723 = vmax.xlane.f32.xlu0 %v5722
        %v5724 = vpop.xlane.xlu0 %5723
        %v5725 = vmax.f32 %v5516, %v5605
        %5726 = vmax.xlane.f32.xlu0 %v5725
        %v5727 = vpop.xlane.xlu0 %5726
        %v5728 = vmax.f32 %v5518, %v5607
        %5729 = vmax.xlane.f32.xlu0 %v5728
        %v5730 = vpop.xlane.xlu0 %5729
        %v5731 = vmax.f32 %v5521, %v5610
        %5732 = vmax.xlane.f32.xlu0 %v5731
        %v5733 = vpop.xlane.xlu0 %5732
        %v5734 = vmax.f32 %v5523, %v5612
        %5735 = vmax.xlane.f32.xlu0 %v5734
        %v5736 = vpop.xlane.xlu0 %5735
        %v5737 = vmax.f32 %v5526, %v5615
        %5738 = vmax.xlane.f32.xlu0 %v5737
        %v5739 = vpop.xlane.xlu0 %5738
        %v5740 = vmax.f32 %v5528, %v5617
        %5741 = vmax.xlane.f32.xlu0 %v5740
        %v5742 = vpop.xlane.xlu0 %5741
        %v5743 = vmax.f32 %v5531, %v5620
        %5744 = vmax.xlane.f32.xlu0 %v5743
        %v5745 = vpop.xlane.xlu0 %5744
        %v5746 = vmax.f32 %v5533, %v5622
        %5747 = vmax.xlane.f32.xlu0 %v5746
        %v5748 = vpop.xlane.xlu0 %5747
        %v5749 = vmax.f32 %v5536, %v5625
        %5750 = vmax.xlane.f32.xlu0 %v5749
        %v5751 = vpop.xlane.xlu0 %5750
        %v5752 = vmax.f32 %v5538, %v5627
        %5753 = vmax.xlane.f32.xlu0 %v5752
        %v5754 = vpop.xlane.xlu0 %5753
        %v5755 = vmax.f32 %v5541, %v5630
        %5756 = vmax.xlane.f32.xlu0 %v5755
        %v5757 = vpop.xlane.xlu0 %5756
        %v5758 = vmax.f32 %v5543, %v5632
        %5759 = vmax.xlane.f32.xlu0 %v5758
        %v5760 = vpop.xlane.xlu0 %5759
        %v5761 = vmax.f32 %v5546, %v5635
        %5762 = vmax.xlane.f32.xlu0 %v5761
        %v5763 = vpop.xlane.xlu0 %5762
        %v5764 = vmax.f32 %v5548, %v5637
        %5765 = vmax.xlane.f32.xlu0 %v5764
        %v5766 = vpop.xlane.xlu0 %5765
        %v5767 = vmax.f32 %v5551, %v5640
        %5768 = vmax.xlane.f32.xlu0 %v5767
        %v5769 = vpop.xlane.xlu0 %5768
        %v5770 = vmax.f32 %v5553, %v5642
        %5771 = vmax.xlane.f32.xlu0 %v5770
        %v5772 = vpop.xlane.xlu0 %5771
        %v5773 = vmax.f32 %v5645, %v5679
        %v5774 = vmax.f32 %v5646, %v5682
        %v5775 = vmax.f32 %v5647, %v5685
        %v5776 = vmax.f32 %v5648, %v5688
        %v5777 = vmax.f32 %v5649, %v5691
        %v5778 = vmax.f32 %v5650, %v5694
        %v5779 = vmax.f32 %v5651, %v5697
        %v5780 = vmax.f32 %v5652, %v5700
        %v5781 = vmax.f32 %v5653, %v5703
        %v5782 = vmax.f32 %v5654, %v5706
        %v5783 = vmax.f32 %v5655, %v5709
        %v5784 = vmax.f32 %v5656, %v5712
        %v5785 = vmax.f32 %v5657, %v5715
        %v5786 = vmax.f32 %v5658, %v5718
        %v5787 = vmax.f32 %v5659, %v5721
        %v5788 = vmax.f32 %v5660, %v5724
        %v5789 = vmax.f32 %v5661, %v5727
        %v5790 = vmax.f32 %v5662, %v5730
        %v5791 = vmax.f32 %v5663, %v5733
        %v5792 = vmax.f32 %v5664, %v5736
        %v5793 = vmax.f32 %v5665, %v5739
        %v5794 = vmax.f32 %v5666, %v5742
        %v5795 = vmax.f32 %v5667, %v5745
        %v5796 = vmax.f32 %v5668, %v5748
        %v5797 = vmax.f32 %v5669, %v5751
        %v5798 = vmax.f32 %v5670, %v5754
        %v5799 = vmax.f32 %v5671, %v5757
        %v5800 = vmax.f32 %v5672, %v5760
        %v5801 = vmax.f32 %v5673, %v5763
        %v5802 = vmax.f32 %v5674, %v5766
        %v5803 = vmax.f32 %v5675, %v5769
        %v5804 = vmax.f32 %v5676, %v5772
        %vm5805 = vcmp.eq.f32.partialorder %v5773, -inf
        %vm5806 = vcmp.eq.f32.partialorder %v5774, -inf
        %vm5807 = vcmp.eq.f32.partialorder %v5775, -inf
        %vm5808 = vcmp.eq.f32.partialorder %v5776, -inf
        %vm5809 = vcmp.eq.f32.partialorder %v5777, -inf
        %vm5810 = vcmp.eq.f32.partialorder %v5778, -inf
        %vm5811 = vcmp.eq.f32.partialorder %v5779, -inf
        %vm5812 = vcmp.eq.f32.partialorder %v5780, -inf
        %vm5813 = vcmp.eq.f32.partialorder %v5781, -inf
        %vm5814 = vcmp.eq.f32.partialorder %v5782, -inf
        %vm5815 = vcmp.eq.f32.partialorder %v5783, -inf
        %vm5816 = vcmp.eq.f32.partialorder %v5784, -inf
        %vm5817 = vcmp.eq.f32.partialorder %v5785, -inf
        %vm5818 = vcmp.eq.f32.partialorder %v5786, -inf
        %vm5819 = vcmp.eq.f32.partialorder %v5787, -inf
        %vm5820 = vcmp.eq.f32.partialorder %v5788, -inf
        %vm5821 = vcmp.eq.f32.partialorder %v5789, -inf
        %vm5822 = vcmp.eq.f32.partialorder %v5790, -inf
        %vm5823 = vcmp.eq.f32.partialorder %v5791, -inf
        %vm5824 = vcmp.eq.f32.partialorder %v5792, -inf
        %vm5825 = vcmp.eq.f32.partialorder %v5793, -inf
        %vm5826 = vcmp.eq.f32.partialorder %v5794, -inf
        %vm5827 = vcmp.eq.f32.partialorder %v5795, -inf
        %vm5828 = vcmp.eq.f32.partialorder %v5796, -inf
        %vm5829 = vcmp.eq.f32.partialorder %v5797, -inf
        %vm5830 = vcmp.eq.f32.partialorder %v5798, -inf
        %vm5831 = vcmp.eq.f32.partialorder %v5799, -inf
        %vm5832 = vcmp.eq.f32.partialorder %v5800, -inf
        %vm5833 = vcmp.eq.f32.partialorder %v5801, -inf
        %vm5834 = vcmp.eq.f32.partialorder %v5802, -inf
        %vm5835 = vcmp.eq.f32.partialorder %v5803, -inf
        %vm5836 = vcmp.eq.f32.partialorder %v5804, -inf
        %v5837 = vsel %vm5805, 0.0, %v5773
        %v5838 = vsel %vm5806, 0.0, %v5774
        %v5839 = vsel %vm5807, 0.0, %v5775
        %v5840 = vsel %vm5808, 0.0, %v5776
        %v5841 = vsel %vm5809, 0.0, %v5777
        %v5842 = vsel %vm5810, 0.0, %v5778
        %v5843 = vsel %vm5811, 0.0, %v5779
        %v5844 = vsel %vm5812, 0.0, %v5780
        %v5845 = vsel %vm5813, 0.0, %v5781
        %v5846 = vsel %vm5814, 0.0, %v5782
        %v5847 = vsel %vm5815, 0.0, %v5783
        %v5848 = vsel %vm5816, 0.0, %v5784
        %v5849 = vsel %vm5817, 0.0, %v5785
        %v5850 = vsel %vm5818, 0.0, %v5786
        %v5851 = vsel %vm5819, 0.0, %v5787
        %v5852 = vsel %vm5820, 0.0, %v5788
        %v5853 = vsel %vm5821, 0.0, %v5789
        %v5854 = vsel %vm5822, 0.0, %v5790
        %v5855 = vsel %vm5823, 0.0, %v5791
        %v5856 = vsel %vm5824, 0.0, %v5792
        %v5857 = vsel %vm5825, 0.0, %v5793
        %v5858 = vsel %vm5826, 0.0, %v5794
        %v5859 = vsel %vm5827, 0.0, %v5795
        %v5860 = vsel %vm5828, 0.0, %v5796
        %v5861 = vsel %vm5829, 0.0, %v5797
        %v5862 = vsel %vm5830, 0.0, %v5798
        %v5863 = vsel %vm5831, 0.0, %v5799
        %v5864 = vsel %vm5832, 0.0, %v5800
        %v5865 = vsel %vm5833, 0.0, %v5801
        %v5866 = vsel %vm5834, 0.0, %v5802
        %v5867 = vsel %vm5835, 0.0, %v5803
        %v5868 = vsel %vm5836, 0.0, %v5804
        %v5869 = vsub.f32 %v5645, %v5837
        %v5870 = vsub.f32 %v5646, %v5838
        %v5871 = vsub.f32 %v5647, %v5839
        %v5872 = vsub.f32 %v5648, %v5840
        %v5873 = vsub.f32 %v5649, %v5841
        %v5874 = vsub.f32 %v5650, %v5842
        %v5875 = vsub.f32 %v5651, %v5843
        %v5876 = vsub.f32 %v5652, %v5844
        %v5877 = vsub.f32 %v5653, %v5845
        %v5878 = vsub.f32 %v5654, %v5846
        %v5879 = vsub.f32 %v5655, %v5847
        %v5880 = vsub.f32 %v5656, %v5848
        %v5881 = vsub.f32 %v5657, %v5849
        %v5882 = vsub.f32 %v5658, %v5850
        %v5883 = vsub.f32 %v5659, %v5851
        %v5884 = vsub.f32 %v5660, %v5852
        %v5885 = vsub.f32 %v5661, %v5853
        %v5886 = vsub.f32 %v5662, %v5854
        %v5887 = vsub.f32 %v5663, %v5855
        %v5888 = vsub.f32 %v5664, %v5856
        %v5889 = vsub.f32 %v5665, %v5857
        %v5890 = vsub.f32 %v5666, %v5858
        %v5891 = vsub.f32 %v5667, %v5859
        %v5892 = vsub.f32 %v5668, %v5860
        %v5893 = vsub.f32 %v5669, %v5861
        %v5894 = vsub.f32 %v5670, %v5862
        %v5895 = vsub.f32 %v5671, %v5863
        %v5896 = vsub.f32 %v5672, %v5864
        %v5897 = vsub.f32 %v5673, %v5865
        %v5898 = vsub.f32 %v5674, %v5866
        %v5899 = vsub.f32 %v5675, %v5867
        %v5900 = vsub.f32 %v5676, %v5868
        %v5901 = vmul.f32 %v5869, 1.442695
        %v5902 = vpow.pop %v5901
        %v5903 = vmul.f32 %v5870, 1.442695
        %v5904 = vpow.pop %v5903
        %v5905 = vmul.f32 %v5871, 1.442695
        %v5906 = vpow.pop %v5905
        %v5907 = vmul.f32 %v5872, 1.442695
        %v5908 = vpow.pop %v5907
        %v5909 = vmul.f32 %v5873, 1.442695
        %v5910 = vpow.pop %v5909
        %v5911 = vmul.f32 %v5874, 1.442695
        %v5912 = vpow.pop %v5911
        %v5913 = vmul.f32 %v5875, 1.442695
        %v5914 = vpow.pop %v5913
        %v5915 = vmul.f32 %v5876, 1.442695
        %v5916 = vpow.pop %v5915
        %v5917 = vmul.f32 %v5877, 1.442695
        %v5918 = vpow.pop %v5917
        %v5919 = vmul.f32 %v5878, 1.442695
        %v5920 = vpow.pop %v5919
        %v5921 = vmul.f32 %v5879, 1.442695
        %v5922 = vpow.pop %v5921
        %v5923 = vmul.f32 %v5880, 1.442695
        %v5924 = vpow.pop %v5923
        %v5925 = vmul.f32 %v5881, 1.442695
        %v5926 = vpow.pop %v5925
        %v5927 = vmul.f32 %v5882, 1.442695
        %v5928 = vpow.pop %v5927
        %v5929 = vmul.f32 %v5883, 1.442695
        %v5930 = vpow.pop %v5929
        %v5931 = vmul.f32 %v5884, 1.442695
        %v5932 = vpow.pop %v5931
        %v5933 = vmul.f32 %v5885, 1.442695
        %v5934 = vpow.pop %v5933
        %v5935 = vmul.f32 %v5886, 1.442695
        %v5936 = vpow.pop %v5935
        %v5937 = vmul.f32 %v5887, 1.442695
        %v5938 = vpow.pop %v5937
        %v5939 = vmul.f32 %v5888, 1.442695
        %v5940 = vpow.pop %v5939
        %v5941 = vmul.f32 %v5889, 1.442695
        %v5942 = vpow.pop %v5941
        %v5943 = vmul.f32 %v5890, 1.442695
        %v5944 = vpow.pop %v5943
        %v5945 = vmul.f32 %v5891, 1.442695
        %v5946 = vpow.pop %v5945
        %v5947 = vmul.f32 %v5892, 1.442695
        %v5948 = vpow.pop %v5947
        %v5949 = vmul.f32 %v5893, 1.442695
        %v5950 = vpow.pop %v5949
        %v5951 = vmul.f32 %v5894, 1.442695
        %v5952 = vpow.pop %v5951
        %v5953 = vmul.f32 %v5895, 1.442695
        %v5954 = vpow.pop %v5953
        %v5955 = vmul.f32 %v5896, 1.442695
        %v5956 = vpow.pop %v5955
        %v5957 = vmul.f32 %v5897, 1.442695
        %v5958 = vpow.pop %v5957
        %v5959 = vmul.f32 %v5898, 1.442695
        %v5960 = vpow.pop %v5959
        %v5961 = vmul.f32 %v5899, 1.442695
        %v5962 = vpow.pop %v5961
        %v5963 = vmul.f32 %v5900, 1.442695
        %v5964 = vpow.pop %v5963
        %5966 = vset.pattern.permute.xlu0 0
        %5967 = vperm.xlu0 %5966, %v5837
        %v5968 = vpop.permute.xlu0 %5967
        %5971 = vset.pattern.permute.xlu0 0
        %5972 = vperm.xlu0 %5971, %v5838
        %v5973 = vpop.permute.xlu0 %5972
        %5976 = vset.pattern.permute.xlu0 0
        %5977 = vperm.xlu0 %5976, %v5839
        %v5978 = vpop.permute.xlu0 %5977
        %5981 = vset.pattern.permute.xlu0 0
        %5982 = vperm.xlu0 %5981, %v5840
        %v5983 = vpop.permute.xlu0 %5982
        %5986 = vset.pattern.permute.xlu0 0
        %5987 = vperm.xlu0 %5986, %v5841
        %v5988 = vpop.permute.xlu0 %5987
        %5991 = vset.pattern.permute.xlu0 0
        %5992 = vperm.xlu0 %5991, %v5842
        %v5993 = vpop.permute.xlu0 %5992
        %5996 = vset.pattern.permute.xlu0 0
        %5997 = vperm.xlu0 %5996, %v5843
        %v5998 = vpop.permute.xlu0 %5997
        %6001 = vset.pattern.permute.xlu0 0
        %6002 = vperm.xlu0 %6001, %v5844
        %v6003 = vpop.permute.xlu0 %6002
        %6006 = vset.pattern.permute.xlu0 0
        %6007 = vperm.xlu0 %6006, %v5845
        %v6008 = vpop.permute.xlu0 %6007
        %6011 = vset.pattern.permute.xlu0 0
        %6012 = vperm.xlu0 %6011, %v5846
        %v6013 = vpop.permute.xlu0 %6012
        %6016 = vset.pattern.permute.xlu0 0
        %6017 = vperm.xlu0 %6016, %v5847
        %v6018 = vpop.permute.xlu0 %6017
        %6021 = vset.pattern.permute.xlu0 0
        %6022 = vperm.xlu0 %6021, %v5848
        %v6023 = vpop.permute.xlu0 %6022
        %6026 = vset.pattern.permute.xlu0 0
        %6027 = vperm.xlu0 %6026, %v5849
        %v6028 = vpop.permute.xlu0 %6027
        %6031 = vset.pattern.permute.xlu0 0
        %6032 = vperm.xlu0 %6031, %v5850
        %v6033 = vpop.permute.xlu0 %6032
        %6036 = vset.pattern.permute.xlu0 0
        %6037 = vperm.xlu0 %6036, %v5851
        %v6038 = vpop.permute.xlu0 %6037
        %6041 = vset.pattern.permute.xlu0 0
        %6042 = vperm.xlu0 %6041, %v5852
        %v6043 = vpop.permute.xlu0 %6042
        %6046 = vset.pattern.permute.xlu0 0
        %6047 = vperm.xlu0 %6046, %v5853
        %v6048 = vpop.permute.xlu0 %6047
        %6051 = vset.pattern.permute.xlu0 0
        %6052 = vperm.xlu0 %6051, %v5854
        %v6053 = vpop.permute.xlu0 %6052
        %6056 = vset.pattern.permute.xlu0 0
        %6057 = vperm.xlu0 %6056, %v5855
        %v6058 = vpop.permute.xlu0 %6057
        %6061 = vset.pattern.permute.xlu0 0
        %6062 = vperm.xlu0 %6061, %v5856
        %v6063 = vpop.permute.xlu0 %6062
        %6066 = vset.pattern.permute.xlu0 0
        %6067 = vperm.xlu0 %6066, %v5857
        %v6068 = vpop.permute.xlu0 %6067
        %6071 = vset.pattern.permute.xlu0 0
        %6072 = vperm.xlu0 %6071, %v5858
        %v6073 = vpop.permute.xlu0 %6072
        %6076 = vset.pattern.permute.xlu0 0
        %6077 = vperm.xlu0 %6076, %v5859
        %v6078 = vpop.permute.xlu0 %6077
        %6081 = vset.pattern.permute.xlu0 0
        %6082 = vperm.xlu0 %6081, %v5860
        %v6083 = vpop.permute.xlu0 %6082
        %6086 = vset.pattern.permute.xlu0 0
        %6087 = vperm.xlu0 %6086, %v5861
        %v6088 = vpop.permute.xlu0 %6087
        %6091 = vset.pattern.permute.xlu0 0
        %6092 = vperm.xlu0 %6091, %v5862
        %v6093 = vpop.permute.xlu0 %6092
        %6096 = vset.pattern.permute.xlu0 0
        %6097 = vperm.xlu0 %6096, %v5863
        %v6098 = vpop.permute.xlu0 %6097
        %6101 = vset.pattern.permute.xlu0 0
        %6102 = vperm.xlu0 %6101, %v5864
        %v6103 = vpop.permute.xlu0 %6102
        %6106 = vset.pattern.permute.xlu0 0
        %6107 = vperm.xlu0 %6106, %v5865
        %v6108 = vpop.permute.xlu0 %6107
        %6111 = vset.pattern.permute.xlu0 0
        %6112 = vperm.xlu0 %6111, %v5866
        %v6113 = vpop.permute.xlu0 %6112
        %6116 = vset.pattern.permute.xlu0 0
        %6117 = vperm.xlu0 %6116, %v5867
        %v6118 = vpop.permute.xlu0 %6117
        %6121 = vset.pattern.permute.xlu0 0
        %6122 = vperm.xlu0 %6121, %v5868
        %v6123 = vpop.permute.xlu0 %6122
        %v6125 = vsub.f32 %v5476, %v5968
        %v6126 = vsub.f32 %v5565, %v5968
        %v6127 = vsub.f32 %v5478, %v5973
        %v6128 = vsub.f32 %v5567, %v5973
        %v6129 = vsub.f32 %v5481, %v5978
        %v6130 = vsub.f32 %v5570, %v5978
        %v6131 = vsub.f32 %v5483, %v5983
        %v6132 = vsub.f32 %v5572, %v5983
        %v6133 = vsub.f32 %v5486, %v5988
        %v6134 = vsub.f32 %v5575, %v5988
        %v6135 = vsub.f32 %v5488, %v5993
        %v6136 = vsub.f32 %v5577, %v5993
        %v6137 = vsub.f32 %v5491, %v5998
        %v6138 = vsub.f32 %v5580, %v5998
        %v6139 = vsub.f32 %v5493, %v6003
        %v6140 = vsub.f32 %v5582, %v6003
        %v6141 = vsub.f32 %v5496, %v6008
        %v6142 = vsub.f32 %v5585, %v6008
        %v6143 = vsub.f32 %v5498, %v6013
        %v6144 = vsub.f32 %v5587, %v6013
        %v6145 = vsub.f32 %v5501, %v6018
        %v6146 = vsub.f32 %v5590, %v6018
        %v6147 = vsub.f32 %v5503, %v6023
        %v6148 = vsub.f32 %v5592, %v6023
        %v6149 = vsub.f32 %v5506, %v6028
        %v6150 = vsub.f32 %v5595, %v6028
        %v6151 = vsub.f32 %v5508, %v6033
        %v6152 = vsub.f32 %v5597, %v6033
        %v6153 = vsub.f32 %v5511, %v6038
        %v6154 = vsub.f32 %v5600, %v6038
        %v6155 = vsub.f32 %v5513, %v6043
        %v6156 = vsub.f32 %v5602, %v6043
        %v6157 = vsub.f32 %v5516, %v6048
        %v6158 = vsub.f32 %v5605, %v6048
        %v6159 = vsub.f32 %v5518, %v6053
        %v6160 = vsub.f32 %v5607, %v6053
        %v6161 = vsub.f32 %v5521, %v6058
        %v6162 = vsub.f32 %v5610, %v6058
        %v6163 = vsub.f32 %v5523, %v6063
        %v6164 = vsub.f32 %v5612, %v6063
        %v6165 = vsub.f32 %v5526, %v6068
        %v6166 = vsub.f32 %v5615, %v6068
        %v6167 = vsub.f32 %v5528, %v6073
        %v6168 = vsub.f32 %v5617, %v6073
        %v6169 = vsub.f32 %v5531, %v6078
        %v6170 = vsub.f32 %v5620, %v6078
        %v6171 = vsub.f32 %v5533, %v6083
        %v6172 = vsub.f32 %v5622, %v6083
        %v6173 = vsub.f32 %v5536, %v6088
        %v6174 = vsub.f32 %v5625, %v6088
        %v6175 = vsub.f32 %v5538, %v6093
        %v6176 = vsub.f32 %v5627, %v6093
        %v6177 = vsub.f32 %v5541, %v6098
        %v6178 = vsub.f32 %v5630, %v6098
        %v6179 = vsub.f32 %v5543, %v6103
        %v6180 = vsub.f32 %v5632, %v6103
        %v6181 = vsub.f32 %v5546, %v6108
        %v6182 = vsub.f32 %v5635, %v6108
        %v6183 = vsub.f32 %v5548, %v6113
        %v6184 = vsub.f32 %v5637, %v6113
        %v6185 = vsub.f32 %v5551, %v6118
        %v6186 = vsub.f32 %v5640, %v6118
        %v6187 = vsub.f32 %v5553, %v6123
        %v6188 = vsub.f32 %v5642, %v6123
        %v6189 = vmul.f32 %v6125, 1.442695
        %v6190 = vpow.pop %v6189
        %v6191 = vmul.f32 %v6126, 1.442695
        %v6192 = vpow.pop %v6191
        %v6193 = vmul.f32 %v6127, 1.442695
        %v6194 = vpow.pop %v6193
        %v6195 = vmul.f32 %v6128, 1.442695
        %v6196 = vpow.pop %v6195
        %v6197 = vmul.f32 %v6129, 1.442695
        %v6198 = vpow.pop %v6197
        %v6199 = vmul.f32 %v6130, 1.442695
        %v6200 = vpow.pop %v6199
        %v6201 = vmul.f32 %v6131, 1.442695
        %v6202 = vpow.pop %v6201
        %v6203 = vmul.f32 %v6132, 1.442695
        %v6204 = vpow.pop %v6203
        %v6205 = vmul.f32 %v6133, 1.442695
        %v6206 = vpow.pop %v6205
        %v6207 = vmul.f32 %v6134, 1.442695
        %v6208 = vpow.pop %v6207
        %v6209 = vmul.f32 %v6135, 1.442695
        %v6210 = vpow.pop %v6209
        %v6211 = vmul.f32 %v6136, 1.442695
        %v6212 = vpow.pop %v6211
        %v6213 = vmul.f32 %v6137, 1.442695
        %v6214 = vpow.pop %v6213
        %v6215 = vmul.f32 %v6138, 1.442695
        %v6216 = vpow.pop %v6215
        %v6217 = vmul.f32 %v6139, 1.442695
        %v6218 = vpow.pop %v6217
        %v6219 = vmul.f32 %v6140, 1.442695
        %v6220 = vpow.pop %v6219
        %v6221 = vmul.f32 %v6141, 1.442695
        %v6222 = vpow.pop %v6221
        %v6223 = vmul.f32 %v6142, 1.442695
        %v6224 = vpow.pop %v6223
        %v6225 = vmul.f32 %v6143, 1.442695
        %v6226 = vpow.pop %v6225
        %v6227 = vmul.f32 %v6144, 1.442695
        %v6228 = vpow.pop %v6227
        %v6229 = vmul.f32 %v6145, 1.442695
        %v6230 = vpow.pop %v6229
        %v6231 = vmul.f32 %v6146, 1.442695
        %v6232 = vpow.pop %v6231
        %v6233 = vmul.f32 %v6147, 1.442695
        %v6234 = vpow.pop %v6233
        %v6235 = vmul.f32 %v6148, 1.442695
        %v6236 = vpow.pop %v6235
        %v6237 = vmul.f32 %v6149, 1.442695
        %v6238 = vpow.pop %v6237
        %v6239 = vmul.f32 %v6150, 1.442695
        %v6240 = vpow.pop %v6239
        %v6241 = vmul.f32 %v6151, 1.442695
        %v6242 = vpow.pop %v6241
        %v6243 = vmul.f32 %v6152, 1.442695
        %v6244 = vpow.pop %v6243
        %v6245 = vmul.f32 %v6153, 1.442695
        %v6246 = vpow.pop %v6245
        %v6247 = vmul.f32 %v6154, 1.442695
        %v6248 = vpow.pop %v6247
        %v6249 = vmul.f32 %v6155, 1.442695
        %v6250 = vpow.pop %v6249
        %v6251 = vmul.f32 %v6156, 1.442695
        %v6252 = vpow.pop %v6251
        %v6253 = vmul.f32 %v6157, 1.442695
        %v6254 = vpow.pop %v6253
        %v6255 = vmul.f32 %v6158, 1.442695
        %v6256 = vpow.pop %v6255
        %v6257 = vmul.f32 %v6159, 1.442695
        %v6258 = vpow.pop %v6257
        %v6259 = vmul.f32 %v6160, 1.442695
        %v6260 = vpow.pop %v6259
        %v6261 = vmul.f32 %v6161, 1.442695
        %v6262 = vpow.pop %v6261
        %v6263 = vmul.f32 %v6162, 1.442695
        %v6264 = vpow.pop %v6263
        %v6265 = vmul.f32 %v6163, 1.442695
        %v6266 = vpow.pop %v6265
        %v6267 = vmul.f32 %v6164, 1.442695
        %v6268 = vpow.pop %v6267
        %v6269 = vmul.f32 %v6165, 1.442695
        %v6270 = vpow.pop %v6269
        %v6271 = vmul.f32 %v6166, 1.442695
        %v6272 = vpow.pop %v6271
        %v6273 = vmul.f32 %v6167, 1.442695
        %v6274 = vpow.pop %v6273
        %v6275 = vmul.f32 %v6168, 1.442695
        %v6276 = vpow.pop %v6275
        %v6277 = vmul.f32 %v6169, 1.442695
        %v6278 = vpow.pop %v6277
        %v6279 = vmul.f32 %v6170, 1.442695
        %v6280 = vpow.pop %v6279
        %v6281 = vmul.f32 %v6171, 1.442695
        %v6282 = vpow.pop %v6281
        %v6283 = vmul.f32 %v6172, 1.442695
        %v6284 = vpow.pop %v6283
        %v6285 = vmul.f32 %v6173, 1.442695
        %v6286 = vpow.pop %v6285
        %v6287 = vmul.f32 %v6174, 1.442695
        %v6288 = vpow.pop %v6287
        %v6289 = vmul.f32 %v6175, 1.442695
        %v6290 = vpow.pop %v6289
        %v6291 = vmul.f32 %v6176, 1.442695
        %v6292 = vpow.pop %v6291
        %v6293 = vmul.f32 %v6177, 1.442695
        %v6294 = vpow.pop %v6293
        %v6295 = vmul.f32 %v6178, 1.442695
        %v6296 = vpow.pop %v6295
        %v6297 = vmul.f32 %v6179, 1.442695
        %v6298 = vpow.pop %v6297
        %v6299 = vmul.f32 %v6180, 1.442695
        %v6300 = vpow.pop %v6299
        %v6301 = vmul.f32 %v6181, 1.442695
        %v6302 = vpow.pop %v6301
        %v6303 = vmul.f32 %v6182, 1.442695
        %v6304 = vpow.pop %v6303
        %v6305 = vmul.f32 %v6183, 1.442695
        %v6306 = vpow.pop %v6305
        %v6307 = vmul.f32 %v6184, 1.442695
        %v6308 = vpow.pop %v6307
        %v6309 = vmul.f32 %v6185, 1.442695
        %v6310 = vpow.pop %v6309
        %v6311 = vmul.f32 %v6186, 1.442695
        %v6312 = vpow.pop %v6311
        %v6313 = vmul.f32 %v6187, 1.442695
        %v6314 = vpow.pop %v6313
        %v6315 = vmul.f32 %v6188, 1.442695
        %v6316 = vpow.pop %v6315
        %s6317 = scalar_lea.vmem [#allocation4], 512
        %v6318 = vld [vmem:[%s6317] sm:$0xff]
        %v6319 = vld [vmem:[%s6317 + $0x8] sm:$0xff]
        %v6320 = vld [vmem:[%s6317 + $0x10] sm:$0xff]
        %v6321 = vld [vmem:[%s6317 + $0x18] sm:$0xff]
        %v6322 = vld [vmem:[%s6317 + $0x20] sm:$0xff]
        %v6323 = vld [vmem:[%s6317 + $0x28] sm:$0xff]
        %v6324 = vld [vmem:[%s6317 + $0x30] sm:$0xff]
        %v6325 = vld [vmem:[%s6317 + $0x38] sm:$0xff]
        %v6326 = vld [vmem:[%s6317 + $0x40] sm:$0xff]
        %v6327 = vld [vmem:[%s6317 + $0x48] sm:$0xff]
        %v6328 = vld [vmem:[%s6317 + $0x50] sm:$0xff]
        %v6329 = vld [vmem:[%s6317 + $0x58] sm:$0xff]
        %v6330 = vld [vmem:[%s6317 + $0x60] sm:$0xff]
        %v6331 = vld [vmem:[%s6317 + $0x68] sm:$0xff]
        %v6332 = vld [vmem:[%s6317 + $0x70] sm:$0xff]
        %v6333 = vld [vmem:[%s6317 + $0x78] sm:$0xff]
        %v6334 = vld [vmem:[%s6317 + $0x80] sm:$0xff]
        %v6335 = vld [vmem:[%s6317 + $0x88] sm:$0xff]
        %v6336 = vld [vmem:[%s6317 + $0x90] sm:$0xff]
        %v6337 = vld [vmem:[%s6317 + $0x98] sm:$0xff]
        %v6338 = vld [vmem:[%s6317 + $0xa0] sm:$0xff]
        %v6339 = vld [vmem:[%s6317 + $0xa8] sm:$0xff]
        %v6340 = vld [vmem:[%s6317 + $0xb0] sm:$0xff]
        %v6341 = vld [vmem:[%s6317 + $0xb8] sm:$0xff]
        %v6342 = vld [vmem:[%s6317 + $0xc0] sm:$0xff]
        %v6343 = vld [vmem:[%s6317 + $0xc8] sm:$0xff]
        %v6344 = vld [vmem:[%s6317 + $0xd0] sm:$0xff]
        %v6345 = vld [vmem:[%s6317 + $0xd8] sm:$0xff]
        %v6346 = vld [vmem:[%s6317 + $0xe0] sm:$0xff]
        %v6347 = vld [vmem:[%s6317 + $0xe8] sm:$0xff]
        %v6348 = vld [vmem:[%s6317 + $0xf0] sm:$0xff]
        %v6349 = vld [vmem:[%s6317 + $0xf8] sm:$0xff]
        %v6350 = vmul.f32 %v5902, %v6318
        %v6351 = vmul.f32 %v5904, %v6319
        %v6352 = vmul.f32 %v5906, %v6320
        %v6353 = vmul.f32 %v5908, %v6321
        %v6354 = vmul.f32 %v5910, %v6322
        %v6355 = vmul.f32 %v5912, %v6323
        %v6356 = vmul.f32 %v5914, %v6324
        %v6357 = vmul.f32 %v5916, %v6325
        %v6358 = vmul.f32 %v5918, %v6326
        %v6359 = vmul.f32 %v5920, %v6327
        %v6360 = vmul.f32 %v5922, %v6328
        %v6361 = vmul.f32 %v5924, %v6329
        %v6362 = vmul.f32 %v5926, %v6330
        %v6363 = vmul.f32 %v5928, %v6331
        %v6364 = vmul.f32 %v5930, %v6332
        %v6365 = vmul.f32 %v5932, %v6333
        %v6366 = vmul.f32 %v5934, %v6334
        %v6367 = vmul.f32 %v5936, %v6335
        %v6368 = vmul.f32 %v5938, %v6336
        %v6369 = vmul.f32 %v5940, %v6337
        %v6370 = vmul.f32 %v5942, %v6338
        %v6371 = vmul.f32 %v5944, %v6339
        %v6372 = vmul.f32 %v5946, %v6340
        %v6373 = vmul.f32 %v5948, %v6341
        %v6374 = vmul.f32 %v5950, %v6342
        %v6375 = vmul.f32 %v5952, %v6343
        %v6376 = vmul.f32 %v5954, %v6344
        %v6377 = vmul.f32 %v5956, %v6345
        %v6378 = vmul.f32 %v5958, %v6346
        %v6379 = vmul.f32 %v5960, %v6347
        %v6380 = vmul.f32 %v5962, %v6348
        %v6381 = vmul.f32 %v5964, %v6349
        %v6382 = vadd.f32 %v6190, %v6192
        %6383 = vadd.xlane.f32.xlu0 %v6382
        %v6384 = vpop.xlane.xlu0 %6383
        %v6385 = vadd.f32 %v6194, %v6196
        %6386 = vadd.xlane.f32.xlu0 %v6385
        %v6387 = vpop.xlane.xlu0 %6386
        %v6388 = vadd.f32 %v6198, %v6200
        %6389 = vadd.xlane.f32.xlu0 %v6388
        %v6390 = vpop.xlane.xlu0 %6389
        %v6391 = vadd.f32 %v6202, %v6204
        %6392 = vadd.xlane.f32.xlu0 %v6391
        %v6393 = vpop.xlane.xlu0 %6392
        %v6394 = vadd.f32 %v6206, %v6208
        %6395 = vadd.xlane.f32.xlu0 %v6394
        %v6396 = vpop.xlane.xlu0 %6395
        %v6397 = vadd.f32 %v6210, %v6212
        %6398 = vadd.xlane.f32.xlu0 %v6397
        %v6399 = vpop.xlane.xlu0 %6398
        %v6400 = vadd.f32 %v6214, %v6216
        %6401 = vadd.xlane.f32.xlu0 %v6400
        %v6402 = vpop.xlane.xlu0 %6401
        %v6403 = vadd.f32 %v6218, %v6220
        %6404 = vadd.xlane.f32.xlu0 %v6403
        %v6405 = vpop.xlane.xlu0 %6404
        %v6406 = vadd.f32 %v6222, %v6224
        %6407 = vadd.xlane.f32.xlu0 %v6406
        %v6408 = vpop.xlane.xlu0 %6407
        %v6409 = vadd.f32 %v6226, %v6228
        %6410 = vadd.xlane.f32.xlu0 %v6409
        %v6411 = vpop.xlane.xlu0 %6410
        %v6412 = vadd.f32 %v6230, %v6232
        %6413 = vadd.xlane.f32.xlu0 %v6412
        %v6414 = vpop.xlane.xlu0 %6413
        %v6415 = vadd.f32 %v6234, %v6236
        %6416 = vadd.xlane.f32.xlu0 %v6415
        %v6417 = vpop.xlane.xlu0 %6416
        %v6418 = vadd.f32 %v6238, %v6240
        %6419 = vadd.xlane.f32.xlu0 %v6418
        %v6420 = vpop.xlane.xlu0 %6419
        %v6421 = vadd.f32 %v6242, %v6244
        %6422 = vadd.xlane.f32.xlu0 %v6421
        %v6423 = vpop.xlane.xlu0 %6422
        %v6424 = vadd.f32 %v6246, %v6248
        %6425 = vadd.xlane.f32.xlu0 %v6424
        %v6426 = vpop.xlane.xlu0 %6425
        %v6427 = vadd.f32 %v6250, %v6252
        %6428 = vadd.xlane.f32.xlu0 %v6427
        %v6429 = vpop.xlane.xlu0 %6428
        %v6430 = vadd.f32 %v6254, %v6256
        %6431 = vadd.xlane.f32.xlu0 %v6430
        %v6432 = vpop.xlane.xlu0 %6431
        %v6433 = vadd.f32 %v6258, %v6260
        %6434 = vadd.xlane.f32.xlu0 %v6433
        %v6435 = vpop.xlane.xlu0 %6434
        %v6436 = vadd.f32 %v6262, %v6264
        %6437 = vadd.xlane.f32.xlu0 %v6436
        %v6438 = vpop.xlane.xlu0 %6437
        %v6439 = vadd.f32 %v6266, %v6268
        %6440 = vadd.xlane.f32.xlu0 %v6439
        %v6441 = vpop.xlane.xlu0 %6440
        %v6442 = vadd.f32 %v6270, %v6272
        %6443 = vadd.xlane.f32.xlu0 %v6442
        %v6444 = vpop.xlane.xlu0 %6443
        %v6445 = vadd.f32 %v6274, %v6276
        %6446 = vadd.xlane.f32.xlu0 %v6445
        %v6447 = vpop.xlane.xlu0 %6446
        %v6448 = vadd.f32 %v6278, %v6280
        %6449 = vadd.xlane.f32.xlu0 %v6448
        %v6450 = vpop.xlane.xlu0 %6449
        %v6451 = vadd.f32 %v6282, %v6284
        %6452 = vadd.xlane.f32.xlu0 %v6451
        %v6453 = vpop.xlane.xlu0 %6452
        %v6454 = vadd.f32 %v6286, %v6288
        %6455 = vadd.xlane.f32.xlu0 %v6454
        %v6456 = vpop.xlane.xlu0 %6455
        %v6457 = vadd.f32 %v6290, %v6292
        %6458 = vadd.xlane.f32.xlu0 %v6457
        %v6459 = vpop.xlane.xlu0 %6458
        %v6460 = vadd.f32 %v6294, %v6296
        %6461 = vadd.xlane.f32.xlu0 %v6460
        %v6462 = vpop.xlane.xlu0 %6461
        %v6463 = vadd.f32 %v6298, %v6300
        %6464 = vadd.xlane.f32.xlu0 %v6463
        %v6465 = vpop.xlane.xlu0 %6464
        %v6466 = vadd.f32 %v6302, %v6304
        %6467 = vadd.xlane.f32.xlu0 %v6466
        %v6468 = vpop.xlane.xlu0 %6467
        %v6469 = vadd.f32 %v6306, %v6308
        %6470 = vadd.xlane.f32.xlu0 %v6469
        %v6471 = vpop.xlane.xlu0 %6470
        %v6472 = vadd.f32 %v6310, %v6312
        %6473 = vadd.xlane.f32.xlu0 %v6472
        %v6474 = vpop.xlane.xlu0 %6473
        %v6475 = vadd.f32 %v6314, %v6316
        %6476 = vadd.xlane.f32.xlu0 %v6475
        %v6477 = vpop.xlane.xlu0 %6476
        %v6478 = vadd.f32 %v6350, %v6384
        %v6479 = vadd.f32 %v6351, %v6387
        %v6480 = vadd.f32 %v6352, %v6390
        %v6481 = vadd.f32 %v6353, %v6393
        %v6482 = vadd.f32 %v6354, %v6396
        %v6483 = vadd.f32 %v6355, %v6399
        %v6484 = vadd.f32 %v6356, %v6402
        %v6485 = vadd.f32 %v6357, %v6405
        %v6486 = vadd.f32 %v6358, %v6408
        %v6487 = vadd.f32 %v6359, %v6411
        %v6488 = vadd.f32 %v6360, %v6414
        %v6489 = vadd.f32 %v6361, %v6417
        %v6490 = vadd.f32 %v6362, %v6420
        %v6491 = vadd.f32 %v6363, %v6423
        %v6492 = vadd.f32 %v6364, %v6426
        %v6493 = vadd.f32 %v6365, %v6429
        %v6494 = vadd.f32 %v6366, %v6432
        %v6495 = vadd.f32 %v6367, %v6435
        %v6496 = vadd.f32 %v6368, %v6438
        %v6497 = vadd.f32 %v6369, %v6441
        %v6498 = vadd.f32 %v6370, %v6444
        %v6499 = vadd.f32 %v6371, %v6447
        %v6500 = vadd.f32 %v6372, %v6450
        %v6501 = vadd.f32 %v6373, %v6453
        %v6502 = vadd.f32 %v6374, %v6456
        %v6503 = vadd.f32 %v6375, %v6459
        %v6504 = vadd.f32 %v6376, %v6462
        %v6505 = vadd.f32 %v6377, %v6465
        %v6506 = vadd.f32 %v6378, %v6468
        %v6507 = vadd.f32 %v6379, %v6471
        %v6508 = vadd.f32 %v6380, %v6474
        %v6509 = vadd.f32 %v6381, %v6477
        %6510 = vst.msk [vmem:[%s6317] sm:$0xff] %vm2733, %v6478
        %6511 = vst.msk [vmem:[%s6317 + $0x8] sm:$0xff] %vm2733, %v6479
        %6512 = vst.msk [vmem:[%s6317 + $0x10] sm:$0xff] %vm2733, %v6480
        %6513 = vst.msk [vmem:[%s6317 + $0x18] sm:$0xff] %vm2733, %v6481
        %6514 = vst.msk [vmem:[%s6317 + $0x20] sm:$0xff] %vm2733, %v6482
        %6515 = vst.msk [vmem:[%s6317 + $0x28] sm:$0xff] %vm2733, %v6483
        %6516 = vst.msk [vmem:[%s6317 + $0x30] sm:$0xff] %vm2733, %v6484
        %6517 = vst.msk [vmem:[%s6317 + $0x38] sm:$0xff] %vm2733, %v6485
        %6518 = vst.msk [vmem:[%s6317 + $0x40] sm:$0xff] %vm2733, %v6486
        %6519 = vst.msk [vmem:[%s6317 + $0x48] sm:$0xff] %vm2733, %v6487
        %6520 = vst.msk [vmem:[%s6317 + $0x50] sm:$0xff] %vm2733, %v6488
        %6521 = vst.msk [vmem:[%s6317 + $0x58] sm:$0xff] %vm2733, %v6489
        %6522 = vst.msk [vmem:[%s6317 + $0x60] sm:$0xff] %vm2733, %v6490
        %6523 = vst.msk [vmem:[%s6317 + $0x68] sm:$0xff] %vm2733, %v6491
        %6524 = vst.msk [vmem:[%s6317 + $0x70] sm:$0xff] %vm2733, %v6492
        %6525 = vst.msk [vmem:[%s6317 + $0x78] sm:$0xff] %vm2733, %v6493
        %6526 = vst.msk [vmem:[%s6317 + $0x80] sm:$0xff] %vm2733, %v6494
        %6527 = vst.msk [vmem:[%s6317 + $0x88] sm:$0xff] %vm2733, %v6495
        %6528 = vst.msk [vmem:[%s6317 + $0x90] sm:$0xff] %vm2733, %v6496
        %6529 = vst.msk [vmem:[%s6317 + $0x98] sm:$0xff] %vm2733, %v6497
        %6530 = vst.msk [vmem:[%s6317 + $0xa0] sm:$0xff] %vm2733, %v6498
        %6531 = vst.msk [vmem:[%s6317 + $0xa8] sm:$0xff] %vm2733, %v6499
        %6532 = vst.msk [vmem:[%s6317 + $0xb0] sm:$0xff] %vm2733, %v6500
        %6533 = vst.msk [vmem:[%s6317 + $0xb8] sm:$0xff] %vm2733, %v6501
        %6534 = vst.msk [vmem:[%s6317 + $0xc0] sm:$0xff] %vm2733, %v6502
        %6535 = vst.msk [vmem:[%s6317 + $0xc8] sm:$0xff] %vm2733, %v6503
        %6536 = vst.msk [vmem:[%s6317 + $0xd0] sm:$0xff] %vm2733, %v6504
        %6537 = vst.msk [vmem:[%s6317 + $0xd8] sm:$0xff] %vm2733, %v6505
        %6538 = vst.msk [vmem:[%s6317 + $0xe0] sm:$0xff] %vm2733, %v6506
        %6539 = vst.msk [vmem:[%s6317 + $0xe8] sm:$0xff] %vm2733, %v6507
        %6540 = vst.msk [vmem:[%s6317 + $0xf0] sm:$0xff] %vm2733, %v6508
        %6541 = vst.msk [vmem:[%s6317 + $0xf8] sm:$0xff] %vm2733, %v6509
        %6542 = vst.msk [vmem:[%s5644] sm:$0xff] %vm2733, %v5773
        %6543 = vst.msk [vmem:[%s5644 + $0x8] sm:$0xff] %vm2733, %v5774
        %6544 = vst.msk [vmem:[%s5644 + $0x10] sm:$0xff] %vm2733, %v5775
        %6545 = vst.msk [vmem:[%s5644 + $0x18] sm:$0xff] %vm2733, %v5776
        %6546 = vst.msk [vmem:[%s5644 + $0x20] sm:$0xff] %vm2733, %v5777
        %6547 = vst.msk [vmem:[%s5644 + $0x28] sm:$0xff] %vm2733, %v5778
        %6548 = vst.msk [vmem:[%s5644 + $0x30] sm:$0xff] %vm2733, %v5779
        %6549 = vst.msk [vmem:[%s5644 + $0x38] sm:$0xff] %vm2733, %v5780
        %6550 = vst.msk [vmem:[%s5644 + $0x40] sm:$0xff] %vm2733, %v5781
        %6551 = vst.msk [vmem:[%s5644 + $0x48] sm:$0xff] %vm2733, %v5782
        %6552 = vst.msk [vmem:[%s5644 + $0x50] sm:$0xff] %vm2733, %v5783
        %6553 = vst.msk [vmem:[%s5644 + $0x58] sm:$0xff] %vm2733, %v5784
        %6554 = vst.msk [vmem:[%s5644 + $0x60] sm:$0xff] %vm2733, %v5785
        %6555 = vst.msk [vmem:[%s5644 + $0x68] sm:$0xff] %vm2733, %v5786
        %6556 = vst.msk [vmem:[%s5644 + $0x70] sm:$0xff] %vm2733, %v5787
        %6557 = vst.msk [vmem:[%s5644 + $0x78] sm:$0xff] %vm2733, %v5788
        %6558 = vst.msk [vmem:[%s5644 + $0x80] sm:$0xff] %vm2733, %v5789
        %6559 = vst.msk [vmem:[%s5644 + $0x88] sm:$0xff] %vm2733, %v5790
        %6560 = vst.msk [vmem:[%s5644 + $0x90] sm:$0xff] %vm2733, %v5791
        %6561 = vst.msk [vmem:[%s5644 + $0x98] sm:$0xff] %vm2733, %v5792
        %6562 = vst.msk [vmem:[%s5644 + $0xa0] sm:$0xff] %vm2733, %v5793
        %6563 = vst.msk [vmem:[%s5644 + $0xa8] sm:$0xff] %vm2733, %v5794
        %6564 = vst.msk [vmem:[%s5644 + $0xb0] sm:$0xff] %vm2733, %v5795
        %6565 = vst.msk [vmem:[%s5644 + $0xb8] sm:$0xff] %vm2733, %v5796
        %6566 = vst.msk [vmem:[%s5644 + $0xc0] sm:$0xff] %vm2733, %v5797
        %6567 = vst.msk [vmem:[%s5644 + $0xc8] sm:$0xff] %vm2733, %v5798
        %6568 = vst.msk [vmem:[%s5644 + $0xd0] sm:$0xff] %vm2733, %v5799
        %6569 = vst.msk [vmem:[%s5644 + $0xd8] sm:$0xff] %vm2733, %v5800
        %6570 = vst.msk [vmem:[%s5644 + $0xe0] sm:$0xff] %vm2733, %v5801
        %6571 = vst.msk [vmem:[%s5644 + $0xe8] sm:$0xff] %vm2733, %v5802
        %6572 = vst.msk [vmem:[%s5644 + $0xf0] sm:$0xff] %vm2733, %v5803
        %6573 = vst.msk [vmem:[%s5644 + $0xf8] sm:$0xff] %vm2733, %v5804
        %v6574 = vpack.c.bf16 %v6194, %v6190
        %v6575 = vpack.c.bf16 %v6196, %v6192
        %v6576 = vpack.c.bf16 %v6202, %v6198
        %v6577 = vpack.c.bf16 %v6204, %v6200
        %v6578 = vpack.c.bf16 %v6210, %v6206
        %v6579 = vpack.c.bf16 %v6212, %v6208
        %v6580 = vpack.c.bf16 %v6218, %v6214
        %v6581 = vpack.c.bf16 %v6220, %v6216
        %v6582 = vpack.c.bf16 %v6226, %v6222
        %v6583 = vpack.c.bf16 %v6228, %v6224
        %v6584 = vpack.c.bf16 %v6234, %v6230
        %v6585 = vpack.c.bf16 %v6236, %v6232
        %v6586 = vpack.c.bf16 %v6242, %v6238
        %v6587 = vpack.c.bf16 %v6244, %v6240
        %v6588 = vpack.c.bf16 %v6250, %v6246
        %v6589 = vpack.c.bf16 %v6252, %v6248
        %v6590 = vpack.c.bf16 %v6258, %v6254
        %v6591 = vpack.c.bf16 %v6260, %v6256
        %v6592 = vpack.c.bf16 %v6266, %v6262
        %v6593 = vpack.c.bf16 %v6268, %v6264
        %v6594 = vpack.c.bf16 %v6274, %v6270
        %v6595 = vpack.c.bf16 %v6276, %v6272
        %v6596 = vpack.c.bf16 %v6282, %v6278
        %v6597 = vpack.c.bf16 %v6284, %v6280
        %v6598 = vpack.c.bf16 %v6290, %v6286
        %v6599 = vpack.c.bf16 %v6292, %v6288
        %v6600 = vpack.c.bf16 %v6298, %v6294
        %v6601 = vpack.c.bf16 %v6300, %v6296
        %v6602 = vpack.c.bf16 %v6306, %v6302
        %v6603 = vpack.c.bf16 %v6308, %v6304
        %v6604 = vpack.c.bf16 %v6314, %v6310
        %v6605 = vpack.c.bf16 %v6316, %v6312
        %6606 = vrot.lane.b32.xlu0 %v2894, 64
        %v6607 = vpop.permute.xlu0 %6606
        %6608 = vrot.lane.b32.xlu0 %v2895, 64
        %v6609 = vpop.permute.xlu0 %6608
        %6610 = vrot.lane.b32.xlu0 %v2896, 64
        %v6611 = vpop.permute.xlu0 %6610
        %6612 = vrot.lane.b32.xlu0 %v2897, 64
        %v6613 = vpop.permute.xlu0 %6612
        %6614 = vrot.lane.b32.xlu0 %v2898, 64
        %v6615 = vpop.permute.xlu0 %6614
        %6616 = vrot.lane.b32.xlu0 %v2899, 64
        %v6617 = vpop.permute.xlu0 %6616
        %6618 = vrot.lane.b32.xlu0 %v2900, 64
        %v6619 = vpop.permute.xlu0 %6618
        %6620 = vrot.lane.b32.xlu0 %v2901, 64
        %v6621 = vpop.permute.xlu0 %6620
        %6622 = vrot.lane.b32.xlu0 %v2902, 64
        %v6623 = vpop.permute.xlu0 %6622
        %6624 = vrot.lane.b32.xlu0 %v2903, 64
        %v6625 = vpop.permute.xlu0 %6624
        %6626 = vrot.lane.b32.xlu0 %v2904, 64
        %v6627 = vpop.permute.xlu0 %6626
        %6628 = vrot.lane.b32.xlu0 %v2905, 64
        %v6629 = vpop.permute.xlu0 %6628
        %6630 = vrot.lane.b32.xlu0 %v2906, 64
        %v6631 = vpop.permute.xlu0 %6630
        %6632 = vrot.lane.b32.xlu0 %v2907, 64
        %v6633 = vpop.permute.xlu0 %6632
        %6634 = vrot.lane.b32.xlu0 %v2908, 64
        %v6635 = vpop.permute.xlu0 %6634
        %6636 = vrot.lane.b32.xlu0 %v2909, 64
        %v6637 = vpop.permute.xlu0 %6636
        %6654 = vmatpush.bf16.msra.mxu0 %v6621
        %6655 = vmatpush.bf16.msra.mxu0 %v6619
        %6656 = vmatpush.bf16.msra.mxu0 %v6617
        %6657 = vmatpush.bf16.msra.mxu0 %v6615
        %6658 = vmatpush.bf16.msra.mxu0 %v6613
        %6659 = vmatpush.bf16.msra.mxu0 %v6611
        %6660 = vmatpush.bf16.msra.mxu0 %v6609
        %6661 = vmatpush.bf16.msra.mxu0 %v6607
        %6662 = vmatmul.bf16.gmra.mxu0 %v6574
        %v6663 = vpop.f32.mrf.mxu0
        %v6664 = vadd.f32 0.0, %v6663
        %v6665 = vpop.f32.mrf.mxu0
        %v6666 = vadd.f32 0.0, %v6665
        %6667 = vmatmul.bf16.gmra.mxu0 %v6576
        %v6668 = vpop.f32.mrf.mxu0
        %v6669 = vadd.f32 0.0, %v6668
        %v6670 = vpop.f32.mrf.mxu0
        %v6671 = vadd.f32 0.0, %v6670
        %6672 = vmatmul.bf16.gmra.mxu0 %v6578
        %v6673 = vpop.f32.mrf.mxu0
        %v6674 = vadd.f32 0.0, %v6673
        %v6675 = vpop.f32.mrf.mxu0
        %v6676 = vadd.f32 0.0, %v6675
        %6677 = vmatmul.bf16.gmra.mxu0 %v6580
        %v6678 = vpop.f32.mrf.mxu0
        %v6679 = vadd.f32 0.0, %v6678
        %v6680 = vpop.f32.mrf.mxu0
        %v6681 = vadd.f32 0.0, %v6680
        %6682 = vmatmul.bf16.gmra.mxu0 %v6582
        %v6683 = vpop.f32.mrf.mxu0
        %v6684 = vadd.f32 0.0, %v6683
        %v6685 = vpop.f32.mrf.mxu0
        %v6686 = vadd.f32 0.0, %v6685
        %6687 = vmatmul.bf16.gmra.mxu0 %v6584
        %v6688 = vpop.f32.mrf.mxu0
        %v6689 = vadd.f32 0.0, %v6688
        %v6690 = vpop.f32.mrf.mxu0
        %v6691 = vadd.f32 0.0, %v6690
        %6692 = vmatmul.bf16.gmra.mxu0 %v6586
        %v6693 = vpop.f32.mrf.mxu0
        %v6694 = vadd.f32 0.0, %v6693
        %v6695 = vpop.f32.mrf.mxu0
        %v6696 = vadd.f32 0.0, %v6695
        %6697 = vmatmul.bf16.gmra.mxu0 %v6588
        %v6698 = vpop.f32.mrf.mxu0
        %v6699 = vadd.f32 0.0, %v6698
        %v6700 = vpop.f32.mrf.mxu0
        %v6701 = vadd.f32 0.0, %v6700
        %6702 = vmatmul.bf16.gmra.mxu0 %v6590
        %v6703 = vpop.f32.mrf.mxu0
        %v6704 = vadd.f32 0.0, %v6703
        %v6705 = vpop.f32.mrf.mxu0
        %v6706 = vadd.f32 0.0, %v6705
        %6707 = vmatmul.bf16.gmra.mxu0 %v6592
        %v6708 = vpop.f32.mrf.mxu0
        %v6709 = vadd.f32 0.0, %v6708
        %v6710 = vpop.f32.mrf.mxu0
        %v6711 = vadd.f32 0.0, %v6710
        %6712 = vmatmul.bf16.gmra.mxu0 %v6594
        %v6713 = vpop.f32.mrf.mxu0
        %v6714 = vadd.f32 0.0, %v6713
        %v6715 = vpop.f32.mrf.mxu0
        %v6716 = vadd.f32 0.0, %v6715
        %6717 = vmatmul.bf16.gmra.mxu0 %v6596
        %v6718 = vpop.f32.mrf.mxu0
        %v6719 = vadd.f32 0.0, %v6718
        %v6720 = vpop.f32.mrf.mxu0
        %v6721 = vadd.f32 0.0, %v6720
        %6722 = vmatmul.bf16.gmra.mxu0 %v6598
        %v6723 = vpop.f32.mrf.mxu0
        %v6724 = vadd.f32 0.0, %v6723
        %v6725 = vpop.f32.mrf.mxu0
        %v6726 = vadd.f32 0.0, %v6725
        %6727 = vmatmul.bf16.gmra.mxu0 %v6600
        %v6728 = vpop.f32.mrf.mxu0
        %v6729 = vadd.f32 0.0, %v6728
        %v6730 = vpop.f32.mrf.mxu0
        %v6731 = vadd.f32 0.0, %v6730
        %6732 = vmatmul.bf16.gmra.mxu0 %v6602
        %v6733 = vpop.f32.mrf.mxu0
        %v6734 = vadd.f32 0.0, %v6733
        %v6735 = vpop.f32.mrf.mxu0
        %v6736 = vadd.f32 0.0, %v6735
        %6737 = vmatmul.bf16.gmra.mxu0 %v6604
        %v6738 = vpop.f32.mrf.mxu0
        %v6739 = vadd.f32 0.0, %v6738
        %v6740 = vpop.f32.mrf.mxu0
        %v6741 = vadd.f32 0.0, %v6740
        %6742 = vdwg.mxu0
        %6743 = vmatpush.bf16.msra.mxu0 %v6637
        %6744 = vmatpush.bf16.msra.mxu0 %v6635
        %6745 = vmatpush.bf16.msra.mxu0 %v6633
        %6746 = vmatpush.bf16.msra.mxu0 %v6631
        %6747 = vmatpush.bf16.msra.mxu0 %v6629
        %6748 = vmatpush.bf16.msra.mxu0 %v6627
        %6749 = vmatpush.bf16.msra.mxu0 %v6625
        %6750 = vmatpush.bf16.msra.mxu0 %v6623
        %6751 = vmatmul.bf16.gmra.mxu0 %v6575
        %v6752 = vpop.f32.mrf.mxu0
        %v6753 = vadd.f32 %v6664, %v6752
        %v6754 = vpop.f32.mrf.mxu0
        %v6755 = vadd.f32 %v6666, %v6754
        %6756 = vmatmul.bf16.gmra.mxu0 %v6577
        %v6757 = vpop.f32.mrf.mxu0
        %v6758 = vadd.f32 %v6669, %v6757
        %v6759 = vpop.f32.mrf.mxu0
        %v6760 = vadd.f32 %v6671, %v6759
        %6761 = vmatmul.bf16.gmra.mxu0 %v6579
        %v6762 = vpop.f32.mrf.mxu0
        %v6763 = vadd.f32 %v6674, %v6762
        %v6764 = vpop.f32.mrf.mxu0
        %v6765 = vadd.f32 %v6676, %v6764
        %6766 = vmatmul.bf16.gmra.mxu0 %v6581
        %v6767 = vpop.f32.mrf.mxu0
        %v6768 = vadd.f32 %v6679, %v6767
        %v6769 = vpop.f32.mrf.mxu0
        %v6770 = vadd.f32 %v6681, %v6769
        %6771 = vmatmul.bf16.gmra.mxu0 %v6583
        %v6772 = vpop.f32.mrf.mxu0
        %v6773 = vadd.f32 %v6684, %v6772
        %v6774 = vpop.f32.mrf.mxu0
        %v6775 = vadd.f32 %v6686, %v6774
        %6776 = vmatmul.bf16.gmra.mxu0 %v6585
        %v6777 = vpop.f32.mrf.mxu0
        %v6778 = vadd.f32 %v6689, %v6777
        %v6779 = vpop.f32.mrf.mxu0
        %v6780 = vadd.f32 %v6691, %v6779
        %6781 = vmatmul.bf16.gmra.mxu0 %v6587
        %v6782 = vpop.f32.mrf.mxu0
        %v6783 = vadd.f32 %v6694, %v6782
        %v6784 = vpop.f32.mrf.mxu0
        %v6785 = vadd.f32 %v6696, %v6784
        %6786 = vmatmul.bf16.gmra.mxu0 %v6589
        %v6787 = vpop.f32.mrf.mxu0
        %v6788 = vadd.f32 %v6699, %v6787
        %v6789 = vpop.f32.mrf.mxu0
        %v6790 = vadd.f32 %v6701, %v6789
        %6791 = vmatmul.bf16.gmra.mxu0 %v6591
        %v6792 = vpop.f32.mrf.mxu0
        %v6793 = vadd.f32 %v6704, %v6792
        %v6794 = vpop.f32.mrf.mxu0
        %v6795 = vadd.f32 %v6706, %v6794
        %6796 = vmatmul.bf16.gmra.mxu0 %v6593
        %v6797 = vpop.f32.mrf.mxu0
        %v6798 = vadd.f32 %v6709, %v6797
        %v6799 = vpop.f32.mrf.mxu0
        %v6800 = vadd.f32 %v6711, %v6799
        %6801 = vmatmul.bf16.gmra.mxu0 %v6595
        %v6802 = vpop.f32.mrf.mxu0
        %v6803 = vadd.f32 %v6714, %v6802
        %v6804 = vpop.f32.mrf.mxu0
        %v6805 = vadd.f32 %v6716, %v6804
        %6806 = vmatmul.bf16.gmra.mxu0 %v6597
        %v6807 = vpop.f32.mrf.mxu0
        %v6808 = vadd.f32 %v6719, %v6807
        %v6809 = vpop.f32.mrf.mxu0
        %v6810 = vadd.f32 %v6721, %v6809
        %6811 = vmatmul.bf16.gmra.mxu0 %v6599
        %v6812 = vpop.f32.mrf.mxu0
        %v6813 = vadd.f32 %v6724, %v6812
        %v6814 = vpop.f32.mrf.mxu0
        %v6815 = vadd.f32 %v6726, %v6814
        %6816 = vmatmul.bf16.gmra.mxu0 %v6601
        %v6817 = vpop.f32.mrf.mxu0
        %v6818 = vadd.f32 %v6729, %v6817
        %v6819 = vpop.f32.mrf.mxu0
        %v6820 = vadd.f32 %v6731, %v6819
        %6821 = vmatmul.bf16.gmra.mxu0 %v6603
        %v6822 = vpop.f32.mrf.mxu0
        %v6823 = vadd.f32 %v6734, %v6822
        %v6824 = vpop.f32.mrf.mxu0
        %v6825 = vadd.f32 %v6736, %v6824
        %6826 = vmatmul.bf16.gmra.mxu0 %v6605
        %v6827 = vpop.f32.mrf.mxu0
        %v6828 = vadd.f32 %v6739, %v6827
        %v6829 = vpop.f32.mrf.mxu0
        %v6830 = vadd.f32 %v6741, %v6829
        %6831 = vdwg.mxu0
        %6833 = vset.pattern.permute.xlu0 0
        %6834 = vperm.xlu0 %6833, %v5902
        %v6835 = vpop.permute.xlu0 %6834
        %6838 = vset.pattern.permute.xlu0 0
        %6839 = vperm.xlu0 %6838, %v5904
        %v6840 = vpop.permute.xlu0 %6839
        %6843 = vset.pattern.permute.xlu0 0
        %6844 = vperm.xlu0 %6843, %v5906
        %v6845 = vpop.permute.xlu0 %6844
        %6848 = vset.pattern.permute.xlu0 0
        %6849 = vperm.xlu0 %6848, %v5908
        %v6850 = vpop.permute.xlu0 %6849
        %6853 = vset.pattern.permute.xlu0 0
        %6854 = vperm.xlu0 %6853, %v5910
        %v6855 = vpop.permute.xlu0 %6854
        %6858 = vset.pattern.permute.xlu0 0
        %6859 = vperm.xlu0 %6858, %v5912
        %v6860 = vpop.permute.xlu0 %6859
        %6863 = vset.pattern.permute.xlu0 0
        %6864 = vperm.xlu0 %6863, %v5914
        %v6865 = vpop.permute.xlu0 %6864
        %6868 = vset.pattern.permute.xlu0 0
        %6869 = vperm.xlu0 %6868, %v5916
        %v6870 = vpop.permute.xlu0 %6869
        %6873 = vset.pattern.permute.xlu0 0
        %6874 = vperm.xlu0 %6873, %v5918
        %v6875 = vpop.permute.xlu0 %6874
        %6878 = vset.pattern.permute.xlu0 0
        %6879 = vperm.xlu0 %6878, %v5920
        %v6880 = vpop.permute.xlu0 %6879
        %6883 = vset.pattern.permute.xlu0 0
        %6884 = vperm.xlu0 %6883, %v5922
        %v6885 = vpop.permute.xlu0 %6884
        %6888 = vset.pattern.permute.xlu0 0
        %6889 = vperm.xlu0 %6888, %v5924
        %v6890 = vpop.permute.xlu0 %6889
        %6893 = vset.pattern.permute.xlu0 0
        %6894 = vperm.xlu0 %6893, %v5926
        %v6895 = vpop.permute.xlu0 %6894
        %6898 = vset.pattern.permute.xlu0 0
        %6899 = vperm.xlu0 %6898, %v5928
        %v6900 = vpop.permute.xlu0 %6899
        %6903 = vset.pattern.permute.xlu0 0
        %6904 = vperm.xlu0 %6903, %v5930
        %v6905 = vpop.permute.xlu0 %6904
        %6908 = vset.pattern.permute.xlu0 0
        %6909 = vperm.xlu0 %6908, %v5932
        %v6910 = vpop.permute.xlu0 %6909
        %6913 = vset.pattern.permute.xlu0 0
        %6914 = vperm.xlu0 %6913, %v5934
        %v6915 = vpop.permute.xlu0 %6914
        %6918 = vset.pattern.permute.xlu0 0
        %6919 = vperm.xlu0 %6918, %v5936
        %v6920 = vpop.permute.xlu0 %6919
        %6923 = vset.pattern.permute.xlu0 0
        %6924 = vperm.xlu0 %6923, %v5938
        %v6925 = vpop.permute.xlu0 %6924
        %6928 = vset.pattern.permute.xlu0 0
        %6929 = vperm.xlu0 %6928, %v5940
        %v6930 = vpop.permute.xlu0 %6929
        %6933 = vset.pattern.permute.xlu0 0
        %6934 = vperm.xlu0 %6933, %v5942
        %v6935 = vpop.permute.xlu0 %6934
        %6938 = vset.pattern.permute.xlu0 0
        %6939 = vperm.xlu0 %6938, %v5944
        %v6940 = vpop.permute.xlu0 %6939
        %6943 = vset.pattern.permute.xlu0 0
        %6944 = vperm.xlu0 %6943, %v5946
        %v6945 = vpop.permute.xlu0 %6944
        %6948 = vset.pattern.permute.xlu0 0
        %6949 = vperm.xlu0 %6948, %v5948
        %v6950 = vpop.permute.xlu0 %6949
        %6953 = vset.pattern.permute.xlu0 0
        %6954 = vperm.xlu0 %6953, %v5950
        %v6955 = vpop.permute.xlu0 %6954
        %6958 = vset.pattern.permute.xlu0 0
        %6959 = vperm.xlu0 %6958, %v5952
        %v6960 = vpop.permute.xlu0 %6959
        %6963 = vset.pattern.permute.xlu0 0
        %6964 = vperm.xlu0 %6963, %v5954
        %v6965 = vpop.permute.xlu0 %6964
        %6968 = vset.pattern.permute.xlu0 0
        %6969 = vperm.xlu0 %6968, %v5956
        %v6970 = vpop.permute.xlu0 %6969
        %6973 = vset.pattern.permute.xlu0 0
        %6974 = vperm.xlu0 %6973, %v5958
        %v6975 = vpop.permute.xlu0 %6974
        %6978 = vset.pattern.permute.xlu0 0
        %6979 = vperm.xlu0 %6978, %v5960
        %v6980 = vpop.permute.xlu0 %6979
        %6983 = vset.pattern.permute.xlu0 0
        %6984 = vperm.xlu0 %6983, %v5962
        %v6985 = vpop.permute.xlu0 %6984
        %6988 = vset.pattern.permute.xlu0 0
        %6989 = vperm.xlu0 %6988, %v5964
        %v6990 = vpop.permute.xlu0 %6989
        %s6992 = scalar_lea.vmem [#allocation2], 384
        %v6993 = vld [vmem:[%s6992] sm:$0xf]
        %v6994 = vld [vmem:[%s6992 + $0x4] sm:$0xf]
        %v6995 = vld [vmem:[%s6992 + $0x8] sm:$0xf]
        %v6996 = vld [vmem:[%s6992 + $0xc] sm:$0xf]
        %v6997 = vld [vmem:[%s6992 + $0x10] sm:$0xf]
        %v6998 = vld [vmem:[%s6992 + $0x14] sm:$0xf]
        %v6999 = vld [vmem:[%s6992 + $0x18] sm:$0xf]
        %v7000 = vld [vmem:[%s6992 + $0x1c] sm:$0xf]
        %v7001 = vld [vmem:[%s6992 + $0x20] sm:$0xf]
        %v7002 = vld [vmem:[%s6992 + $0x24] sm:$0xf]
        %v7003 = vld [vmem:[%s6992 + $0x28] sm:$0xf]
        %v7004 = vld [vmem:[%s6992 + $0x2c] sm:$0xf]
        %v7005 = vld [vmem:[%s6992 + $0x30] sm:$0xf]
        %v7006 = vld [vmem:[%s6992 + $0x34] sm:$0xf]
        %v7007 = vld [vmem:[%s6992 + $0x38] sm:$0xf]
        %v7008 = vld [vmem:[%s6992 + $0x3c] sm:$0xf]
        %v7009 = vld [vmem:[%s6992 + $0x40] sm:$0xf]
        %v7010 = vld [vmem:[%s6992 + $0x44] sm:$0xf]
        %v7011 = vld [vmem:[%s6992 + $0x48] sm:$0xf]
        %v7012 = vld [vmem:[%s6992 + $0x4c] sm:$0xf]
        %v7013 = vld [vmem:[%s6992 + $0x50] sm:$0xf]
        %v7014 = vld [vmem:[%s6992 + $0x54] sm:$0xf]
        %v7015 = vld [vmem:[%s6992 + $0x58] sm:$0xf]
        %v7016 = vld [vmem:[%s6992 + $0x5c] sm:$0xf]
        %v7017 = vld [vmem:[%s6992 + $0x60] sm:$0xf]
        %v7018 = vld [vmem:[%s6992 + $0x64] sm:$0xf]
        %v7019 = vld [vmem:[%s6992 + $0x68] sm:$0xf]
        %v7020 = vld [vmem:[%s6992 + $0x6c] sm:$0xf]
        %v7021 = vld [vmem:[%s6992 + $0x70] sm:$0xf]
        %v7022 = vld [vmem:[%s6992 + $0x74] sm:$0xf]
        %v7023 = vld [vmem:[%s6992 + $0x78] sm:$0xf]
        %v7024 = vld [vmem:[%s6992 + $0x7c] sm:$0xf]
        %s7025 = scalar_lea.vmem %s270, 768 [#allocation6]
        %v7026 = vld [vmem:[%s7025] sm:$0xff]
        %v7027 = vld [vmem:[%s7025 + $0x8] sm:$0xff]
        %v7028 = vld [vmem:[%s7025 + $0x10] sm:$0xff]
        %v7029 = vld [vmem:[%s7025 + $0x18] sm:$0xff]
        %v7030 = vld [vmem:[%s7025 + $0x20] sm:$0xff]
        %v7031 = vld [vmem:[%s7025 + $0x28] sm:$0xff]
        %v7032 = vld [vmem:[%s7025 + $0x30] sm:$0xff]
        %v7033 = vld [vmem:[%s7025 + $0x38] sm:$0xff]
        %v7034 = vld [vmem:[%s7025 + $0x40] sm:$0xff]
        %v7035 = vld [vmem:[%s7025 + $0x48] sm:$0xff]
        %v7036 = vld [vmem:[%s7025 + $0x50] sm:$0xff]
        %v7037 = vld [vmem:[%s7025 + $0x58] sm:$0xff]
        %v7038 = vld [vmem:[%s7025 + $0x60] sm:$0xff]
        %v7039 = vld [vmem:[%s7025 + $0x68] sm:$0xff]
        %v7040 = vld [vmem:[%s7025 + $0x70] sm:$0xff]
        %v7041 = vld [vmem:[%s7025 + $0x78] sm:$0xff]
        %v7042 = vld [vmem:[%s7025 + $0x80] sm:$0xff]
        %v7043 = vld [vmem:[%s7025 + $0x88] sm:$0xff]
        %v7044 = vld [vmem:[%s7025 + $0x90] sm:$0xff]
        %v7045 = vld [vmem:[%s7025 + $0x98] sm:$0xff]
        %v7046 = vld [vmem:[%s7025 + $0xa0] sm:$0xff]
        %v7047 = vld [vmem:[%s7025 + $0xa8] sm:$0xff]
        %v7048 = vld [vmem:[%s7025 + $0xb0] sm:$0xff]
        %v7049 = vld [vmem:[%s7025 + $0xb8] sm:$0xff]
        %v7050 = vld [vmem:[%s7025 + $0xc0] sm:$0xff]
        %v7051 = vld [vmem:[%s7025 + $0xc8] sm:$0xff]
        %v7052 = vld [vmem:[%s7025 + $0xd0] sm:$0xff]
        %v7053 = vld [vmem:[%s7025 + $0xd8] sm:$0xff]
        %v7054 = vld [vmem:[%s7025 + $0xe0] sm:$0xff]
        %v7055 = vld [vmem:[%s7025 + $0xe8] sm:$0xff]
        %v7056 = vld [vmem:[%s7025 + $0xf0] sm:$0xff]
        %v7057 = vld [vmem:[%s7025 + $0xf8] sm:$0xff]
        %v7058 = vunpack.c.l.bf16 %v7026
        %v7059 = vunpack.c.h.bf16 %v7026
        %v7060 = vunpack.c.l.bf16 %v7027
        %v7061 = vunpack.c.h.bf16 %v7027
        %v7062 = vunpack.c.l.bf16 %v7028
        %v7063 = vunpack.c.h.bf16 %v7028
        %v7064 = vunpack.c.l.bf16 %v7029
        %v7065 = vunpack.c.h.bf16 %v7029
        %v7066 = vunpack.c.l.bf16 %v7030
        %v7067 = vunpack.c.h.bf16 %v7030
        %v7068 = vunpack.c.l.bf16 %v7031
        %v7069 = vunpack.c.h.bf16 %v7031
        %v7070 = vunpack.c.l.bf16 %v7032
        %v7071 = vunpack.c.h.bf16 %v7032
        %v7072 = vunpack.c.l.bf16 %v7033
        %v7073 = vunpack.c.h.bf16 %v7033
        %v7074 = vunpack.c.l.bf16 %v7034
        %v7075 = vunpack.c.h.bf16 %v7034
        %v7076 = vunpack.c.l.bf16 %v7035
        %v7077 = vunpack.c.h.bf16 %v7035
        %v7078 = vunpack.c.l.bf16 %v7036
        %v7079 = vunpack.c.h.bf16 %v7036
        %v7080 = vunpack.c.l.bf16 %v7037
        %v7081 = vunpack.c.h.bf16 %v7037
        %v7082 = vunpack.c.l.bf16 %v7038
        %v7083 = vunpack.c.h.bf16 %v7038
        %v7084 = vunpack.c.l.bf16 %v7039
        %v7085 = vunpack.c.h.bf16 %v7039
        %v7086 = vunpack.c.l.bf16 %v7040
        %v7087 = vunpack.c.h.bf16 %v7040
        %v7088 = vunpack.c.l.bf16 %v7041
        %v7089 = vunpack.c.h.bf16 %v7041
        %v7090 = vunpack.c.l.bf16 %v7042
        %v7091 = vunpack.c.h.bf16 %v7042
        %v7092 = vunpack.c.l.bf16 %v7043
        %v7093 = vunpack.c.h.bf16 %v7043
        %v7094 = vunpack.c.l.bf16 %v7044
        %v7095 = vunpack.c.h.bf16 %v7044
        %v7096 = vunpack.c.l.bf16 %v7045
        %v7097 = vunpack.c.h.bf16 %v7045
        %v7098 = vunpack.c.l.bf16 %v7046
        %v7099 = vunpack.c.h.bf16 %v7046
        %v7100 = vunpack.c.l.bf16 %v7047
        %v7101 = vunpack.c.h.bf16 %v7047
        %v7102 = vunpack.c.l.bf16 %v7048
        %v7103 = vunpack.c.h.bf16 %v7048
        %v7104 = vunpack.c.l.bf16 %v7049
        %v7105 = vunpack.c.h.bf16 %v7049
        %v7106 = vunpack.c.l.bf16 %v7050
        %v7107 = vunpack.c.h.bf16 %v7050
        %v7108 = vunpack.c.l.bf16 %v7051
        %v7109 = vunpack.c.h.bf16 %v7051
        %v7110 = vunpack.c.l.bf16 %v7052
        %v7111 = vunpack.c.h.bf16 %v7052
        %v7112 = vunpack.c.l.bf16 %v7053
        %v7113 = vunpack.c.h.bf16 %v7053
        %v7114 = vunpack.c.l.bf16 %v7054
        %v7115 = vunpack.c.h.bf16 %v7054
        %v7116 = vunpack.c.l.bf16 %v7055
        %v7117 = vunpack.c.h.bf16 %v7055
        %v7118 = vunpack.c.l.bf16 %v7056
        %v7119 = vunpack.c.h.bf16 %v7056
        %v7120 = vunpack.c.l.bf16 %v7057
        %v7121 = vunpack.c.h.bf16 %v7057
        %v7154 = vunpack.c.l.b16 %v6993
        %v7155 = vunpack.c.l.b16 %v6994
        %v7156 = vunpack.c.l.b16 %v6995
        %v7157 = vunpack.c.l.b16 %v6996
        %v7158 = vunpack.c.l.b16 %v6997
        %v7159 = vunpack.c.l.b16 %v6998
        %v7160 = vunpack.c.l.b16 %v6999
        %v7161 = vunpack.c.l.b16 %v7000
        %v7162 = vunpack.c.l.b16 %v7001
        %v7163 = vunpack.c.l.b16 %v7002
        %v7164 = vunpack.c.l.b16 %v7003
        %v7165 = vunpack.c.l.b16 %v7004
        %v7166 = vunpack.c.l.b16 %v7005
        %v7167 = vunpack.c.l.b16 %v7006
        %v7168 = vunpack.c.l.b16 %v7007
        %v7169 = vunpack.c.l.b16 %v7008
        %v7170 = vunpack.c.l.b16 %v7009
        %v7171 = vunpack.c.l.b16 %v7010
        %v7172 = vunpack.c.l.b16 %v7011
        %v7173 = vunpack.c.l.b16 %v7012
        %v7174 = vunpack.c.l.b16 %v7013
        %v7175 = vunpack.c.l.b16 %v7014
        %v7176 = vunpack.c.l.b16 %v7015
        %v7177 = vunpack.c.l.b16 %v7016
        %v7178 = vunpack.c.l.b16 %v7017
        %v7179 = vunpack.c.l.b16 %v7018
        %v7180 = vunpack.c.l.b16 %v7019
        %v7181 = vunpack.c.l.b16 %v7020
        %v7182 = vunpack.c.l.b16 %v7021
        %v7183 = vunpack.c.l.b16 %v7022
        %v7184 = vunpack.c.l.b16 %v7023
        %v7185 = vunpack.c.l.b16 %v7024
        %v7186 = vpack.c.b16 %v7155, %v7154
        %v7187 = vpack.c.b16 %v7157, %v7156
        %v7188 = vpack.c.b16 %v7159, %v7158
        %v7189 = vpack.c.b16 %v7161, %v7160
        %v7190 = vpack.c.b16 %v7163, %v7162
        %v7191 = vpack.c.b16 %v7165, %v7164
        %v7192 = vpack.c.b16 %v7167, %v7166
        %v7193 = vpack.c.b16 %v7169, %v7168
        %v7194 = vpack.c.b16 %v7171, %v7170
        %v7195 = vpack.c.b16 %v7173, %v7172
        %v7196 = vpack.c.b16 %v7175, %v7174
        %v7197 = vpack.c.b16 %v7177, %v7176
        %v7198 = vpack.c.b16 %v7179, %v7178
        %v7199 = vpack.c.b16 %v7181, %v7180
        %v7200 = vpack.c.b16 %v7183, %v7182
        %v7201 = vpack.c.b16 %v7185, %v7184
        %7202 = vrot.lane.b32.xlu0 %v1578, 32
        %v7203 = vpop.permute.xlu0 %7202
        %7204 = vrot.lane.b32.xlu0 %v1579, 32
        %v7205 = vpop.permute.xlu0 %7204
        %7206 = vrot.lane.b32.xlu0 %v1580, 32
        %v7207 = vpop.permute.xlu0 %7206
        %7208 = vrot.lane.b32.xlu0 %v1581, 32
        %v7209 = vpop.permute.xlu0 %7208
        %7210 = vrot.lane.b32.xlu0 %v1582, 32
        %v7211 = vpop.permute.xlu0 %7210
        %7212 = vrot.lane.b32.xlu0 %v1583, 32
        %v7213 = vpop.permute.xlu0 %7212
        %7214 = vrot.lane.b32.xlu0 %v1584, 32
        %v7215 = vpop.permute.xlu0 %7214
        %7216 = vrot.lane.b32.xlu0 %v1585, 32
        %v7217 = vpop.permute.xlu0 %7216
        %7218 = vrot.lane.b32.xlu0 %v1586, 32
        %v7219 = vpop.permute.xlu0 %7218
        %7220 = vrot.lane.b32.xlu0 %v1587, 32
        %v7221 = vpop.permute.xlu0 %7220
        %7222 = vrot.lane.b32.xlu0 %v1588, 32
        %v7223 = vpop.permute.xlu0 %7222
        %7224 = vrot.lane.b32.xlu0 %v1589, 32
        %v7225 = vpop.permute.xlu0 %7224
        %7226 = vrot.lane.b32.xlu0 %v1590, 32
        %v7227 = vpop.permute.xlu0 %7226
        %7228 = vrot.lane.b32.xlu0 %v1591, 32
        %v7229 = vpop.permute.xlu0 %7228
        %7230 = vrot.lane.b32.xlu0 %v1592, 32
        %v7231 = vpop.permute.xlu0 %7230
        %7232 = vrot.lane.b32.xlu0 %v1593, 32
        %v7233 = vpop.permute.xlu0 %7232
        %v7235 = vsel %vm1594, %v7186, 0
        %v7238 = vsel %vm1594, %v7187, 0
        %v7241 = vsel %vm1594, %v7188, 0
        %v7244 = vsel %vm1594, %v7189, 0
        %v7247 = vsel %vm1594, %v7190, 0
        %v7250 = vsel %vm1594, %v7191, 0
        %v7253 = vsel %vm1594, %v7192, 0
        %v7256 = vsel %vm1594, %v7193, 0
        %v7259 = vsel %vm1594, %v7194, 0
        %v7262 = vsel %vm1594, %v7195, 0
        %v7265 = vsel %vm1594, %v7196, 0
        %v7268 = vsel %vm1594, %v7197, 0
        %v7271 = vsel %vm1594, %v7198, 0
        %v7274 = vsel %vm1594, %v7199, 0
        %v7277 = vsel %vm1594, %v7200, 0
        %v7280 = vsel %vm1594, %v7201, 0
        %v7283 = vsel %vm1594, %v7203, 0
        %v7286 = vsel %vm1594, %v7205, 0
        %v7289 = vsel %vm1594, %v7207, 0
        %v7292 = vsel %vm1594, %v7209, 0
        %v7295 = vsel %vm1594, %v7211, 0
        %v7298 = vsel %vm1594, %v7213, 0
        %v7301 = vsel %vm1594, %v7215, 0
        %v7304 = vsel %vm1594, %v7217, 0
        %v7307 = vsel %vm1594, %v7219, 0
        %v7310 = vsel %vm1594, %v7221, 0
        %v7313 = vsel %vm1594, %v7223, 0
        %v7316 = vsel %vm1594, %v7225, 0
        %v7319 = vsel %vm1594, %v7227, 0
        %v7322 = vsel %vm1594, %v7229, 0
        %v7325 = vsel %vm1594, %v7231, 0
        %v7328 = vsel %vm1594, %v7233, 0
        %7330 = vmatpush.bf16.xpose.msra.mxu0 %v7304
        %7331 = vmatpush.bf16.xpose.msra.mxu0 %v7301
        %7332 = vmatpush.bf16.xpose.msra.mxu0 %v7298
        %7333 = vmatpush.bf16.xpose.msra.mxu0 %v7295
        %7334 = vmatpush.bf16.xpose.msra.mxu0 %v7292
        %7335 = vmatpush.bf16.xpose.msra.mxu0 %v7289
        %7336 = vmatpush.bf16.xpose.msra.mxu0 %v7286
        %7337 = vmatpush.bf16.xpose.msra.mxu0 %v7283
        %7338 = vmatmul.bf16.gmra.mxu0 %v7235
        %v7339 = vpop.f32.mrf.mxu0
        %v7340 = vadd.f32 %v7058, %v7339
        %v7341 = vpop.f32.mrf.mxu0
        %v7342 = vadd.f32 %v7060, %v7341
        %7343 = vmatmul.bf16.gmra.mxu0 %v7238
        %v7344 = vpop.f32.mrf.mxu0
        %v7345 = vadd.f32 %v7062, %v7344
        %v7346 = vpop.f32.mrf.mxu0
        %v7347 = vadd.f32 %v7064, %v7346
        %7348 = vmatmul.bf16.gmra.mxu0 %v7241
        %v7349 = vpop.f32.mrf.mxu0
        %v7350 = vadd.f32 %v7066, %v7349
        %v7351 = vpop.f32.mrf.mxu0
        %v7352 = vadd.f32 %v7068, %v7351
        %7353 = vmatmul.bf16.gmra.mxu0 %v7244
        %v7354 = vpop.f32.mrf.mxu0
        %v7355 = vadd.f32 %v7070, %v7354
        %v7356 = vpop.f32.mrf.mxu0
        %v7357 = vadd.f32 %v7072, %v7356
        %7358 = vmatmul.bf16.gmra.mxu0 %v7247
        %v7359 = vpop.f32.mrf.mxu0
        %v7360 = vadd.f32 %v7074, %v7359
        %v7361 = vpop.f32.mrf.mxu0
        %v7362 = vadd.f32 %v7076, %v7361
        %7363 = vmatmul.bf16.gmra.mxu0 %v7250
        %v7364 = vpop.f32.mrf.mxu0
        %v7365 = vadd.f32 %v7078, %v7364
        %v7366 = vpop.f32.mrf.mxu0
        %v7367 = vadd.f32 %v7080, %v7366
        %7368 = vmatmul.bf16.gmra.mxu0 %v7253
        %v7369 = vpop.f32.mrf.mxu0
        %v7370 = vadd.f32 %v7082, %v7369
        %v7371 = vpop.f32.mrf.mxu0
        %v7372 = vadd.f32 %v7084, %v7371
        %7373 = vmatmul.bf16.gmra.mxu0 %v7256
        %v7374 = vpop.f32.mrf.mxu0
        %v7375 = vadd.f32 %v7086, %v7374
        %v7376 = vpop.f32.mrf.mxu0
        %v7377 = vadd.f32 %v7088, %v7376
        %7378 = vmatmul.bf16.gmra.mxu0 %v7259
        %v7379 = vpop.f32.mrf.mxu0
        %v7380 = vadd.f32 %v7090, %v7379
        %v7381 = vpop.f32.mrf.mxu0
        %v7382 = vadd.f32 %v7092, %v7381
        %7383 = vmatmul.bf16.gmra.mxu0 %v7262
        %v7384 = vpop.f32.mrf.mxu0
        %v7385 = vadd.f32 %v7094, %v7384
        %v7386 = vpop.f32.mrf.mxu0
        %v7387 = vadd.f32 %v7096, %v7386
        %7388 = vmatmul.bf16.gmra.mxu0 %v7265
        %v7389 = vpop.f32.mrf.mxu0
        %v7390 = vadd.f32 %v7098, %v7389
        %v7391 = vpop.f32.mrf.mxu0
        %v7392 = vadd.f32 %v7100, %v7391
        %7393 = vmatmul.bf16.gmra.mxu0 %v7268
        %v7394 = vpop.f32.mrf.mxu0
        %v7395 = vadd.f32 %v7102, %v7394
        %v7396 = vpop.f32.mrf.mxu0
        %v7397 = vadd.f32 %v7104, %v7396
        %7398 = vmatmul.bf16.gmra.mxu0 %v7271
        %v7399 = vpop.f32.mrf.mxu0
        %v7400 = vadd.f32 %v7106, %v7399
        %v7401 = vpop.f32.mrf.mxu0
        %v7402 = vadd.f32 %v7108, %v7401
        %7403 = vmatmul.bf16.gmra.mxu0 %v7274
        %v7404 = vpop.f32.mrf.mxu0
        %v7405 = vadd.f32 %v7110, %v7404
        %v7406 = vpop.f32.mrf.mxu0
        %v7407 = vadd.f32 %v7112, %v7406
        %7408 = vmatmul.bf16.gmra.mxu0 %v7277
        %v7409 = vpop.f32.mrf.mxu0
        %v7410 = vadd.f32 %v7114, %v7409
        %v7411 = vpop.f32.mrf.mxu0
        %v7412 = vadd.f32 %v7116, %v7411
        %7413 = vmatmul.bf16.gmra.mxu0 %v7280
        %v7414 = vpop.f32.mrf.mxu0
        %v7415 = vadd.f32 %v7118, %v7414
        %v7416 = vpop.f32.mrf.mxu0
        %v7417 = vadd.f32 %v7120, %v7416
        %7418 = vdwg.mxu0
        %7419 = vmatpush.bf16.xpose.msra.mxu0 %v7328
        %7420 = vmatpush.bf16.xpose.msra.mxu0 %v7325
        %7421 = vmatpush.bf16.xpose.msra.mxu0 %v7322
        %7422 = vmatpush.bf16.xpose.msra.mxu0 %v7319
        %7423 = vmatpush.bf16.xpose.msra.mxu0 %v7316
        %7424 = vmatpush.bf16.xpose.msra.mxu0 %v7313
        %7425 = vmatpush.bf16.xpose.msra.mxu0 %v7310
        %7426 = vmatpush.bf16.xpose.msra.mxu0 %v7307
        %7427 = vmatmul.bf16.gmra.mxu0 %v7235
        %v7428 = vpop.f32.mrf.mxu0
        %v7429 = vadd.f32 %v7059, %v7428
        %v7430 = vpop.f32.mrf.mxu0
        %v7431 = vadd.f32 %v7061, %v7430
        %7432 = vmatmul.bf16.gmra.mxu0 %v7238
        %v7433 = vpop.f32.mrf.mxu0
        %v7434 = vadd.f32 %v7063, %v7433
        %v7435 = vpop.f32.mrf.mxu0
        %v7436 = vadd.f32 %v7065, %v7435
        %7437 = vmatmul.bf16.gmra.mxu0 %v7241
        %v7438 = vpop.f32.mrf.mxu0
        %v7439 = vadd.f32 %v7067, %v7438
        %v7440 = vpop.f32.mrf.mxu0
        %v7441 = vadd.f32 %v7069, %v7440
        %7442 = vmatmul.bf16.gmra.mxu0 %v7244
        %v7443 = vpop.f32.mrf.mxu0
        %v7444 = vadd.f32 %v7071, %v7443
        %v7445 = vpop.f32.mrf.mxu0
        %v7446 = vadd.f32 %v7073, %v7445
        %7447 = vmatmul.bf16.gmra.mxu0 %v7247
        %v7448 = vpop.f32.mrf.mxu0
        %v7449 = vadd.f32 %v7075, %v7448
        %v7450 = vpop.f32.mrf.mxu0
        %v7451 = vadd.f32 %v7077, %v7450
        %7452 = vmatmul.bf16.gmra.mxu0 %v7250
        %v7453 = vpop.f32.mrf.mxu0
        %v7454 = vadd.f32 %v7079, %v7453
        %v7455 = vpop.f32.mrf.mxu0
        %v7456 = vadd.f32 %v7081, %v7455
        %7457 = vmatmul.bf16.gmra.mxu0 %v7253
        %v7458 = vpop.f32.mrf.mxu0
        %v7459 = vadd.f32 %v7083, %v7458
        %v7460 = vpop.f32.mrf.mxu0
        %v7461 = vadd.f32 %v7085, %v7460
        %7462 = vmatmul.bf16.gmra.mxu0 %v7256
        %v7463 = vpop.f32.mrf.mxu0
        %v7464 = vadd.f32 %v7087, %v7463
        %v7465 = vpop.f32.mrf.mxu0
        %v7466 = vadd.f32 %v7089, %v7465
        %7467 = vmatmul.bf16.gmra.mxu0 %v7259
        %v7468 = vpop.f32.mrf.mxu0
        %v7469 = vadd.f32 %v7091, %v7468
        %v7470 = vpop.f32.mrf.mxu0
        %v7471 = vadd.f32 %v7093, %v7470
        %7472 = vmatmul.bf16.gmra.mxu0 %v7262
        %v7473 = vpop.f32.mrf.mxu0
        %v7474 = vadd.f32 %v7095, %v7473
        %v7475 = vpop.f32.mrf.mxu0
        %v7476 = vadd.f32 %v7097, %v7475
        %7477 = vmatmul.bf16.gmra.mxu0 %v7265
        %v7478 = vpop.f32.mrf.mxu0
        %v7479 = vadd.f32 %v7099, %v7478
        %v7480 = vpop.f32.mrf.mxu0
        %v7481 = vadd.f32 %v7101, %v7480
        %7482 = vmatmul.bf16.gmra.mxu0 %v7268
        %v7483 = vpop.f32.mrf.mxu0
        %v7484 = vadd.f32 %v7103, %v7483
        %v7485 = vpop.f32.mrf.mxu0
        %v7486 = vadd.f32 %v7105, %v7485
        %7487 = vmatmul.bf16.gmra.mxu0 %v7271
        %v7488 = vpop.f32.mrf.mxu0
        %v7489 = vadd.f32 %v7107, %v7488
        %v7490 = vpop.f32.mrf.mxu0
        %v7491 = vadd.f32 %v7109, %v7490
        %7492 = vmatmul.bf16.gmra.mxu0 %v7274
        %v7493 = vpop.f32.mrf.mxu0
        %v7494 = vadd.f32 %v7111, %v7493
        %v7495 = vpop.f32.mrf.mxu0
        %v7496 = vadd.f32 %v7113, %v7495
        %7497 = vmatmul.bf16.gmra.mxu0 %v7277
        %v7498 = vpop.f32.mrf.mxu0
        %v7499 = vadd.f32 %v7115, %v7498
        %v7500 = vpop.f32.mrf.mxu0
        %v7501 = vadd.f32 %v7117, %v7500
        %7502 = vmatmul.bf16.gmra.mxu0 %v7280
        %v7503 = vpop.f32.mrf.mxu0
        %v7504 = vadd.f32 %v7119, %v7503
        %v7505 = vpop.f32.mrf.mxu0
        %v7506 = vadd.f32 %v7121, %v7505
        %7507 = vdwg.mxu0
        %s7508 = scalar_lea.vmem [#allocation3], 768
        %v7509 = vld [vmem:[%s7508] sm:$0xff]
        %v7510 = vld [vmem:[%s7508 + $0x8] sm:$0xff]
        %v7511 = vld [vmem:[%s7508 + $0x10] sm:$0xff]
        %v7512 = vld [vmem:[%s7508 + $0x18] sm:$0xff]
        %v7513 = vld [vmem:[%s7508 + $0x20] sm:$0xff]
        %v7514 = vld [vmem:[%s7508 + $0x28] sm:$0xff]
        %v7515 = vld [vmem:[%s7508 + $0x30] sm:$0xff]
        %v7516 = vld [vmem:[%s7508 + $0x38] sm:$0xff]
        %v7517 = vld [vmem:[%s7508 + $0x40] sm:$0xff]
        %v7518 = vld [vmem:[%s7508 + $0x48] sm:$0xff]
        %v7519 = vld [vmem:[%s7508 + $0x50] sm:$0xff]
        %v7520 = vld [vmem:[%s7508 + $0x58] sm:$0xff]
        %v7521 = vld [vmem:[%s7508 + $0x60] sm:$0xff]
        %v7522 = vld [vmem:[%s7508 + $0x68] sm:$0xff]
        %v7523 = vld [vmem:[%s7508 + $0x70] sm:$0xff]
        %v7524 = vld [vmem:[%s7508 + $0x78] sm:$0xff]
        %v7525 = vld [vmem:[%s7508 + $0x80] sm:$0xff]
        %v7526 = vld [vmem:[%s7508 + $0x88] sm:$0xff]
        %v7527 = vld [vmem:[%s7508 + $0x90] sm:$0xff]
        %v7528 = vld [vmem:[%s7508 + $0x98] sm:$0xff]
        %v7529 = vld [vmem:[%s7508 + $0xa0] sm:$0xff]
        %v7530 = vld [vmem:[%s7508 + $0xa8] sm:$0xff]
        %v7531 = vld [vmem:[%s7508 + $0xb0] sm:$0xff]
        %v7532 = vld [vmem:[%s7508 + $0xb8] sm:$0xff]
        %v7533 = vld [vmem:[%s7508 + $0xc0] sm:$0xff]
        %v7534 = vld [vmem:[%s7508 + $0xc8] sm:$0xff]
        %v7535 = vld [vmem:[%s7508 + $0xd0] sm:$0xff]
        %v7536 = vld [vmem:[%s7508 + $0xd8] sm:$0xff]
        %v7537 = vld [vmem:[%s7508 + $0xe0] sm:$0xff]
        %v7538 = vld [vmem:[%s7508 + $0xe8] sm:$0xff]
        %v7539 = vld [vmem:[%s7508 + $0xf0] sm:$0xff]
        %v7540 = vld [vmem:[%s7508 + $0xf8] sm:$0xff]
        %v7541 = vmax.f32 %v7340, %v7429
        %7542 = vmax.xlane.f32.xlu0 %v7541
        %v7543 = vpop.xlane.xlu0 %7542
        %v7544 = vmax.f32 %v7342, %v7431
        %7545 = vmax.xlane.f32.xlu0 %v7544
        %v7546 = vpop.xlane.xlu0 %7545
        %v7547 = vmax.f32 %v7345, %v7434
        %7548 = vmax.xlane.f32.xlu0 %v7547
        %v7549 = vpop.xlane.xlu0 %7548
        %v7550 = vmax.f32 %v7347, %v7436
        %7551 = vmax.xlane.f32.xlu0 %v7550
        %v7552 = vpop.xlane.xlu0 %7551
        %v7553 = vmax.f32 %v7350, %v7439
        %7554 = vmax.xlane.f32.xlu0 %v7553
        %v7555 = vpop.xlane.xlu0 %7554
        %v7556 = vmax.f32 %v7352, %v7441
        %7557 = vmax.xlane.f32.xlu0 %v7556
        %v7558 = vpop.xlane.xlu0 %7557
        %v7559 = vmax.f32 %v7355, %v7444
        %7560 = vmax.xlane.f32.xlu0 %v7559
        %v7561 = vpop.xlane.xlu0 %7560
        %v7562 = vmax.f32 %v7357, %v7446
        %7563 = vmax.xlane.f32.xlu0 %v7562
        %v7564 = vpop.xlane.xlu0 %7563
        %v7565 = vmax.f32 %v7360, %v7449
        %7566 = vmax.xlane.f32.xlu0 %v7565
        %v7567 = vpop.xlane.xlu0 %7566
        %v7568 = vmax.f32 %v7362, %v7451
        %7569 = vmax.xlane.f32.xlu0 %v7568
        %v7570 = vpop.xlane.xlu0 %7569
        %v7571 = vmax.f32 %v7365, %v7454
        %7572 = vmax.xlane.f32.xlu0 %v7571
        %v7573 = vpop.xlane.xlu0 %7572
        %v7574 = vmax.f32 %v7367, %v7456
        %7575 = vmax.xlane.f32.xlu0 %v7574
        %v7576 = vpop.xlane.xlu0 %7575
        %v7577 = vmax.f32 %v7370, %v7459
        %7578 = vmax.xlane.f32.xlu0 %v7577
        %v7579 = vpop.xlane.xlu0 %7578
        %v7580 = vmax.f32 %v7372, %v7461
        %7581 = vmax.xlane.f32.xlu0 %v7580
        %v7582 = vpop.xlane.xlu0 %7581
        %v7583 = vmax.f32 %v7375, %v7464
        %7584 = vmax.xlane.f32.xlu0 %v7583
        %v7585 = vpop.xlane.xlu0 %7584
        %v7586 = vmax.f32 %v7377, %v7466
        %7587 = vmax.xlane.f32.xlu0 %v7586
        %v7588 = vpop.xlane.xlu0 %7587
        %v7589 = vmax.f32 %v7380, %v7469
        %7590 = vmax.xlane.f32.xlu0 %v7589
        %v7591 = vpop.xlane.xlu0 %7590
        %v7592 = vmax.f32 %v7382, %v7471
        %7593 = vmax.xlane.f32.xlu0 %v7592
        %v7594 = vpop.xlane.xlu0 %7593
        %v7595 = vmax.f32 %v7385, %v7474
        %7596 = vmax.xlane.f32.xlu0 %v7595
        %v7597 = vpop.xlane.xlu0 %7596
        %v7598 = vmax.f32 %v7387, %v7476
        %7599 = vmax.xlane.f32.xlu0 %v7598
        %v7600 = vpop.xlane.xlu0 %7599
        %v7601 = vmax.f32 %v7390, %v7479
        %7602 = vmax.xlane.f32.xlu0 %v7601
        %v7603 = vpop.xlane.xlu0 %7602
        %v7604 = vmax.f32 %v7392, %v7481
        %7605 = vmax.xlane.f32.xlu0 %v7604
        %v7606 = vpop.xlane.xlu0 %7605
        %v7607 = vmax.f32 %v7395, %v7484
        %7608 = vmax.xlane.f32.xlu0 %v7607
        %v7609 = vpop.xlane.xlu0 %7608
        %v7610 = vmax.f32 %v7397, %v7486
        %7611 = vmax.xlane.f32.xlu0 %v7610
        %v7612 = vpop.xlane.xlu0 %7611
        %v7613 = vmax.f32 %v7400, %v7489
        %7614 = vmax.xlane.f32.xlu0 %v7613
        %v7615 = vpop.xlane.xlu0 %7614
        %v7616 = vmax.f32 %v7402, %v7491
        %7617 = vmax.xlane.f32.xlu0 %v7616
        %v7618 = vpop.xlane.xlu0 %7617
        %v7619 = vmax.f32 %v7405, %v7494
        %7620 = vmax.xlane.f32.xlu0 %v7619
        %v7621 = vpop.xlane.xlu0 %7620
        %v7622 = vmax.f32 %v7407, %v7496
        %7623 = vmax.xlane.f32.xlu0 %v7622
        %v7624 = vpop.xlane.xlu0 %7623
        %v7625 = vmax.f32 %v7410, %v7499
        %7626 = vmax.xlane.f32.xlu0 %v7625
        %v7627 = vpop.xlane.xlu0 %7626
        %v7628 = vmax.f32 %v7412, %v7501
        %7629 = vmax.xlane.f32.xlu0 %v7628
        %v7630 = vpop.xlane.xlu0 %7629
        %v7631 = vmax.f32 %v7415, %v7504
        %7632 = vmax.xlane.f32.xlu0 %v7631
        %v7633 = vpop.xlane.xlu0 %7632
        %v7634 = vmax.f32 %v7417, %v7506
        %7635 = vmax.xlane.f32.xlu0 %v7634
        %v7636 = vpop.xlane.xlu0 %7635
        %v7637 = vmax.f32 %v7509, %v7543
        %v7638 = vmax.f32 %v7510, %v7546
        %v7639 = vmax.f32 %v7511, %v7549
        %v7640 = vmax.f32 %v7512, %v7552
        %v7641 = vmax.f32 %v7513, %v7555
        %v7642 = vmax.f32 %v7514, %v7558
        %v7643 = vmax.f32 %v7515, %v7561
        %v7644 = vmax.f32 %v7516, %v7564
        %v7645 = vmax.f32 %v7517, %v7567
        %v7646 = vmax.f32 %v7518, %v7570
        %v7647 = vmax.f32 %v7519, %v7573
        %v7648 = vmax.f32 %v7520, %v7576
        %v7649 = vmax.f32 %v7521, %v7579
        %v7650 = vmax.f32 %v7522, %v7582
        %v7651 = vmax.f32 %v7523, %v7585
        %v7652 = vmax.f32 %v7524, %v7588
        %v7653 = vmax.f32 %v7525, %v7591
        %v7654 = vmax.f32 %v7526, %v7594
        %v7655 = vmax.f32 %v7527, %v7597
        %v7656 = vmax.f32 %v7528, %v7600
        %v7657 = vmax.f32 %v7529, %v7603
        %v7658 = vmax.f32 %v7530, %v7606
        %v7659 = vmax.f32 %v7531, %v7609
        %v7660 = vmax.f32 %v7532, %v7612
        %v7661 = vmax.f32 %v7533, %v7615
        %v7662 = vmax.f32 %v7534, %v7618
        %v7663 = vmax.f32 %v7535, %v7621
        %v7664 = vmax.f32 %v7536, %v7624
        %v7665 = vmax.f32 %v7537, %v7627
        %v7666 = vmax.f32 %v7538, %v7630
        %v7667 = vmax.f32 %v7539, %v7633
        %v7668 = vmax.f32 %v7540, %v7636
        %vm7669 = vcmp.eq.f32.partialorder %v7637, -inf
        %vm7670 = vcmp.eq.f32.partialorder %v7638, -inf
        %vm7671 = vcmp.eq.f32.partialorder %v7639, -inf
        %vm7672 = vcmp.eq.f32.partialorder %v7640, -inf
        %vm7673 = vcmp.eq.f32.partialorder %v7641, -inf
        %vm7674 = vcmp.eq.f32.partialorder %v7642, -inf
        %vm7675 = vcmp.eq.f32.partialorder %v7643, -inf
        %vm7676 = vcmp.eq.f32.partialorder %v7644, -inf
        %vm7677 = vcmp.eq.f32.partialorder %v7645, -inf
        %vm7678 = vcmp.eq.f32.partialorder %v7646, -inf
        %vm7679 = vcmp.eq.f32.partialorder %v7647, -inf
        %vm7680 = vcmp.eq.f32.partialorder %v7648, -inf
        %vm7681 = vcmp.eq.f32.partialorder %v7649, -inf
        %vm7682 = vcmp.eq.f32.partialorder %v7650, -inf
        %vm7683 = vcmp.eq.f32.partialorder %v7651, -inf
        %vm7684 = vcmp.eq.f32.partialorder %v7652, -inf
        %vm7685 = vcmp.eq.f32.partialorder %v7653, -inf
        %vm7686 = vcmp.eq.f32.partialorder %v7654, -inf
        %vm7687 = vcmp.eq.f32.partialorder %v7655, -inf
        %vm7688 = vcmp.eq.f32.partialorder %v7656, -inf
        %vm7689 = vcmp.eq.f32.partialorder %v7657, -inf
        %vm7690 = vcmp.eq.f32.partialorder %v7658, -inf
        %vm7691 = vcmp.eq.f32.partialorder %v7659, -inf
        %vm7692 = vcmp.eq.f32.partialorder %v7660, -inf
        %vm7693 = vcmp.eq.f32.partialorder %v7661, -inf
        %vm7694 = vcmp.eq.f32.partialorder %v7662, -inf
        %vm7695 = vcmp.eq.f32.partialorder %v7663, -inf
        %vm7696 = vcmp.eq.f32.partialorder %v7664, -inf
        %vm7697 = vcmp.eq.f32.partialorder %v7665, -inf
        %vm7698 = vcmp.eq.f32.partialorder %v7666, -inf
        %vm7699 = vcmp.eq.f32.partialorder %v7667, -inf
        %vm7700 = vcmp.eq.f32.partialorder %v7668, -inf
        %v7701 = vsel %vm7669, 0.0, %v7637
        %v7702 = vsel %vm7670, 0.0, %v7638
        %v7703 = vsel %vm7671, 0.0, %v7639
        %v7704 = vsel %vm7672, 0.0, %v7640
        %v7705 = vsel %vm7673, 0.0, %v7641
        %v7706 = vsel %vm7674, 0.0, %v7642
        %v7707 = vsel %vm7675, 0.0, %v7643
        %v7708 = vsel %vm7676, 0.0, %v7644
        %v7709 = vsel %vm7677, 0.0, %v7645
        %v7710 = vsel %vm7678, 0.0, %v7646
        %v7711 = vsel %vm7679, 0.0, %v7647
        %v7712 = vsel %vm7680, 0.0, %v7648
        %v7713 = vsel %vm7681, 0.0, %v7649
        %v7714 = vsel %vm7682, 0.0, %v7650
        %v7715 = vsel %vm7683, 0.0, %v7651
        %v7716 = vsel %vm7684, 0.0, %v7652
        %v7717 = vsel %vm7685, 0.0, %v7653
        %v7718 = vsel %vm7686, 0.0, %v7654
        %v7719 = vsel %vm7687, 0.0, %v7655
        %v7720 = vsel %vm7688, 0.0, %v7656
        %v7721 = vsel %vm7689, 0.0, %v7657
        %v7722 = vsel %vm7690, 0.0, %v7658
        %v7723 = vsel %vm7691, 0.0, %v7659
        %v7724 = vsel %vm7692, 0.0, %v7660
        %v7725 = vsel %vm7693, 0.0, %v7661
        %v7726 = vsel %vm7694, 0.0, %v7662
        %v7727 = vsel %vm7695, 0.0, %v7663
        %v7728 = vsel %vm7696, 0.0, %v7664
        %v7729 = vsel %vm7697, 0.0, %v7665
        %v7730 = vsel %vm7698, 0.0, %v7666
        %v7731 = vsel %vm7699, 0.0, %v7667
        %v7732 = vsel %vm7700, 0.0, %v7668
        %v7733 = vsub.f32 %v7509, %v7701
        %v7734 = vsub.f32 %v7510, %v7702
        %v7735 = vsub.f32 %v7511, %v7703
        %v7736 = vsub.f32 %v7512, %v7704
        %v7737 = vsub.f32 %v7513, %v7705
        %v7738 = vsub.f32 %v7514, %v7706
        %v7739 = vsub.f32 %v7515, %v7707
        %v7740 = vsub.f32 %v7516, %v7708
        %v7741 = vsub.f32 %v7517, %v7709
        %v7742 = vsub.f32 %v7518, %v7710
        %v7743 = vsub.f32 %v7519, %v7711
        %v7744 = vsub.f32 %v7520, %v7712
        %v7745 = vsub.f32 %v7521, %v7713
        %v7746 = vsub.f32 %v7522, %v7714
        %v7747 = vsub.f32 %v7523, %v7715
        %v7748 = vsub.f32 %v7524, %v7716
        %v7749 = vsub.f32 %v7525, %v7717
        %v7750 = vsub.f32 %v7526, %v7718
        %v7751 = vsub.f32 %v7527, %v7719
        %v7752 = vsub.f32 %v7528, %v7720
        %v7753 = vsub.f32 %v7529, %v7721
        %v7754 = vsub.f32 %v7530, %v7722
        %v7755 = vsub.f32 %v7531, %v7723
        %v7756 = vsub.f32 %v7532, %v7724
        %v7757 = vsub.f32 %v7533, %v7725
        %v7758 = vsub.f32 %v7534, %v7726
        %v7759 = vsub.f32 %v7535, %v7727
        %v7760 = vsub.f32 %v7536, %v7728
        %v7761 = vsub.f32 %v7537, %v7729
        %v7762 = vsub.f32 %v7538, %v7730
        %v7763 = vsub.f32 %v7539, %v7731
        %v7764 = vsub.f32 %v7540, %v7732
        %v7765 = vmul.f32 %v7733, 1.442695
        %v7766 = vpow.pop %v7765
        %v7767 = vmul.f32 %v7734, 1.442695
        %v7768 = vpow.pop %v7767
        %v7769 = vmul.f32 %v7735, 1.442695
        %v7770 = vpow.pop %v7769
        %v7771 = vmul.f32 %v7736, 1.442695
        %v7772 = vpow.pop %v7771
        %v7773 = vmul.f32 %v7737, 1.442695
        %v7774 = vpow.pop %v7773
        %v7775 = vmul.f32 %v7738, 1.442695
        %v7776 = vpow.pop %v7775
        %v7777 = vmul.f32 %v7739, 1.442695
        %v7778 = vpow.pop %v7777
        %v7779 = vmul.f32 %v7740, 1.442695
        %v7780 = vpow.pop %v7779
        %v7781 = vmul.f32 %v7741, 1.442695
        %v7782 = vpow.pop %v7781
        %v7783 = vmul.f32 %v7742, 1.442695
        %v7784 = vpow.pop %v7783
        %v7785 = vmul.f32 %v7743, 1.442695
        %v7786 = vpow.pop %v7785
        %v7787 = vmul.f32 %v7744, 1.442695
        %v7788 = vpow.pop %v7787
        %v7789 = vmul.f32 %v7745, 1.442695
        %v7790 = vpow.pop %v7789
        %v7791 = vmul.f32 %v7746, 1.442695
        %v7792 = vpow.pop %v7791
        %v7793 = vmul.f32 %v7747, 1.442695
        %v7794 = vpow.pop %v7793
        %v7795 = vmul.f32 %v7748, 1.442695
        %v7796 = vpow.pop %v7795
        %v7797 = vmul.f32 %v7749, 1.442695
        %v7798 = vpow.pop %v7797
        %v7799 = vmul.f32 %v7750, 1.442695
        %v7800 = vpow.pop %v7799
        %v7801 = vmul.f32 %v7751, 1.442695
        %v7802 = vpow.pop %v7801
        %v7803 = vmul.f32 %v7752, 1.442695
        %v7804 = vpow.pop %v7803
        %v7805 = vmul.f32 %v7753, 1.442695
        %v7806 = vpow.pop %v7805
        %v7807 = vmul.f32 %v7754, 1.442695
        %v7808 = vpow.pop %v7807
        %v7809 = vmul.f32 %v7755, 1.442695
        %v7810 = vpow.pop %v7809
        %v7811 = vmul.f32 %v7756, 1.442695
        %v7812 = vpow.pop %v7811
        %v7813 = vmul.f32 %v7757, 1.442695
        %v7814 = vpow.pop %v7813
        %v7815 = vmul.f32 %v7758, 1.442695
        %v7816 = vpow.pop %v7815
        %v7817 = vmul.f32 %v7759, 1.442695
        %v7818 = vpow.pop %v7817
        %v7819 = vmul.f32 %v7760, 1.442695
        %v7820 = vpow.pop %v7819
        %v7821 = vmul.f32 %v7761, 1.442695
        %v7822 = vpow.pop %v7821
        %v7823 = vmul.f32 %v7762, 1.442695
        %v7824 = vpow.pop %v7823
        %v7825 = vmul.f32 %v7763, 1.442695
        %v7826 = vpow.pop %v7825
        %v7827 = vmul.f32 %v7764, 1.442695
        %v7828 = vpow.pop %v7827
        %7830 = vset.pattern.permute.xlu0 0
        %7831 = vperm.xlu0 %7830, %v7701
        %v7832 = vpop.permute.xlu0 %7831
        %7835 = vset.pattern.permute.xlu0 0
        %7836 = vperm.xlu0 %7835, %v7702
        %v7837 = vpop.permute.xlu0 %7836
        %7840 = vset.pattern.permute.xlu0 0
        %7841 = vperm.xlu0 %7840, %v7703
        %v7842 = vpop.permute.xlu0 %7841
        %7845 = vset.pattern.permute.xlu0 0
        %7846 = vperm.xlu0 %7845, %v7704
        %v7847 = vpop.permute.xlu0 %7846
        %7850 = vset.pattern.permute.xlu0 0
        %7851 = vperm.xlu0 %7850, %v7705
        %v7852 = vpop.permute.xlu0 %7851
        %7855 = vset.pattern.permute.xlu0 0
        %7856 = vperm.xlu0 %7855, %v7706
        %v7857 = vpop.permute.xlu0 %7856
        %7860 = vset.pattern.permute.xlu0 0
        %7861 = vperm.xlu0 %7860, %v7707
        %v7862 = vpop.permute.xlu0 %7861
        %7865 = vset.pattern.permute.xlu0 0
        %7866 = vperm.xlu0 %7865, %v7708
        %v7867 = vpop.permute.xlu0 %7866
        %7870 = vset.pattern.permute.xlu0 0
        %7871 = vperm.xlu0 %7870, %v7709
        %v7872 = vpop.permute.xlu0 %7871
        %7875 = vset.pattern.permute.xlu0 0
        %7876 = vperm.xlu0 %7875, %v7710
        %v7877 = vpop.permute.xlu0 %7876
        %7880 = vset.pattern.permute.xlu0 0
        %7881 = vperm.xlu0 %7880, %v7711
        %v7882 = vpop.permute.xlu0 %7881
        %7885 = vset.pattern.permute.xlu0 0
        %7886 = vperm.xlu0 %7885, %v7712
        %v7887 = vpop.permute.xlu0 %7886
        %7890 = vset.pattern.permute.xlu0 0
        %7891 = vperm.xlu0 %7890, %v7713
        %v7892 = vpop.permute.xlu0 %7891
        %7895 = vset.pattern.permute.xlu0 0
        %7896 = vperm.xlu0 %7895, %v7714
        %v7897 = vpop.permute.xlu0 %7896
        %7900 = vset.pattern.permute.xlu0 0
        %7901 = vperm.xlu0 %7900, %v7715
        %v7902 = vpop.permute.xlu0 %7901
        %7905 = vset.pattern.permute.xlu0 0
        %7906 = vperm.xlu0 %7905, %v7716
        %v7907 = vpop.permute.xlu0 %7906
        %7910 = vset.pattern.permute.xlu0 0
        %7911 = vperm.xlu0 %7910, %v7717
        %v7912 = vpop.permute.xlu0 %7911
        %7915 = vset.pattern.permute.xlu0 0
        %7916 = vperm.xlu0 %7915, %v7718
        %v7917 = vpop.permute.xlu0 %7916
        %7920 = vset.pattern.permute.xlu0 0
        %7921 = vperm.xlu0 %7920, %v7719
        %v7922 = vpop.permute.xlu0 %7921
        %7925 = vset.pattern.permute.xlu0 0
        %7926 = vperm.xlu0 %7925, %v7720
        %v7927 = vpop.permute.xlu0 %7926
        %7930 = vset.pattern.permute.xlu0 0
        %7931 = vperm.xlu0 %7930, %v7721
        %v7932 = vpop.permute.xlu0 %7931
        %7935 = vset.pattern.permute.xlu0 0
        %7936 = vperm.xlu0 %7935, %v7722
        %v7937 = vpop.permute.xlu0 %7936
        %7940 = vset.pattern.permute.xlu0 0
        %7941 = vperm.xlu0 %7940, %v7723
        %v7942 = vpop.permute.xlu0 %7941
        %7945 = vset.pattern.permute.xlu0 0
        %7946 = vperm.xlu0 %7945, %v7724
        %v7947 = vpop.permute.xlu0 %7946
        %7950 = vset.pattern.permute.xlu0 0
        %7951 = vperm.xlu0 %7950, %v7725
        %v7952 = vpop.permute.xlu0 %7951
        %7955 = vset.pattern.permute.xlu0 0
        %7956 = vperm.xlu0 %7955, %v7726
        %v7957 = vpop.permute.xlu0 %7956
        %7960 = vset.pattern.permute.xlu0 0
        %7961 = vperm.xlu0 %7960, %v7727
        %v7962 = vpop.permute.xlu0 %7961
        %7965 = vset.pattern.permute.xlu0 0
        %7966 = vperm.xlu0 %7965, %v7728
        %v7967 = vpop.permute.xlu0 %7966
        %7970 = vset.pattern.permute.xlu0 0
        %7971 = vperm.xlu0 %7970, %v7729
        %v7972 = vpop.permute.xlu0 %7971
        %7975 = vset.pattern.permute.xlu0 0
        %7976 = vperm.xlu0 %7975, %v7730
        %v7977 = vpop.permute.xlu0 %7976
        %7980 = vset.pattern.permute.xlu0 0
        %7981 = vperm.xlu0 %7980, %v7731
        %v7982 = vpop.permute.xlu0 %7981
        %7985 = vset.pattern.permute.xlu0 0
        %7986 = vperm.xlu0 %7985, %v7732
        %v7987 = vpop.permute.xlu0 %7986
        %v7989 = vsub.f32 %v7340, %v7832
        %v7990 = vsub.f32 %v7429, %v7832
        %v7991 = vsub.f32 %v7342, %v7837
        %v7992 = vsub.f32 %v7431, %v7837
        %v7993 = vsub.f32 %v7345, %v7842
        %v7994 = vsub.f32 %v7434, %v7842
        %v7995 = vsub.f32 %v7347, %v7847
        %v7996 = vsub.f32 %v7436, %v7847
        %v7997 = vsub.f32 %v7350, %v7852
        %v7998 = vsub.f32 %v7439, %v7852
        %v7999 = vsub.f32 %v7352, %v7857
        %v8000 = vsub.f32 %v7441, %v7857
        %v8001 = vsub.f32 %v7355, %v7862
        %v8002 = vsub.f32 %v7444, %v7862
        %v8003 = vsub.f32 %v7357, %v7867
        %v8004 = vsub.f32 %v7446, %v7867
        %v8005 = vsub.f32 %v7360, %v7872
        %v8006 = vsub.f32 %v7449, %v7872
        %v8007 = vsub.f32 %v7362, %v7877
        %v8008 = vsub.f32 %v7451, %v7877
        %v8009 = vsub.f32 %v7365, %v7882
        %v8010 = vsub.f32 %v7454, %v7882
        %v8011 = vsub.f32 %v7367, %v7887
        %v8012 = vsub.f32 %v7456, %v7887
        %v8013 = vsub.f32 %v7370, %v7892
        %v8014 = vsub.f32 %v7459, %v7892
        %v8015 = vsub.f32 %v7372, %v7897
        %v8016 = vsub.f32 %v7461, %v7897
        %v8017 = vsub.f32 %v7375, %v7902
        %v8018 = vsub.f32 %v7464, %v7902
        %v8019 = vsub.f32 %v7377, %v7907
        %v8020 = vsub.f32 %v7466, %v7907
        %v8021 = vsub.f32 %v7380, %v7912
        %v8022 = vsub.f32 %v7469, %v7912
        %v8023 = vsub.f32 %v7382, %v7917
        %v8024 = vsub.f32 %v7471, %v7917
        %v8025 = vsub.f32 %v7385, %v7922
        %v8026 = vsub.f32 %v7474, %v7922
        %v8027 = vsub.f32 %v7387, %v7927
        %v8028 = vsub.f32 %v7476, %v7927
        %v8029 = vsub.f32 %v7390, %v7932
        %v8030 = vsub.f32 %v7479, %v7932
        %v8031 = vsub.f32 %v7392, %v7937
        %v8032 = vsub.f32 %v7481, %v7937
        %v8033 = vsub.f32 %v7395, %v7942
        %v8034 = vsub.f32 %v7484, %v7942
        %v8035 = vsub.f32 %v7397, %v7947
        %v8036 = vsub.f32 %v7486, %v7947
        %v8037 = vsub.f32 %v7400, %v7952
        %v8038 = vsub.f32 %v7489, %v7952
        %v8039 = vsub.f32 %v7402, %v7957
        %v8040 = vsub.f32 %v7491, %v7957
        %v8041 = vsub.f32 %v7405, %v7962
        %v8042 = vsub.f32 %v7494, %v7962
        %v8043 = vsub.f32 %v7407, %v7967
        %v8044 = vsub.f32 %v7496, %v7967
        %v8045 = vsub.f32 %v7410, %v7972
        %v8046 = vsub.f32 %v7499, %v7972
        %v8047 = vsub.f32 %v7412, %v7977
        %v8048 = vsub.f32 %v7501, %v7977
        %v8049 = vsub.f32 %v7415, %v7982
        %v8050 = vsub.f32 %v7504, %v7982
        %v8051 = vsub.f32 %v7417, %v7987
        %v8052 = vsub.f32 %v7506, %v7987
        %v8053 = vmul.f32 %v7989, 1.442695
        %v8054 = vpow.pop %v8053
        %v8055 = vmul.f32 %v7990, 1.442695
        %v8056 = vpow.pop %v8055
        %v8057 = vmul.f32 %v7991, 1.442695
        %v8058 = vpow.pop %v8057
        %v8059 = vmul.f32 %v7992, 1.442695
        %v8060 = vpow.pop %v8059
        %v8061 = vmul.f32 %v7993, 1.442695
        %v8062 = vpow.pop %v8061
        %v8063 = vmul.f32 %v7994, 1.442695
        %v8064 = vpow.pop %v8063
        %v8065 = vmul.f32 %v7995, 1.442695
        %v8066 = vpow.pop %v8065
        %v8067 = vmul.f32 %v7996, 1.442695
        %v8068 = vpow.pop %v8067
        %v8069 = vmul.f32 %v7997, 1.442695
        %v8070 = vpow.pop %v8069
        %v8071 = vmul.f32 %v7998, 1.442695
        %v8072 = vpow.pop %v8071
        %v8073 = vmul.f32 %v7999, 1.442695
        %v8074 = vpow.pop %v8073
        %v8075 = vmul.f32 %v8000, 1.442695
        %v8076 = vpow.pop %v8075
        %v8077 = vmul.f32 %v8001, 1.442695
        %v8078 = vpow.pop %v8077
        %v8079 = vmul.f32 %v8002, 1.442695
        %v8080 = vpow.pop %v8079
        %v8081 = vmul.f32 %v8003, 1.442695
        %v8082 = vpow.pop %v8081
        %v8083 = vmul.f32 %v8004, 1.442695
        %v8084 = vpow.pop %v8083
        %v8085 = vmul.f32 %v8005, 1.442695
        %v8086 = vpow.pop %v8085
        %v8087 = vmul.f32 %v8006, 1.442695
        %v8088 = vpow.pop %v8087
        %v8089 = vmul.f32 %v8007, 1.442695
        %v8090 = vpow.pop %v8089
        %v8091 = vmul.f32 %v8008, 1.442695
        %v8092 = vpow.pop %v8091
        %v8093 = vmul.f32 %v8009, 1.442695
        %v8094 = vpow.pop %v8093
        %v8095 = vmul.f32 %v8010, 1.442695
        %v8096 = vpow.pop %v8095
        %v8097 = vmul.f32 %v8011, 1.442695
        %v8098 = vpow.pop %v8097
        %v8099 = vmul.f32 %v8012, 1.442695
        %v8100 = vpow.pop %v8099
        %v8101 = vmul.f32 %v8013, 1.442695
        %v8102 = vpow.pop %v8101
        %v8103 = vmul.f32 %v8014, 1.442695
        %v8104 = vpow.pop %v8103
        %v8105 = vmul.f32 %v8015, 1.442695
        %v8106 = vpow.pop %v8105
        %v8107 = vmul.f32 %v8016, 1.442695
        %v8108 = vpow.pop %v8107
        %v8109 = vmul.f32 %v8017, 1.442695
        %v8110 = vpow.pop %v8109
        %v8111 = vmul.f32 %v8018, 1.442695
        %v8112 = vpow.pop %v8111
        %v8113 = vmul.f32 %v8019, 1.442695
        %v8114 = vpow.pop %v8113
        %v8115 = vmul.f32 %v8020, 1.442695
        %v8116 = vpow.pop %v8115
        %v8117 = vmul.f32 %v8021, 1.442695
        %v8118 = vpow.pop %v8117
        %v8119 = vmul.f32 %v8022, 1.442695
        %v8120 = vpow.pop %v8119
        %v8121 = vmul.f32 %v8023, 1.442695
        %v8122 = vpow.pop %v8121
        %v8123 = vmul.f32 %v8024, 1.442695
        %v8124 = vpow.pop %v8123
        %v8125 = vmul.f32 %v8025, 1.442695
        %v8126 = vpow.pop %v8125
        %v8127 = vmul.f32 %v8026, 1.442695
        %v8128 = vpow.pop %v8127
        %v8129 = vmul.f32 %v8027, 1.442695
        %v8130 = vpow.pop %v8129
        %v8131 = vmul.f32 %v8028, 1.442695
        %v8132 = vpow.pop %v8131
        %v8133 = vmul.f32 %v8029, 1.442695
        %v8134 = vpow.pop %v8133
        %v8135 = vmul.f32 %v8030, 1.442695
        %v8136 = vpow.pop %v8135
        %v8137 = vmul.f32 %v8031, 1.442695
        %v8138 = vpow.pop %v8137
        %v8139 = vmul.f32 %v8032, 1.442695
        %v8140 = vpow.pop %v8139
        %v8141 = vmul.f32 %v8033, 1.442695
        %v8142 = vpow.pop %v8141
        %v8143 = vmul.f32 %v8034, 1.442695
        %v8144 = vpow.pop %v8143
        %v8145 = vmul.f32 %v8035, 1.442695
        %v8146 = vpow.pop %v8145
        %v8147 = vmul.f32 %v8036, 1.442695
        %v8148 = vpow.pop %v8147
        %v8149 = vmul.f32 %v8037, 1.442695
        %v8150 = vpow.pop %v8149
        %v8151 = vmul.f32 %v8038, 1.442695
        %v8152 = vpow.pop %v8151
        %v8153 = vmul.f32 %v8039, 1.442695
        %v8154 = vpow.pop %v8153
        %v8155 = vmul.f32 %v8040, 1.442695
        %v8156 = vpow.pop %v8155
        %v8157 = vmul.f32 %v8041, 1.442695
        %v8158 = vpow.pop %v8157
        %v8159 = vmul.f32 %v8042, 1.442695
        %v8160 = vpow.pop %v8159
        %v8161 = vmul.f32 %v8043, 1.442695
        %v8162 = vpow.pop %v8161
        %v8163 = vmul.f32 %v8044, 1.442695
        %v8164 = vpow.pop %v8163
        %v8165 = vmul.f32 %v8045, 1.442695
        %v8166 = vpow.pop %v8165
        %v8167 = vmul.f32 %v8046, 1.442695
        %v8168 = vpow.pop %v8167
        %v8169 = vmul.f32 %v8047, 1.442695
        %v8170 = vpow.pop %v8169
        %v8171 = vmul.f32 %v8048, 1.442695
        %v8172 = vpow.pop %v8171
        %v8173 = vmul.f32 %v8049, 1.442695
        %v8174 = vpow.pop %v8173
        %v8175 = vmul.f32 %v8050, 1.442695
        %v8176 = vpow.pop %v8175
        %v8177 = vmul.f32 %v8051, 1.442695
        %v8178 = vpow.pop %v8177
        %v8179 = vmul.f32 %v8052, 1.442695
        %v8180 = vpow.pop %v8179
        %s8181 = scalar_lea.vmem [#allocation4], 768
        %v8182 = vld [vmem:[%s8181] sm:$0xff]
        %v8183 = vld [vmem:[%s8181 + $0x8] sm:$0xff]
        %v8184 = vld [vmem:[%s8181 + $0x10] sm:$0xff]
        %v8185 = vld [vmem:[%s8181 + $0x18] sm:$0xff]
        %v8186 = vld [vmem:[%s8181 + $0x20] sm:$0xff]
        %v8187 = vld [vmem:[%s8181 + $0x28] sm:$0xff]
        %v8188 = vld [vmem:[%s8181 + $0x30] sm:$0xff]
        %v8189 = vld [vmem:[%s8181 + $0x38] sm:$0xff]
        %v8190 = vld [vmem:[%s8181 + $0x40] sm:$0xff]
        %v8191 = vld [vmem:[%s8181 + $0x48] sm:$0xff]
        %v8192 = vld [vmem:[%s8181 + $0x50] sm:$0xff]
        %v8193 = vld [vmem:[%s8181 + $0x58] sm:$0xff]
        %v8194 = vld [vmem:[%s8181 + $0x60] sm:$0xff]
        %v8195 = vld [vmem:[%s8181 + $0x68] sm:$0xff]
        %v8196 = vld [vmem:[%s8181 + $0x70] sm:$0xff]
        %v8197 = vld [vmem:[%s8181 + $0x78] sm:$0xff]
        %v8198 = vld [vmem:[%s8181 + $0x80] sm:$0xff]
        %v8199 = vld [vmem:[%s8181 + $0x88] sm:$0xff]
        %v8200 = vld [vmem:[%s8181 + $0x90] sm:$0xff]
        %v8201 = vld [vmem:[%s8181 + $0x98] sm:$0xff]
        %v8202 = vld [vmem:[%s8181 + $0xa0] sm:$0xff]
        %v8203 = vld [vmem:[%s8181 + $0xa8] sm:$0xff]
        %v8204 = vld [vmem:[%s8181 + $0xb0] sm:$0xff]
        %v8205 = vld [vmem:[%s8181 + $0xb8] sm:$0xff]
        %v8206 = vld [vmem:[%s8181 + $0xc0] sm:$0xff]
        %v8207 = vld [vmem:[%s8181 + $0xc8] sm:$0xff]
        %v8208 = vld [vmem:[%s8181 + $0xd0] sm:$0xff]
        %v8209 = vld [vmem:[%s8181 + $0xd8] sm:$0xff]
        %v8210 = vld [vmem:[%s8181 + $0xe0] sm:$0xff]
        %v8211 = vld [vmem:[%s8181 + $0xe8] sm:$0xff]
        %v8212 = vld [vmem:[%s8181 + $0xf0] sm:$0xff]
        %v8213 = vld [vmem:[%s8181 + $0xf8] sm:$0xff]
        %v8214 = vmul.f32 %v7766, %v8182
        %v8215 = vmul.f32 %v7768, %v8183
        %v8216 = vmul.f32 %v7770, %v8184
        %v8217 = vmul.f32 %v7772, %v8185
        %v8218 = vmul.f32 %v7774, %v8186
        %v8219 = vmul.f32 %v7776, %v8187
        %v8220 = vmul.f32 %v7778, %v8188
        %v8221 = vmul.f32 %v7780, %v8189
        %v8222 = vmul.f32 %v7782, %v8190
        %v8223 = vmul.f32 %v7784, %v8191
        %v8224 = vmul.f32 %v7786, %v8192
        %v8225 = vmul.f32 %v7788, %v8193
        %v8226 = vmul.f32 %v7790, %v8194
        %v8227 = vmul.f32 %v7792, %v8195
        %v8228 = vmul.f32 %v7794, %v8196
        %v8229 = vmul.f32 %v7796, %v8197
        %v8230 = vmul.f32 %v7798, %v8198
        %v8231 = vmul.f32 %v7800, %v8199
        %v8232 = vmul.f32 %v7802, %v8200
        %v8233 = vmul.f32 %v7804, %v8201
        %v8234 = vmul.f32 %v7806, %v8202
        %v8235 = vmul.f32 %v7808, %v8203
        %v8236 = vmul.f32 %v7810, %v8204
        %v8237 = vmul.f32 %v7812, %v8205
        %v8238 = vmul.f32 %v7814, %v8206
        %v8239 = vmul.f32 %v7816, %v8207
        %v8240 = vmul.f32 %v7818, %v8208
        %v8241 = vmul.f32 %v7820, %v8209
        %v8242 = vmul.f32 %v7822, %v8210
        %v8243 = vmul.f32 %v7824, %v8211
        %v8244 = vmul.f32 %v7826, %v8212
        %v8245 = vmul.f32 %v7828, %v8213
        %v8246 = vadd.f32 %v8054, %v8056
        %8247 = vadd.xlane.f32.xlu0 %v8246
        %v8248 = vpop.xlane.xlu0 %8247
        %v8249 = vadd.f32 %v8058, %v8060
        %8250 = vadd.xlane.f32.xlu0 %v8249
        %v8251 = vpop.xlane.xlu0 %8250
        %v8252 = vadd.f32 %v8062, %v8064
        %8253 = vadd.xlane.f32.xlu0 %v8252
        %v8254 = vpop.xlane.xlu0 %8253
        %v8255 = vadd.f32 %v8066, %v8068
        %8256 = vadd.xlane.f32.xlu0 %v8255
        %v8257 = vpop.xlane.xlu0 %8256
        %v8258 = vadd.f32 %v8070, %v8072
        %8259 = vadd.xlane.f32.xlu0 %v8258
        %v8260 = vpop.xlane.xlu0 %8259
        %v8261 = vadd.f32 %v8074, %v8076
        %8262 = vadd.xlane.f32.xlu0 %v8261
        %v8263 = vpop.xlane.xlu0 %8262
        %v8264 = vadd.f32 %v8078, %v8080
        %8265 = vadd.xlane.f32.xlu0 %v8264
        %v8266 = vpop.xlane.xlu0 %8265
        %v8267 = vadd.f32 %v8082, %v8084
        %8268 = vadd.xlane.f32.xlu0 %v8267
        %v8269 = vpop.xlane.xlu0 %8268
        %v8270 = vadd.f32 %v8086, %v8088
        %8271 = vadd.xlane.f32.xlu0 %v8270
        %v8272 = vpop.xlane.xlu0 %8271
        %v8273 = vadd.f32 %v8090, %v8092
        %8274 = vadd.xlane.f32.xlu0 %v8273
        %v8275 = vpop.xlane.xlu0 %8274
        %v8276 = vadd.f32 %v8094, %v8096
        %8277 = vadd.xlane.f32.xlu0 %v8276
        %v8278 = vpop.xlane.xlu0 %8277
        %v8279 = vadd.f32 %v8098, %v8100
        %8280 = vadd.xlane.f32.xlu0 %v8279
        %v8281 = vpop.xlane.xlu0 %8280
        %v8282 = vadd.f32 %v8102, %v8104
        %8283 = vadd.xlane.f32.xlu0 %v8282
        %v8284 = vpop.xlane.xlu0 %8283
        %v8285 = vadd.f32 %v8106, %v8108
        %8286 = vadd.xlane.f32.xlu0 %v8285
        %v8287 = vpop.xlane.xlu0 %8286
        %v8288 = vadd.f32 %v8110, %v8112
        %8289 = vadd.xlane.f32.xlu0 %v8288
        %v8290 = vpop.xlane.xlu0 %8289
        %v8291 = vadd.f32 %v8114, %v8116
        %8292 = vadd.xlane.f32.xlu0 %v8291
        %v8293 = vpop.xlane.xlu0 %8292
        %v8294 = vadd.f32 %v8118, %v8120
        %8295 = vadd.xlane.f32.xlu0 %v8294
        %v8296 = vpop.xlane.xlu0 %8295
        %v8297 = vadd.f32 %v8122, %v8124
        %8298 = vadd.xlane.f32.xlu0 %v8297
        %v8299 = vpop.xlane.xlu0 %8298
        %v8300 = vadd.f32 %v8126, %v8128
        %8301 = vadd.xlane.f32.xlu0 %v8300
        %v8302 = vpop.xlane.xlu0 %8301
        %v8303 = vadd.f32 %v8130, %v8132
        %8304 = vadd.xlane.f32.xlu0 %v8303
        %v8305 = vpop.xlane.xlu0 %8304
        %v8306 = vadd.f32 %v8134, %v8136
        %8307 = vadd.xlane.f32.xlu0 %v8306
        %v8308 = vpop.xlane.xlu0 %8307
        %v8309 = vadd.f32 %v8138, %v8140
        %8310 = vadd.xlane.f32.xlu0 %v8309
        %v8311 = vpop.xlane.xlu0 %8310
        %v8312 = vadd.f32 %v8142, %v8144
        %8313 = vadd.xlane.f32.xlu0 %v8312
        %v8314 = vpop.xlane.xlu0 %8313
        %v8315 = vadd.f32 %v8146, %v8148
        %8316 = vadd.xlane.f32.xlu0 %v8315
        %v8317 = vpop.xlane.xlu0 %8316
        %v8318 = vadd.f32 %v8150, %v8152
        %8319 = vadd.xlane.f32.xlu0 %v8318
        %v8320 = vpop.xlane.xlu0 %8319
        %v8321 = vadd.f32 %v8154, %v8156
        %8322 = vadd.xlane.f32.xlu0 %v8321
        %v8323 = vpop.xlane.xlu0 %8322
        %v8324 = vadd.f32 %v8158, %v8160
        %8325 = vadd.xlane.f32.xlu0 %v8324
        %v8326 = vpop.xlane.xlu0 %8325
        %v8327 = vadd.f32 %v8162, %v8164
        %8328 = vadd.xlane.f32.xlu0 %v8327
        %v8329 = vpop.xlane.xlu0 %8328
        %v8330 = vadd.f32 %v8166, %v8168
        %8331 = vadd.xlane.f32.xlu0 %v8330
        %v8332 = vpop.xlane.xlu0 %8331
        %v8333 = vadd.f32 %v8170, %v8172
        %8334 = vadd.xlane.f32.xlu0 %v8333
        %v8335 = vpop.xlane.xlu0 %8334
        %v8336 = vadd.f32 %v8174, %v8176
        %8337 = vadd.xlane.f32.xlu0 %v8336
        %v8338 = vpop.xlane.xlu0 %8337
        %v8339 = vadd.f32 %v8178, %v8180
        %8340 = vadd.xlane.f32.xlu0 %v8339
        %v8341 = vpop.xlane.xlu0 %8340
        %v8342 = vadd.f32 %v8214, %v8248
        %v8343 = vadd.f32 %v8215, %v8251
        %v8344 = vadd.f32 %v8216, %v8254
        %v8345 = vadd.f32 %v8217, %v8257
        %v8346 = vadd.f32 %v8218, %v8260
        %v8347 = vadd.f32 %v8219, %v8263
        %v8348 = vadd.f32 %v8220, %v8266
        %v8349 = vadd.f32 %v8221, %v8269
        %v8350 = vadd.f32 %v8222, %v8272
        %v8351 = vadd.f32 %v8223, %v8275
        %v8352 = vadd.f32 %v8224, %v8278
        %v8353 = vadd.f32 %v8225, %v8281
        %v8354 = vadd.f32 %v8226, %v8284
        %v8355 = vadd.f32 %v8227, %v8287
        %v8356 = vadd.f32 %v8228, %v8290
        %v8357 = vadd.f32 %v8229, %v8293
        %v8358 = vadd.f32 %v8230, %v8296
        %v8359 = vadd.f32 %v8231, %v8299
        %v8360 = vadd.f32 %v8232, %v8302
        %v8361 = vadd.f32 %v8233, %v8305
        %v8362 = vadd.f32 %v8234, %v8308
        %v8363 = vadd.f32 %v8235, %v8311
        %v8364 = vadd.f32 %v8236, %v8314
        %v8365 = vadd.f32 %v8237, %v8317
        %v8366 = vadd.f32 %v8238, %v8320
        %v8367 = vadd.f32 %v8239, %v8323
        %v8368 = vadd.f32 %v8240, %v8326
        %v8369 = vadd.f32 %v8241, %v8329
        %v8370 = vadd.f32 %v8242, %v8332
        %v8371 = vadd.f32 %v8243, %v8335
        %v8372 = vadd.f32 %v8244, %v8338
        %v8373 = vadd.f32 %v8245, %v8341
        %8374 = vst.msk [vmem:[%s8181] sm:$0xff] %vm2733, %v8342
        %8375 = vst.msk [vmem:[%s8181 + $0x8] sm:$0xff] %vm2733, %v8343
        %8376 = vst.msk [vmem:[%s8181 + $0x10] sm:$0xff] %vm2733, %v8344
        %8377 = vst.msk [vmem:[%s8181 + $0x18] sm:$0xff] %vm2733, %v8345
        %8378 = vst.msk [vmem:[%s8181 + $0x20] sm:$0xff] %vm2733, %v8346
        %8379 = vst.msk [vmem:[%s8181 + $0x28] sm:$0xff] %vm2733, %v8347
        %8380 = vst.msk [vmem:[%s8181 + $0x30] sm:$0xff] %vm2733, %v8348
        %8381 = vst.msk [vmem:[%s8181 + $0x38] sm:$0xff] %vm2733, %v8349
        %8382 = vst.msk [vmem:[%s8181 + $0x40] sm:$0xff] %vm2733, %v8350
        %8383 = vst.msk [vmem:[%s8181 + $0x48] sm:$0xff] %vm2733, %v8351
        %8384 = vst.msk [vmem:[%s8181 + $0x50] sm:$0xff] %vm2733, %v8352
        %8385 = vst.msk [vmem:[%s8181 + $0x58] sm:$0xff] %vm2733, %v8353
        %8386 = vst.msk [vmem:[%s8181 + $0x60] sm:$0xff] %vm2733, %v8354
        %8387 = vst.msk [vmem:[%s8181 + $0x68] sm:$0xff] %vm2733, %v8355
        %8388 = vst.msk [vmem:[%s8181 + $0x70] sm:$0xff] %vm2733, %v8356
        %8389 = vst.msk [vmem:[%s8181 + $0x78] sm:$0xff] %vm2733, %v8357
        %8390 = vst.msk [vmem:[%s8181 + $0x80] sm:$0xff] %vm2733, %v8358
        %8391 = vst.msk [vmem:[%s8181 + $0x88] sm:$0xff] %vm2733, %v8359
        %8392 = vst.msk [vmem:[%s8181 + $0x90] sm:$0xff] %vm2733, %v8360
        %8393 = vst.msk [vmem:[%s8181 + $0x98] sm:$0xff] %vm2733, %v8361
        %8394 = vst.msk [vmem:[%s8181 + $0xa0] sm:$0xff] %vm2733, %v8362
        %8395 = vst.msk [vmem:[%s8181 + $0xa8] sm:$0xff] %vm2733, %v8363
        %8396 = vst.msk [vmem:[%s8181 + $0xb0] sm:$0xff] %vm2733, %v8364
        %8397 = vst.msk [vmem:[%s8181 + $0xb8] sm:$0xff] %vm2733, %v8365
        %8398 = vst.msk [vmem:[%s8181 + $0xc0] sm:$0xff] %vm2733, %v8366
        %8399 = vst.msk [vmem:[%s8181 + $0xc8] sm:$0xff] %vm2733, %v8367
        %8400 = vst.msk [vmem:[%s8181 + $0xd0] sm:$0xff] %vm2733, %v8368
        %8401 = vst.msk [vmem:[%s8181 + $0xd8] sm:$0xff] %vm2733, %v8369
        %8402 = vst.msk [vmem:[%s8181 + $0xe0] sm:$0xff] %vm2733, %v8370
        %8403 = vst.msk [vmem:[%s8181 + $0xe8] sm:$0xff] %vm2733, %v8371
        %8404 = vst.msk [vmem:[%s8181 + $0xf0] sm:$0xff] %vm2733, %v8372
        %8405 = vst.msk [vmem:[%s8181 + $0xf8] sm:$0xff] %vm2733, %v8373
        %8406 = vst.msk [vmem:[%s7508] sm:$0xff] %vm2733, %v7637
        %8407 = vst.msk [vmem:[%s7508 + $0x8] sm:$0xff] %vm2733, %v7638
        %8408 = vst.msk [vmem:[%s7508 + $0x10] sm:$0xff] %vm2733, %v7639
        %8409 = vst.msk [vmem:[%s7508 + $0x18] sm:$0xff] %vm2733, %v7640
        %8410 = vst.msk [vmem:[%s7508 + $0x20] sm:$0xff] %vm2733, %v7641
        %8411 = vst.msk [vmem:[%s7508 + $0x28] sm:$0xff] %vm2733, %v7642
        %8412 = vst.msk [vmem:[%s7508 + $0x30] sm:$0xff] %vm2733, %v7643
        %8413 = vst.msk [vmem:[%s7508 + $0x38] sm:$0xff] %vm2733, %v7644
        %8414 = vst.msk [vmem:[%s7508 + $0x40] sm:$0xff] %vm2733, %v7645
        %8415 = vst.msk [vmem:[%s7508 + $0x48] sm:$0xff] %vm2733, %v7646
        %8416 = vst.msk [vmem:[%s7508 + $0x50] sm:$0xff] %vm2733, %v7647
        %8417 = vst.msk [vmem:[%s7508 + $0x58] sm:$0xff] %vm2733, %v7648
        %8418 = vst.msk [vmem:[%s7508 + $0x60] sm:$0xff] %vm2733, %v7649
        %8419 = vst.msk [vmem:[%s7508 + $0x68] sm:$0xff] %vm2733, %v7650
        %8420 = vst.msk [vmem:[%s7508 + $0x70] sm:$0xff] %vm2733, %v7651
        %8421 = vst.msk [vmem:[%s7508 + $0x78] sm:$0xff] %vm2733, %v7652
        %8422 = vst.msk [vmem:[%s7508 + $0x80] sm:$0xff] %vm2733, %v7653
        %8423 = vst.msk [vmem:[%s7508 + $0x88] sm:$0xff] %vm2733, %v7654
        %8424 = vst.msk [vmem:[%s7508 + $0x90] sm:$0xff] %vm2733, %v7655
        %8425 = vst.msk [vmem:[%s7508 + $0x98] sm:$0xff] %vm2733, %v7656
        %8426 = vst.msk [vmem:[%s7508 + $0xa0] sm:$0xff] %vm2733, %v7657
        %8427 = vst.msk [vmem:[%s7508 + $0xa8] sm:$0xff] %vm2733, %v7658
        %8428 = vst.msk [vmem:[%s7508 + $0xb0] sm:$0xff] %vm2733, %v7659
        %8429 = vst.msk [vmem:[%s7508 + $0xb8] sm:$0xff] %vm2733, %v7660
        %8430 = vst.msk [vmem:[%s7508 + $0xc0] sm:$0xff] %vm2733, %v7661
        %8431 = vst.msk [vmem:[%s7508 + $0xc8] sm:$0xff] %vm2733, %v7662
        %8432 = vst.msk [vmem:[%s7508 + $0xd0] sm:$0xff] %vm2733, %v7663
        %8433 = vst.msk [vmem:[%s7508 + $0xd8] sm:$0xff] %vm2733, %v7664
        %8434 = vst.msk [vmem:[%s7508 + $0xe0] sm:$0xff] %vm2733, %v7665
        %8435 = vst.msk [vmem:[%s7508 + $0xe8] sm:$0xff] %vm2733, %v7666
        %8436 = vst.msk [vmem:[%s7508 + $0xf0] sm:$0xff] %vm2733, %v7667
        %8437 = vst.msk [vmem:[%s7508 + $0xf8] sm:$0xff] %vm2733, %v7668
        %v8438 = vpack.c.bf16 %v8058, %v8054
        %v8439 = vpack.c.bf16 %v8060, %v8056
        %v8440 = vpack.c.bf16 %v8066, %v8062
        %v8441 = vpack.c.bf16 %v8068, %v8064
        %v8442 = vpack.c.bf16 %v8074, %v8070
        %v8443 = vpack.c.bf16 %v8076, %v8072
        %v8444 = vpack.c.bf16 %v8082, %v8078
        %v8445 = vpack.c.bf16 %v8084, %v8080
        %v8446 = vpack.c.bf16 %v8090, %v8086
        %v8447 = vpack.c.bf16 %v8092, %v8088
        %v8448 = vpack.c.bf16 %v8098, %v8094
        %v8449 = vpack.c.bf16 %v8100, %v8096
        %v8450 = vpack.c.bf16 %v8106, %v8102
        %v8451 = vpack.c.bf16 %v8108, %v8104
        %v8452 = vpack.c.bf16 %v8114, %v8110
        %v8453 = vpack.c.bf16 %v8116, %v8112
        %v8454 = vpack.c.bf16 %v8122, %v8118
        %v8455 = vpack.c.bf16 %v8124, %v8120
        %v8456 = vpack.c.bf16 %v8130, %v8126
        %v8457 = vpack.c.bf16 %v8132, %v8128
        %v8458 = vpack.c.bf16 %v8138, %v8134
        %v8459 = vpack.c.bf16 %v8140, %v8136
        %v8460 = vpack.c.bf16 %v8146, %v8142
        %v8461 = vpack.c.bf16 %v8148, %v8144
        %v8462 = vpack.c.bf16 %v8154, %v8150
        %v8463 = vpack.c.bf16 %v8156, %v8152
        %v8464 = vpack.c.bf16 %v8162, %v8158
        %v8465 = vpack.c.bf16 %v8164, %v8160
        %v8466 = vpack.c.bf16 %v8170, %v8166
        %v8467 = vpack.c.bf16 %v8172, %v8168
        %v8468 = vpack.c.bf16 %v8178, %v8174
        %v8469 = vpack.c.bf16 %v8180, %v8176
        %8470 = vrot.lane.b32.xlu0 %v2894, 32
        %v8471 = vpop.permute.xlu0 %8470
        %8472 = vrot.lane.b32.xlu0 %v2895, 32
        %v8473 = vpop.permute.xlu0 %8472
        %8474 = vrot.lane.b32.xlu0 %v2896, 32
        %v8475 = vpop.permute.xlu0 %8474
        %8476 = vrot.lane.b32.xlu0 %v2897, 32
        %v8477 = vpop.permute.xlu0 %8476
        %8478 = vrot.lane.b32.xlu0 %v2898, 32
        %v8479 = vpop.permute.xlu0 %8478
        %8480 = vrot.lane.b32.xlu0 %v2899, 32
        %v8481 = vpop.permute.xlu0 %8480
        %8482 = vrot.lane.b32.xlu0 %v2900, 32
        %v8483 = vpop.permute.xlu0 %8482
        %8484 = vrot.lane.b32.xlu0 %v2901, 32
        %v8485 = vpop.permute.xlu0 %8484
        %8486 = vrot.lane.b32.xlu0 %v2902, 32
        %v8487 = vpop.permute.xlu0 %8486
        %8488 = vrot.lane.b32.xlu0 %v2903, 32
        %v8489 = vpop.permute.xlu0 %8488
        %8490 = vrot.lane.b32.xlu0 %v2904, 32
        %v8491 = vpop.permute.xlu0 %8490
        %8492 = vrot.lane.b32.xlu0 %v2905, 32
        %v8493 = vpop.permute.xlu0 %8492
        %8494 = vrot.lane.b32.xlu0 %v2906, 32
        %v8495 = vpop.permute.xlu0 %8494
        %8496 = vrot.lane.b32.xlu0 %v2907, 32
        %v8497 = vpop.permute.xlu0 %8496
        %8498 = vrot.lane.b32.xlu0 %v2908, 32
        %v8499 = vpop.permute.xlu0 %8498
        %8500 = vrot.lane.b32.xlu0 %v2909, 32
        %v8501 = vpop.permute.xlu0 %8500
        %8518 = vmatpush.bf16.msra.mxu0 %v8485
        %8519 = vmatpush.bf16.msra.mxu0 %v8483
        %8520 = vmatpush.bf16.msra.mxu0 %v8481
        %8521 = vmatpush.bf16.msra.mxu0 %v8479
        %8522 = vmatpush.bf16.msra.mxu0 %v8477
        %8523 = vmatpush.bf16.msra.mxu0 %v8475
        %8524 = vmatpush.bf16.msra.mxu0 %v8473
        %8525 = vmatpush.bf16.msra.mxu0 %v8471
        %8526 = vmatmul.bf16.gmra.mxu0 %v8438
        %v8527 = vpop.f32.mrf.mxu0
        %v8528 = vadd.f32 0.0, %v8527
        %v8529 = vpop.f32.mrf.mxu0
        %v8530 = vadd.f32 0.0, %v8529
        %8531 = vmatmul.bf16.gmra.mxu0 %v8440
        %v8532 = vpop.f32.mrf.mxu0
        %v8533 = vadd.f32 0.0, %v8532
        %v8534 = vpop.f32.mrf.mxu0
        %v8535 = vadd.f32 0.0, %v8534
        %8536 = vmatmul.bf16.gmra.mxu0 %v8442
        %v8537 = vpop.f32.mrf.mxu0
        %v8538 = vadd.f32 0.0, %v8537
        %v8539 = vpop.f32.mrf.mxu0
        %v8540 = vadd.f32 0.0, %v8539
        %8541 = vmatmul.bf16.gmra.mxu0 %v8444
        %v8542 = vpop.f32.mrf.mxu0
        %v8543 = vadd.f32 0.0, %v8542
        %v8544 = vpop.f32.mrf.mxu0
        %v8545 = vadd.f32 0.0, %v8544
        %8546 = vmatmul.bf16.gmra.mxu0 %v8446
        %v8547 = vpop.f32.mrf.mxu0
        %v8548 = vadd.f32 0.0, %v8547
        %v8549 = vpop.f32.mrf.mxu0
        %v8550 = vadd.f32 0.0, %v8549
        %8551 = vmatmul.bf16.gmra.mxu0 %v8448
        %v8552 = vpop.f32.mrf.mxu0
        %v8553 = vadd.f32 0.0, %v8552
        %v8554 = vpop.f32.mrf.mxu0
        %v8555 = vadd.f32 0.0, %v8554
        %8556 = vmatmul.bf16.gmra.mxu0 %v8450
        %v8557 = vpop.f32.mrf.mxu0
        %v8558 = vadd.f32 0.0, %v8557
        %v8559 = vpop.f32.mrf.mxu0
        %v8560 = vadd.f32 0.0, %v8559
        %8561 = vmatmul.bf16.gmra.mxu0 %v8452
        %v8562 = vpop.f32.mrf.mxu0
        %v8563 = vadd.f32 0.0, %v8562
        %v8564 = vpop.f32.mrf.mxu0
        %v8565 = vadd.f32 0.0, %v8564
        %8566 = vmatmul.bf16.gmra.mxu0 %v8454
        %v8567 = vpop.f32.mrf.mxu0
        %v8568 = vadd.f32 0.0, %v8567
        %v8569 = vpop.f32.mrf.mxu0
        %v8570 = vadd.f32 0.0, %v8569
        %8571 = vmatmul.bf16.gmra.mxu0 %v8456
        %v8572 = vpop.f32.mrf.mxu0
        %v8573 = vadd.f32 0.0, %v8572
        %v8574 = vpop.f32.mrf.mxu0
        %v8575 = vadd.f32 0.0, %v8574
        %8576 = vmatmul.bf16.gmra.mxu0 %v8458
        %v8577 = vpop.f32.mrf.mxu0
        %v8578 = vadd.f32 0.0, %v8577
        %v8579 = vpop.f32.mrf.mxu0
        %v8580 = vadd.f32 0.0, %v8579
        %8581 = vmatmul.bf16.gmra.mxu0 %v8460
        %v8582 = vpop.f32.mrf.mxu0
        %v8583 = vadd.f32 0.0, %v8582
        %v8584 = vpop.f32.mrf.mxu0
        %v8585 = vadd.f32 0.0, %v8584
        %8586 = vmatmul.bf16.gmra.mxu0 %v8462
        %v8587 = vpop.f32.mrf.mxu0
        %v8588 = vadd.f32 0.0, %v8587
        %v8589 = vpop.f32.mrf.mxu0
        %v8590 = vadd.f32 0.0, %v8589
        %8591 = vmatmul.bf16.gmra.mxu0 %v8464
        %v8592 = vpop.f32.mrf.mxu0
        %v8593 = vadd.f32 0.0, %v8592
        %v8594 = vpop.f32.mrf.mxu0
        %v8595 = vadd.f32 0.0, %v8594
        %8596 = vmatmul.bf16.gmra.mxu0 %v8466
        %v8597 = vpop.f32.mrf.mxu0
        %v8598 = vadd.f32 0.0, %v8597
        %v8599 = vpop.f32.mrf.mxu0
        %v8600 = vadd.f32 0.0, %v8599
        %8601 = vmatmul.bf16.gmra.mxu0 %v8468
        %v8602 = vpop.f32.mrf.mxu0
        %v8603 = vadd.f32 0.0, %v8602
        %v8604 = vpop.f32.mrf.mxu0
        %v8605 = vadd.f32 0.0, %v8604
        %8606 = vdwg.mxu0
        %8607 = vmatpush.bf16.msra.mxu0 %v8501
        %8608 = vmatpush.bf16.msra.mxu0 %v8499
        %8609 = vmatpush.bf16.msra.mxu0 %v8497
        %8610 = vmatpush.bf16.msra.mxu0 %v8495
        %8611 = vmatpush.bf16.msra.mxu0 %v8493
        %8612 = vmatpush.bf16.msra.mxu0 %v8491
        %8613 = vmatpush.bf16.msra.mxu0 %v8489
        %8614 = vmatpush.bf16.msra.mxu0 %v8487
        %8615 = vmatmul.bf16.gmra.mxu0 %v8439
        %v8616 = vpop.f32.mrf.mxu0
        %v8617 = vadd.f32 %v8528, %v8616
        %v8618 = vpop.f32.mrf.mxu0
        %v8619 = vadd.f32 %v8530, %v8618
        %8620 = vmatmul.bf16.gmra.mxu0 %v8441
        %v8621 = vpop.f32.mrf.mxu0
        %v8622 = vadd.f32 %v8533, %v8621
        %v8623 = vpop.f32.mrf.mxu0
        %v8624 = vadd.f32 %v8535, %v8623
        %8625 = vmatmul.bf16.gmra.mxu0 %v8443
        %v8626 = vpop.f32.mrf.mxu0
        %v8627 = vadd.f32 %v8538, %v8626
        %v8628 = vpop.f32.mrf.mxu0
        %v8629 = vadd.f32 %v8540, %v8628
        %8630 = vmatmul.bf16.gmra.mxu0 %v8445
        %v8631 = vpop.f32.mrf.mxu0
        %v8632 = vadd.f32 %v8543, %v8631
        %v8633 = vpop.f32.mrf.mxu0
        %v8634 = vadd.f32 %v8545, %v8633
        %8635 = vmatmul.bf16.gmra.mxu0 %v8447
        %v8636 = vpop.f32.mrf.mxu0
        %v8637 = vadd.f32 %v8548, %v8636
        %v8638 = vpop.f32.mrf.mxu0
        %v8639 = vadd.f32 %v8550, %v8638
        %8640 = vmatmul.bf16.gmra.mxu0 %v8449
        %v8641 = vpop.f32.mrf.mxu0
        %v8642 = vadd.f32 %v8553, %v8641
        %v8643 = vpop.f32.mrf.mxu0
        %v8644 = vadd.f32 %v8555, %v8643
        %8645 = vmatmul.bf16.gmra.mxu0 %v8451
        %v8646 = vpop.f32.mrf.mxu0
        %v8647 = vadd.f32 %v8558, %v8646
        %v8648 = vpop.f32.mrf.mxu0
        %v8649 = vadd.f32 %v8560, %v8648
        %8650 = vmatmul.bf16.gmra.mxu0 %v8453
        %v8651 = vpop.f32.mrf.mxu0
        %v8652 = vadd.f32 %v8563, %v8651
        %v8653 = vpop.f32.mrf.mxu0
        %v8654 = vadd.f32 %v8565, %v8653
        %8655 = vmatmul.bf16.gmra.mxu0 %v8455
        %v8656 = vpop.f32.mrf.mxu0
        %v8657 = vadd.f32 %v8568, %v8656
        %v8658 = vpop.f32.mrf.mxu0
        %v8659 = vadd.f32 %v8570, %v8658
        %8660 = vmatmul.bf16.gmra.mxu0 %v8457
        %v8661 = vpop.f32.mrf.mxu0
        %v8662 = vadd.f32 %v8573, %v8661
        %v8663 = vpop.f32.mrf.mxu0
        %v8664 = vadd.f32 %v8575, %v8663
        %8665 = vmatmul.bf16.gmra.mxu0 %v8459
        %v8666 = vpop.f32.mrf.mxu0
        %v8667 = vadd.f32 %v8578, %v8666
        %v8668 = vpop.f32.mrf.mxu0
        %v8669 = vadd.f32 %v8580, %v8668
        %8670 = vmatmul.bf16.gmra.mxu0 %v8461
        %v8671 = vpop.f32.mrf.mxu0
        %v8672 = vadd.f32 %v8583, %v8671
        %v8673 = vpop.f32.mrf.mxu0
        %v8674 = vadd.f32 %v8585, %v8673
        %8675 = vmatmul.bf16.gmra.mxu0 %v8463
        %v8676 = vpop.f32.mrf.mxu0
        %v8677 = vadd.f32 %v8588, %v8676
        %v8678 = vpop.f32.mrf.mxu0
        %v8679 = vadd.f32 %v8590, %v8678
        %8680 = vmatmul.bf16.gmra.mxu0 %v8465
        %v8681 = vpop.f32.mrf.mxu0
        %v8682 = vadd.f32 %v8593, %v8681
        %v8683 = vpop.f32.mrf.mxu0
        %v8684 = vadd.f32 %v8595, %v8683
        %8685 = vmatmul.bf16.gmra.mxu0 %v8467
        %v8686 = vpop.f32.mrf.mxu0
        %v8687 = vadd.f32 %v8598, %v8686
        %v8688 = vpop.f32.mrf.mxu0
        %v8689 = vadd.f32 %v8600, %v8688
        %8690 = vmatmul.bf16.gmra.mxu0 %v8469
        %v8691 = vpop.f32.mrf.mxu0
        %v8692 = vadd.f32 %v8603, %v8691
        %v8693 = vpop.f32.mrf.mxu0
        %v8694 = vadd.f32 %v8605, %v8693
        %8695 = vdwg.mxu0
        %8697 = vset.pattern.permute.xlu0 0
        %8698 = vperm.xlu0 %8697, %v7766
        %v8699 = vpop.permute.xlu0 %8698
        %8702 = vset.pattern.permute.xlu0 0
        %8703 = vperm.xlu0 %8702, %v7768
        %v8704 = vpop.permute.xlu0 %8703
        %8707 = vset.pattern.permute.xlu0 0
        %8708 = vperm.xlu0 %8707, %v7770
        %v8709 = vpop.permute.xlu0 %8708
        %8712 = vset.pattern.permute.xlu0 0
        %8713 = vperm.xlu0 %8712, %v7772
        %v8714 = vpop.permute.xlu0 %8713
        %8717 = vset.pattern.permute.xlu0 0
        %8718 = vperm.xlu0 %8717, %v7774
        %v8719 = vpop.permute.xlu0 %8718
        %8722 = vset.pattern.permute.xlu0 0
        %8723 = vperm.xlu0 %8722, %v7776
        %v8724 = vpop.permute.xlu0 %8723
        %8727 = vset.pattern.permute.xlu0 0
        %8728 = vperm.xlu0 %8727, %v7778
        %v8729 = vpop.permute.xlu0 %8728
        %8732 = vset.pattern.permute.xlu0 0
        %8733 = vperm.xlu0 %8732, %v7780
        %v8734 = vpop.permute.xlu0 %8733
        %8737 = vset.pattern.permute.xlu0 0
        %8738 = vperm.xlu0 %8737, %v7782
        %v8739 = vpop.permute.xlu0 %8738
        %8742 = vset.pattern.permute.xlu0 0
        %8743 = vperm.xlu0 %8742, %v7784
        %v8744 = vpop.permute.xlu0 %8743
        %8747 = vset.pattern.permute.xlu0 0
        %8748 = vperm.xlu0 %8747, %v7786
        %v8749 = vpop.permute.xlu0 %8748
        %8752 = vset.pattern.permute.xlu0 0
        %8753 = vperm.xlu0 %8752, %v7788
        %v8754 = vpop.permute.xlu0 %8753
        %8757 = vset.pattern.permute.xlu0 0
        %8758 = vperm.xlu0 %8757, %v7790
        %v8759 = vpop.permute.xlu0 %8758
        %8762 = vset.pattern.permute.xlu0 0
        %8763 = vperm.xlu0 %8762, %v7792
        %v8764 = vpop.permute.xlu0 %8763
        %8767 = vset.pattern.permute.xlu0 0
        %8768 = vperm.xlu0 %8767, %v7794
        %v8769 = vpop.permute.xlu0 %8768
        %8772 = vset.pattern.permute.xlu0 0
        %8773 = vperm.xlu0 %8772, %v7796
        %v8774 = vpop.permute.xlu0 %8773
        %8777 = vset.pattern.permute.xlu0 0
        %8778 = vperm.xlu0 %8777, %v7798
        %v8779 = vpop.permute.xlu0 %8778
        %8782 = vset.pattern.permute.xlu0 0
        %8783 = vperm.xlu0 %8782, %v7800
        %v8784 = vpop.permute.xlu0 %8783
        %8787 = vset.pattern.permute.xlu0 0
        %8788 = vperm.xlu0 %8787, %v7802
        %v8789 = vpop.permute.xlu0 %8788
        %8792 = vset.pattern.permute.xlu0 0
        %8793 = vperm.xlu0 %8792, %v7804
        %v8794 = vpop.permute.xlu0 %8793
        %8797 = vset.pattern.permute.xlu0 0
        %8798 = vperm.xlu0 %8797, %v7806
        %v8799 = vpop.permute.xlu0 %8798
        %8802 = vset.pattern.permute.xlu0 0
        %8803 = vperm.xlu0 %8802, %v7808
        %v8804 = vpop.permute.xlu0 %8803
        %8807 = vset.pattern.permute.xlu0 0
        %8808 = vperm.xlu0 %8807, %v7810
        %v8809 = vpop.permute.xlu0 %8808
        %8812 = vset.pattern.permute.xlu0 0
        %8813 = vperm.xlu0 %8812, %v7812
        %v8814 = vpop.permute.xlu0 %8813
        %8817 = vset.pattern.permute.xlu0 0
        %8818 = vperm.xlu0 %8817, %v7814
        %v8819 = vpop.permute.xlu0 %8818
        %8822 = vset.pattern.permute.xlu0 0
        %8823 = vperm.xlu0 %8822, %v7816
        %v8824 = vpop.permute.xlu0 %8823
        %8827 = vset.pattern.permute.xlu0 0
        %8828 = vperm.xlu0 %8827, %v7818
        %v8829 = vpop.permute.xlu0 %8828
        %8832 = vset.pattern.permute.xlu0 0
        %8833 = vperm.xlu0 %8832, %v7820
        %v8834 = vpop.permute.xlu0 %8833
        %8837 = vset.pattern.permute.xlu0 0
        %8838 = vperm.xlu0 %8837, %v7822
        %v8839 = vpop.permute.xlu0 %8838
        %8842 = vset.pattern.permute.xlu0 0
        %8843 = vperm.xlu0 %8842, %v7824
        %v8844 = vpop.permute.xlu0 %8843
        %8847 = vset.pattern.permute.xlu0 0
        %8848 = vperm.xlu0 %8847, %v7826
        %v8849 = vpop.permute.xlu0 %8848
        %8852 = vset.pattern.permute.xlu0 0
        %8853 = vperm.xlu0 %8852, %v7828
        %v8854 = vpop.permute.xlu0 %8853
        %v8856 = vsel %vm1594, %v3107, %v4971
        %v8857 = vsel %vm1594, %v3112, %v4976
        %v8858 = vsel %vm1594, %v3117, %v4981
        %v8859 = vsel %vm1594, %v3122, %v4986
        %v8860 = vsel %vm1594, %v3127, %v4991
        %v8861 = vsel %vm1594, %v3132, %v4996
        %v8862 = vsel %vm1594, %v3137, %v5001
        %v8863 = vsel %vm1594, %v3142, %v5006
        %v8864 = vsel %vm1594, %v3147, %v5011
        %v8865 = vsel %vm1594, %v3152, %v5016
        %v8866 = vsel %vm1594, %v3157, %v5021
        %v8867 = vsel %vm1594, %v3162, %v5026
        %v8868 = vsel %vm1594, %v3167, %v5031
        %v8869 = vsel %vm1594, %v3172, %v5036
        %v8870 = vsel %vm1594, %v3177, %v5041
        %v8871 = vsel %vm1594, %v3182, %v5046
        %v8872 = vsel %vm1594, %v3187, %v5051
        %v8873 = vsel %vm1594, %v3192, %v5056
        %v8874 = vsel %vm1594, %v3197, %v5061
        %v8875 = vsel %vm1594, %v3202, %v5066
        %v8876 = vsel %vm1594, %v3207, %v5071
        %v8877 = vsel %vm1594, %v3212, %v5076
        %v8878 = vsel %vm1594, %v3217, %v5081
        %v8879 = vsel %vm1594, %v3222, %v5086
        %v8880 = vsel %vm1594, %v3227, %v5091
        %v8881 = vsel %vm1594, %v3232, %v5096
        %v8882 = vsel %vm1594, %v3237, %v5101
        %v8883 = vsel %vm1594, %v3242, %v5106
        %v8884 = vsel %vm1594, %v3247, %v5111
        %v8885 = vsel %vm1594, %v3252, %v5116
        %v8886 = vsel %vm1594, %v3257, %v5121
        %v8887 = vsel %vm1594, %v3262, %v5126
        %vm8888 = vcmask 523264
        %v8889 = vsel %vm8888, %v8856, %v6835
        %v8890 = vsel %vm8888, %v8857, %v6840
        %v8891 = vsel %vm8888, %v8858, %v6845
        %v8892 = vsel %vm8888, %v8859, %v6850
        %v8893 = vsel %vm8888, %v8860, %v6855
        %v8894 = vsel %vm8888, %v8861, %v6860
        %v8895 = vsel %vm8888, %v8862, %v6865
        %v8896 = vsel %vm8888, %v8863, %v6870
        %v8897 = vsel %vm8888, %v8864, %v6875
        %v8898 = vsel %vm8888, %v8865, %v6880
        %v8899 = vsel %vm8888, %v8866, %v6885
        %v8900 = vsel %vm8888, %v8867, %v6890
        %v8901 = vsel %vm8888, %v8868, %v6895
        %v8902 = vsel %vm8888, %v8869, %v6900
        %v8903 = vsel %vm8888, %v8870, %v6905
        %v8904 = vsel %vm8888, %v8871, %v6910
        %v8905 = vsel %vm8888, %v8872, %v6915
        %v8906 = vsel %vm8888, %v8873, %v6920
        %v8907 = vsel %vm8888, %v8874, %v6925
        %v8908 = vsel %vm8888, %v8875, %v6930
        %v8909 = vsel %vm8888, %v8876, %v6935
        %v8910 = vsel %vm8888, %v8877, %v6940
        %v8911 = vsel %vm8888, %v8878, %v6945
        %v8912 = vsel %vm8888, %v8879, %v6950
        %v8913 = vsel %vm8888, %v8880, %v6955
        %v8914 = vsel %vm8888, %v8881, %v6960
        %v8915 = vsel %vm8888, %v8882, %v6965
        %v8916 = vsel %vm8888, %v8883, %v6970
        %v8917 = vsel %vm8888, %v8884, %v6975
        %v8918 = vsel %vm8888, %v8885, %v6980
        %v8919 = vsel %vm8888, %v8886, %v6985
        %v8920 = vsel %vm8888, %v8887, %v6990
        %vm8921 = vcmask 785408
        %v8922 = vsel %vm8921, %v8889, %v8699
        %v8923 = vsel %vm8921, %v8890, %v8704
        %v8924 = vsel %vm8921, %v8891, %v8709
        %v8925 = vsel %vm8921, %v8892, %v8714
        %v8926 = vsel %vm8921, %v8893, %v8719
        %v8927 = vsel %vm8921, %v8894, %v8724
        %v8928 = vsel %vm8921, %v8895, %v8729
        %v8929 = vsel %vm8921, %v8896, %v8734
        %v8930 = vsel %vm8921, %v8897, %v8739
        %v8931 = vsel %vm8921, %v8898, %v8744
        %v8932 = vsel %vm8921, %v8899, %v8749
        %v8933 = vsel %vm8921, %v8900, %v8754
        %v8934 = vsel %vm8921, %v8901, %v8759
        %v8935 = vsel %vm8921, %v8902, %v8764
        %v8936 = vsel %vm8921, %v8903, %v8769
        %v8937 = vsel %vm8921, %v8904, %v8774
        %v8938 = vsel %vm8921, %v8905, %v8779
        %v8939 = vsel %vm8921, %v8906, %v8784
        %v8940 = vsel %vm8921, %v8907, %v8789
        %v8941 = vsel %vm8921, %v8908, %v8794
        %v8942 = vsel %vm8921, %v8909, %v8799
        %v8943 = vsel %vm8921, %v8910, %v8804
        %v8944 = vsel %vm8921, %v8911, %v8809
        %v8945 = vsel %vm8921, %v8912, %v8814
        %v8946 = vsel %vm8921, %v8913, %v8819
        %v8947 = vsel %vm8921, %v8914, %v8824
        %v8948 = vsel %vm8921, %v8915, %v8829
        %v8949 = vsel %vm8921, %v8916, %v8834
        %v8950 = vsel %vm8921, %v8917, %v8839
        %v8951 = vsel %vm8921, %v8918, %v8844
        %v8952 = vsel %vm8921, %v8919, %v8849
        %v8953 = vsel %vm8921, %v8920, %v8854
        %8986 = vrot.lane.b32.xlu0 %v4889, 32
        %v8987 = vpop.permute.xlu0 %8986
        %8988 = vrot.lane.b32.xlu0 %v4891, 32
        %v8989 = vpop.permute.xlu0 %8988
        %8990 = vrot.lane.b32.xlu0 %v4894, 32
        %v8991 = vpop.permute.xlu0 %8990
        %8992 = vrot.lane.b32.xlu0 %v4896, 32
        %v8993 = vpop.permute.xlu0 %8992
        %8994 = vrot.lane.b32.xlu0 %v4899, 32
        %v8995 = vpop.permute.xlu0 %8994
        %8996 = vrot.lane.b32.xlu0 %v4901, 32
        %v8997 = vpop.permute.xlu0 %8996
        %8998 = vrot.lane.b32.xlu0 %v4904, 32
        %v8999 = vpop.permute.xlu0 %8998
        %9000 = vrot.lane.b32.xlu0 %v4906, 32
        %v9001 = vpop.permute.xlu0 %9000
        %9002 = vrot.lane.b32.xlu0 %v4909, 32
        %v9003 = vpop.permute.xlu0 %9002
        %9004 = vrot.lane.b32.xlu0 %v4911, 32
        %v9005 = vpop.permute.xlu0 %9004
        %9006 = vrot.lane.b32.xlu0 %v4914, 32
        %v9007 = vpop.permute.xlu0 %9006
        %9008 = vrot.lane.b32.xlu0 %v4916, 32
        %v9009 = vpop.permute.xlu0 %9008
        %9010 = vrot.lane.b32.xlu0 %v4919, 32
        %v9011 = vpop.permute.xlu0 %9010
        %9012 = vrot.lane.b32.xlu0 %v4921, 32
        %v9013 = vpop.permute.xlu0 %9012
        %9014 = vrot.lane.b32.xlu0 %v4924, 32
        %v9015 = vpop.permute.xlu0 %9014
        %9016 = vrot.lane.b32.xlu0 %v4926, 32
        %v9017 = vpop.permute.xlu0 %9016
        %9018 = vrot.lane.b32.xlu0 %v4929, 32
        %v9019 = vpop.permute.xlu0 %9018
        %9020 = vrot.lane.b32.xlu0 %v4931, 32
        %v9021 = vpop.permute.xlu0 %9020
        %9022 = vrot.lane.b32.xlu0 %v4934, 32
        %v9023 = vpop.permute.xlu0 %9022
        %9024 = vrot.lane.b32.xlu0 %v4936, 32
        %v9025 = vpop.permute.xlu0 %9024
        %9026 = vrot.lane.b32.xlu0 %v4939, 32
        %v9027 = vpop.permute.xlu0 %9026
        %9028 = vrot.lane.b32.xlu0 %v4941, 32
        %v9029 = vpop.permute.xlu0 %9028
        %9030 = vrot.lane.b32.xlu0 %v4944, 32
        %v9031 = vpop.permute.xlu0 %9030
        %9032 = vrot.lane.b32.xlu0 %v4946, 32
        %v9033 = vpop.permute.xlu0 %9032
        %9034 = vrot.lane.b32.xlu0 %v4949, 32
        %v9035 = vpop.permute.xlu0 %9034
        %9036 = vrot.lane.b32.xlu0 %v4951, 32
        %v9037 = vpop.permute.xlu0 %9036
        %9038 = vrot.lane.b32.xlu0 %v4954, 32
        %v9039 = vpop.permute.xlu0 %9038
        %9040 = vrot.lane.b32.xlu0 %v4956, 32
        %v9041 = vpop.permute.xlu0 %9040
        %9042 = vrot.lane.b32.xlu0 %v4959, 32
        %v9043 = vpop.permute.xlu0 %9042
        %9044 = vrot.lane.b32.xlu0 %v4961, 32
        %v9045 = vpop.permute.xlu0 %9044
        %9046 = vrot.lane.b32.xlu0 %v4964, 32
        %v9047 = vpop.permute.xlu0 %9046
        %9048 = vrot.lane.b32.xlu0 %v4966, 32
        %v9049 = vpop.permute.xlu0 %9048
        %9114 = vrot.lane.b32.xlu0 %v6753, 64
        %v9115 = vpop.permute.xlu0 %9114
        %9116 = vrot.lane.b32.xlu0 %v6755, 64
        %v9117 = vpop.permute.xlu0 %9116
        %9118 = vrot.lane.b32.xlu0 %v6758, 64
        %v9119 = vpop.permute.xlu0 %9118
        %9120 = vrot.lane.b32.xlu0 %v6760, 64
        %v9121 = vpop.permute.xlu0 %9120
        %9122 = vrot.lane.b32.xlu0 %v6763, 64
        %v9123 = vpop.permute.xlu0 %9122
        %9124 = vrot.lane.b32.xlu0 %v6765, 64
        %v9125 = vpop.permute.xlu0 %9124
        %9126 = vrot.lane.b32.xlu0 %v6768, 64
        %v9127 = vpop.permute.xlu0 %9126
        %9128 = vrot.lane.b32.xlu0 %v6770, 64
        %v9129 = vpop.permute.xlu0 %9128
        %9130 = vrot.lane.b32.xlu0 %v6773, 64
        %v9131 = vpop.permute.xlu0 %9130
        %9132 = vrot.lane.b32.xlu0 %v6775, 64
        %v9133 = vpop.permute.xlu0 %9132
        %9134 = vrot.lane.b32.xlu0 %v6778, 64
        %v9135 = vpop.permute.xlu0 %9134
        %9136 = vrot.lane.b32.xlu0 %v6780, 64
        %v9137 = vpop.permute.xlu0 %9136
        %9138 = vrot.lane.b32.xlu0 %v6783, 64
        %v9139 = vpop.permute.xlu0 %9138
        %9140 = vrot.lane.b32.xlu0 %v6785, 64
        %v9141 = vpop.permute.xlu0 %9140
        %9142 = vrot.lane.b32.xlu0 %v6788, 64
        %v9143 = vpop.permute.xlu0 %9142
        %9144 = vrot.lane.b32.xlu0 %v6790, 64
        %v9145 = vpop.permute.xlu0 %9144
        %9146 = vrot.lane.b32.xlu0 %v6793, 64
        %v9147 = vpop.permute.xlu0 %9146
        %9148 = vrot.lane.b32.xlu0 %v6795, 64
        %v9149 = vpop.permute.xlu0 %9148
        %9150 = vrot.lane.b32.xlu0 %v6798, 64
        %v9151 = vpop.permute.xlu0 %9150
        %9152 = vrot.lane.b32.xlu0 %v6800, 64
        %v9153 = vpop.permute.xlu0 %9152
        %9154 = vrot.lane.b32.xlu0 %v6803, 64
        %v9155 = vpop.permute.xlu0 %9154
        %9156 = vrot.lane.b32.xlu0 %v6805, 64
        %v9157 = vpop.permute.xlu0 %9156
        %9158 = vrot.lane.b32.xlu0 %v6808, 64
        %v9159 = vpop.permute.xlu0 %9158
        %9160 = vrot.lane.b32.xlu0 %v6810, 64
        %v9161 = vpop.permute.xlu0 %9160
        %9162 = vrot.lane.b32.xlu0 %v6813, 64
        %v9163 = vpop.permute.xlu0 %9162
        %9164 = vrot.lane.b32.xlu0 %v6815, 64
        %v9165 = vpop.permute.xlu0 %9164
        %9166 = vrot.lane.b32.xlu0 %v6818, 64
        %v9167 = vpop.permute.xlu0 %9166
        %9168 = vrot.lane.b32.xlu0 %v6820, 64
        %v9169 = vpop.permute.xlu0 %9168
        %9170 = vrot.lane.b32.xlu0 %v6823, 64
        %v9171 = vpop.permute.xlu0 %9170
        %9172 = vrot.lane.b32.xlu0 %v6825, 64
        %v9173 = vpop.permute.xlu0 %9172
        %9174 = vrot.lane.b32.xlu0 %v6828, 64
        %v9175 = vpop.permute.xlu0 %9174
        %9176 = vrot.lane.b32.xlu0 %v6830, 64
        %v9177 = vpop.permute.xlu0 %9176
        %9242 = vrot.lane.b32.xlu0 %v8617, 96
        %v9243 = vpop.permute.xlu0 %9242
        %9244 = vrot.lane.b32.xlu0 %v8619, 96
        %v9245 = vpop.permute.xlu0 %9244
        %9246 = vrot.lane.b32.xlu0 %v8622, 96
        %v9247 = vpop.permute.xlu0 %9246
        %9248 = vrot.lane.b32.xlu0 %v8624, 96
        %v9249 = vpop.permute.xlu0 %9248
        %9250 = vrot.lane.b32.xlu0 %v8627, 96
        %v9251 = vpop.permute.xlu0 %9250
        %9252 = vrot.lane.b32.xlu0 %v8629, 96
        %v9253 = vpop.permute.xlu0 %9252
        %9254 = vrot.lane.b32.xlu0 %v8632, 96
        %v9255 = vpop.permute.xlu0 %9254
        %9256 = vrot.lane.b32.xlu0 %v8634, 96
        %v9257 = vpop.permute.xlu0 %9256
        %9258 = vrot.lane.b32.xlu0 %v8637, 96
        %v9259 = vpop.permute.xlu0 %9258
        %9260 = vrot.lane.b32.xlu0 %v8639, 96
        %v9261 = vpop.permute.xlu0 %9260
        %9262 = vrot.lane.b32.xlu0 %v8642, 96
        %v9263 = vpop.permute.xlu0 %9262
        %9264 = vrot.lane.b32.xlu0 %v8644, 96
        %v9265 = vpop.permute.xlu0 %9264
        %9266 = vrot.lane.b32.xlu0 %v8647, 96
        %v9267 = vpop.permute.xlu0 %9266
        %9268 = vrot.lane.b32.xlu0 %v8649, 96
        %v9269 = vpop.permute.xlu0 %9268
        %9270 = vrot.lane.b32.xlu0 %v8652, 96
        %v9271 = vpop.permute.xlu0 %9270
        %9272 = vrot.lane.b32.xlu0 %v8654, 96
        %v9273 = vpop.permute.xlu0 %9272
        %9274 = vrot.lane.b32.xlu0 %v8657, 96
        %v9275 = vpop.permute.xlu0 %9274
        %9276 = vrot.lane.b32.xlu0 %v8659, 96
        %v9277 = vpop.permute.xlu0 %9276
        %9278 = vrot.lane.b32.xlu0 %v8662, 96
        %v9279 = vpop.permute.xlu0 %9278
        %9280 = vrot.lane.b32.xlu0 %v8664, 96
        %v9281 = vpop.permute.xlu0 %9280
        %9282 = vrot.lane.b32.xlu0 %v8667, 96
        %v9283 = vpop.permute.xlu0 %9282
        %9284 = vrot.lane.b32.xlu0 %v8669, 96
        %v9285 = vpop.permute.xlu0 %9284
        %9286 = vrot.lane.b32.xlu0 %v8672, 96
        %v9287 = vpop.permute.xlu0 %9286
        %9288 = vrot.lane.b32.xlu0 %v8674, 96
        %v9289 = vpop.permute.xlu0 %9288
        %9290 = vrot.lane.b32.xlu0 %v8677, 96
        %v9291 = vpop.permute.xlu0 %9290
        %9292 = vrot.lane.b32.xlu0 %v8679, 96
        %v9293 = vpop.permute.xlu0 %9292
        %9294 = vrot.lane.b32.xlu0 %v8682, 96
        %v9295 = vpop.permute.xlu0 %9294
        %9296 = vrot.lane.b32.xlu0 %v8684, 96
        %v9297 = vpop.permute.xlu0 %9296
        %9298 = vrot.lane.b32.xlu0 %v8687, 96
        %v9299 = vpop.permute.xlu0 %9298
        %9300 = vrot.lane.b32.xlu0 %v8689, 96
        %v9301 = vpop.permute.xlu0 %9300
        %9302 = vrot.lane.b32.xlu0 %v8692, 96
        %v9303 = vpop.permute.xlu0 %9302
        %9304 = vrot.lane.b32.xlu0 %v8694, 96
        %v9305 = vpop.permute.xlu0 %9304
        %v9338 = vsel %vm1594, %v3025, %v8987
        %v9339 = vsel %vm1594, %v3027, %v8989
        %v9340 = vsel %vm1594, %v3030, %v8991
        %v9341 = vsel %vm1594, %v3032, %v8993
        %v9342 = vsel %vm1594, %v3035, %v8995
        %v9343 = vsel %vm1594, %v3037, %v8997
        %v9344 = vsel %vm1594, %v3040, %v8999
        %v9345 = vsel %vm1594, %v3042, %v9001
        %v9346 = vsel %vm1594, %v3045, %v9003
        %v9347 = vsel %vm1594, %v3047, %v9005
        %v9348 = vsel %vm1594, %v3050, %v9007
        %v9349 = vsel %vm1594, %v3052, %v9009
        %v9350 = vsel %vm1594, %v3055, %v9011
        %v9351 = vsel %vm1594, %v3057, %v9013
        %v9352 = vsel %vm1594, %v3060, %v9015
        %v9353 = vsel %vm1594, %v3062, %v9017
        %v9354 = vsel %vm1594, %v3065, %v9019
        %v9355 = vsel %vm1594, %v3067, %v9021
        %v9356 = vsel %vm1594, %v3070, %v9023
        %v9357 = vsel %vm1594, %v3072, %v9025
        %v9358 = vsel %vm1594, %v3075, %v9027
        %v9359 = vsel %vm1594, %v3077, %v9029
        %v9360 = vsel %vm1594, %v3080, %v9031
        %v9361 = vsel %vm1594, %v3082, %v9033
        %v9362 = vsel %vm1594, %v3085, %v9035
        %v9363 = vsel %vm1594, %v3087, %v9037
        %v9364 = vsel %vm1594, %v3090, %v9039
        %v9365 = vsel %vm1594, %v3092, %v9041
        %v9366 = vsel %vm1594, %v3095, %v9043
        %v9367 = vsel %vm1594, %v3097, %v9045
        %v9368 = vsel %vm1594, %v3100, %v9047
        %v9369 = vsel %vm1594, %v3102, %v9049
        %v9370 = vsel %vm8888, %v9338, %v9115
        %v9371 = vsel %vm8888, %v9339, %v9117
        %v9372 = vsel %vm8888, %v9340, %v9119
        %v9373 = vsel %vm8888, %v9341, %v9121
        %v9374 = vsel %vm8888, %v9342, %v9123
        %v9375 = vsel %vm8888, %v9343, %v9125
        %v9376 = vsel %vm8888, %v9344, %v9127
        %v9377 = vsel %vm8888, %v9345, %v9129
        %v9378 = vsel %vm8888, %v9346, %v9131
        %v9379 = vsel %vm8888, %v9347, %v9133
        %v9380 = vsel %vm8888, %v9348, %v9135
        %v9381 = vsel %vm8888, %v9349, %v9137
        %v9382 = vsel %vm8888, %v9350, %v9139
        %v9383 = vsel %vm8888, %v9351, %v9141
        %v9384 = vsel %vm8888, %v9352, %v9143
        %v9385 = vsel %vm8888, %v9353, %v9145
        %v9386 = vsel %vm8888, %v9354, %v9147
        %v9387 = vsel %vm8888, %v9355, %v9149
        %v9388 = vsel %vm8888, %v9356, %v9151
        %v9389 = vsel %vm8888, %v9357, %v9153
        %v9390 = vsel %vm8888, %v9358, %v9155
        %v9391 = vsel %vm8888, %v9359, %v9157
        %v9392 = vsel %vm8888, %v9360, %v9159
        %v9393 = vsel %vm8888, %v9361, %v9161
        %v9394 = vsel %vm8888, %v9362, %v9163
        %v9395 = vsel %vm8888, %v9363, %v9165
        %v9396 = vsel %vm8888, %v9364, %v9167
        %v9397 = vsel %vm8888, %v9365, %v9169
        %v9398 = vsel %vm8888, %v9366, %v9171
        %v9399 = vsel %vm8888, %v9367, %v9173
        %v9400 = vsel %vm8888, %v9368, %v9175
        %v9401 = vsel %vm8888, %v9369, %v9177
        %v9402 = vsel %vm8921, %v9370, %v9243
        %v9403 = vsel %vm8921, %v9371, %v9245
        %v9404 = vsel %vm8921, %v9372, %v9247
        %v9405 = vsel %vm8921, %v9373, %v9249
        %v9406 = vsel %vm8921, %v9374, %v9251
        %v9407 = vsel %vm8921, %v9375, %v9253
        %v9408 = vsel %vm8921, %v9376, %v9255
        %v9409 = vsel %vm8921, %v9377, %v9257
        %v9410 = vsel %vm8921, %v9378, %v9259
        %v9411 = vsel %vm8921, %v9379, %v9261
        %v9412 = vsel %vm8921, %v9380, %v9263
        %v9413 = vsel %vm8921, %v9381, %v9265
        %v9414 = vsel %vm8921, %v9382, %v9267
        %v9415 = vsel %vm8921, %v9383, %v9269
        %v9416 = vsel %vm8921, %v9384, %v9271
        %v9417 = vsel %vm8921, %v9385, %v9273
        %v9418 = vsel %vm8921, %v9386, %v9275
        %v9419 = vsel %vm8921, %v9387, %v9277
        %v9420 = vsel %vm8921, %v9388, %v9279
        %v9421 = vsel %vm8921, %v9389, %v9281
        %v9422 = vsel %vm8921, %v9390, %v9283
        %v9423 = vsel %vm8921, %v9391, %v9285
        %v9424 = vsel %vm8921, %v9392, %v9287
        %v9425 = vsel %vm8921, %v9393, %v9289
        %v9426 = vsel %vm8921, %v9394, %v9291
        %v9427 = vsel %vm8921, %v9395, %v9293
        %v9428 = vsel %vm8921, %v9396, %v9295
        %v9429 = vsel %vm8921, %v9397, %v9297
        %v9430 = vsel %vm8921, %v9398, %v9299
        %v9431 = vsel %vm8921, %v9399, %v9301
        %v9432 = vsel %vm8921, %v9400, %v9303
        %v9433 = vsel %vm8921, %v9401, %v9305
        %v9434 = vld [vmem:[#allocation5] sm:$0xff]
        %v9435 = vld [vmem:[#allocation5 + $0x8] sm:$0xff]
        %v9436 = vld [vmem:[#allocation5 + $0x10] sm:$0xff]
        %v9437 = vld [vmem:[#allocation5 + $0x18] sm:$0xff]
        %v9438 = vld [vmem:[#allocation5 + $0x20] sm:$0xff]
        %v9439 = vld [vmem:[#allocation5 + $0x28] sm:$0xff]
        %v9440 = vld [vmem:[#allocation5 + $0x30] sm:$0xff]
        %v9441 = vld [vmem:[#allocation5 + $0x38] sm:$0xff]
        %v9442 = vld [vmem:[#allocation5 + $0x40] sm:$0xff]
        %v9443 = vld [vmem:[#allocation5 + $0x48] sm:$0xff]
        %v9444 = vld [vmem:[#allocation5 + $0x50] sm:$0xff]
        %v9445 = vld [vmem:[#allocation5 + $0x58] sm:$0xff]
        %v9446 = vld [vmem:[#allocation5 + $0x60] sm:$0xff]
        %v9447 = vld [vmem:[#allocation5 + $0x68] sm:$0xff]
        %v9448 = vld [vmem:[#allocation5 + $0x70] sm:$0xff]
        %v9449 = vld [vmem:[#allocation5 + $0x78] sm:$0xff]
        %v9450 = vld [vmem:[#allocation5 + $0x80] sm:$0xff]
        %v9451 = vld [vmem:[#allocation5 + $0x88] sm:$0xff]
        %v9452 = vld [vmem:[#allocation5 + $0x90] sm:$0xff]
        %v9453 = vld [vmem:[#allocation5 + $0x98] sm:$0xff]
        %v9454 = vld [vmem:[#allocation5 + $0xa0] sm:$0xff]
        %v9455 = vld [vmem:[#allocation5 + $0xa8] sm:$0xff]
        %v9456 = vld [vmem:[#allocation5 + $0xb0] sm:$0xff]
        %v9457 = vld [vmem:[#allocation5 + $0xb8] sm:$0xff]
        %v9458 = vld [vmem:[#allocation5 + $0xc0] sm:$0xff]
        %v9459 = vld [vmem:[#allocation5 + $0xc8] sm:$0xff]
        %v9460 = vld [vmem:[#allocation5 + $0xd0] sm:$0xff]
        %v9461 = vld [vmem:[#allocation5 + $0xd8] sm:$0xff]
        %v9462 = vld [vmem:[#allocation5 + $0xe0] sm:$0xff]
        %v9463 = vld [vmem:[#allocation5 + $0xe8] sm:$0xff]
        %v9464 = vld [vmem:[#allocation5 + $0xf0] sm:$0xff]
        %v9465 = vld [vmem:[#allocation5 + $0xf8] sm:$0xff]
        %v9466 = vmul.f32 %v8922, %v9434
        %v9467 = vmul.f32 %v8923, %v9435
        %v9468 = vmul.f32 %v8924, %v9436
        %v9469 = vmul.f32 %v8925, %v9437
        %v9470 = vmul.f32 %v8926, %v9438
        %v9471 = vmul.f32 %v8927, %v9439
        %v9472 = vmul.f32 %v8928, %v9440
        %v9473 = vmul.f32 %v8929, %v9441
        %v9474 = vmul.f32 %v8930, %v9442
        %v9475 = vmul.f32 %v8931, %v9443
        %v9476 = vmul.f32 %v8932, %v9444
        %v9477 = vmul.f32 %v8933, %v9445
        %v9478 = vmul.f32 %v8934, %v9446
        %v9479 = vmul.f32 %v8935, %v9447
        %v9480 = vmul.f32 %v8936, %v9448
        %v9481 = vmul.f32 %v8937, %v9449
        %v9482 = vmul.f32 %v8938, %v9450
        %v9483 = vmul.f32 %v8939, %v9451
        %v9484 = vmul.f32 %v8940, %v9452
        %v9485 = vmul.f32 %v8941, %v9453
        %v9486 = vmul.f32 %v8942, %v9454
        %v9487 = vmul.f32 %v8943, %v9455
        %v9488 = vmul.f32 %v8944, %v9456
        %v9489 = vmul.f32 %v8945, %v9457
        %v9490 = vmul.f32 %v8946, %v9458
        %v9491 = vmul.f32 %v8947, %v9459
        %v9492 = vmul.f32 %v8948, %v9460
        %v9493 = vmul.f32 %v8949, %v9461
        %v9494 = vmul.f32 %v8950, %v9462
        %v9495 = vmul.f32 %v8951, %v9463
        %v9496 = vmul.f32 %v8952, %v9464
        %v9497 = vmul.f32 %v8953, %v9465
        %v9498 = vadd.f32 %v9466, %v9402
        %v9499 = vadd.f32 %v9467, %v9403
        %v9500 = vadd.f32 %v9468, %v9404
        %v9501 = vadd.f32 %v9469, %v9405
        %v9502 = vadd.f32 %v9470, %v9406
        %v9503 = vadd.f32 %v9471, %v9407
        %v9504 = vadd.f32 %v9472, %v9408
        %v9505 = vadd.f32 %v9473, %v9409
        %v9506 = vadd.f32 %v9474, %v9410
        %v9507 = vadd.f32 %v9475, %v9411
        %v9508 = vadd.f32 %v9476, %v9412
        %v9509 = vadd.f32 %v9477, %v9413
        %v9510 = vadd.f32 %v9478, %v9414
        %v9511 = vadd.f32 %v9479, %v9415
        %v9512 = vadd.f32 %v9480, %v9416
        %v9513 = vadd.f32 %v9481, %v9417
        %v9514 = vadd.f32 %v9482, %v9418
        %v9515 = vadd.f32 %v9483, %v9419
        %v9516 = vadd.f32 %v9484, %v9420
        %v9517 = vadd.f32 %v9485, %v9421
        %v9518 = vadd.f32 %v9486, %v9422
        %v9519 = vadd.f32 %v9487, %v9423
        %v9520 = vadd.f32 %v9488, %v9424
        %v9521 = vadd.f32 %v9489, %v9425
        %v9522 = vadd.f32 %v9490, %v9426
        %v9523 = vadd.f32 %v9491, %v9427
        %v9524 = vadd.f32 %v9492, %v9428
        %v9525 = vadd.f32 %v9493, %v9429
        %v9526 = vadd.f32 %v9494, %v9430
        %v9527 = vadd.f32 %v9495, %v9431
        %v9528 = vadd.f32 %v9496, %v9432
        %v9529 = vadd.f32 %v9497, %v9433
        %9530 = vst [vmem:[#allocation5] sm:$0xff] %v9498
        %9531 = vst [vmem:[#allocation5 + $0x8] sm:$0xff] %v9499
        %9532 = vst [vmem:[#allocation5 + $0x10] sm:$0xff] %v9500
        %9533 = vst [vmem:[#allocation5 + $0x18] sm:$0xff] %v9501
        %9534 = vst [vmem:[#allocation5 + $0x20] sm:$0xff] %v9502
        %9535 = vst [vmem:[#allocation5 + $0x28] sm:$0xff] %v9503
        %9536 = vst [vmem:[#allocation5 + $0x30] sm:$0xff] %v9504
        %9537 = vst [vmem:[#allocation5 + $0x38] sm:$0xff] %v9505
        %9538 = vst [vmem:[#allocation5 + $0x40] sm:$0xff] %v9506
        %9539 = vst [vmem:[#allocation5 + $0x48] sm:$0xff] %v9507
        %9540 = vst [vmem:[#allocation5 + $0x50] sm:$0xff] %v9508
        %9541 = vst [vmem:[#allocation5 + $0x58] sm:$0xff] %v9509
        %9542 = vst [vmem:[#allocation5 + $0x60] sm:$0xff] %v9510
        %9543 = vst [vmem:[#allocation5 + $0x68] sm:$0xff] %v9511
        %9544 = vst [vmem:[#allocation5 + $0x70] sm:$0xff] %v9512
        %9545 = vst [vmem:[#allocation5 + $0x78] sm:$0xff] %v9513
        %9546 = vst [vmem:[#allocation5 + $0x80] sm:$0xff] %v9514
        %9547 = vst [vmem:[#allocation5 + $0x88] sm:$0xff] %v9515
        %9548 = vst [vmem:[#allocation5 + $0x90] sm:$0xff] %v9516
        %9549 = vst [vmem:[#allocation5 + $0x98] sm:$0xff] %v9517
        %9550 = vst [vmem:[#allocation5 + $0xa0] sm:$0xff] %v9518
        %9551 = vst [vmem:[#allocation5 + $0xa8] sm:$0xff] %v9519
        %9552 = vst [vmem:[#allocation5 + $0xb0] sm:$0xff] %v9520
        %9553 = vst [vmem:[#allocation5 + $0xb8] sm:$0xff] %v9521
        %9554 = vst [vmem:[#allocation5 + $0xc0] sm:$0xff] %v9522
        %9555 = vst [vmem:[#allocation5 + $0xc8] sm:$0xff] %v9523
        %9556 = vst [vmem:[#allocation5 + $0xd0] sm:$0xff] %v9524
        %9557 = vst [vmem:[#allocation5 + $0xd8] sm:$0xff] %v9525
        %9558 = vst [vmem:[#allocation5 + $0xe0] sm:$0xff] %v9526
        %9559 = vst [vmem:[#allocation5 + $0xe8] sm:$0xff] %v9527
        %9560 = vst [vmem:[#allocation5 + $0xf0] sm:$0xff] %v9528
        %9561 = vst [vmem:[#allocation5 + $0xf8] sm:$0xff] %v9529
        // Predicated region
        $region45: #{distributed_attention_global0_forward.1} parent=35 // pred_check
          %p9562 = pneg %p369
        $region46: #{distributed_attention_global0_forward.1} parent=35 // pred_check_branch
          %9564 = sbr.rel (%p9562) target = $region48
        $region47: #{distributed_attention_global0_forward.1} parent=35 // pred_region
          %v9565 = vld [vmem:[#allocation4] sm:$0xff]
          %v9566 = vld [vmem:[#allocation4 + $0x8] sm:$0xff]
          %v9567 = vld [vmem:[#allocation4 + $0x10] sm:$0xff]
          %v9568 = vld [vmem:[#allocation4 + $0x18] sm:$0xff]
          %v9569 = vld [vmem:[#allocation4 + $0x20] sm:$0xff]
          %v9570 = vld [vmem:[#allocation4 + $0x28] sm:$0xff]
          %v9571 = vld [vmem:[#allocation4 + $0x30] sm:$0xff]
          %v9572 = vld [vmem:[#allocation4 + $0x38] sm:$0xff]
          %v9573 = vld [vmem:[#allocation4 + $0x40] sm:$0xff]
          %v9574 = vld [vmem:[#allocation4 + $0x48] sm:$0xff]
          %v9575 = vld [vmem:[#allocation4 + $0x50] sm:$0xff]
          %v9576 = vld [vmem:[#allocation4 + $0x58] sm:$0xff]
          %v9577 = vld [vmem:[#allocation4 + $0x60] sm:$0xff]
          %v9578 = vld [vmem:[#allocation4 + $0x68] sm:$0xff]
          %v9579 = vld [vmem:[#allocation4 + $0x70] sm:$0xff]
          %v9580 = vld [vmem:[#allocation4 + $0x78] sm:$0xff]
          %v9581 = vld [vmem:[#allocation4 + $0x80] sm:$0xff]
          %v9582 = vld [vmem:[#allocation4 + $0x88] sm:$0xff]
          %v9583 = vld [vmem:[#allocation4 + $0x90] sm:$0xff]
          %v9584 = vld [vmem:[#allocation4 + $0x98] sm:$0xff]
          %v9585 = vld [vmem:[#allocation4 + $0xa0] sm:$0xff]
          %v9586 = vld [vmem:[#allocation4 + $0xa8] sm:$0xff]
          %v9587 = vld [vmem:[#allocation4 + $0xb0] sm:$0xff]
          %v9588 = vld [vmem:[#allocation4 + $0xb8] sm:$0xff]
          %v9589 = vld [vmem:[#allocation4 + $0xc0] sm:$0xff]
          %v9590 = vld [vmem:[#allocation4 + $0xc8] sm:$0xff]
          %v9591 = vld [vmem:[#allocation4 + $0xd0] sm:$0xff]
          %v9592 = vld [vmem:[#allocation4 + $0xd8] sm:$0xff]
          %v9593 = vld [vmem:[#allocation4 + $0xe0] sm:$0xff]
          %v9594 = vld [vmem:[#allocation4 + $0xe8] sm:$0xff]
          %v9595 = vld [vmem:[#allocation4 + $0xf0] sm:$0xff]
          %v9596 = vld [vmem:[#allocation4 + $0xf8] sm:$0xff]
          %vm9597 = vcmp.eq.f32.partialorder %v9565, 0.0
          %vm9598 = vcmp.eq.f32.partialorder %v9566, 0.0
          %vm9599 = vcmp.eq.f32.partialorder %v9567, 0.0
          %vm9600 = vcmp.eq.f32.partialorder %v9568, 0.0
          %vm9601 = vcmp.eq.f32.partialorder %v9569, 0.0
          %vm9602 = vcmp.eq.f32.partialorder %v9570, 0.0
          %vm9603 = vcmp.eq.f32.partialorder %v9571, 0.0
          %vm9604 = vcmp.eq.f32.partialorder %v9572, 0.0
          %vm9605 = vcmp.eq.f32.partialorder %v9573, 0.0
          %vm9606 = vcmp.eq.f32.partialorder %v9574, 0.0
          %vm9607 = vcmp.eq.f32.partialorder %v9575, 0.0
          %vm9608 = vcmp.eq.f32.partialorder %v9576, 0.0
          %vm9609 = vcmp.eq.f32.partialorder %v9577, 0.0
          %vm9610 = vcmp.eq.f32.partialorder %v9578, 0.0
          %vm9611 = vcmp.eq.f32.partialorder %v9579, 0.0
          %vm9612 = vcmp.eq.f32.partialorder %v9580, 0.0
          %vm9613 = vcmp.eq.f32.partialorder %v9581, 0.0
          %vm9614 = vcmp.eq.f32.partialorder %v9582, 0.0
          %vm9615 = vcmp.eq.f32.partialorder %v9583, 0.0
          %vm9616 = vcmp.eq.f32.partialorder %v9584, 0.0
          %vm9617 = vcmp.eq.f32.partialorder %v9585, 0.0
          %vm9618 = vcmp.eq.f32.partialorder %v9586, 0.0
          %vm9619 = vcmp.eq.f32.partialorder %v9587, 0.0
          %vm9620 = vcmp.eq.f32.partialorder %v9588, 0.0
          %vm9621 = vcmp.eq.f32.partialorder %v9589, 0.0
          %vm9622 = vcmp.eq.f32.partialorder %v9590, 0.0
          %vm9623 = vcmp.eq.f32.partialorder %v9591, 0.0
          %vm9624 = vcmp.eq.f32.partialorder %v9592, 0.0
          %vm9625 = vcmp.eq.f32.partialorder %v9593, 0.0
          %vm9626 = vcmp.eq.f32.partialorder %v9594, 0.0
          %vm9627 = vcmp.eq.f32.partialorder %v9595, 0.0
          %vm9628 = vcmp.eq.f32.partialorder %v9596, 0.0
          %v9629 = vsel %vm9597, 1.0, %v9565
          %v9630 = vsel %vm9598, 1.0, %v9566
          %v9631 = vsel %vm9599, 1.0, %v9567
          %v9632 = vsel %vm9600, 1.0, %v9568
          %v9633 = vsel %vm9601, 1.0, %v9569
          %v9634 = vsel %vm9602, 1.0, %v9570
          %v9635 = vsel %vm9603, 1.0, %v9571
          %v9636 = vsel %vm9604, 1.0, %v9572
          %v9637 = vsel %vm9605, 1.0, %v9573
          %v9638 = vsel %vm9606, 1.0, %v9574
          %v9639 = vsel %vm9607, 1.0, %v9575
          %v9640 = vsel %vm9608, 1.0, %v9576
          %v9641 = vsel %vm9609, 1.0, %v9577
          %v9642 = vsel %vm9610, 1.0, %v9578
          %v9643 = vsel %vm9611, 1.0, %v9579
          %v9644 = vsel %vm9612, 1.0, %v9580
          %v9645 = vsel %vm9613, 1.0, %v9581
          %v9646 = vsel %vm9614, 1.0, %v9582
          %v9647 = vsel %vm9615, 1.0, %v9583
          %v9648 = vsel %vm9616, 1.0, %v9584
          %v9649 = vsel %vm9617, 1.0, %v9585
          %v9650 = vsel %vm9618, 1.0, %v9586
          %v9651 = vsel %vm9619, 1.0, %v9587
          %v9652 = vsel %vm9620, 1.0, %v9588
          %v9653 = vsel %vm9621, 1.0, %v9589
          %v9654 = vsel %vm9622, 1.0, %v9590
          %v9655 = vsel %vm9623, 1.0, %v9591
          %v9656 = vsel %vm9624, 1.0, %v9592
          %v9657 = vsel %vm9625, 1.0, %v9593
          %v9658 = vsel %vm9626, 1.0, %v9594
          %v9659 = vsel %vm9627, 1.0, %v9595
          %v9660 = vsel %vm9628, 1.0, %v9596
          %v9661 = vrcp.pop %v9629
          %v9662 = vrcp.pop %v9630
          %v9663 = vrcp.pop %v9631
          %v9664 = vrcp.pop %v9632
          %v9665 = vrcp.pop %v9633
          %v9666 = vrcp.pop %v9634
          %v9667 = vrcp.pop %v9635
          %v9668 = vrcp.pop %v9636
          %v9669 = vrcp.pop %v9637
          %v9670 = vrcp.pop %v9638
          %v9671 = vrcp.pop %v9639
          %v9672 = vrcp.pop %v9640
          %v9673 = vrcp.pop %v9641
          %v9674 = vrcp.pop %v9642
          %v9675 = vrcp.pop %v9643
          %v9676 = vrcp.pop %v9644
          %v9677 = vrcp.pop %v9645
          %v9678 = vrcp.pop %v9646
          %v9679 = vrcp.pop %v9647
          %v9680 = vrcp.pop %v9648
          %v9681 = vrcp.pop %v9649
          %v9682 = vrcp.pop %v9650
          %v9683 = vrcp.pop %v9651
          %v9684 = vrcp.pop %v9652
          %v9685 = vrcp.pop %v9653
          %v9686 = vrcp.pop %v9654
          %v9687 = vrcp.pop %v9655
          %v9688 = vrcp.pop %v9656
          %v9689 = vrcp.pop %v9657
          %v9690 = vrcp.pop %v9658
          %v9691 = vrcp.pop %v9659
          %v9692 = vrcp.pop %v9660
          %9694 = vset.pattern.permute.xlu0 0
          %9695 = vperm.xlu0 %9694, %v9661
          %v9696 = vpop.permute.xlu0 %9695
          %9699 = vset.pattern.permute.xlu0 0
          %9700 = vperm.xlu0 %9699, %v9662
          %v9701 = vpop.permute.xlu0 %9700
          %9704 = vset.pattern.permute.xlu0 0
          %9705 = vperm.xlu0 %9704, %v9663
          %v9706 = vpop.permute.xlu0 %9705
          %9709 = vset.pattern.permute.xlu0 0
          %9710 = vperm.xlu0 %9709, %v9664
          %v9711 = vpop.permute.xlu0 %9710
          %9714 = vset.pattern.permute.xlu0 0
          %9715 = vperm.xlu0 %9714, %v9665
          %v9716 = vpop.permute.xlu0 %9715
          %9719 = vset.pattern.permute.xlu0 0
          %9720 = vperm.xlu0 %9719, %v9666
          %v9721 = vpop.permute.xlu0 %9720
          %9724 = vset.pattern.permute.xlu0 0
          %9725 = vperm.xlu0 %9724, %v9667
          %v9726 = vpop.permute.xlu0 %9725
          %9729 = vset.pattern.permute.xlu0 0
          %9730 = vperm.xlu0 %9729, %v9668
          %v9731 = vpop.permute.xlu0 %9730
          %9734 = vset.pattern.permute.xlu0 0
          %9735 = vperm.xlu0 %9734, %v9669
          %v9736 = vpop.permute.xlu0 %9735
          %9739 = vset.pattern.permute.xlu0 0
          %9740 = vperm.xlu0 %9739, %v9670
          %v9741 = vpop.permute.xlu0 %9740
          %9744 = vset.pattern.permute.xlu0 0
          %9745 = vperm.xlu0 %9744, %v9671
          %v9746 = vpop.permute.xlu0 %9745
          %9749 = vset.pattern.permute.xlu0 0
          %9750 = vperm.xlu0 %9749, %v9672
          %v9751 = vpop.permute.xlu0 %9750
          %9754 = vset.pattern.permute.xlu0 0
          %9755 = vperm.xlu0 %9754, %v9673
          %v9756 = vpop.permute.xlu0 %9755
          %9759 = vset.pattern.permute.xlu0 0
          %9760 = vperm.xlu0 %9759, %v9674
          %v9761 = vpop.permute.xlu0 %9760
          %9764 = vset.pattern.permute.xlu0 0
          %9765 = vperm.xlu0 %9764, %v9675
          %v9766 = vpop.permute.xlu0 %9765
          %9769 = vset.pattern.permute.xlu0 0
          %9770 = vperm.xlu0 %9769, %v9676
          %v9771 = vpop.permute.xlu0 %9770
          %9774 = vset.pattern.permute.xlu0 0
          %9775 = vperm.xlu0 %9774, %v9677
          %v9776 = vpop.permute.xlu0 %9775
          %9779 = vset.pattern.permute.xlu0 0
          %9780 = vperm.xlu0 %9779, %v9678
          %v9781 = vpop.permute.xlu0 %9780
          %9784 = vset.pattern.permute.xlu0 0
          %9785 = vperm.xlu0 %9784, %v9679
          %v9786 = vpop.permute.xlu0 %9785
          %9789 = vset.pattern.permute.xlu0 0
          %9790 = vperm.xlu0 %9789, %v9680
          %v9791 = vpop.permute.xlu0 %9790
          %9794 = vset.pattern.permute.xlu0 0
          %9795 = vperm.xlu0 %9794, %v9681
          %v9796 = vpop.permute.xlu0 %9795
          %9799 = vset.pattern.permute.xlu0 0
          %9800 = vperm.xlu0 %9799, %v9682
          %v9801 = vpop.permute.xlu0 %9800
          %9804 = vset.pattern.permute.xlu0 0
          %9805 = vperm.xlu0 %9804, %v9683
          %v9806 = vpop.permute.xlu0 %9805
          %9809 = vset.pattern.permute.xlu0 0
          %9810 = vperm.xlu0 %9809, %v9684
          %v9811 = vpop.permute.xlu0 %9810
          %9814 = vset.pattern.permute.xlu0 0
          %9815 = vperm.xlu0 %9814, %v9685
          %v9816 = vpop.permute.xlu0 %9815
          %9819 = vset.pattern.permute.xlu0 0
          %9820 = vperm.xlu0 %9819, %v9686
          %v9821 = vpop.permute.xlu0 %9820
          %9824 = vset.pattern.permute.xlu0 0
          %9825 = vperm.xlu0 %9824, %v9687
          %v9826 = vpop.permute.xlu0 %9825
          %9829 = vset.pattern.permute.xlu0 0
          %9830 = vperm.xlu0 %9829, %v9688
          %v9831 = vpop.permute.xlu0 %9830
          %9834 = vset.pattern.permute.xlu0 0
          %9835 = vperm.xlu0 %9834, %v9689
          %v9836 = vpop.permute.xlu0 %9835
          %9839 = vset.pattern.permute.xlu0 0
          %9840 = vperm.xlu0 %9839, %v9690
          %v9841 = vpop.permute.xlu0 %9840
          %9844 = vset.pattern.permute.xlu0 0
          %9845 = vperm.xlu0 %9844, %v9691
          %v9846 = vpop.permute.xlu0 %9845
          %9849 = vset.pattern.permute.xlu0 0
          %9850 = vperm.xlu0 %9849, %v9692
          %v9851 = vpop.permute.xlu0 %9850
          %v9853 = vld [vmem:[%s4453] sm:$0xff]
          %v9854 = vld [vmem:[%s4453 + $0x8] sm:$0xff]
          %v9855 = vld [vmem:[%s4453 + $0x10] sm:$0xff]
          %v9856 = vld [vmem:[%s4453 + $0x18] sm:$0xff]
          %v9857 = vld [vmem:[%s4453 + $0x20] sm:$0xff]
          %v9858 = vld [vmem:[%s4453 + $0x28] sm:$0xff]
          %v9859 = vld [vmem:[%s4453 + $0x30] sm:$0xff]
          %v9860 = vld [vmem:[%s4453 + $0x38] sm:$0xff]
          %v9861 = vld [vmem:[%s4453 + $0x40] sm:$0xff]
          %v9862 = vld [vmem:[%s4453 + $0x48] sm:$0xff]
          %v9863 = vld [vmem:[%s4453 + $0x50] sm:$0xff]
          %v9864 = vld [vmem:[%s4453 + $0x58] sm:$0xff]
          %v9865 = vld [vmem:[%s4453 + $0x60] sm:$0xff]
          %v9866 = vld [vmem:[%s4453 + $0x68] sm:$0xff]
          %v9867 = vld [vmem:[%s4453 + $0x70] sm:$0xff]
          %v9868 = vld [vmem:[%s4453 + $0x78] sm:$0xff]
          %v9869 = vld [vmem:[%s4453 + $0x80] sm:$0xff]
          %v9870 = vld [vmem:[%s4453 + $0x88] sm:$0xff]
          %v9871 = vld [vmem:[%s4453 + $0x90] sm:$0xff]
          %v9872 = vld [vmem:[%s4453 + $0x98] sm:$0xff]
          %v9873 = vld [vmem:[%s4453 + $0xa0] sm:$0xff]
          %v9874 = vld [vmem:[%s4453 + $0xa8] sm:$0xff]
          %v9875 = vld [vmem:[%s4453 + $0xb0] sm:$0xff]
          %v9876 = vld [vmem:[%s4453 + $0xb8] sm:$0xff]
          %v9877 = vld [vmem:[%s4453 + $0xc0] sm:$0xff]
          %v9878 = vld [vmem:[%s4453 + $0xc8] sm:$0xff]
          %v9879 = vld [vmem:[%s4453 + $0xd0] sm:$0xff]
          %v9880 = vld [vmem:[%s4453 + $0xd8] sm:$0xff]
          %v9881 = vld [vmem:[%s4453 + $0xe0] sm:$0xff]
          %v9882 = vld [vmem:[%s4453 + $0xe8] sm:$0xff]
          %v9883 = vld [vmem:[%s4453 + $0xf0] sm:$0xff]
          %v9884 = vld [vmem:[%s4453 + $0xf8] sm:$0xff]
          %vm9885 = vcmp.eq.f32.partialorder %v9853, 0.0
          %vm9886 = vcmp.eq.f32.partialorder %v9854, 0.0
          %vm9887 = vcmp.eq.f32.partialorder %v9855, 0.0
          %vm9888 = vcmp.eq.f32.partialorder %v9856, 0.0
          %vm9889 = vcmp.eq.f32.partialorder %v9857, 0.0
          %vm9890 = vcmp.eq.f32.partialorder %v9858, 0.0
          %vm9891 = vcmp.eq.f32.partialorder %v9859, 0.0
          %vm9892 = vcmp.eq.f32.partialorder %v9860, 0.0
          %vm9893 = vcmp.eq.f32.partialorder %v9861, 0.0
          %vm9894 = vcmp.eq.f32.partialorder %v9862, 0.0
          %vm9895 = vcmp.eq.f32.partialorder %v9863, 0.0
          %vm9896 = vcmp.eq.f32.partialorder %v9864, 0.0
          %vm9897 = vcmp.eq.f32.partialorder %v9865, 0.0
          %vm9898 = vcmp.eq.f32.partialorder %v9866, 0.0
          %vm9899 = vcmp.eq.f32.partialorder %v9867, 0.0
          %vm9900 = vcmp.eq.f32.partialorder %v9868, 0.0
          %vm9901 = vcmp.eq.f32.partialorder %v9869, 0.0
          %vm9902 = vcmp.eq.f32.partialorder %v9870, 0.0
          %vm9903 = vcmp.eq.f32.partialorder %v9871, 0.0
          %vm9904 = vcmp.eq.f32.partialorder %v9872, 0.0
          %vm9905 = vcmp.eq.f32.partialorder %v9873, 0.0
          %vm9906 = vcmp.eq.f32.partialorder %v9874, 0.0
          %vm9907 = vcmp.eq.f32.partialorder %v9875, 0.0
          %vm9908 = vcmp.eq.f32.partialorder %v9876, 0.0
          %vm9909 = vcmp.eq.f32.partialorder %v9877, 0.0
          %vm9910 = vcmp.eq.f32.partialorder %v9878, 0.0
          %vm9911 = vcmp.eq.f32.partialorder %v9879, 0.0
          %vm9912 = vcmp.eq.f32.partialorder %v9880, 0.0
          %vm9913 = vcmp.eq.f32.partialorder %v9881, 0.0
          %vm9914 = vcmp.eq.f32.partialorder %v9882, 0.0
          %vm9915 = vcmp.eq.f32.partialorder %v9883, 0.0
          %vm9916 = vcmp.eq.f32.partialorder %v9884, 0.0
          %v9917 = vsel %vm9885, 1.0, %v9853
          %v9918 = vsel %vm9886, 1.0, %v9854
          %v9919 = vsel %vm9887, 1.0, %v9855
          %v9920 = vsel %vm9888, 1.0, %v9856
          %v9921 = vsel %vm9889, 1.0, %v9857
          %v9922 = vsel %vm9890, 1.0, %v9858
          %v9923 = vsel %vm9891, 1.0, %v9859
          %v9924 = vsel %vm9892, 1.0, %v9860
          %v9925 = vsel %vm9893, 1.0, %v9861
          %v9926 = vsel %vm9894, 1.0, %v9862
          %v9927 = vsel %vm9895, 1.0, %v9863
          %v9928 = vsel %vm9896, 1.0, %v9864
          %v9929 = vsel %vm9897, 1.0, %v9865
          %v9930 = vsel %vm9898, 1.0, %v9866
          %v9931 = vsel %vm9899, 1.0, %v9867
          %v9932 = vsel %vm9900, 1.0, %v9868
          %v9933 = vsel %vm9901, 1.0, %v9869
          %v9934 = vsel %vm9902, 1.0, %v9870
          %v9935 = vsel %vm9903, 1.0, %v9871
          %v9936 = vsel %vm9904, 1.0, %v9872
          %v9937 = vsel %vm9905, 1.0, %v9873
          %v9938 = vsel %vm9906, 1.0, %v9874
          %v9939 = vsel %vm9907, 1.0, %v9875
          %v9940 = vsel %vm9908, 1.0, %v9876
          %v9941 = vsel %vm9909, 1.0, %v9877
          %v9942 = vsel %vm9910, 1.0, %v9878
          %v9943 = vsel %vm9911, 1.0, %v9879
          %v9944 = vsel %vm9912, 1.0, %v9880
          %v9945 = vsel %vm9913, 1.0, %v9881
          %v9946 = vsel %vm9914, 1.0, %v9882
          %v9947 = vsel %vm9915, 1.0, %v9883
          %v9948 = vsel %vm9916, 1.0, %v9884
          %v9949 = vrcp.pop %v9917
          %v9950 = vrcp.pop %v9918
          %v9951 = vrcp.pop %v9919
          %v9952 = vrcp.pop %v9920
          %v9953 = vrcp.pop %v9921
          %v9954 = vrcp.pop %v9922
          %v9955 = vrcp.pop %v9923
          %v9956 = vrcp.pop %v9924
          %v9957 = vrcp.pop %v9925
          %v9958 = vrcp.pop %v9926
          %v9959 = vrcp.pop %v9927
          %v9960 = vrcp.pop %v9928
          %v9961 = vrcp.pop %v9929
          %v9962 = vrcp.pop %v9930
          %v9963 = vrcp.pop %v9931
          %v9964 = vrcp.pop %v9932
          %v9965 = vrcp.pop %v9933
          %v9966 = vrcp.pop %v9934
          %v9967 = vrcp.pop %v9935
          %v9968 = vrcp.pop %v9936
          %v9969 = vrcp.pop %v9937
          %v9970 = vrcp.pop %v9938
          %v9971 = vrcp.pop %v9939
          %v9972 = vrcp.pop %v9940
          %v9973 = vrcp.pop %v9941
          %v9974 = vrcp.pop %v9942
          %v9975 = vrcp.pop %v9943
          %v9976 = vrcp.pop %v9944
          %v9977 = vrcp.pop %v9945
          %v9978 = vrcp.pop %v9946
          %v9979 = vrcp.pop %v9947
          %v9980 = vrcp.pop %v9948
          %9982 = vset.pattern.permute.xlu0 0
          %9983 = vperm.xlu0 %9982, %v9949
          %v9984 = vpop.permute.xlu0 %9983
          %9987 = vset.pattern.permute.xlu0 0
          %9988 = vperm.xlu0 %9987, %v9950
          %v9989 = vpop.permute.xlu0 %9988
          %9992 = vset.pattern.permute.xlu0 0
          %9993 = vperm.xlu0 %9992, %v9951
          %v9994 = vpop.permute.xlu0 %9993
          %9997 = vset.pattern.permute.xlu0 0
          %9998 = vperm.xlu0 %9997, %v9952
          %v9999 = vpop.permute.xlu0 %9998
          %10002 = vset.pattern.permute.xlu0 0
          %10003 = vperm.xlu0 %10002, %v9953
          %v10004 = vpop.permute.xlu0 %10003
          %10007 = vset.pattern.permute.xlu0 0
          %10008 = vperm.xlu0 %10007, %v9954
          %v10009 = vpop.permute.xlu0 %10008
          %10012 = vset.pattern.permute.xlu0 0
          %10013 = vperm.xlu0 %10012, %v9955
          %v10014 = vpop.permute.xlu0 %10013
          %10017 = vset.pattern.permute.xlu0 0
          %10018 = vperm.xlu0 %10017, %v9956
          %v10019 = vpop.permute.xlu0 %10018
          %10022 = vset.pattern.permute.xlu0 0
          %10023 = vperm.xlu0 %10022, %v9957
          %v10024 = vpop.permute.xlu0 %10023
          %10027 = vset.pattern.permute.xlu0 0
          %10028 = vperm.xlu0 %10027, %v9958
          %v10029 = vpop.permute.xlu0 %10028
          %10032 = vset.pattern.permute.xlu0 0
          %10033 = vperm.xlu0 %10032, %v9959
          %v10034 = vpop.permute.xlu0 %10033
          %10037 = vset.pattern.permute.xlu0 0
          %10038 = vperm.xlu0 %10037, %v9960
          %v10039 = vpop.permute.xlu0 %10038
          %10042 = vset.pattern.permute.xlu0 0
          %10043 = vperm.xlu0 %10042, %v9961
          %v10044 = vpop.permute.xlu0 %10043
          %10047 = vset.pattern.permute.xlu0 0
          %10048 = vperm.xlu0 %10047, %v9962
          %v10049 = vpop.permute.xlu0 %10048
          %10052 = vset.pattern.permute.xlu0 0
          %10053 = vperm.xlu0 %10052, %v9963
          %v10054 = vpop.permute.xlu0 %10053
          %10057 = vset.pattern.permute.xlu0 0
          %10058 = vperm.xlu0 %10057, %v9964
          %v10059 = vpop.permute.xlu0 %10058
          %10062 = vset.pattern.permute.xlu0 0
          %10063 = vperm.xlu0 %10062, %v9965
          %v10064 = vpop.permute.xlu0 %10063
          %10067 = vset.pattern.permute.xlu0 0
          %10068 = vperm.xlu0 %10067, %v9966
          %v10069 = vpop.permute.xlu0 %10068
          %10072 = vset.pattern.permute.xlu0 0
          %10073 = vperm.xlu0 %10072, %v9967
          %v10074 = vpop.permute.xlu0 %10073
          %10077 = vset.pattern.permute.xlu0 0
          %10078 = vperm.xlu0 %10077, %v9968
          %v10079 = vpop.permute.xlu0 %10078
          %10082 = vset.pattern.permute.xlu0 0
          %10083 = vperm.xlu0 %10082, %v9969
          %v10084 = vpop.permute.xlu0 %10083
          %10087 = vset.pattern.permute.xlu0 0
          %10088 = vperm.xlu0 %10087, %v9970
          %v10089 = vpop.permute.xlu0 %10088
          %10092 = vset.pattern.permute.xlu0 0
          %10093 = vperm.xlu0 %10092, %v9971
          %v10094 = vpop.permute.xlu0 %10093
          %10097 = vset.pattern.permute.xlu0 0
          %10098 = vperm.xlu0 %10097, %v9972
          %v10099 = vpop.permute.xlu0 %10098
          %10102 = vset.pattern.permute.xlu0 0
          %10103 = vperm.xlu0 %10102, %v9973
          %v10104 = vpop.permute.xlu0 %10103
          %10107 = vset.pattern.permute.xlu0 0
          %10108 = vperm.xlu0 %10107, %v9974
          %v10109 = vpop.permute.xlu0 %10108
          %10112 = vset.pattern.permute.xlu0 0
          %10113 = vperm.xlu0 %10112, %v9975
          %v10114 = vpop.permute.xlu0 %10113
          %10117 = vset.pattern.permute.xlu0 0
          %10118 = vperm.xlu0 %10117, %v9976
          %v10119 = vpop.permute.xlu0 %10118
          %10122 = vset.pattern.permute.xlu0 0
          %10123 = vperm.xlu0 %10122, %v9977
          %v10124 = vpop.permute.xlu0 %10123
          %10127 = vset.pattern.permute.xlu0 0
          %10128 = vperm.xlu0 %10127, %v9978
          %v10129 = vpop.permute.xlu0 %10128
          %10132 = vset.pattern.permute.xlu0 0
          %10133 = vperm.xlu0 %10132, %v9979
          %v10134 = vpop.permute.xlu0 %10133
          %10137 = vset.pattern.permute.xlu0 0
          %10138 = vperm.xlu0 %10137, %v9980
          %v10139 = vpop.permute.xlu0 %10138
          %v10141 = vld [vmem:[%s6317] sm:$0xff]
          %v10142 = vld [vmem:[%s6317 + $0x8] sm:$0xff]
          %v10143 = vld [vmem:[%s6317 + $0x10] sm:$0xff]
          %v10144 = vld [vmem:[%s6317 + $0x18] sm:$0xff]
          %v10145 = vld [vmem:[%s6317 + $0x20] sm:$0xff]
          %v10146 = vld [vmem:[%s6317 + $0x28] sm:$0xff]
          %v10147 = vld [vmem:[%s6317 + $0x30] sm:$0xff]
          %v10148 = vld [vmem:[%s6317 + $0x38] sm:$0xff]
          %v10149 = vld [vmem:[%s6317 + $0x40] sm:$0xff]
          %v10150 = vld [vmem:[%s6317 + $0x48] sm:$0xff]
          %v10151 = vld [vmem:[%s6317 + $0x50] sm:$0xff]
          %v10152 = vld [vmem:[%s6317 + $0x58] sm:$0xff]
          %v10153 = vld [vmem:[%s6317 + $0x60] sm:$0xff]
          %v10154 = vld [vmem:[%s6317 + $0x68] sm:$0xff]
          %v10155 = vld [vmem:[%s6317 + $0x70] sm:$0xff]
          %v10156 = vld [vmem:[%s6317 + $0x78] sm:$0xff]
          %v10157 = vld [vmem:[%s6317 + $0x80] sm:$0xff]
          %v10158 = vld [vmem:[%s6317 + $0x88] sm:$0xff]
          %v10159 = vld [vmem:[%s6317 + $0x90] sm:$0xff]
          %v10160 = vld [vmem:[%s6317 + $0x98] sm:$0xff]
          %v10161 = vld [vmem:[%s6317 + $0xa0] sm:$0xff]
          %v10162 = vld [vmem:[%s6317 + $0xa8] sm:$0xff]
          %v10163 = vld [vmem:[%s6317 + $0xb0] sm:$0xff]
          %v10164 = vld [vmem:[%s6317 + $0xb8] sm:$0xff]
          %v10165 = vld [vmem:[%s6317 + $0xc0] sm:$0xff]
          %v10166 = vld [vmem:[%s6317 + $0xc8] sm:$0xff]
          %v10167 = vld [vmem:[%s6317 + $0xd0] sm:$0xff]
          %v10168 = vld [vmem:[%s6317 + $0xd8] sm:$0xff]
          %v10169 = vld [vmem:[%s6317 + $0xe0] sm:$0xff]
          %v10170 = vld [vmem:[%s6317 + $0xe8] sm:$0xff]
          %v10171 = vld [vmem:[%s6317 + $0xf0] sm:$0xff]
          %v10172 = vld [vmem:[%s6317 + $0xf8] sm:$0xff]
          %vm10173 = vcmp.eq.f32.partialorder %v10141, 0.0
          %vm10174 = vcmp.eq.f32.partialorder %v10142, 0.0
          %vm10175 = vcmp.eq.f32.partialorder %v10143, 0.0
          %vm10176 = vcmp.eq.f32.partialorder %v10144, 0.0
          %vm10177 = vcmp.eq.f32.partialorder %v10145, 0.0
          %vm10178 = vcmp.eq.f32.partialorder %v10146, 0.0
          %vm10179 = vcmp.eq.f32.partialorder %v10147, 0.0
          %vm10180 = vcmp.eq.f32.partialorder %v10148, 0.0
          %vm10181 = vcmp.eq.f32.partialorder %v10149, 0.0
          %vm10182 = vcmp.eq.f32.partialorder %v10150, 0.0
          %vm10183 = vcmp.eq.f32.partialorder %v10151, 0.0
          %vm10184 = vcmp.eq.f32.partialorder %v10152, 0.0
          %vm10185 = vcmp.eq.f32.partialorder %v10153, 0.0
          %vm10186 = vcmp.eq.f32.partialorder %v10154, 0.0
          %vm10187 = vcmp.eq.f32.partialorder %v10155, 0.0
          %vm10188 = vcmp.eq.f32.partialorder %v10156, 0.0
          %vm10189 = vcmp.eq.f32.partialorder %v10157, 0.0
          %vm10190 = vcmp.eq.f32.partialorder %v10158, 0.0
          %vm10191 = vcmp.eq.f32.partialorder %v10159, 0.0
          %vm10192 = vcmp.eq.f32.partialorder %v10160, 0.0
          %vm10193 = vcmp.eq.f32.partialorder %v10161, 0.0
          %vm10194 = vcmp.eq.f32.partialorder %v10162, 0.0
          %vm10195 = vcmp.eq.f32.partialorder %v10163, 0.0
          %vm10196 = vcmp.eq.f32.partialorder %v10164, 0.0
          %vm10197 = vcmp.eq.f32.partialorder %v10165, 0.0
          %vm10198 = vcmp.eq.f32.partialorder %v10166, 0.0
          %vm10199 = vcmp.eq.f32.partialorder %v10167, 0.0
          %vm10200 = vcmp.eq.f32.partialorder %v10168, 0.0
          %vm10201 = vcmp.eq.f32.partialorder %v10169, 0.0
          %vm10202 = vcmp.eq.f32.partialorder %v10170, 0.0
          %vm10203 = vcmp.eq.f32.partialorder %v10171, 0.0
          %vm10204 = vcmp.eq.f32.partialorder %v10172, 0.0
          %v10205 = vsel %vm10173, 1.0, %v10141
          %v10206 = vsel %vm10174, 1.0, %v10142
          %v10207 = vsel %vm10175, 1.0, %v10143
          %v10208 = vsel %vm10176, 1.0, %v10144
          %v10209 = vsel %vm10177, 1.0, %v10145
          %v10210 = vsel %vm10178, 1.0, %v10146
          %v10211 = vsel %vm10179, 1.0, %v10147
          %v10212 = vsel %vm10180, 1.0, %v10148
          %v10213 = vsel %vm10181, 1.0, %v10149
          %v10214 = vsel %vm10182, 1.0, %v10150
          %v10215 = vsel %vm10183, 1.0, %v10151
          %v10216 = vsel %vm10184, 1.0, %v10152
          %v10217 = vsel %vm10185, 1.0, %v10153
          %v10218 = vsel %vm10186, 1.0, %v10154
          %v10219 = vsel %vm10187, 1.0, %v10155
          %v10220 = vsel %vm10188, 1.0, %v10156
          %v10221 = vsel %vm10189, 1.0, %v10157
          %v10222 = vsel %vm10190, 1.0, %v10158
          %v10223 = vsel %vm10191, 1.0, %v10159
          %v10224 = vsel %vm10192, 1.0, %v10160
          %v10225 = vsel %vm10193, 1.0, %v10161
          %v10226 = vsel %vm10194, 1.0, %v10162
          %v10227 = vsel %vm10195, 1.0, %v10163
          %v10228 = vsel %vm10196, 1.0, %v10164
          %v10229 = vsel %vm10197, 1.0, %v10165
          %v10230 = vsel %vm10198, 1.0, %v10166
          %v10231 = vsel %vm10199, 1.0, %v10167
          %v10232 = vsel %vm10200, 1.0, %v10168
          %v10233 = vsel %vm10201, 1.0, %v10169
          %v10234 = vsel %vm10202, 1.0, %v10170
          %v10235 = vsel %vm10203, 1.0, %v10171
          %v10236 = vsel %vm10204, 1.0, %v10172
          %v10237 = vrcp.pop %v10205
          %v10238 = vrcp.pop %v10206
          %v10239 = vrcp.pop %v10207
          %v10240 = vrcp.pop %v10208
          %v10241 = vrcp.pop %v10209
          %v10242 = vrcp.pop %v10210
          %v10243 = vrcp.pop %v10211
          %v10244 = vrcp.pop %v10212
          %v10245 = vrcp.pop %v10213
          %v10246 = vrcp.pop %v10214
          %v10247 = vrcp.pop %v10215
          %v10248 = vrcp.pop %v10216
          %v10249 = vrcp.pop %v10217
          %v10250 = vrcp.pop %v10218
          %v10251 = vrcp.pop %v10219
          %v10252 = vrcp.pop %v10220
          %v10253 = vrcp.pop %v10221
          %v10254 = vrcp.pop %v10222
          %v10255 = vrcp.pop %v10223
          %v10256 = vrcp.pop %v10224
          %v10257 = vrcp.pop %v10225
          %v10258 = vrcp.pop %v10226
          %v10259 = vrcp.pop %v10227
          %v10260 = vrcp.pop %v10228
          %v10261 = vrcp.pop %v10229
          %v10262 = vrcp.pop %v10230
          %v10263 = vrcp.pop %v10231
          %v10264 = vrcp.pop %v10232
          %v10265 = vrcp.pop %v10233
          %v10266 = vrcp.pop %v10234
          %v10267 = vrcp.pop %v10235
          %v10268 = vrcp.pop %v10236
          %10270 = vset.pattern.permute.xlu0 0
          %10271 = vperm.xlu0 %10270, %v10237
          %v10272 = vpop.permute.xlu0 %10271
          %10275 = vset.pattern.permute.xlu0 0
          %10276 = vperm.xlu0 %10275, %v10238
          %v10277 = vpop.permute.xlu0 %10276
          %10280 = vset.pattern.permute.xlu0 0
          %10281 = vperm.xlu0 %10280, %v10239
          %v10282 = vpop.permute.xlu0 %10281
          %10285 = vset.pattern.permute.xlu0 0
          %10286 = vperm.xlu0 %10285, %v10240
          %v10287 = vpop.permute.xlu0 %10286
          %10290 = vset.pattern.permute.xlu0 0
          %10291 = vperm.xlu0 %10290, %v10241
          %v10292 = vpop.permute.xlu0 %10291
          %10295 = vset.pattern.permute.xlu0 0
          %10296 = vperm.xlu0 %10295, %v10242
          %v10297 = vpop.permute.xlu0 %10296
          %10300 = vset.pattern.permute.xlu0 0
          %10301 = vperm.xlu0 %10300, %v10243
          %v10302 = vpop.permute.xlu0 %10301
          %10305 = vset.pattern.permute.xlu0 0
          %10306 = vperm.xlu0 %10305, %v10244
          %v10307 = vpop.permute.xlu0 %10306
          %10310 = vset.pattern.permute.xlu0 0
          %10311 = vperm.xlu0 %10310, %v10245
          %v10312 = vpop.permute.xlu0 %10311
          %10315 = vset.pattern.permute.xlu0 0
          %10316 = vperm.xlu0 %10315, %v10246
          %v10317 = vpop.permute.xlu0 %10316
          %10320 = vset.pattern.permute.xlu0 0
          %10321 = vperm.xlu0 %10320, %v10247
          %v10322 = vpop.permute.xlu0 %10321
          %10325 = vset.pattern.permute.xlu0 0
          %10326 = vperm.xlu0 %10325, %v10248
          %v10327 = vpop.permute.xlu0 %10326
          %10330 = vset.pattern.permute.xlu0 0
          %10331 = vperm.xlu0 %10330, %v10249
          %v10332 = vpop.permute.xlu0 %10331
          %10335 = vset.pattern.permute.xlu0 0
          %10336 = vperm.xlu0 %10335, %v10250
          %v10337 = vpop.permute.xlu0 %10336
          %10340 = vset.pattern.permute.xlu0 0
          %10341 = vperm.xlu0 %10340, %v10251
          %v10342 = vpop.permute.xlu0 %10341
          %10345 = vset.pattern.permute.xlu0 0
          %10346 = vperm.xlu0 %10345, %v10252
          %v10347 = vpop.permute.xlu0 %10346
          %10350 = vset.pattern.permute.xlu0 0
          %10351 = vperm.xlu0 %10350, %v10253
          %v10352 = vpop.permute.xlu0 %10351
          %10355 = vset.pattern.permute.xlu0 0
          %10356 = vperm.xlu0 %10355, %v10254
          %v10357 = vpop.permute.xlu0 %10356
          %10360 = vset.pattern.permute.xlu0 0
          %10361 = vperm.xlu0 %10360, %v10255
          %v10362 = vpop.permute.xlu0 %10361
          %10365 = vset.pattern.permute.xlu0 0
          %10366 = vperm.xlu0 %10365, %v10256
          %v10367 = vpop.permute.xlu0 %10366
          %10370 = vset.pattern.permute.xlu0 0
          %10371 = vperm.xlu0 %10370, %v10257
          %v10372 = vpop.permute.xlu0 %10371
          %10375 = vset.pattern.permute.xlu0 0
          %10376 = vperm.xlu0 %10375, %v10258
          %v10377 = vpop.permute.xlu0 %10376
          %10380 = vset.pattern.permute.xlu0 0
          %10381 = vperm.xlu0 %10380, %v10259
          %v10382 = vpop.permute.xlu0 %10381
          %10385 = vset.pattern.permute.xlu0 0
          %10386 = vperm.xlu0 %10385, %v10260
          %v10387 = vpop.permute.xlu0 %10386
          %10390 = vset.pattern.permute.xlu0 0
          %10391 = vperm.xlu0 %10390, %v10261
          %v10392 = vpop.permute.xlu0 %10391
          %10395 = vset.pattern.permute.xlu0 0
          %10396 = vperm.xlu0 %10395, %v10262
          %v10397 = vpop.permute.xlu0 %10396
          %10400 = vset.pattern.permute.xlu0 0
          %10401 = vperm.xlu0 %10400, %v10263
          %v10402 = vpop.permute.xlu0 %10401
          %10405 = vset.pattern.permute.xlu0 0
          %10406 = vperm.xlu0 %10405, %v10264
          %v10407 = vpop.permute.xlu0 %10406
          %10410 = vset.pattern.permute.xlu0 0
          %10411 = vperm.xlu0 %10410, %v10265
          %v10412 = vpop.permute.xlu0 %10411
          %10415 = vset.pattern.permute.xlu0 0
          %10416 = vperm.xlu0 %10415, %v10266
          %v10417 = vpop.permute.xlu0 %10416
          %10420 = vset.pattern.permute.xlu0 0
          %10421 = vperm.xlu0 %10420, %v10267
          %v10422 = vpop.permute.xlu0 %10421
          %10425 = vset.pattern.permute.xlu0 0
          %10426 = vperm.xlu0 %10425, %v10268
          %v10427 = vpop.permute.xlu0 %10426
          %v10429 = vld [vmem:[%s8181] sm:$0xff]
          %v10430 = vld [vmem:[%s8181 + $0x8] sm:$0xff]
          %v10431 = vld [vmem:[%s8181 + $0x10] sm:$0xff]
          %v10432 = vld [vmem:[%s8181 + $0x18] sm:$0xff]
          %v10433 = vld [vmem:[%s8181 + $0x20] sm:$0xff]
          %v10434 = vld [vmem:[%s8181 + $0x28] sm:$0xff]
          %v10435 = vld [vmem:[%s8181 + $0x30] sm:$0xff]
          %v10436 = vld [vmem:[%s8181 + $0x38] sm:$0xff]
          %v10437 = vld [vmem:[%s8181 + $0x40] sm:$0xff]
          %v10438 = vld [vmem:[%s8181 + $0x48] sm:$0xff]
          %v10439 = vld [vmem:[%s8181 + $0x50] sm:$0xff]
          %v10440 = vld [vmem:[%s8181 + $0x58] sm:$0xff]
          %v10441 = vld [vmem:[%s8181 + $0x60] sm:$0xff]
          %v10442 = vld [vmem:[%s8181 + $0x68] sm:$0xff]
          %v10443 = vld [vmem:[%s8181 + $0x70] sm:$0xff]
          %v10444 = vld [vmem:[%s8181 + $0x78] sm:$0xff]
          %v10445 = vld [vmem:[%s8181 + $0x80] sm:$0xff]
          %v10446 = vld [vmem:[%s8181 + $0x88] sm:$0xff]
          %v10447 = vld [vmem:[%s8181 + $0x90] sm:$0xff]
          %v10448 = vld [vmem:[%s8181 + $0x98] sm:$0xff]
          %v10449 = vld [vmem:[%s8181 + $0xa0] sm:$0xff]
          %v10450 = vld [vmem:[%s8181 + $0xa8] sm:$0xff]
          %v10451 = vld [vmem:[%s8181 + $0xb0] sm:$0xff]
          %v10452 = vld [vmem:[%s8181 + $0xb8] sm:$0xff]
          %v10453 = vld [vmem:[%s8181 + $0xc0] sm:$0xff]
          %v10454 = vld [vmem:[%s8181 + $0xc8] sm:$0xff]
          %v10455 = vld [vmem:[%s8181 + $0xd0] sm:$0xff]
          %v10456 = vld [vmem:[%s8181 + $0xd8] sm:$0xff]
          %v10457 = vld [vmem:[%s8181 + $0xe0] sm:$0xff]
          %v10458 = vld [vmem:[%s8181 + $0xe8] sm:$0xff]
          %v10459 = vld [vmem:[%s8181 + $0xf0] sm:$0xff]
          %v10460 = vld [vmem:[%s8181 + $0xf8] sm:$0xff]
          %vm10461 = vcmp.eq.f32.partialorder %v10429, 0.0
          %vm10462 = vcmp.eq.f32.partialorder %v10430, 0.0
          %vm10463 = vcmp.eq.f32.partialorder %v10431, 0.0
          %vm10464 = vcmp.eq.f32.partialorder %v10432, 0.0
          %vm10465 = vcmp.eq.f32.partialorder %v10433, 0.0
          %vm10466 = vcmp.eq.f32.partialorder %v10434, 0.0
          %vm10467 = vcmp.eq.f32.partialorder %v10435, 0.0
          %vm10468 = vcmp.eq.f32.partialorder %v10436, 0.0
          %vm10469 = vcmp.eq.f32.partialorder %v10437, 0.0
          %vm10470 = vcmp.eq.f32.partialorder %v10438, 0.0
          %vm10471 = vcmp.eq.f32.partialorder %v10439, 0.0
          %vm10472 = vcmp.eq.f32.partialorder %v10440, 0.0
          %vm10473 = vcmp.eq.f32.partialorder %v10441, 0.0
          %vm10474 = vcmp.eq.f32.partialorder %v10442, 0.0
          %vm10475 = vcmp.eq.f32.partialorder %v10443, 0.0
          %vm10476 = vcmp.eq.f32.partialorder %v10444, 0.0
          %vm10477 = vcmp.eq.f32.partialorder %v10445, 0.0
          %vm10478 = vcmp.eq.f32.partialorder %v10446, 0.0
          %vm10479 = vcmp.eq.f32.partialorder %v10447, 0.0
          %vm10480 = vcmp.eq.f32.partialorder %v10448, 0.0
          %vm10481 = vcmp.eq.f32.partialorder %v10449, 0.0
          %vm10482 = vcmp.eq.f32.partialorder %v10450, 0.0
          %vm10483 = vcmp.eq.f32.partialorder %v10451, 0.0
          %vm10484 = vcmp.eq.f32.partialorder %v10452, 0.0
          %vm10485 = vcmp.eq.f32.partialorder %v10453, 0.0
          %vm10486 = vcmp.eq.f32.partialorder %v10454, 0.0
          %vm10487 = vcmp.eq.f32.partialorder %v10455, 0.0
          %vm10488 = vcmp.eq.f32.partialorder %v10456, 0.0
          %vm10489 = vcmp.eq.f32.partialorder %v10457, 0.0
          %vm10490 = vcmp.eq.f32.partialorder %v10458, 0.0
          %vm10491 = vcmp.eq.f32.partialorder %v10459, 0.0
          %vm10492 = vcmp.eq.f32.partialorder %v10460, 0.0
          %v10493 = vsel %vm10461, 1.0, %v10429
          %v10494 = vsel %vm10462, 1.0, %v10430
          %v10495 = vsel %vm10463, 1.0, %v10431
          %v10496 = vsel %vm10464, 1.0, %v10432
          %v10497 = vsel %vm10465, 1.0, %v10433
          %v10498 = vsel %vm10466, 1.0, %v10434
          %v10499 = vsel %vm10467, 1.0, %v10435
          %v10500 = vsel %vm10468, 1.0, %v10436
          %v10501 = vsel %vm10469, 1.0, %v10437
          %v10502 = vsel %vm10470, 1.0, %v10438
          %v10503 = vsel %vm10471, 1.0, %v10439
          %v10504 = vsel %vm10472, 1.0, %v10440
          %v10505 = vsel %vm10473, 1.0, %v10441
          %v10506 = vsel %vm10474, 1.0, %v10442
          %v10507 = vsel %vm10475, 1.0, %v10443
          %v10508 = vsel %vm10476, 1.0, %v10444
          %v10509 = vsel %vm10477, 1.0, %v10445
          %v10510 = vsel %vm10478, 1.0, %v10446
          %v10511 = vsel %vm10479, 1.0, %v10447
          %v10512 = vsel %vm10480, 1.0, %v10448
          %v10513 = vsel %vm10481, 1.0, %v10449
          %v10514 = vsel %vm10482, 1.0, %v10450
          %v10515 = vsel %vm10483, 1.0, %v10451
          %v10516 = vsel %vm10484, 1.0, %v10452
          %v10517 = vsel %vm10485, 1.0, %v10453
          %v10518 = vsel %vm10486, 1.0, %v10454
          %v10519 = vsel %vm10487, 1.0, %v10455
          %v10520 = vsel %vm10488, 1.0, %v10456
          %v10521 = vsel %vm10489, 1.0, %v10457
          %v10522 = vsel %vm10490, 1.0, %v10458
          %v10523 = vsel %vm10491, 1.0, %v10459
          %v10524 = vsel %vm10492, 1.0, %v10460
          %v10525 = vrcp.pop %v10493
          %v10526 = vrcp.pop %v10494
          %v10527 = vrcp.pop %v10495
          %v10528 = vrcp.pop %v10496
          %v10529 = vrcp.pop %v10497
          %v10530 = vrcp.pop %v10498
          %v10531 = vrcp.pop %v10499
          %v10532 = vrcp.pop %v10500
          %v10533 = vrcp.pop %v10501
          %v10534 = vrcp.pop %v10502
          %v10535 = vrcp.pop %v10503
          %v10536 = vrcp.pop %v10504
          %v10537 = vrcp.pop %v10505
          %v10538 = vrcp.pop %v10506
          %v10539 = vrcp.pop %v10507
          %v10540 = vrcp.pop %v10508
          %v10541 = vrcp.pop %v10509
          %v10542 = vrcp.pop %v10510
          %v10543 = vrcp.pop %v10511
          %v10544 = vrcp.pop %v10512
          %v10545 = vrcp.pop %v10513
          %v10546 = vrcp.pop %v10514
          %v10547 = vrcp.pop %v10515
          %v10548 = vrcp.pop %v10516
          %v10549 = vrcp.pop %v10517
          %v10550 = vrcp.pop %v10518
          %v10551 = vrcp.pop %v10519
          %v10552 = vrcp.pop %v10520
          %v10553 = vrcp.pop %v10521
          %v10554 = vrcp.pop %v10522
          %v10555 = vrcp.pop %v10523
          %v10556 = vrcp.pop %v10524
          %10558 = vset.pattern.permute.xlu0 0
          %10559 = vperm.xlu0 %10558, %v10525
          %v10560 = vpop.permute.xlu0 %10559
          %10563 = vset.pattern.permute.xlu0 0
          %10564 = vperm.xlu0 %10563, %v10526
          %v10565 = vpop.permute.xlu0 %10564
          %10568 = vset.pattern.permute.xlu0 0
          %10569 = vperm.xlu0 %10568, %v10527
          %v10570 = vpop.permute.xlu0 %10569
          %10573 = vset.pattern.permute.xlu0 0
          %10574 = vperm.xlu0 %10573, %v10528
          %v10575 = vpop.permute.xlu0 %10574
          %10578 = vset.pattern.permute.xlu0 0
          %10579 = vperm.xlu0 %10578, %v10529
          %v10580 = vpop.permute.xlu0 %10579
          %10583 = vset.pattern.permute.xlu0 0
          %10584 = vperm.xlu0 %10583, %v10530
          %v10585 = vpop.permute.xlu0 %10584
          %10588 = vset.pattern.permute.xlu0 0
          %10589 = vperm.xlu0 %10588, %v10531
          %v10590 = vpop.permute.xlu0 %10589
          %10593 = vset.pattern.permute.xlu0 0
          %10594 = vperm.xlu0 %10593, %v10532
          %v10595 = vpop.permute.xlu0 %10594
          %10598 = vset.pattern.permute.xlu0 0
          %10599 = vperm.xlu0 %10598, %v10533
          %v10600 = vpop.permute.xlu0 %10599
          %10603 = vset.pattern.permute.xlu0 0
          %10604 = vperm.xlu0 %10603, %v10534
          %v10605 = vpop.permute.xlu0 %10604
          %10608 = vset.pattern.permute.xlu0 0
          %10609 = vperm.xlu0 %10608, %v10535
          %v10610 = vpop.permute.xlu0 %10609
          %10613 = vset.pattern.permute.xlu0 0
          %10614 = vperm.xlu0 %10613, %v10536
          %v10615 = vpop.permute.xlu0 %10614
          %10618 = vset.pattern.permute.xlu0 0
          %10619 = vperm.xlu0 %10618, %v10537
          %v10620 = vpop.permute.xlu0 %10619
          %10623 = vset.pattern.permute.xlu0 0
          %10624 = vperm.xlu0 %10623, %v10538
          %v10625 = vpop.permute.xlu0 %10624
          %10628 = vset.pattern.permute.xlu0 0
          %10629 = vperm.xlu0 %10628, %v10539
          %v10630 = vpop.permute.xlu0 %10629
          %10633 = vset.pattern.permute.xlu0 0
          %10634 = vperm.xlu0 %10633, %v10540
          %v10635 = vpop.permute.xlu0 %10634
          %10638 = vset.pattern.permute.xlu0 0
          %10639 = vperm.xlu0 %10638, %v10541
          %v10640 = vpop.permute.xlu0 %10639
          %10643 = vset.pattern.permute.xlu0 0
          %10644 = vperm.xlu0 %10643, %v10542
          %v10645 = vpop.permute.xlu0 %10644
          %10648 = vset.pattern.permute.xlu0 0
          %10649 = vperm.xlu0 %10648, %v10543
          %v10650 = vpop.permute.xlu0 %10649
          %10653 = vset.pattern.permute.xlu0 0
          %10654 = vperm.xlu0 %10653, %v10544
          %v10655 = vpop.permute.xlu0 %10654
          %10658 = vset.pattern.permute.xlu0 0
          %10659 = vperm.xlu0 %10658, %v10545
          %v10660 = vpop.permute.xlu0 %10659
          %10663 = vset.pattern.permute.xlu0 0
          %10664 = vperm.xlu0 %10663, %v10546
          %v10665 = vpop.permute.xlu0 %10664
          %10668 = vset.pattern.permute.xlu0 0
          %10669 = vperm.xlu0 %10668, %v10547
          %v10670 = vpop.permute.xlu0 %10669
          %10673 = vset.pattern.permute.xlu0 0
          %10674 = vperm.xlu0 %10673, %v10548
          %v10675 = vpop.permute.xlu0 %10674
          %10678 = vset.pattern.permute.xlu0 0
          %10679 = vperm.xlu0 %10678, %v10549
          %v10680 = vpop.permute.xlu0 %10679
          %10683 = vset.pattern.permute.xlu0 0
          %10684 = vperm.xlu0 %10683, %v10550
          %v10685 = vpop.permute.xlu0 %10684
          %10688 = vset.pattern.permute.xlu0 0
          %10689 = vperm.xlu0 %10688, %v10551
          %v10690 = vpop.permute.xlu0 %10689
          %10693 = vset.pattern.permute.xlu0 0
          %10694 = vperm.xlu0 %10693, %v10552
          %v10695 = vpop.permute.xlu0 %10694
          %10698 = vset.pattern.permute.xlu0 0
          %10699 = vperm.xlu0 %10698, %v10553
          %v10700 = vpop.permute.xlu0 %10699
          %10703 = vset.pattern.permute.xlu0 0
          %10704 = vperm.xlu0 %10703, %v10554
          %v10705 = vpop.permute.xlu0 %10704
          %10708 = vset.pattern.permute.xlu0 0
          %10709 = vperm.xlu0 %10708, %v10555
          %v10710 = vpop.permute.xlu0 %10709
          %10713 = vset.pattern.permute.xlu0 0
          %10714 = vperm.xlu0 %10713, %v10556
          %v10715 = vpop.permute.xlu0 %10714
          %v10717 = vsel %vm1594, %v9696, %v9984
          %v10718 = vsel %vm1594, %v9701, %v9989
          %v10719 = vsel %vm1594, %v9706, %v9994
          %v10720 = vsel %vm1594, %v9711, %v9999
          %v10721 = vsel %vm1594, %v9716, %v10004
          %v10722 = vsel %vm1594, %v9721, %v10009
          %v10723 = vsel %vm1594, %v9726, %v10014
          %v10724 = vsel %vm1594, %v9731, %v10019
          %v10725 = vsel %vm1594, %v9736, %v10024
          %v10726 = vsel %vm1594, %v9741, %v10029
          %v10727 = vsel %vm1594, %v9746, %v10034
          %v10728 = vsel %vm1594, %v9751, %v10039
          %v10729 = vsel %vm1594, %v9756, %v10044
          %v10730 = vsel %vm1594, %v9761, %v10049
          %v10731 = vsel %vm1594, %v9766, %v10054
          %v10732 = vsel %vm1594, %v9771, %v10059
          %v10733 = vsel %vm1594, %v9776, %v10064
          %v10734 = vsel %vm1594, %v9781, %v10069
          %v10735 = vsel %vm1594, %v9786, %v10074
          %v10736 = vsel %vm1594, %v9791, %v10079
          %v10737 = vsel %vm1594, %v9796, %v10084
          %v10738 = vsel %vm1594, %v9801, %v10089
          %v10739 = vsel %vm1594, %v9806, %v10094
          %v10740 = vsel %vm1594, %v9811, %v10099
          %v10741 = vsel %vm1594, %v9816, %v10104
          %v10742 = vsel %vm1594, %v9821, %v10109
          %v10743 = vsel %vm1594, %v9826, %v10114
          %v10744 = vsel %vm1594, %v9831, %v10119
          %v10745 = vsel %vm1594, %v9836, %v10124
          %v10746 = vsel %vm1594, %v9841, %v10129
          %v10747 = vsel %vm1594, %v9846, %v10134
          %v10748 = vsel %vm1594, %v9851, %v10139
          %v10749 = vsel %vm8888, %v10717, %v10272
          %v10750 = vsel %vm8888, %v10718, %v10277
          %v10751 = vsel %vm8888, %v10719, %v10282
          %v10752 = vsel %vm8888, %v10720, %v10287
          %v10753 = vsel %vm8888, %v10721, %v10292
          %v10754 = vsel %vm8888, %v10722, %v10297
          %v10755 = vsel %vm8888, %v10723, %v10302
          %v10756 = vsel %vm8888, %v10724, %v10307
          %v10757 = vsel %vm8888, %v10725, %v10312
          %v10758 = vsel %vm8888, %v10726, %v10317
          %v10759 = vsel %vm8888, %v10727, %v10322
          %v10760 = vsel %vm8888, %v10728, %v10327
          %v10761 = vsel %vm8888, %v10729, %v10332
          %v10762 = vsel %vm8888, %v10730, %v10337
          %v10763 = vsel %vm8888, %v10731, %v10342
          %v10764 = vsel %vm8888, %v10732, %v10347
          %v10765 = vsel %vm8888, %v10733, %v10352
          %v10766 = vsel %vm8888, %v10734, %v10357
          %v10767 = vsel %vm8888, %v10735, %v10362
          %v10768 = vsel %vm8888, %v10736, %v10367
          %v10769 = vsel %vm8888, %v10737, %v10372
          %v10770 = vsel %vm8888, %v10738, %v10377
          %v10771 = vsel %vm8888, %v10739, %v10382
          %v10772 = vsel %vm8888, %v10740, %v10387
          %v10773 = vsel %vm8888, %v10741, %v10392
          %v10774 = vsel %vm8888, %v10742, %v10397
          %v10775 = vsel %vm8888, %v10743, %v10402
          %v10776 = vsel %vm8888, %v10744, %v10407
          %v10777 = vsel %vm8888, %v10745, %v10412
          %v10778 = vsel %vm8888, %v10746, %v10417
          %v10779 = vsel %vm8888, %v10747, %v10422
          %v10780 = vsel %vm8888, %v10748, %v10427
          %v10781 = vsel %vm8921, %v10749, %v10560
          %v10782 = vsel %vm8921, %v10750, %v10565
          %v10783 = vsel %vm8921, %v10751, %v10570
          %v10784 = vsel %vm8921, %v10752, %v10575
          %v10785 = vsel %vm8921, %v10753, %v10580
          %v10786 = vsel %vm8921, %v10754, %v10585
          %v10787 = vsel %vm8921, %v10755, %v10590
          %v10788 = vsel %vm8921, %v10756, %v10595
          %v10789 = vsel %vm8921, %v10757, %v10600
          %v10790 = vsel %vm8921, %v10758, %v10605
          %v10791 = vsel %vm8921, %v10759, %v10610
          %v10792 = vsel %vm8921, %v10760, %v10615
          %v10793 = vsel %vm8921, %v10761, %v10620
          %v10794 = vsel %vm8921, %v10762, %v10625
          %v10795 = vsel %vm8921, %v10763, %v10630
          %v10796 = vsel %vm8921, %v10764, %v10635
          %v10797 = vsel %vm8921, %v10765, %v10640
          %v10798 = vsel %vm8921, %v10766, %v10645
          %v10799 = vsel %vm8921, %v10767, %v10650
          %v10800 = vsel %vm8921, %v10768, %v10655
          %v10801 = vsel %vm8921, %v10769, %v10660
          %v10802 = vsel %vm8921, %v10770, %v10665
          %v10803 = vsel %vm8921, %v10771, %v10670
          %v10804 = vsel %vm8921, %v10772, %v10675
          %v10805 = vsel %vm8921, %v10773, %v10680
          %v10806 = vsel %vm8921, %v10774, %v10685
          %v10807 = vsel %vm8921, %v10775, %v10690
          %v10808 = vsel %vm8921, %v10776, %v10695
          %v10809 = vsel %vm8921, %v10777, %v10700
          %v10810 = vsel %vm8921, %v10778, %v10705
          %v10811 = vsel %vm8921, %v10779, %v10710
          %v10812 = vsel %vm8921, %v10780, %v10715
          %v10813 = vld [vmem:[#allocation5] sm:$0xff]
          %v10814 = vld [vmem:[#allocation5 + $0x8] sm:$0xff]
          %v10815 = vld [vmem:[#allocation5 + $0x10] sm:$0xff]
          %v10816 = vld [vmem:[#allocation5 + $0x18] sm:$0xff]
          %v10817 = vld [vmem:[#allocation5 + $0x20] sm:$0xff]
          %v10818 = vld [vmem:[#allocation5 + $0x28] sm:$0xff]
          %v10819 = vld [vmem:[#allocation5 + $0x30] sm:$0xff]
          %v10820 = vld [vmem:[#allocation5 + $0x38] sm:$0xff]
          %v10821 = vld [vmem:[#allocation5 + $0x40] sm:$0xff]
          %v10822 = vld [vmem:[#allocation5 + $0x48] sm:$0xff]
          %v10823 = vld [vmem:[#allocation5 + $0x50] sm:$0xff]
          %v10824 = vld [vmem:[#allocation5 + $0x58] sm:$0xff]
          %v10825 = vld [vmem:[#allocation5 + $0x60] sm:$0xff]
          %v10826 = vld [vmem:[#allocation5 + $0x68] sm:$0xff]
          %v10827 = vld [vmem:[#allocation5 + $0x70] sm:$0xff]
          %v10828 = vld [vmem:[#allocation5 + $0x78] sm:$0xff]
          %v10829 = vld [vmem:[#allocation5 + $0x80] sm:$0xff]
          %v10830 = vld [vmem:[#allocation5 + $0x88] sm:$0xff]
          %v10831 = vld [vmem:[#allocation5 + $0x90] sm:$0xff]
          %v10832 = vld [vmem:[#allocation5 + $0x98] sm:$0xff]
          %v10833 = vld [vmem:[#allocation5 + $0xa0] sm:$0xff]
          %v10834 = vld [vmem:[#allocation5 + $0xa8] sm:$0xff]
          %v10835 = vld [vmem:[#allocation5 + $0xb0] sm:$0xff]
          %v10836 = vld [vmem:[#allocation5 + $0xb8] sm:$0xff]
          %v10837 = vld [vmem:[#allocation5 + $0xc0] sm:$0xff]
          %v10838 = vld [vmem:[#allocation5 + $0xc8] sm:$0xff]
          %v10839 = vld [vmem:[#allocation5 + $0xd0] sm:$0xff]
          %v10840 = vld [vmem:[#allocation5 + $0xd8] sm:$0xff]
          %v10841 = vld [vmem:[#allocation5 + $0xe0] sm:$0xff]
          %v10842 = vld [vmem:[#allocation5 + $0xe8] sm:$0xff]
          %v10843 = vld [vmem:[#allocation5 + $0xf0] sm:$0xff]
          %v10844 = vld [vmem:[#allocation5 + $0xf8] sm:$0xff]
          %v10845 = vmul.f32 %v10813, %v10781
          %v10846 = vmul.f32 %v10814, %v10782
          %v10847 = vmul.f32 %v10815, %v10783
          %v10848 = vmul.f32 %v10816, %v10784
          %v10849 = vmul.f32 %v10817, %v10785
          %v10850 = vmul.f32 %v10818, %v10786
          %v10851 = vmul.f32 %v10819, %v10787
          %v10852 = vmul.f32 %v10820, %v10788
          %v10853 = vmul.f32 %v10821, %v10789
          %v10854 = vmul.f32 %v10822, %v10790
          %v10855 = vmul.f32 %v10823, %v10791
          %v10856 = vmul.f32 %v10824, %v10792
          %v10857 = vmul.f32 %v10825, %v10793
          %v10858 = vmul.f32 %v10826, %v10794
          %v10859 = vmul.f32 %v10827, %v10795
          %v10860 = vmul.f32 %v10828, %v10796
          %v10861 = vmul.f32 %v10829, %v10797
          %v10862 = vmul.f32 %v10830, %v10798
          %v10863 = vmul.f32 %v10831, %v10799
          %v10864 = vmul.f32 %v10832, %v10800
          %v10865 = vmul.f32 %v10833, %v10801
          %v10866 = vmul.f32 %v10834, %v10802
          %v10867 = vmul.f32 %v10835, %v10803
          %v10868 = vmul.f32 %v10836, %v10804
          %v10869 = vmul.f32 %v10837, %v10805
          %v10870 = vmul.f32 %v10838, %v10806
          %v10871 = vmul.f32 %v10839, %v10807
          %v10872 = vmul.f32 %v10840, %v10808
          %v10873 = vmul.f32 %v10841, %v10809
          %v10874 = vmul.f32 %v10842, %v10810
          %v10875 = vmul.f32 %v10843, %v10811
          %v10876 = vmul.f32 %v10844, %v10812
          %v10877 = vpack.c.bf16 %v10845, %v10845
          %v10878 = vpack.c.bf16 %v10846, %v10846
          %v10879 = vpack.c.bf16 %v10847, %v10847
          %v10880 = vpack.c.bf16 %v10848, %v10848
          %v10881 = vpack.c.bf16 %v10849, %v10849
          %v10882 = vpack.c.bf16 %v10850, %v10850
          %v10883 = vpack.c.bf16 %v10851, %v10851
          %v10884 = vpack.c.bf16 %v10852, %v10852
          %v10885 = vpack.c.bf16 %v10853, %v10853
          %v10886 = vpack.c.bf16 %v10854, %v10854
          %v10887 = vpack.c.bf16 %v10855, %v10855
          %v10888 = vpack.c.bf16 %v10856, %v10856
          %v10889 = vpack.c.bf16 %v10857, %v10857
          %v10890 = vpack.c.bf16 %v10858, %v10858
          %v10891 = vpack.c.bf16 %v10859, %v10859
          %v10892 = vpack.c.bf16 %v10860, %v10860
          %v10893 = vpack.c.bf16 %v10861, %v10861
          %v10894 = vpack.c.bf16 %v10862, %v10862
          %v10895 = vpack.c.bf16 %v10863, %v10863
          %v10896 = vpack.c.bf16 %v10864, %v10864
          %v10897 = vpack.c.bf16 %v10865, %v10865
          %v10898 = vpack.c.bf16 %v10866, %v10866
          %v10899 = vpack.c.bf16 %v10867, %v10867
          %v10900 = vpack.c.bf16 %v10868, %v10868
          %v10901 = vpack.c.bf16 %v10869, %v10869
          %v10902 = vpack.c.bf16 %v10870, %v10870
          %v10903 = vpack.c.bf16 %v10871, %v10871
          %v10904 = vpack.c.bf16 %v10872, %v10872
          %v10905 = vpack.c.bf16 %v10873, %v10873
          %v10906 = vpack.c.bf16 %v10874, %v10874
          %v10907 = vpack.c.bf16 %v10875, %v10875
          %v10908 = vpack.c.bf16 %v10876, %v10876
          %10909 = vst [vmem:[%s367] sm:$0xf] %v10877
          %10910 = vst [vmem:[%s367 + $0x4] sm:$0xf] %v10878
          %10911 = vst [vmem:[%s367 + $0x8] sm:$0xf] %v10879
          %10912 = vst [vmem:[%s367 + $0xc] sm:$0xf] %v10880
          %10913 = vst [vmem:[%s367 + $0x10] sm:$0xf] %v10881
          %10914 = vst [vmem:[%s367 + $0x14] sm:$0xf] %v10882
          %10915 = vst [vmem:[%s367 + $0x18] sm:$0xf] %v10883
          %10916 = vst [vmem:[%s367 + $0x1c] sm:$0xf] %v10884
          %10917 = vst [vmem:[%s367 + $0x20] sm:$0xf] %v10885
          %10918 = vst [vmem:[%s367 + $0x24] sm:$0xf] %v10886
          %10919 = vst [vmem:[%s367 + $0x28] sm:$0xf] %v10887
          %10920 = vst [vmem:[%s367 + $0x2c] sm:$0xf] %v10888
          %10921 = vst [vmem:[%s367 + $0x30] sm:$0xf] %v10889
          %10922 = vst [vmem:[%s367 + $0x34] sm:$0xf] %v10890
          %10923 = vst [vmem:[%s367 + $0x38] sm:$0xf] %v10891
          %10924 = vst [vmem:[%s367 + $0x3c] sm:$0xf] %v10892
          %10925 = vst [vmem:[%s367 + $0x40] sm:$0xf] %v10893
          %10926 = vst [vmem:[%s367 + $0x44] sm:$0xf] %v10894
          %10927 = vst [vmem:[%s367 + $0x48] sm:$0xf] %v10895
          %10928 = vst [vmem:[%s367 + $0x4c] sm:$0xf] %v10896
          %10929 = vst [vmem:[%s367 + $0x50] sm:$0xf] %v10897
          %10930 = vst [vmem:[%s367 + $0x54] sm:$0xf] %v10898
          %10931 = vst [vmem:[%s367 + $0x58] sm:$0xf] %v10899
          %10932 = vst [vmem:[%s367 + $0x5c] sm:$0xf] %v10900
          %10933 = vst [vmem:[%s367 + $0x60] sm:$0xf] %v10901
          %10934 = vst [vmem:[%s367 + $0x64] sm:$0xf] %v10902
          %10935 = vst [vmem:[%s367 + $0x68] sm:$0xf] %v10903
          %10936 = vst [vmem:[%s367 + $0x6c] sm:$0xf] %v10904
          %10937 = vst [vmem:[%s367 + $0x70] sm:$0xf] %v10905
          %10938 = vst [vmem:[%s367 + $0x74] sm:$0xf] %v10906
          %10939 = vst [vmem:[%s367 + $0x78] sm:$0xf] %v10907
          %10940 = vst [vmem:[%s367 + $0x7c] sm:$0xf] %v10908
        $region48: #{distributed_attention_global0_forward.1} parent=35 // pred_fallthru
          _
        %s10941 = smul.u32 32, %s24
        %p10942 = scmp.lt.s32.totalorder %s23, 1
        %s10943 = scalar_select %p10942, %s23, 1
        %p10944 = scmp.lt.s32.totalorder %s10941, 31
        %s10945 = scalar_select %p10944, %s10941, 31
        %s10946 = smul.addr %s10943, 32
        %s10947 = sadd.s32 %s10945, %s10946
        %s10948 = smul.addr %s10947, 4
        %s10949 = scalar_lea.vmem %s4, %s10948
        // Predicated region
        $region49: #{distributed_attention_global0_forward.1} parent=35 // pred_check
          %p10950 = pneg %p171
        $region50: #{distributed_attention_global0_forward.1} parent=35 // pred_check_branch
          %10952 = sbr.rel (%p10950) target = $region52
        $region51: #{distributed_attention_global0_forward.1} parent=35 // pred_region
          %s10953 = smul.u32 32, %s24
        $region52: #{distributed_attention_global0_forward.1} parent=35 // pred_fallthru
          _
      $region36: #{distributed_attention_global0_forward.1} parent=5 // pred_fallthru
        _
      %p10954 = scmp.le.s32.totalorder 2, %s13
      // Predicated region
      $region53: #{distributed_attention_global0_forward.1} parent=5 // pred_check
        %p10955 = pneg %p10954
      $region54: #{distributed_attention_global0_forward.1} parent=5 // pred_check_branch
        %10957 = sbr.rel (%p10955) target = $region56
      $region55: #{distributed_attention_global0_forward.1} parent=5 // pred_region
        %s10958 = ssub.s32 %s13, 2
        // Predicated region
        $region57: #{distributed_attention_global0_forward.1} parent=55 // pred_check
          %p10959 = pneg %p177
        $region58: #{distributed_attention_global0_forward.1} parent=55 // pred_check_branch
          %10961 = sbr.rel (%p10959) target = $region60
        $region59: #{distributed_attention_global0_forward.1} parent=55 // pred_region
          %s10962 = smul.u32 32, %s27
          %p10963 = scmp.lt.s32.totalorder %s26, 1
          %s10964 = scalar_select %p10963, %s26, 1
          %p10965 = scmp.lt.s32.totalorder %s10962, 31
          %s10966 = scalar_select %p10965, %s10962, 31
          %s10967 = smul.addr %s10964, 32
          %s10968 = sadd.s32 %s10966, %s10967
          %s10969 = smul.addr %s10968, 4
          %s10970 = scalar_lea.vmem %s4, %s10969
        $region60: #{distributed_attention_global0_forward.1} parent=55 // pred_fallthru
          _
      $region56: #{distributed_attention_global0_forward.1} parent=5 // pred_fallthru
        _
    $region6: #{distributed_attention_global0_forward.1} parent=1 // loop_footer
      %s17 = sadd.s32 1, %s13
    $region7: #{distributed_attention_global0_forward.1} parent=1 // loop_footer_branch
      %12 = sbr.rel target = $region3
    $region8: #{distributed_attention_global0_forward.1} parent=1 // loop_exit
      _
    %10971 = vsyncpa [#allocation7], 1
    %s10972 = scalar_lea.sflag [#allocation7], 1
    %10973 = vsyncpa %s10972, 1

</llo_original>
